<compile_context>
chip_gen: v5e
topology: v5e:2x2
jax: 0.10.0
libtpu: 0.0.40
codegen_flags: <defaults>
</compile_context>

<pallas_src>
import jax
import jax.numpy as jnp
from jax.experimental import pallas as pl
from jax.experimental.pallas import tpu as pltpu

# ----------------------------------------------------------------------------
# Small demo configuration (module hardwires seq_len=3442 and nhid=2048; we use
# the same structural formula at a smaller, demo-friendly size).
# ----------------------------------------------------------------------------
BATCH = 2
SEQ_LEN = 132          # stands in for the module's hardwired 3442
HIDDEN_DIM = 32        # Conv1d(1, hidden_dim, k)
OUTPUT_DIM = 64        # Conv1d(hidden_dim, output_dim, k)
KERNEL_SIZE = 5
NHID = 512             # module default 2048, shrunk for the small demo
EMBEDDING_SIZE = 256
# s = int(((L - 2*(k//2)) / 2 - 2*(k//2)) / 2)  -- same formula as the module
S_OUT = int(((SEQ_LEN - 2 * (KERNEL_SIZE // 2)) / 2 - 2 * (KERNEL_SIZE // 2)) / 2)


# ----------------------------------------------------------------------------
# Fused Pallas kernel: entire forward for ONE batch element per grid step.
# Activation layout inside the kernel: (length, channels)  -> lane = channels.
# ----------------------------------------------------------------------------
def _embedding_net_kernel(x_ref, w1_ref, b1_ref, w2_ref, b2_ref,
                          w3_ref, b3_ref, w4_ref, b4_ref, w5_ref, b5_ref,
                          prelu_ref, emb_ref, logits_ref):
    f32 = jnp.float32
    ksize, c1 = w1_ref.shape          # (5, 32)
    seq = x_ref.shape[0]              # 132
    l1 = seq - (ksize - 1)            # conv1 output length (128)
    c2 = w2_ref.shape[2]              # 64
    l3 = (l1 // 2) - (ksize - 1)      # conv2 output length (60)
    s_out, _, nhid = w3_ref.shape     # (30, 64, 512)

    pre = prelu_ref[...]              # (1, 4) PReLU slopes
    a1, a2 = pre[:, 0:1], pre[:, 1:2]
    a3, a4 = pre[:, 2:3], pre[:, 3:4]

    def prelu(h, a):                  # a: (1,1), broadcasts over h
        return jnp.where(h >= 0, h, a * h)

    def maxpool2(h):
        # 1-D max pool (kernel 2, stride 2) along the length (sublane) axis.
        # out[j] = max(h[2j], h[2j+1]) via pairwise max + 0/1 selection matmul
        # (trivial MXU work; avoids strided slices / layout-heavy reshapes).
        m = jnp.maximum(h[:-1, :], h[1:, :])                      # (Lin-1, C)
        l_out = h.shape[0] // 2
        rows = jax.lax.broadcasted_iota(jnp.int32, (l_out, m.shape[0]), 0)
        cols = jax.lax.broadcasted_iota(jnp.int32, (l_out, m.shape[0]), 1)
        sel = (cols == 2 * rows).astype(f32)                      # (Lout, Lin-1)
        return jnp.dot(sel, m, preferred_element_type=f32)        # (Lout, C)

    # ---- Conv1d(1 -> c1, k) valid: 5 shifted broadcast-FMAs (Cin == 1) ------
    x = x_ref[...]                                                # (seq, 1)
    w1 = w1_ref[...]                                              # (k, c1)
    h = jnp.zeros((l1, c1), f32)
    for k in range(ksize):
        h = h + x[k:k + l1, :] * w1[k:k + 1, :]                   # (l1,1)*(1,c1)
    h = prelu(h + b1_ref[...], a1)
    h = maxpool2(h)                                               # (l1//2, c1)

    # ---- Conv1d(c1 -> c2, k) valid: 5 shifted MXU matmuls -------------------
    h2 = jnp.zeros((l3, c2), f32)
    for k in range(ksize):
        h2 = h2 + jnp.dot(h[k:k + l3, :], w2_ref[k],
                          preferred_element_type=f32)             # (l3, c2)
    h2 = prelu(h2 + b2_ref[...], a2)
    h2 = maxpool2(h2)                                             # (s_out, c2)

    # ---- Flatten + Dropout(eval: identity) + Linear(c2*s_out -> nhid) -------
    # TODO(synk): nn.Dropout(p=0.5) is identity at inference; training-mode
    # dropout (RNG mask) is not implemented.
    # PyTorch's NCW flatten order (idx = c*s_out + t) is folded into the packed
    # weight w3[t, c, o]; contract as s_out accumulated (1,c2)@(c2,nhid) dots so
    # no flatten reshape is needed in-kernel.
    y = jnp.zeros((1, nhid), f32)
    for t in range(s_out):
        y = y + jnp.dot(h2[t:t + 1, :], w3_ref[t],
                        preferred_element_type=f32)               # (1, nhid)
    y = prelu(y + b3_ref[...], a3)

    # ---- Linear(nhid -> emb): the embedding ---------------------------------
    emb = jnp.dot(y, w4_ref[...], preferred_element_type=f32) + b4_ref[...]
    emb_ref[...] = emb                                            # (1, emb)

    # ---- fc head: PReLU -> Linear(emb -> 2) ---------------------------------
    z = prelu(emb, a4)
    logits_ref[...] = (jnp.dot(z, w5_ref[...], preferred_element_type=f32)
                       + b5_ref[...])                             # (1, 2)


# ----------------------------------------------------------------------------
# Wrapper: one fused pallas_call over the batch grid.
# ----------------------------------------------------------------------------
def embedding_net_apply(packed, x):
    """x: (N, 1, L) float32 (PyTorch NCW).  Returns (embedding (N,emb), logits (N,2))."""
    n, cin, seq = x.shape
    assert cin == 1
    ksize, c1 = packed["w1"].shape
    s_out, c2, nhid = packed["w3"].shape
    emb_dim = packed["w4"].shape[1]

    # (N, 1, L) -> (N, L, 1): length on sublane, (single) channel on lane.
    x3 = x.reshape(n, seq, 1)

    emb, logits = pl.pallas_call(
        _embedding_net_kernel,
        out_shape=(jax.ShapeDtypeStruct((n, 1, emb_dim), jnp.float32),
                   jax.ShapeDtypeStruct((n, 1, 2), jnp.float32)),
        grid=(n,),
        in_specs=[
            pl.BlockSpec((None, seq, 1), lambda i: (i, 0, 0)),        # x
            pl.BlockSpec((ksize, c1), lambda i: (0, 0)),              # conv1 w
            pl.BlockSpec((1, c1), lambda i: (0, 0)),                  # conv1 b
            pl.BlockSpec((ksize, c1, c2), lambda i: (0, 0, 0)),       # conv2 w
            pl.BlockSpec((1, c2), lambda i: (0, 0)),                  # conv2 b
            pl.BlockSpec((s_out, c2, nhid), lambda i: (0, 0, 0)),     # fc1 w
            pl.BlockSpec((1, nhid), lambda i: (0, 0)),                # fc1 b
            pl.BlockSpec((nhid, emb_dim), lambda i: (0, 0)),          # fc2 w
            pl.BlockSpec((1, emb_dim), lambda i: (0, 0)),             # fc2 b
            pl.BlockSpec((emb_dim, 2), lambda i: (0, 0)),             # head w
            pl.BlockSpec((1, 2), lambda i: (0, 0)),                   # head b
            pl.BlockSpec((1, 4), lambda i: (0, 0)),                   # PReLU slopes
        ],
        out_specs=(pl.BlockSpec((None, 1, emb_dim), lambda i: (i, 0, 0)),
                   pl.BlockSpec((None, 1, 2), lambda i: (i, 0, 0))),
        compiler_params=pltpu.CompilerParams(
            dimension_semantics=("parallel",),
            vmem_limit_bytes=32 * 1024 * 1024),
    )(x3, packed["w1"], packed["b1"], packed["w2"], packed["b2"],
      packed["w3"], packed["b3"], packed["w4"], packed["b4"],
      packed["w5"], packed["b5"], packed["prelu"])
    return emb.reshape(n, emb_dim), logits.reshape(n, 2)


def embedding_net_forward(packed, x):      # == EmbeddingNet.forward
    return embedding_net_apply(packed, x)[1]


def get_embedding(packed, x):              # == EmbeddingNet.get_embedding
    return embedding_net_apply(packed, x)[0]


# ----------------------------------------------------------------------------
# Parameters: PyTorch-layout init + one-time kernel-layout packing.
# ----------------------------------------------------------------------------
def init_params(key):
    ks = jax.random.split(key, 10)
    f32 = jnp.float32
    return {
        "conv1_w": jax.random.normal(ks[0], (HIDDEN_DIM, 1, KERNEL_SIZE), f32) * 0.3,
        "conv1_b": jax.random.normal(ks[1], (HIDDEN_DIM,), f32) * 0.1,
        "prelu1": jnp.full((1,), 0.25, f32),
        "conv2_w": jax.random.normal(ks[2], (OUTPUT_DIM, HIDDEN_DIM, KERNEL_SIZE), f32) * 0.1,
        "conv2_b": jax.random.normal(ks[3], (OUTPUT_DIM,), f32) * 0.1,
        "prelu2": jnp.full((1,), 0.2, f32),
        "fc1_w": jax.random.normal(ks[4], (NHID, OUTPUT_DIM * S_OUT), f32) * 0.02,
        "fc1_b": jax.random.normal(ks[5], (NHID,), f32) * 0.1,
        "prelu3": jnp.full((1,), 0.3, f32),
        "fc2_w": jax.random.normal(ks[6], (EMBEDDING_SIZE, NHID), f32) * 0.04,
        "fc2_b": jax.random.normal(ks[7], (EMBEDDING_SIZE,), f32) * 0.1,
        "prelu4": jnp.full((1,), 0.15, f32),
        "head_w": jax.random.normal(ks[8], (2, EMBEDDING_SIZE), f32) * 0.06,
        "head_b": jax.random.normal(ks[9], (2,), f32) * 0.1,
    }


def pack_params(p):
    """One-time re-layout of PyTorch-shaped weights into kernel layout."""
    nhid, flat = p["fc1_w"].shape
    c2 = p["conv2_w"].shape[0]
    s = flat // c2
    return {
        "w1": jnp.transpose(p["conv1_w"][:, 0, :], (1, 0)),               # (K, C1)
        "b1": p["conv1_b"].reshape(1, -1),
        "w2": jnp.transpose(p["conv2_w"], (2, 1, 0)),                     # (K, C1, C2)
        "b2": p["conv2_b"].reshape(1, -1),
        # fc1_w[o, c*s + t]  ->  w3[t, c, o]  (folds the NCW flatten order)
        "w3": jnp.transpose(p["fc1_w"].reshape(nhid, c2, s), (2, 1, 0)),  # (S, C2, NHID)
        "b3": p["fc1_b"].reshape(1, -1),
        "w4": jnp.transpose(p["fc2_w"], (1, 0)),                          # (NHID, EMB)
        "b4": p["fc2_b"].reshape(1, -1),
        "w5": jnp.transpose(p["head_w"], (1, 0)),                         # (EMB, 2)
        "b5": p["head_b"].reshape(1, -1),
        "prelu": jnp.concatenate([p["prelu1"], p["prelu2"],
                                  p["prelu3"], p["prelu4"]]).reshape(1, 4),
    }


# ----------------------------------------------------------------------------
# Pure-JAX (XLA) reference of the PyTorch module, for numerical validation.
# ----------------------------------------------------------------------------
def _conv1d_valid(x, w):
    # x: (N, Cin, L), w: (Cout, Cin, K) -> (N, Cout, L-K+1)
    k = w.shape[-1]
    lo = x.shape[-1] - k + 1
    taps = jnp.stack([x[:, :, j:j + lo] for j in range(k)], axis=-1)  # (N,Cin,Lo,K)
    return jnp.einsum("nilk,oik->nol", taps, w,
                      precision=jax.lax.Precision.HIGHEST)


def embedding_net_reference(params, x):
    hp = jax.lax.Precision.HIGHEST

    def prelu(h, a):
        return jnp.where(h >= 0, h, a * h)

    def maxpool1d(h):  # (N, C, L) -> (N, C, L//2)
        n, c, l = h.shape
        return jnp.max(h[:, :, :(l // 2) * 2].reshape(n, c, l // 2, 2), axis=-1)

    h = _conv1d_valid(x, params["conv1_w"]) + params["conv1_b"][None, :, None]
    h = maxpool1d(prelu(h, params["prelu1"][0]))
    h = _conv1d_valid(h, params["conv2_w"]) + params["conv2_b"][None, :, None]
    h = maxpool1d(prelu(h, params["prelu2"][0]))
    h = h.reshape(h.shape[0], -1)                      # nn.Flatten over (C, W)
    # nn.Dropout(p=0.5): identity at inference.
    h = prelu(jnp.matmul(h, params["fc1_w"].T, precision=hp) + params["fc1_b"],
              params["prelu3"][0])
    emb = jnp.matmul(h, params["fc2_w"].T, precision=hp) + params["fc2_b"]
    logits = (jnp.matmul(prelu(emb, params["prelu4"][0]), params["head_w"].T,
                         precision=hp) + params["head_b"])
    return emb, logits


if __name__ == "__main__":
    key = jax.random.PRNGKey(0)
    pkey, xkey = jax.random.split(key)
    params = init_params(pkey)
    x = jax.random.normal(xkey, (BATCH, 1, SEQ_LEN), jnp.float32)  # (2, 1, 132) NCW

    packed = pack_params(params)                 # one-time weight re-layout
    apply_fn = jax.jit(embedding_net_apply)

    emb, logits = apply_fn(packed, x)
    emb, logits = jax.block_until_ready((emb, logits))
    assert logits.shape == (BATCH, 2) and logits.dtype == jnp.float32
    assert emb.shape == (BATCH, EMBEDDING_SIZE)

    # Validate against the pure-JAX reference of the PyTorch module.
    ref_emb, ref_logits = embedding_net_reference(params, x)
    assert bool(jnp.allclose(emb, ref_emb, rtol=5e-2, atol=5e-2)), "embedding mismatch"
    assert bool(jnp.allclose(logits, ref_logits, rtol=5e-2, atol=5e-2)), "logits mismatch"

    print("KERNEL_OK")
</pallas_src>

<mosaic_0001>
module attributes {stable_mosaic.version = 11 : i64} {
  func.func @_embedding_net_kernel(%arg0: i32, %arg1: memref<1x132x1xf32, #tpu.memory_space<vmem>>, %arg2: memref<5x32xf32, #tpu.memory_space<vmem>>, %arg3: memref<1x32xf32, #tpu.memory_space<vmem>>, %arg4: memref<5x32x64xf32, #tpu.memory_space<vmem>>, %arg5: memref<1x64xf32, #tpu.memory_space<vmem>>, %arg6: memref<30x64x512xf32, #tpu.memory_space<vmem>>, %arg7: memref<1x512xf32, #tpu.memory_space<vmem>>, %arg8: memref<512x256xf32, #tpu.memory_space<vmem>>, %arg9: memref<1x256xf32, #tpu.memory_space<vmem>>, %arg10: memref<256x2xf32, #tpu.memory_space<vmem>>, %arg11: memref<1x2xf32, #tpu.memory_space<vmem>>, %arg12: memref<1x4xf32, #tpu.memory_space<vmem>>, %arg13: memref<1x1x256xf32, #tpu.memory_space<vmem>>, %arg14: memref<1x1x2xf32, #tpu.memory_space<vmem>>) attributes {dimension_semantics = [#tpu.dimension_semantics<parallel>], iteration_bounds = array<i64: 2>, scalar_prefetch = 0 : i64, scratch_operands = 0 : i64, tpu.core_type = #tpu.core_type<tc>, window_params = [{transform_indices = @transform_0, window_bounds = array<i64: 1, 132, 1>}, {pipeline_mode = #tpu.pipeline_mode<synchronous>, transform_indices = @transform_1, window_bounds = array<i64: 5, 32>}, {pipeline_mode = #tpu.pipeline_mode<synchronous>, transform_indices = @transform_2, window_bounds = array<i64: 1, 32>}, {pipeline_mode = #tpu.pipeline_mode<synchronous>, transform_indices = @transform_3, window_bounds = array<i64: 5, 32, 64>}, {pipeline_mode = #tpu.pipeline_mode<synchronous>, transform_indices = @transform_4, window_bounds = array<i64: 1, 64>}, {pipeline_mode = #tpu.pipeline_mode<synchronous>, transform_indices = @transform_5, window_bounds = array<i64: 30, 64, 512>}, {pipeline_mode = #tpu.pipeline_mode<synchronous>, transform_indices = @transform_6, window_bounds = array<i64: 1, 512>}, {pipeline_mode = #tpu.pipeline_mode<synchronous>, transform_indices = @transform_7, window_bounds = array<i64: 512, 256>}, {pipeline_mode = #tpu.pipeline_mode<synchronous>, transform_indices = @transform_8, window_bounds = array<i64: 1, 256>}, {pipeline_mode = #tpu.pipeline_mode<synchronous>, transform_indices = @transform_9, window_bounds = array<i64: 256, 2>}, {pipeline_mode = #tpu.pipeline_mode<synchronous>, transform_indices = @transform_10, window_bounds = array<i64: 1, 2>}, {pipeline_mode = #tpu.pipeline_mode<synchronous>, transform_indices = @transform_11, window_bounds = array<i64: 1, 4>}, {transform_indices = @transform_12, window_bounds = array<i64: 1, 1, 256>}, {transform_indices = @transform_13, window_bounds = array<i64: 1, 1, 2>}]} {
    %c0 = arith.constant 0 : index
    %c0_0 = arith.constant 0 : index
    %0 = vector.load %arg12[%c0, %c0_0] : memref<1x4xf32, #tpu.memory_space<vmem>>, vector<1x4xf32>
    %1 = vector.extract_strided_slice %0 {offsets = [0, 0], sizes = [1, 1], strides = [1, 1]} : vector<1x4xf32> to vector<1x1xf32>
    %2 = vector.extract_strided_slice %0 {offsets = [0, 1], sizes = [1, 1], strides = [1, 1]} : vector<1x4xf32> to vector<1x1xf32>
    %3 = vector.extract_strided_slice %0 {offsets = [0, 2], sizes = [1, 1], strides = [1, 1]} : vector<1x4xf32> to vector<1x1xf32>
    %4 = vector.extract_strided_slice %0 {offsets = [0, 3], sizes = [1, 1], strides = [1, 1]} : vector<1x4xf32> to vector<1x1xf32>
    %c0_1 = arith.constant 0 : index
    %c0_2 = arith.constant 0 : index
    %c0_3 = arith.constant 0 : index
    %5 = vector.load %arg1[%c0_1, %c0_2, %c0_3] : memref<1x132x1xf32, #tpu.memory_space<vmem>>, vector<1x132x1xf32>
    %6 = vector.shape_cast %5 : vector<1x132x1xf32> to vector<132x1xf32>
    %c0_4 = arith.constant 0 : index
    %c0_5 = arith.constant 0 : index
    %7 = vector.load %arg2[%c0_4, %c0_5] : memref<5x32xf32, #tpu.memory_space<vmem>>, vector<5x32xf32>
    %cst = arith.constant 0.000000e+00 : f32
    %8 = vector.broadcast %cst : f32 to vector<128x32xf32>
    %9 = vector.extract_strided_slice %6 {offsets = [0, 0], sizes = [128, 1], strides = [1, 1]} : vector<132x1xf32> to vector<128x1xf32>
    %10 = vector.extract_strided_slice %7 {offsets = [0, 0], sizes = [1, 32], strides = [1, 1]} : vector<5x32xf32> to vector<1x32xf32>
    %11 = vector.broadcast %9 : vector<128x1xf32> to vector<128x32xf32>
    %12 = vector.broadcast %10 : vector<1x32xf32> to vector<128x32xf32>
    %13 = arith.mulf %11, %12 : vector<128x32xf32>
    %14 = arith.addf %8, %13 : vector<128x32xf32>
    %15 = vector.extract_strided_slice %6 {offsets = [1, 0], sizes = [128, 1], strides = [1, 1]} : vector<132x1xf32> to vector<128x1xf32>
    %16 = vector.extract_strided_slice %7 {offsets = [1, 0], sizes = [1, 32], strides = [1, 1]} : vector<5x32xf32> to vector<1x32xf32>
    %17 = vector.broadcast %15 : vector<128x1xf32> to vector<128x32xf32>
    %18 = vector.broadcast %16 : vector<1x32xf32> to vector<128x32xf32>
    %19 = arith.mulf %17, %18 : vector<128x32xf32>
    %20 = arith.addf %14, %19 : vector<128x32xf32>
    %21 = vector.extract_strided_slice %6 {offsets = [2, 0], sizes = [128, 1], strides = [1, 1]} : vector<132x1xf32> to vector<128x1xf32>
    %22 = vector.extract_strided_slice %7 {offsets = [2, 0], sizes = [1, 32], strides = [1, 1]} : vector<5x32xf32> to vector<1x32xf32>
    %23 = vector.broadcast %21 : vector<128x1xf32> to vector<128x32xf32>
    %24 = vector.broadcast %22 : vector<1x32xf32> to vector<128x32xf32>
    %25 = arith.mulf %23, %24 : vector<128x32xf32>
    %26 = arith.addf %20, %25 : vector<128x32xf32>
    %27 = vector.extract_strided_slice %6 {offsets = [3, 0], sizes = [128, 1], strides = [1, 1]} : vector<132x1xf32> to vector<128x1xf32>
    %28 = vector.extract_strided_slice %7 {offsets = [3, 0], sizes = [1, 32], strides = [1, 1]} : vector<5x32xf32> to vector<1x32xf32>
    %29 = vector.broadcast %27 : vector<128x1xf32> to vector<128x32xf32>
    %30 = vector.broadcast %28 : vector<1x32xf32> to vector<128x32xf32>
    %31 = arith.mulf %29, %30 : vector<128x32xf32>
    %32 = arith.addf %26, %31 : vector<128x32xf32>
    %33 = vector.extract_strided_slice %6 {offsets = [4, 0], sizes = [128, 1], strides = [1, 1]} : vector<132x1xf32> to vector<128x1xf32>
    %34 = vector.extract_strided_slice %7 {offsets = [4, 0], sizes = [1, 32], strides = [1, 1]} : vector<5x32xf32> to vector<1x32xf32>
    %35 = vector.broadcast %33 : vector<128x1xf32> to vector<128x32xf32>
    %36 = vector.broadcast %34 : vector<1x32xf32> to vector<128x32xf32>
    %37 = arith.mulf %35, %36 : vector<128x32xf32>
    %38 = arith.addf %32, %37 : vector<128x32xf32>
    %c0_6 = arith.constant 0 : index
    %c0_7 = arith.constant 0 : index
    %39 = vector.load %arg3[%c0_6, %c0_7] : memref<1x32xf32, #tpu.memory_space<vmem>>, vector<1x32xf32>
    %40 = vector.broadcast %39 : vector<1x32xf32> to vector<128x32xf32>
    %41 = arith.addf %38, %40 : vector<128x32xf32>
    %cst_8 = arith.constant 0.000000e+00 : f32
    %42 = vector.broadcast %cst_8 : f32 to vector<128x32xf32>
    %43 = arith.cmpf oge, %41, %42 : vector<128x32xf32>
    %44 = vector.broadcast %1 : vector<1x1xf32> to vector<128x32xf32>
    %45 = arith.mulf %44, %41 : vector<128x32xf32>
    %46 = arith.select %43, %41, %45 : vector<128x32xi1>, vector<128x32xf32>
    %47 = vector.extract_strided_slice %46 {offsets = [0, 0], sizes = [127, 32], strides = [1, 1]} : vector<128x32xf32> to vector<127x32xf32>
    %48 = vector.extract_strided_slice %46 {offsets = [1, 0], sizes = [127, 32], strides = [1, 1]} : vector<128x32xf32> to vector<127x32xf32>
    %49 = arith.maximumf %47, %48 : vector<127x32xf32>
    %50 = tpu.iota {dimensions = array<i32: 0>} : vector<64x127xi32>
    %51 = tpu.iota {dimensions = array<i32: 1>} : vector<64x127xi32>
    %c2_i32 = arith.constant 2 : i32
    %52 = vector.broadcast %c2_i32 : i32 to vector<64x127xi32>
    %53 = arith.muli %52, %50 : vector<64x127xi32>
    %54 = arith.cmpi eq, %51, %53 : vector<64x127xi32>
    %55 = arith.extui %54 : vector<64x127xi1> to vector<64x127xi32>
    %56 = arith.sitofp %55 : vector<64x127xi32> to vector<64x127xf32>
    %cst_9 = arith.constant dense<0.000000e+00> : vector<64x32xf32>
    %57 = tpu.matmul %56, %49, %cst_9 {dimension_numbers = #tpu.dot_dimension_numbers<[1], [0], [0], [1], [0, 0, 1, 1], [], []>} : vector<64x127xf32>, vector<127x32xf32>, vector<64x32xf32> -> vector<64x32xf32>
    %cst_10 = arith.constant 0.000000e+00 : f32
    %58 = vector.broadcast %cst_10 : f32 to vector<60x64xf32>
    %59 = vector.extract_strided_slice %57 {offsets = [0, 0], sizes = [60, 32], strides = [1, 1]} : vector<64x32xf32> to vector<60x32xf32>
    %c0_11 = arith.constant 0 : index
    %c0_12 = arith.constant 0 : index
    %c0_13 = arith.constant 0 : index
    %60 = vector.load %arg4[%c0_11, %c0_12, %c0_13] : memref<5x32x64xf32, #tpu.memory_space<vmem>>, vector<1x32x64xf32>
    %61 = vector.shape_cast %60 : vector<1x32x64xf32> to vector<32x64xf32>
    %cst_14 = arith.constant dense<0.000000e+00> : vector<60x64xf32>
    %62 = tpu.matmul %59, %61, %cst_14 {dimension_numbers = #tpu.dot_dimension_numbers<[1], [0], [0], [1], [0, 0, 1, 1], [], []>} : vector<60x32xf32>, vector<32x64xf32>, vector<60x64xf32> -> vector<60x64xf32>
    %63 = arith.addf %58, %62 : vector<60x64xf32>
    %64 = vector.extract_strided_slice %57 {offsets = [1, 0], sizes = [60, 32], strides = [1, 1]} : vector<64x32xf32> to vector<60x32xf32>
    %c1 = arith.constant 1 : index
    %c0_15 = arith.constant 0 : index
    %c0_16 = arith.constant 0 : index
    %65 = vector.load %arg4[%c1, %c0_15, %c0_16] : memref<5x32x64xf32, #tpu.memory_space<vmem>>, vector<1x32x64xf32>
    %66 = vector.shape_cast %65 : vector<1x32x64xf32> to vector<32x64xf32>
    %cst_17 = arith.constant dense<0.000000e+00> : vector<60x64xf32>
    %67 = tpu.matmul %64, %66, %cst_17 {dimension_numbers = #tpu.dot_dimension_numbers<[1], [0], [0], [1], [0, 0, 1, 1], [], []>} : vector<60x32xf32>, vector<32x64xf32>, vector<60x64xf32> -> vector<60x64xf32>
    %68 = arith.addf %63, %67 : vector<60x64xf32>
    %69 = vector.extract_strided_slice %57 {offsets = [2, 0], sizes = [60, 32], strides = [1, 1]} : vector<64x32xf32> to vector<60x32xf32>
    %c2 = arith.constant 2 : index
    %c0_18 = arith.constant 0 : index
    %c0_19 = arith.constant 0 : index
    %70 = vector.load %arg4[%c2, %c0_18, %c0_19] : memref<5x32x64xf32, #tpu.memory_space<vmem>>, vector<1x32x64xf32>
    %71 = vector.shape_cast %70 : vector<1x32x64xf32> to vector<32x64xf32>
    %cst_20 = arith.constant dense<0.000000e+00> : vector<60x64xf32>
    %72 = tpu.matmul %69, %71, %cst_20 {dimension_numbers = #tpu.dot_dimension_numbers<[1], [0], [0], [1], [0, 0, 1, 1], [], []>} : vector<60x32xf32>, vector<32x64xf32>, vector<60x64xf32> -> vector<60x64xf32>
    %73 = arith.addf %68, %72 : vector<60x64xf32>
    %74 = vector.extract_strided_slice %57 {offsets = [3, 0], sizes = [60, 32], strides = [1, 1]} : vector<64x32xf32> to vector<60x32xf32>
    %c3 = arith.constant 3 : index
    %c0_21 = arith.constant 0 : index
    %c0_22 = arith.constant 0 : index
    %75 = vector.load %arg4[%c3, %c0_21, %c0_22] : memref<5x32x64xf32, #tpu.memory_space<vmem>>, vector<1x32x64xf32>
    %76 = vector.shape_cast %75 : vector<1x32x64xf32> to vector<32x64xf32>
    %cst_23 = arith.constant dense<0.000000e+00> : vector<60x64xf32>
    %77 = tpu.matmul %74, %76, %cst_23 {dimension_numbers = #tpu.dot_dimension_numbers<[1], [0], [0], [1], [0, 0, 1, 1], [], []>} : vector<60x32xf32>, vector<32x64xf32>, vector<60x64xf32> -> vector<60x64xf32>
    %78 = arith.addf %73, %77 : vector<60x64xf32>
    %79 = vector.extract_strided_slice %57 {offsets = [4, 0], sizes = [60, 32], strides = [1, 1]} : vector<64x32xf32> to vector<60x32xf32>
    %c4 = arith.constant 4 : index
    %c0_24 = arith.constant 0 : index
    %c0_25 = arith.constant 0 : index
    %80 = vector.load %arg4[%c4, %c0_24, %c0_25] : memref<5x32x64xf32, #tpu.memory_space<vmem>>, vector<1x32x64xf32>
    %81 = vector.shape_cast %80 : vector<1x32x64xf32> to vector<32x64xf32>
    %cst_26 = arith.constant dense<0.000000e+00> : vector<60x64xf32>
    %82 = tpu.matmul %79, %81, %cst_26 {dimension_numbers = #tpu.dot_dimension_numbers<[1], [0], [0], [1], [0, 0, 1, 1], [], []>} : vector<60x32xf32>, vector<32x64xf32>, vector<60x64xf32> -> vector<60x64xf32>
    %83 = arith.addf %78, %82 : vector<60x64xf32>
    %c0_27 = arith.constant 0 : index
    %c0_28 = arith.constant 0 : index
    %84 = vector.load %arg5[%c0_27, %c0_28] : memref<1x64xf32, #tpu.memory_space<vmem>>, vector<1x64xf32>
    %85 = vector.broadcast %84 : vector<1x64xf32> to vector<60x64xf32>
    %86 = arith.addf %83, %85 : vector<60x64xf32>
    %cst_29 = arith.constant 0.000000e+00 : f32
    %87 = vector.broadcast %cst_29 : f32 to vector<60x64xf32>
    %88 = arith.cmpf oge, %86, %87 : vector<60x64xf32>
    %89 = vector.broadcast %2 : vector<1x1xf32> to vector<60x64xf32>
    %90 = arith.mulf %89, %86 : vector<60x64xf32>
    %91 = arith.select %88, %86, %90 : vector<60x64xi1>, vector<60x64xf32>
    %92 = vector.extract_strided_slice %91 {offsets = [0, 0], sizes = [59, 64], strides = [1, 1]} : vector<60x64xf32> to vector<59x64xf32>
    %93 = vector.extract_strided_slice %91 {offsets = [1, 0], sizes = [59, 64], strides = [1, 1]} : vector<60x64xf32> to vector<59x64xf32>
    %94 = arith.maximumf %92, %93 : vector<59x64xf32>
    %95 = tpu.iota {dimensions = array<i32: 0>} : vector<30x59xi32>
    %96 = tpu.iota {dimensions = array<i32: 1>} : vector<30x59xi32>
    %c2_i32_30 = arith.constant 2 : i32
    %97 = vector.broadcast %c2_i32_30 : i32 to vector<30x59xi32>
    %98 = arith.muli %97, %95 : vector<30x59xi32>
    %99 = arith.cmpi eq, %96, %98 : vector<30x59xi32>
    %100 = arith.extui %99 : vector<30x59xi1> to vector<30x59xi32>
    %101 = arith.sitofp %100 : vector<30x59xi32> to vector<30x59xf32>
    %cst_31 = arith.constant dense<0.000000e+00> : vector<30x64xf32>
    %102 = tpu.matmul %101, %94, %cst_31 {dimension_numbers = #tpu.dot_dimension_numbers<[1], [0], [0], [1], [0, 0, 1, 1], [], []>} : vector<30x59xf32>, vector<59x64xf32>, vector<30x64xf32> -> vector<30x64xf32>
    %cst_32 = arith.constant 0.000000e+00 : f32
    %103 = vector.broadcast %cst_32 : f32 to vector<1x512xf32>
    %104 = vector.extract_strided_slice %102 {offsets = [0, 0], sizes = [1, 64], strides = [1, 1]} : vector<30x64xf32> to vector<1x64xf32>
    %c0_33 = arith.constant 0 : index
    %c0_34 = arith.constant 0 : index
    %c0_35 = arith.constant 0 : index
    %105 = vector.load %arg6[%c0_33, %c0_34, %c0_35] : memref<30x64x512xf32, #tpu.memory_space<vmem>>, vector<1x64x512xf32>
    %106 = vector.shape_cast %105 : vector<1x64x512xf32> to vector<64x512xf32>
    %cst_36 = arith.constant dense<0.000000e+00> : vector<1x512xf32>
    %107 = tpu.matmul %104, %106, %cst_36 {dimension_numbers = #tpu.dot_dimension_numbers<[1], [0], [0], [1], [0, 0, 1, 1], [], []>} : vector<1x64xf32>, vector<64x512xf32>, vector<1x512xf32> -> vector<1x512xf32>
    %108 = arith.addf %103, %107 : vector<1x512xf32>
    %109 = vector.extract_strided_slice %102 {offsets = [1, 0], sizes = [1, 64], strides = [1, 1]} : vector<30x64xf32> to vector<1x64xf32>
    %c1_37 = arith.constant 1 : index
    %c0_38 = arith.constant 0 : index
    %c0_39 = arith.constant 0 : index
    %110 = vector.load %arg6[%c1_37, %c0_38, %c0_39] : memref<30x64x512xf32, #tpu.memory_space<vmem>>, vector<1x64x512xf32>
    %111 = vector.shape_cast %110 : vector<1x64x512xf32> to vector<64x512xf32>
    %cst_40 = arith.constant dense<0.000000e+00> : vector<1x512xf32>
    %112 = tpu.matmul %109, %111, %cst_40 {dimension_numbers = #tpu.dot_dimension_numbers<[1], [0], [0], [1], [0, 0, 1, 1], [], []>} : vector<1x64xf32>, vector<64x512xf32>, vector<1x512xf32> -> vector<1x512xf32>
    %113 = arith.addf %108, %112 : vector<1x512xf32>
    %114 = vector.extract_strided_slice %102 {offsets = [2, 0], sizes = [1, 64], strides = [1, 1]} : vector<30x64xf32> to vector<1x64xf32>
    %c2_41 = arith.constant 2 : index
    %c0_42 = arith.constant 0 : index
    %c0_43 = arith.constant 0 : index
    %115 = vector.load %arg6[%c2_41, %c0_42, %c0_43] : memref<30x64x512xf32, #tpu.memory_space<vmem>>, vector<1x64x512xf32>
    %116 = vector.shape_cast %115 : vector<1x64x512xf32> to vector<64x512xf32>
    %cst_44 = arith.constant dense<0.000000e+00> : vector<1x512xf32>
    %117 = tpu.matmul %114, %116, %cst_44 {dimension_numbers = #tpu.dot_dimension_numbers<[1], [0], [0], [1], [0, 0, 1, 1], [], []>} : vector<1x64xf32>, vector<64x512xf32>, vector<1x512xf32> -> vector<1x512xf32>
    %118 = arith.addf %113, %117 : vector<1x512xf32>
    %119 = vector.extract_strided_slice %102 {offsets = [3, 0], sizes = [1, 64], strides = [1, 1]} : vector<30x64xf32> to vector<1x64xf32>
    %c3_45 = arith.constant 3 : index
    %c0_46 = arith.constant 0 : index
    %c0_47 = arith.constant 0 : index
    %120 = vector.load %arg6[%c3_45, %c0_46, %c0_47] : memref<30x64x512xf32, #tpu.memory_space<vmem>>, vector<1x64x512xf32>
    %121 = vector.shape_cast %120 : vector<1x64x512xf32> to vector<64x512xf32>
    %cst_48 = arith.constant dense<0.000000e+00> : vector<1x512xf32>
    %122 = tpu.matmul %119, %121, %cst_48 {dimension_numbers = #tpu.dot_dimension_numbers<[1], [0], [0], [1], [0, 0, 1, 1], [], []>} : vector<1x64xf32>, vector<64x512xf32>, vector<1x512xf32> -> vector<1x512xf32>
    %123 = arith.addf %118, %122 : vector<1x512xf32>
    %124 = vector.extract_strided_slice %102 {offsets = [4, 0], sizes = [1, 64], strides = [1, 1]} : vector<30x64xf32> to vector<1x64xf32>
    %c4_49 = arith.constant 4 : index
    %c0_50 = arith.constant 0 : index
    %c0_51 = arith.constant 0 : index
    %125 = vector.load %arg6[%c4_49, %c0_50, %c0_51] : memref<30x64x512xf32, #tpu.memory_space<vmem>>, vector<1x64x512xf32>
    %126 = vector.shape_cast %125 : vector<1x64x512xf32> to vector<64x512xf32>
    %cst_52 = arith.constant dense<0.000000e+00> : vector<1x512xf32>
    %127 = tpu.matmul %124, %126, %cst_52 {dimension_numbers = #tpu.dot_dimension_numbers<[1], [0], [0], [1], [0, 0, 1, 1], [], []>} : vector<1x64xf32>, vector<64x512xf32>, vector<1x512xf32> -> vector<1x512xf32>
    %128 = arith.addf %123, %127 : vector<1x512xf32>
    %129 = vector.extract_strided_slice %102 {offsets = [5, 0], sizes = [1, 64], strides = [1, 1]} : vector<30x64xf32> to vector<1x64xf32>
    %c5 = arith.constant 5 : index
    %c0_53 = arith.constant 0 : index
    %c0_54 = arith.constant 0 : index
    %130 = vector.load %arg6[%c5, %c0_53, %c0_54] : memref<30x64x512xf32, #tpu.memory_space<vmem>>, vector<1x64x512xf32>
    %131 = vector.shape_cast %130 : vector<1x64x512xf32> to vector<64x512xf32>
    %cst_55 = arith.constant dense<0.000000e+00> : vector<1x512xf32>
    %132 = tpu.matmul %129, %131, %cst_55 {dimension_numbers = #tpu.dot_dimension_numbers<[1], [0], [0], [1], [0, 0, 1, 1], [], []>} : vector<1x64xf32>, vector<64x512xf32>, vector<1x512xf32> -> vector<1x512xf32>
    %133 = arith.addf %128, %132 : vector<1x512xf32>
    %134 = vector.extract_strided_slice %102 {offsets = [6, 0], sizes = [1, 64], strides = [1, 1]} : vector<30x64xf32> to vector<1x64xf32>
    %c6 = arith.constant 6 : index
    %c0_56 = arith.constant 0 : index
    %c0_57 = arith.constant 0 : index
    %135 = vector.load %arg6[%c6, %c0_56, %c0_57] : memref<30x64x512xf32, #tpu.memory_space<vmem>>, vector<1x64x512xf32>
    %136 = vector.shape_cast %135 : vector<1x64x512xf32> to vector<64x512xf32>
    %cst_58 = arith.constant dense<0.000000e+00> : vector<1x512xf32>
    %137 = tpu.matmul %134, %136, %cst_58 {dimension_numbers = #tpu.dot_dimension_numbers<[1], [0], [0], [1], [0, 0, 1, 1], [], []>} : vector<1x64xf32>, vector<64x512xf32>, vector<1x512xf32> -> vector<1x512xf32>
    %138 = arith.addf %133, %137 : vector<1x512xf32>
    %139 = vector.extract_strided_slice %102 {offsets = [7, 0], sizes = [1, 64], strides = [1, 1]} : vector<30x64xf32> to vector<1x64xf32>
    %c7 = arith.constant 7 : index
    %c0_59 = arith.constant 0 : index
    %c0_60 = arith.constant 0 : index
    %140 = vector.load %arg6[%c7, %c0_59, %c0_60] : memref<30x64x512xf32, #tpu.memory_space<vmem>>, vector<1x64x512xf32>
    %141 = vector.shape_cast %140 : vector<1x64x512xf32> to vector<64x512xf32>
    %cst_61 = arith.constant dense<0.000000e+00> : vector<1x512xf32>
    %142 = tpu.matmul %139, %141, %cst_61 {dimension_numbers = #tpu.dot_dimension_numbers<[1], [0], [0], [1], [0, 0, 1, 1], [], []>} : vector<1x64xf32>, vector<64x512xf32>, vector<1x512xf32> -> vector<1x512xf32>
    %143 = arith.addf %138, %142 : vector<1x512xf32>
    %144 = vector.extract_strided_slice %102 {offsets = [8, 0], sizes = [1, 64], strides = [1, 1]} : vector<30x64xf32> to vector<1x64xf32>
    %c8 = arith.constant 8 : index
    %c0_62 = arith.constant 0 : index
    %c0_63 = arith.constant 0 : index
    %145 = vector.load %arg6[%c8, %c0_62, %c0_63] : memref<30x64x512xf32, #tpu.memory_space<vmem>>, vector<1x64x512xf32>
    %146 = vector.shape_cast %145 : vector<1x64x512xf32> to vector<64x512xf32>
    %cst_64 = arith.constant dense<0.000000e+00> : vector<1x512xf32>
    %147 = tpu.matmul %144, %146, %cst_64 {dimension_numbers = #tpu.dot_dimension_numbers<[1], [0], [0], [1], [0, 0, 1, 1], [], []>} : vector<1x64xf32>, vector<64x512xf32>, vector<1x512xf32> -> vector<1x512xf32>
    %148 = arith.addf %143, %147 : vector<1x512xf32>
    %149 = vector.extract_strided_slice %102 {offsets = [9, 0], sizes = [1, 64], strides = [1, 1]} : vector<30x64xf32> to vector<1x64xf32>
    %c9 = arith.constant 9 : index
    %c0_65 = arith.constant 0 : index
    %c0_66 = arith.constant 0 : index
    %150 = vector.load %arg6[%c9, %c0_65, %c0_66] : memref<30x64x512xf32, #tpu.memory_space<vmem>>, vector<1x64x512xf32>
    %151 = vector.shape_cast %150 : vector<1x64x512xf32> to vector<64x512xf32>
    %cst_67 = arith.constant dense<0.000000e+00> : vector<1x512xf32>
    %152 = tpu.matmul %149, %151, %cst_67 {dimension_numbers = #tpu.dot_dimension_numbers<[1], [0], [0], [1], [0, 0, 1, 1], [], []>} : vector<1x64xf32>, vector<64x512xf32>, vector<1x512xf32> -> vector<1x512xf32>
    %153 = arith.addf %148, %152 : vector<1x512xf32>
    %154 = vector.extract_strided_slice %102 {offsets = [10, 0], sizes = [1, 64], strides = [1, 1]} : vector<30x64xf32> to vector<1x64xf32>
    %c10 = arith.constant 10 : index
    %c0_68 = arith.constant 0 : index
    %c0_69 = arith.constant 0 : index
    %155 = vector.load %arg6[%c10, %c0_68, %c0_69] : memref<30x64x512xf32, #tpu.memory_space<vmem>>, vector<1x64x512xf32>
    %156 = vector.shape_cast %155 : vector<1x64x512xf32> to vector<64x512xf32>
    %cst_70 = arith.constant dense<0.000000e+00> : vector<1x512xf32>
    %157 = tpu.matmul %154, %156, %cst_70 {dimension_numbers = #tpu.dot_dimension_numbers<[1], [0], [0], [1], [0, 0, 1, 1], [], []>} : vector<1x64xf32>, vector<64x512xf32>, vector<1x512xf32> -> vector<1x512xf32>
    %158 = arith.addf %153, %157 : vector<1x512xf32>
    %159 = vector.extract_strided_slice %102 {offsets = [11, 0], sizes = [1, 64], strides = [1, 1]} : vector<30x64xf32> to vector<1x64xf32>
    %c11 = arith.constant 11 : index
    %c0_71 = arith.constant 0 : index
    %c0_72 = arith.constant 0 : index
    %160 = vector.load %arg6[%c11, %c0_71, %c0_72] : memref<30x64x512xf32, #tpu.memory_space<vmem>>, vector<1x64x512xf32>
    %161 = vector.shape_cast %160 : vector<1x64x512xf32> to vector<64x512xf32>
    %cst_73 = arith.constant dense<0.000000e+00> : vector<1x512xf32>
    %162 = tpu.matmul %159, %161, %cst_73 {dimension_numbers = #tpu.dot_dimension_numbers<[1], [0], [0], [1], [0, 0, 1, 1], [], []>} : vector<1x64xf32>, vector<64x512xf32>, vector<1x512xf32> -> vector<1x512xf32>
    %163 = arith.addf %158, %162 : vector<1x512xf32>
    %164 = vector.extract_strided_slice %102 {offsets = [12, 0], sizes = [1, 64], strides = [1, 1]} : vector<30x64xf32> to vector<1x64xf32>
    %c12 = arith.constant 12 : index
    %c0_74 = arith.constant 0 : index
    %c0_75 = arith.constant 0 : index
    %165 = vector.load %arg6[%c12, %c0_74, %c0_75] : memref<30x64x512xf32, #tpu.memory_space<vmem>>, vector<1x64x512xf32>
    %166 = vector.shape_cast %165 : vector<1x64x512xf32> to vector<64x512xf32>
    %cst_76 = arith.constant dense<0.000000e+00> : vector<1x512xf32>
    %167 = tpu.matmul %164, %166, %cst_76 {dimension_numbers = #tpu.dot_dimension_numbers<[1], [0], [0], [1], [0, 0, 1, 1], [], []>} : vector<1x64xf32>, vector<64x512xf32>, vector<1x512xf32> -> vector<1x512xf32>
    %168 = arith.addf %163, %167 : vector<1x512xf32>
    %169 = vector.extract_strided_slice %102 {offsets = [13, 0], sizes = [1, 64], strides = [1, 1]} : vector<30x64xf32> to vector<1x64xf32>
    %c13 = arith.constant 13 : index
    %c0_77 = arith.constant 0 : index
    %c0_78 = arith.constant 0 : index
    %170 = vector.load %arg6[%c13, %c0_77, %c0_78] : memref<30x64x512xf32, #tpu.memory_space<vmem>>, vector<1x64x512xf32>
    %171 = vector.shape_cast %170 : vector<1x64x512xf32> to vector<64x512xf32>
    %cst_79 = arith.constant dense<0.000000e+00> : vector<1x512xf32>
    %172 = tpu.matmul %169, %171, %cst_79 {dimension_numbers = #tpu.dot_dimension_numbers<[1], [0], [0], [1], [0, 0, 1, 1], [], []>} : vector<1x64xf32>, vector<64x512xf32>, vector<1x512xf32> -> vector<1x512xf32>
    %173 = arith.addf %168, %172 : vector<1x512xf32>
    %174 = vector.extract_strided_slice %102 {offsets = [14, 0], sizes = [1, 64], strides = [1, 1]} : vector<30x64xf32> to vector<1x64xf32>
    %c14 = arith.constant 14 : index
    %c0_80 = arith.constant 0 : index
    %c0_81 = arith.constant 0 : index
    %175 = vector.load %arg6[%c14, %c0_80, %c0_81] : memref<30x64x512xf32, #tpu.memory_space<vmem>>, vector<1x64x512xf32>
    %176 = vector.shape_cast %175 : vector<1x64x512xf32> to vector<64x512xf32>
    %cst_82 = arith.constant dense<0.000000e+00> : vector<1x512xf32>
    %177 = tpu.matmul %174, %176, %cst_82 {dimension_numbers = #tpu.dot_dimension_numbers<[1], [0], [0], [1], [0, 0, 1, 1], [], []>} : vector<1x64xf32>, vector<64x512xf32>, vector<1x512xf32> -> vector<1x512xf32>
    %178 = arith.addf %173, %177 : vector<1x512xf32>
    %179 = vector.extract_strided_slice %102 {offsets = [15, 0], sizes = [1, 64], strides = [1, 1]} : vector<30x64xf32> to vector<1x64xf32>
    %c15 = arith.constant 15 : index
    %c0_83 = arith.constant 0 : index
    %c0_84 = arith.constant 0 : index
    %180 = vector.load %arg6[%c15, %c0_83, %c0_84] : memref<30x64x512xf32, #tpu.memory_space<vmem>>, vector<1x64x512xf32>
    %181 = vector.shape_cast %180 : vector<1x64x512xf32> to vector<64x512xf32>
    %cst_85 = arith.constant dense<0.000000e+00> : vector<1x512xf32>
    %182 = tpu.matmul %179, %181, %cst_85 {dimension_numbers = #tpu.dot_dimension_numbers<[1], [0], [0], [1], [0, 0, 1, 1], [], []>} : vector<1x64xf32>, vector<64x512xf32>, vector<1x512xf32> -> vector<1x512xf32>
    %183 = arith.addf %178, %182 : vector<1x512xf32>
    %184 = vector.extract_strided_slice %102 {offsets = [16, 0], sizes = [1, 64], strides = [1, 1]} : vector<30x64xf32> to vector<1x64xf32>
    %c16 = arith.constant 16 : index
    %c0_86 = arith.constant 0 : index
    %c0_87 = arith.constant 0 : index
    %185 = vector.load %arg6[%c16, %c0_86, %c0_87] : memref<30x64x512xf32, #tpu.memory_space<vmem>>, vector<1x64x512xf32>
    %186 = vector.shape_cast %185 : vector<1x64x512xf32> to vector<64x512xf32>
    %cst_88 = arith.constant dense<0.000000e+00> : vector<1x512xf32>
    %187 = tpu.matmul %184, %186, %cst_88 {dimension_numbers = #tpu.dot_dimension_numbers<[1], [0], [0], [1], [0, 0, 1, 1], [], []>} : vector<1x64xf32>, vector<64x512xf32>, vector<1x512xf32> -> vector<1x512xf32>
    %188 = arith.addf %183, %187 : vector<1x512xf32>
    %189 = vector.extract_strided_slice %102 {offsets = [17, 0], sizes = [1, 64], strides = [1, 1]} : vector<30x64xf32> to vector<1x64xf32>
    %c17 = arith.constant 17 : index
    %c0_89 = arith.constant 0 : index
    %c0_90 = arith.constant 0 : index
    %190 = vector.load %arg6[%c17, %c0_89, %c0_90] : memref<30x64x512xf32, #tpu.memory_space<vmem>>, vector<1x64x512xf32>
    %191 = vector.shape_cast %190 : vector<1x64x512xf32> to vector<64x512xf32>
    %cst_91 = arith.constant dense<0.000000e+00> : vector<1x512xf32>
    %192 = tpu.matmul %189, %191, %cst_91 {dimension_numbers = #tpu.dot_dimension_numbers<[1], [0], [0], [1], [0, 0, 1, 1], [], []>} : vector<1x64xf32>, vector<64x512xf32>, vector<1x512xf32> -> vector<1x512xf32>
    %193 = arith.addf %188, %192 : vector<1x512xf32>
    %194 = vector.extract_strided_slice %102 {offsets = [18, 0], sizes = [1, 64], strides = [1, 1]} : vector<30x64xf32> to vector<1x64xf32>
    %c18 = arith.constant 18 : index
    %c0_92 = arith.constant 0 : index
    %c0_93 = arith.constant 0 : index
    %195 = vector.load %arg6[%c18, %c0_92, %c0_93] : memref<30x64x512xf32, #tpu.memory_space<vmem>>, vector<1x64x512xf32>
    %196 = vector.shape_cast %195 : vector<1x64x512xf32> to vector<64x512xf32>
    %cst_94 = arith.constant dense<0.000000e+00> : vector<1x512xf32>
    %197 = tpu.matmul %194, %196, %cst_94 {dimension_numbers = #tpu.dot_dimension_numbers<[1], [0], [0], [1], [0, 0, 1, 1], [], []>} : vector<1x64xf32>, vector<64x512xf32>, vector<1x512xf32> -> vector<1x512xf32>
    %198 = arith.addf %193, %197 : vector<1x512xf32>
    %199 = vector.extract_strided_slice %102 {offsets = [19, 0], sizes = [1, 64], strides = [1, 1]} : vector<30x64xf32> to vector<1x64xf32>
    %c19 = arith.constant 19 : index
    %c0_95 = arith.constant 0 : index
    %c0_96 = arith.constant 0 : index
    %200 = vector.load %arg6[%c19, %c0_95, %c0_96] : memref<30x64x512xf32, #tpu.memory_space<vmem>>, vector<1x64x512xf32>
    %201 = vector.shape_cast %200 : vector<1x64x512xf32> to vector<64x512xf32>
    %cst_97 = arith.constant dense<0.000000e+00> : vector<1x512xf32>
    %202 = tpu.matmul %199, %201, %cst_97 {dimension_numbers = #tpu.dot_dimension_numbers<[1], [0], [0], [1], [0, 0, 1, 1], [], []>} : vector<1x64xf32>, vector<64x512xf32>, vector<1x512xf32> -> vector<1x512xf32>
    %203 = arith.addf %198, %202 : vector<1x512xf32>
    %204 = vector.extract_strided_slice %102 {offsets = [20, 0], sizes = [1, 64], strides = [1, 1]} : vector<30x64xf32> to vector<1x64xf32>
    %c20 = arith.constant 20 : index
    %c0_98 = arith.constant 0 : index
    %c0_99 = arith.constant 0 : index
    %205 = vector.load %arg6[%c20, %c0_98, %c0_99] : memref<30x64x512xf32, #tpu.memory_space<vmem>>, vector<1x64x512xf32>
    %206 = vector.shape_cast %205 : vector<1x64x512xf32> to vector<64x512xf32>
    %cst_100 = arith.constant dense<0.000000e+00> : vector<1x512xf32>
    %207 = tpu.matmul %204, %206, %cst_100 {dimension_numbers = #tpu.dot_dimension_numbers<[1], [0], [0], [1], [0, 0, 1, 1], [], []>} : vector<1x64xf32>, vector<64x512xf32>, vector<1x512xf32> -> vector<1x512xf32>
    %208 = arith.addf %203, %207 : vector<1x512xf32>
    %209 = vector.extract_strided_slice %102 {offsets = [21, 0], sizes = [1, 64], strides = [1, 1]} : vector<30x64xf32> to vector<1x64xf32>
    %c21 = arith.constant 21 : index
    %c0_101 = arith.constant 0 : index
    %c0_102 = arith.constant 0 : index
    %210 = vector.load %arg6[%c21, %c0_101, %c0_102] : memref<30x64x512xf32, #tpu.memory_space<vmem>>, vector<1x64x512xf32>
    %211 = vector.shape_cast %210 : vector<1x64x512xf32> to vector<64x512xf32>
    %cst_103 = arith.constant dense<0.000000e+00> : vector<1x512xf32>
    %212 = tpu.matmul %209, %211, %cst_103 {dimension_numbers = #tpu.dot_dimension_numbers<[1], [0], [0], [1], [0, 0, 1, 1], [], []>} : vector<1x64xf32>, vector<64x512xf32>, vector<1x512xf32> -> vector<1x512xf32>
    %213 = arith.addf %208, %212 : vector<1x512xf32>
    %214 = vector.extract_strided_slice %102 {offsets = [22, 0], sizes = [1, 64], strides = [1, 1]} : vector<30x64xf32> to vector<1x64xf32>
    %c22 = arith.constant 22 : index
    %c0_104 = arith.constant 0 : index
    %c0_105 = arith.constant 0 : index
    %215 = vector.load %arg6[%c22, %c0_104, %c0_105] : memref<30x64x512xf32, #tpu.memory_space<vmem>>, vector<1x64x512xf32>
    %216 = vector.shape_cast %215 : vector<1x64x512xf32> to vector<64x512xf32>
    %cst_106 = arith.constant dense<0.000000e+00> : vector<1x512xf32>
    %217 = tpu.matmul %214, %216, %cst_106 {dimension_numbers = #tpu.dot_dimension_numbers<[1], [0], [0], [1], [0, 0, 1, 1], [], []>} : vector<1x64xf32>, vector<64x512xf32>, vector<1x512xf32> -> vector<1x512xf32>
    %218 = arith.addf %213, %217 : vector<1x512xf32>
    %219 = vector.extract_strided_slice %102 {offsets = [23, 0], sizes = [1, 64], strides = [1, 1]} : vector<30x64xf32> to vector<1x64xf32>
    %c23 = arith.constant 23 : index
    %c0_107 = arith.constant 0 : index
    %c0_108 = arith.constant 0 : index
    %220 = vector.load %arg6[%c23, %c0_107, %c0_108] : memref<30x64x512xf32, #tpu.memory_space<vmem>>, vector<1x64x512xf32>
    %221 = vector.shape_cast %220 : vector<1x64x512xf32> to vector<64x512xf32>
    %cst_109 = arith.constant dense<0.000000e+00> : vector<1x512xf32>
    %222 = tpu.matmul %219, %221, %cst_109 {dimension_numbers = #tpu.dot_dimension_numbers<[1], [0], [0], [1], [0, 0, 1, 1], [], []>} : vector<1x64xf32>, vector<64x512xf32>, vector<1x512xf32> -> vector<1x512xf32>
    %223 = arith.addf %218, %222 : vector<1x512xf32>
    %224 = vector.extract_strided_slice %102 {offsets = [24, 0], sizes = [1, 64], strides = [1, 1]} : vector<30x64xf32> to vector<1x64xf32>
    %c24 = arith.constant 24 : index
    %c0_110 = arith.constant 0 : index
    %c0_111 = arith.constant 0 : index
    %225 = vector.load %arg6[%c24, %c0_110, %c0_111] : memref<30x64x512xf32, #tpu.memory_space<vmem>>, vector<1x64x512xf32>
    %226 = vector.shape_cast %225 : vector<1x64x512xf32> to vector<64x512xf32>
    %cst_112 = arith.constant dense<0.000000e+00> : vector<1x512xf32>
    %227 = tpu.matmul %224, %226, %cst_112 {dimension_numbers = #tpu.dot_dimension_numbers<[1], [0], [0], [1], [0, 0, 1, 1], [], []>} : vector<1x64xf32>, vector<64x512xf32>, vector<1x512xf32> -> vector<1x512xf32>
    %228 = arith.addf %223, %227 : vector<1x512xf32>
    %229 = vector.extract_strided_slice %102 {offsets = [25, 0], sizes = [1, 64], strides = [1, 1]} : vector<30x64xf32> to vector<1x64xf32>
    %c25 = arith.constant 25 : index
    %c0_113 = arith.constant 0 : index
    %c0_114 = arith.constant 0 : index
    %230 = vector.load %arg6[%c25, %c0_113, %c0_114] : memref<30x64x512xf32, #tpu.memory_space<vmem>>, vector<1x64x512xf32>
    %231 = vector.shape_cast %230 : vector<1x64x512xf32> to vector<64x512xf32>
    %cst_115 = arith.constant dense<0.000000e+00> : vector<1x512xf32>
    %232 = tpu.matmul %229, %231, %cst_115 {dimension_numbers = #tpu.dot_dimension_numbers<[1], [0], [0], [1], [0, 0, 1, 1], [], []>} : vector<1x64xf32>, vector<64x512xf32>, vector<1x512xf32> -> vector<1x512xf32>
    %233 = arith.addf %228, %232 : vector<1x512xf32>
    %234 = vector.extract_strided_slice %102 {offsets = [26, 0], sizes = [1, 64], strides = [1, 1]} : vector<30x64xf32> to vector<1x64xf32>
    %c26 = arith.constant 26 : index
    %c0_116 = arith.constant 0 : index
    %c0_117 = arith.constant 0 : index
    %235 = vector.load %arg6[%c26, %c0_116, %c0_117] : memref<30x64x512xf32, #tpu.memory_space<vmem>>, vector<1x64x512xf32>
    %236 = vector.shape_cast %235 : vector<1x64x512xf32> to vector<64x512xf32>
    %cst_118 = arith.constant dense<0.000000e+00> : vector<1x512xf32>
    %237 = tpu.matmul %234, %236, %cst_118 {dimension_numbers = #tpu.dot_dimension_numbers<[1], [0], [0], [1], [0, 0, 1, 1], [], []>} : vector<1x64xf32>, vector<64x512xf32>, vector<1x512xf32> -> vector<1x512xf32>
    %238 = arith.addf %233, %237 : vector<1x512xf32>
    %239 = vector.extract_strided_slice %102 {offsets = [27, 0], sizes = [1, 64], strides = [1, 1]} : vector<30x64xf32> to vector<1x64xf32>
    %c27 = arith.constant 27 : index
    %c0_119 = arith.constant 0 : index
    %c0_120 = arith.constant 0 : index
    %240 = vector.load %arg6[%c27, %c0_119, %c0_120] : memref<30x64x512xf32, #tpu.memory_space<vmem>>, vector<1x64x512xf32>
    %241 = vector.shape_cast %240 : vector<1x64x512xf32> to vector<64x512xf32>
    %cst_121 = arith.constant dense<0.000000e+00> : vector<1x512xf32>
    %242 = tpu.matmul %239, %241, %cst_121 {dimension_numbers = #tpu.dot_dimension_numbers<[1], [0], [0], [1], [0, 0, 1, 1], [], []>} : vector<1x64xf32>, vector<64x512xf32>, vector<1x512xf32> -> vector<1x512xf32>
    %243 = arith.addf %238, %242 : vector<1x512xf32>
    %244 = vector.extract_strided_slice %102 {offsets = [28, 0], sizes = [1, 64], strides = [1, 1]} : vector<30x64xf32> to vector<1x64xf32>
    %c28 = arith.constant 28 : index
    %c0_122 = arith.constant 0 : index
    %c0_123 = arith.constant 0 : index
    %245 = vector.load %arg6[%c28, %c0_122, %c0_123] : memref<30x64x512xf32, #tpu.memory_space<vmem>>, vector<1x64x512xf32>
    %246 = vector.shape_cast %245 : vector<1x64x512xf32> to vector<64x512xf32>
    %cst_124 = arith.constant dense<0.000000e+00> : vector<1x512xf32>
    %247 = tpu.matmul %244, %246, %cst_124 {dimension_numbers = #tpu.dot_dimension_numbers<[1], [0], [0], [1], [0, 0, 1, 1], [], []>} : vector<1x64xf32>, vector<64x512xf32>, vector<1x512xf32> -> vector<1x512xf32>
    %248 = arith.addf %243, %247 : vector<1x512xf32>
    %249 = vector.extract_strided_slice %102 {offsets = [29, 0], sizes = [1, 64], strides = [1, 1]} : vector<30x64xf32> to vector<1x64xf32>
    %c29 = arith.constant 29 : index
    %c0_125 = arith.constant 0 : index
    %c0_126 = arith.constant 0 : index
    %250 = vector.load %arg6[%c29, %c0_125, %c0_126] : memref<30x64x512xf32, #tpu.memory_space<vmem>>, vector<1x64x512xf32>
    %251 = vector.shape_cast %250 : vector<1x64x512xf32> to vector<64x512xf32>
    %cst_127 = arith.constant dense<0.000000e+00> : vector<1x512xf32>
    %252 = tpu.matmul %249, %251, %cst_127 {dimension_numbers = #tpu.dot_dimension_numbers<[1], [0], [0], [1], [0, 0, 1, 1], [], []>} : vector<1x64xf32>, vector<64x512xf32>, vector<1x512xf32> -> vector<1x512xf32>
    %253 = arith.addf %248, %252 : vector<1x512xf32>
    %c0_128 = arith.constant 0 : index
    %c0_129 = arith.constant 0 : index
    %254 = vector.load %arg7[%c0_128, %c0_129] : memref<1x512xf32, #tpu.memory_space<vmem>>, vector<1x512xf32>
    %255 = arith.addf %253, %254 : vector<1x512xf32>
    %cst_130 = arith.constant 0.000000e+00 : f32
    %256 = vector.broadcast %cst_130 : f32 to vector<1x512xf32>
    %257 = arith.cmpf oge, %255, %256 : vector<1x512xf32>
    %258 = vector.broadcast %3 : vector<1x1xf32> to vector<1x512xf32>
    %259 = arith.mulf %258, %255 : vector<1x512xf32>
    %260 = arith.select %257, %255, %259 : vector<1x512xi1>, vector<1x512xf32>
    %c0_131 = arith.constant 0 : index
    %c0_132 = arith.constant 0 : index
    %261 = vector.load %arg8[%c0_131, %c0_132] : memref<512x256xf32, #tpu.memory_space<vmem>>, vector<512x256xf32>
    %cst_133 = arith.constant dense<0.000000e+00> : vector<1x256xf32>
    %262 = tpu.matmul %260, %261, %cst_133 {dimension_numbers = #tpu.dot_dimension_numbers<[1], [0], [0], [1], [0, 0, 1, 1], [], []>} : vector<1x512xf32>, vector<512x256xf32>, vector<1x256xf32> -> vector<1x256xf32>
    %c0_134 = arith.constant 0 : index
    %c0_135 = arith.constant 0 : index
    %263 = vector.load %arg9[%c0_134, %c0_135] : memref<1x256xf32, #tpu.memory_space<vmem>>, vector<1x256xf32>
    %264 = arith.addf %262, %263 : vector<1x256xf32>
    %c0_136 = arith.constant 0 : index
    %c0_137 = arith.constant 0 : index
    %c0_138 = arith.constant 0 : index
    %265 = vector.load %arg13[%c0_136, %c0_137, %c0_138] : memref<1x1x256xf32, #tpu.memory_space<vmem>>, vector<1x1x256xf32>
    %266 = vector.shape_cast %265 : vector<1x1x256xf32> to vector<1x256xf32>
    %267 = vector.shape_cast %264 : vector<1x256xf32> to vector<1x1x256xf32>
    tpu.vector_store %arg13[%c0_136, %c0_137, %c0_138], %267 {strides = array<i32>} : memref<1x1x256xf32, #tpu.memory_space<vmem>>, vector<1x1x256xf32>,
    %cst_139 = arith.constant 0.000000e+00 : f32
    %268 = vector.broadcast %cst_139 : f32 to vector<1x256xf32>
    %269 = arith.cmpf oge, %264, %268 : vector<1x256xf32>
    %270 = vector.broadcast %4 : vector<1x1xf32> to vector<1x256xf32>
    %271 = arith.mulf %270, %264 : vector<1x256xf32>
    %272 = arith.select %269, %264, %271 : vector<1x256xi1>, vector<1x256xf32>
    %c0_140 = arith.constant 0 : index
    %c0_141 = arith.constant 0 : index
    %273 = vector.load %arg10[%c0_140, %c0_141] : memref<256x2xf32, #tpu.memory_space<vmem>>, vector<256x2xf32>
    %cst_142 = arith.constant dense<0.000000e+00> : vector<1x2xf32>
    %274 = tpu.matmul %272, %273, %cst_142 {dimension_numbers = #tpu.dot_dimension_numbers<[1], [0], [0], [1], [0, 0, 1, 1], [], []>} : vector<1x256xf32>, vector<256x2xf32>, vector<1x2xf32> -> vector<1x2xf32>
    %c0_143 = arith.constant 0 : index
    %c0_144 = arith.constant 0 : index
    %275 = vector.load %arg11[%c0_143, %c0_144] : memref<1x2xf32, #tpu.memory_space<vmem>>, vector<1x2xf32>
    %276 = arith.addf %274, %275 : vector<1x2xf32>
    %c0_145 = arith.constant 0 : index
    %c0_146 = arith.constant 0 : index
    %c0_147 = arith.constant 0 : index
    %277 = vector.load %arg14[%c0_145, %c0_146, %c0_147] : memref<1x1x2xf32, #tpu.memory_space<vmem>>, vector<1x1x2xf32>
    %278 = vector.shape_cast %277 : vector<1x1x2xf32> to vector<1x2xf32>
    %279 = vector.shape_cast %276 : vector<1x2xf32> to vector<1x1x2xf32>
    tpu.vector_store %arg14[%c0_145, %c0_146, %c0_147], %279 {strides = array<i32>} : memref<1x1x2xf32, #tpu.memory_space<vmem>>, vector<1x1x2xf32>,
    return
  }
  func.func @transform_0(%arg0: i32) -> (i32, i32, i32) {
    %c0_i32 = arith.constant 0 : i32
    %c0_i32_0 = arith.constant 0 : i32
    %c0_i32_1 = arith.constant 0 : i32
    return %arg0, %c0_i32, %c0_i32_0 : i32, i32, i32
  }
  func.func @transform_1(%arg0: i32) -> (i32, i32) {
    %c0_i32 = arith.constant 0 : i32
    %c0_i32_0 = arith.constant 0 : i32
    %c0_i32_1 = arith.constant 0 : i32
    return %c0_i32, %c0_i32_0 : i32, i32
  }
  func.func @transform_2(%arg0: i32) -> (i32, i32) {
    %c0_i32 = arith.constant 0 : i32
    %c0_i32_0 = arith.constant 0 : i32
    %c0_i32_1 = arith.constant 0 : i32
    return %c0_i32, %c0_i32_0 : i32, i32
  }
  func.func @transform_3(%arg0: i32) -> (i32, i32, i32) {
    %c0_i32 = arith.constant 0 : i32
    %c0_i32_0 = arith.constant 0 : i32
    %c0_i32_1 = arith.constant 0 : i32
    %c0_i32_2 = arith.constant 0 : i32
    return %c0_i32, %c0_i32_0, %c0_i32_1 : i32, i32, i32
  }
  func.func @transform_4(%arg0: i32) -> (i32, i32) {
    %c0_i32 = arith.constant 0 : i32
    %c0_i32_0 = arith.constant 0 : i32
    %c0_i32_1 = arith.constant 0 : i32
    return %c0_i32, %c0_i32_0 : i32, i32
  }
  func.func @transform_5(%arg0: i32) -> (i32, i32, i32) {
    %c0_i32 = arith.constant 0 : i32
    %c0_i32_0 = arith.constant 0 : i32
    %c0_i32_1 = arith.constant 0 : i32
    %c0_i32_2 = arith.constant 0 : i32
    return %c0_i32, %c0_i32_0, %c0_i32_1 : i32, i32, i32
  }
  func.func @transform_6(%arg0: i32) -> (i32, i32) {
    %c0_i32 = arith.constant 0 : i32
    %c0_i32_0 = arith.constant 0 : i32
    %c0_i32_1 = arith.constant 0 : i32
    return %c0_i32, %c0_i32_0 : i32, i32
  }
  func.func @transform_7(%arg0: i32) -> (i32, i32) {
    %c0_i32 = arith.constant 0 : i32
    %c0_i32_0 = arith.constant 0 : i32
    %c0_i32_1 = arith.constant 0 : i32
    return %c0_i32, %c0_i32_0 : i32, i32
  }
  func.func @transform_8(%arg0: i32) -> (i32, i32) {
    %c0_i32 = arith.constant 0 : i32
    %c0_i32_0 = arith.constant 0 : i32
    %c0_i32_1 = arith.constant 0 : i32
    return %c0_i32, %c0_i32_0 : i32, i32
  }
  func.func @transform_9(%arg0: i32) -> (i32, i32) {
    %c0_i32 = arith.constant 0 : i32
    %c0_i32_0 = arith.constant 0 : i32
    %c0_i32_1 = arith.constant 0 : i32
    return %c0_i32, %c0_i32_0 : i32, i32
  }
  func.func @transform_10(%arg0: i32) -> (i32, i32) {
    %c0_i32 = arith.constant 0 : i32
    %c0_i32_0 = arith.constant 0 : i32
    %c0_i32_1 = arith.constant 0 : i32
    return %c0_i32, %c0_i32_0 : i32, i32
  }
  func.func @transform_11(%arg0: i32) -> (i32, i32) {
    %c0_i32 = arith.constant 0 : i32
    %c0_i32_0 = arith.constant 0 : i32
    %c0_i32_1 = arith.constant 0 : i32
    return %c0_i32, %c0_i32_0 : i32, i32
  }
  func.func @transform_12(%arg0: i32) -> (i32, i32, i32) {
    %c0_i32 = arith.constant 0 : i32
    %c0_i32_0 = arith.constant 0 : i32
    %c0_i32_1 = arith.constant 0 : i32
    return %arg0, %c0_i32, %c0_i32_0 : i32, i32, i32
  }
  func.func @transform_13(%arg0: i32) -> (i32, i32, i32) {
    %c0_i32 = arith.constant 0 : i32
    %c0_i32_0 = arith.constant 0 : i32
    %c0_i32_1 = arith.constant 0 : i32
    return %arg0, %c0_i32, %c0_i32_0 : i32, i32, i32
  }
}

</mosaic_0001>

<llo_original>
// kernel: embedding_net_apply.1
$region0: #{embedding_net_apply.1}
  #allocation0 [shape = 'u32[]', space=smem, size = 0x4, offset = 0x4, fixed_abs, tag = 'smem constant byte address 0x4 - core index']
  #allocation1 [shape = 'u32[72,128]{1,0:T(1,128)}', space=vmem, size = 0x9000, scoped, tag = 'internal scratch']
  %s0 = inlined_call_operand.vmem [shape: f32[2,132,1], index: 0, kind: input, shape index: {}]
  %s1 = inlined_call_operand.hbm [shape: f32[5,32], index: 1, kind: input, shape index: {}]
  %s2 = inlined_call_operand.hbm [shape: f32[1,32], index: 2, kind: input, shape index: {}]
  %s3 = inlined_call_operand.hbm [shape: f32[5,32,64], index: 3, kind: input, shape index: {}]
  %s4 = inlined_call_operand.hbm [shape: f32[1,64], index: 4, kind: input, shape index: {}]
  %s5 = inlined_call_operand.hbm [shape: f32[30,64,512], index: 5, kind: input, shape index: {}]
  %s6 = inlined_call_operand.hbm [shape: f32[1,512], index: 6, kind: input, shape index: {}]
  %s7 = inlined_call_operand.hbm [shape: f32[512,256], index: 7, kind: input, shape index: {}]
  %s8 = inlined_call_operand.hbm [shape: f32[1,256], index: 8, kind: input, shape index: {}]
  %s9 = inlined_call_operand.vmem [shape: f32[256,2], index: 9, kind: input, shape index: {}]
  %s10 = inlined_call_operand.hbm [shape: f32[1,2], index: 10, kind: input, shape index: {}]
  %s11 = inlined_call_operand.hbm [shape: f32[1,4], index: 11, kind: input, shape index: {}]
  %s12 = inlined_call_operand.vmem [shape: f32[2,1,256], index: 12, kind: output, shape index: {0}]
  %s13 = inlined_call_operand.hbm [shape: f32[2,1,2], index: 13, kind: output, shape index: {1}]
  %14 = xla_tuple %s12, %s13
  %s15 = sld [smem:[#allocation0]]
  $region129: #{embedding_net_apply.1} parent=0
    _
  %s17 = ssub.s32 1, %s15
  %s18 = scalar_select 0, %s17, %s15
  $region1: #{embedding_net_apply.1} parent=0
    #allocation2 [shape = 'u8[4096]{0}', space=vmem, size = 0x1000, scoped, tag = 'input window, operand 1, single buffered']
    #allocation3 [shape = 's32[2]{0}', space=sflag, size = 0x8, scoped, tag = 'scoped memory for embedding_net_apply.1']
    #allocation4 [shape = 's32[2]{0}', space=sflag, size = 0x8, scoped, tag = 'scoped memory for embedding_net_apply.1']
    #allocation5 [shape = 'u8[512]{0}', space=vmem, size = 0x400, scoped, tag = 'input window, operand 2, single buffered']
    #allocation6 [shape = 's32[1]{0}', space=sflag, size = 0x4, scoped, tag = 'scoped memory for embedding_net_apply.1']
    #allocation7 [shape = 'u8[81920]{0}', space=vmem, size = 0x14000, scoped, tag = 'input window, operand 3, single buffered']
    #allocation8 [shape = 'u8[512]{0}', space=vmem, size = 0x400, scoped, tag = 'input window, operand 4, single buffered']
    #allocation9 [shape = 's32[1]{0}', space=sflag, size = 0x4, scoped, tag = 'scoped memory for embedding_net_apply.1']
    #allocation10 [shape = 'u8[3932160]{0}', space=vmem, size = 0x3c0000, scoped, tag = 'input window, operand 5, single buffered']
    #allocation11 [shape = 'u8[2048]{0}', space=vmem, size = 0x800, scoped, tag = 'input window, operand 6, single buffered']
    #allocation12 [shape = 's32[1]{0}', space=sflag, size = 0x4, scoped, tag = 'scoped memory for embedding_net_apply.1']
    #allocation13 [shape = 'u8[524288]{0}', space=vmem, size = 0x80000, scoped, tag = 'input window, operand 7, single buffered']
    #allocation14 [shape = 'u8[1024]{0}', space=vmem, size = 0x400, scoped, tag = 'input window, operand 8, single buffered']
    #allocation15 [shape = 's32[1]{0}', space=sflag, size = 0x4, scoped, tag = 'scoped memory for embedding_net_apply.1']
    #allocation16 [shape = 'u8[512]{0}', space=vmem, size = 0x400, scoped, tag = 'input window, operand 10, single buffered']
    #allocation17 [shape = 'u8[512]{0}', space=vmem, size = 0x400, scoped, tag = 'input window, operand 11, single buffered']
    #allocation18 [shape = 's32[1]{0}', space=sflag, size = 0x4, scoped, tag = 'scoped memory for embedding_net_apply.1']
    #allocation19 [shape = 'u8[1024]{0}', space=vmem, size = 0x400, scoped, tag = 'output window, operand 1']
    %19 = vsyncpa [#allocation3], 0
    %20 = vsyncpa [#allocation6], 0
    %21 = vsyncpa [#allocation9], 0
    %22 = vsyncpa [#allocation12], 0
    %23 = vsyncpa [#allocation15], 0
    %24 = vsyncpa [#allocation18], 0
    %25 = vsyncpa [#allocation4], 0
    %s26 = scalar_lea.sflag [#allocation4], 1
    %27 = vsyncpa %s26, 0
    loop: start=0, step=1, limit=4
    $region2: #{embedding_net_apply.1} parent=1 // loop_pre_header
      _
    $region3: #{embedding_net_apply.1} parent=1 // loop_header
      %s29 = sphi 0, %s33
      %p30 = scmp.ge.s32.totalorder %s29, 4
      %s39 = sphi 0, %s41
      %s42 = sphi 0, %s39
      %s43 = sphi 0, %s42
      %s59 = sphi 0, %s43
      %s63 = sphi 0, %s63
      %s65 = sphi 0, %s63
      %s66 = sphi 0, %s65
      %s80 = sphi 0, %s66
      %s84 = sphi 0, %s84
      %s86 = sphi 0, %s84
      %s87 = sphi 0, %s86
      %s101 = sphi 0, %s87
      %s105 = sphi 0, %s105
      %s107 = sphi 0, %s105
      %s108 = sphi 0, %s107
      %s122 = sphi 0, %s108
      %s126 = sphi 0, %s126
      %s128 = sphi 0, %s126
      %s129 = sphi 0, %s128
      %s143 = sphi 0, %s129
      %s147 = sphi 0, %s147
      %s149 = sphi 0, %s147
      %s150 = sphi 0, %s149
      %s164 = sphi 0, %s150
      %s168 = sphi 0, %s168
      %s170 = sphi 0, %s168
      %s171 = sphi 0, %s170
      %s185 = sphi 0, %s171
      %s189 = sphi 0, %s189
      %s191 = sphi 0, %s189
      %s192 = sphi 0, %s191
      %s206 = sphi 0, %s192
      %s210 = sphi 0, %s210
      %s212 = sphi 0, %s210
      %s213 = sphi 0, %s212
      %s227 = sphi 0, %s213
      %s231 = sphi 0, %s231
      %s233 = sphi 0, %s231
      %s234 = sphi 0, %s233
      %s248 = sphi 0, %s234
      %s252 = sphi 0, %s252
      %s254 = sphi 0, %s252
      %s255 = sphi 0, %s254
      %s269 = sphi 0, %s255
      %s273 = sphi 0, %s273
      %s275 = sphi 0, %s273
      %s276 = sphi 0, %s275
      %s290 = sphi 0, %s276
      %s296 = sphi 0, %s298
      %s299 = sphi 0, %s296
      %s300 = sphi 0, %s299
      %s316 = sphi 0, %s300
      %s322 = sphi 0, %s324
      %s325 = sphi 0, %s322
      %s326 = sphi 0, %s325
      %s342 = sphi 0, %s326
    $region4: #{embedding_net_apply.1} parent=1 // loop_header_branch
      %32 = sbr.rel (%p30) target = $region8
    $region5: #{embedding_net_apply.1} parent=1 // loop_body
      %s34 = ssub.s32 %s29, 1
      %s35 = ssub.s32 %s29, 2
      %s36 = sadd.s32 %s29, 1
      %s37 = ssub.s32 %s29, %s36
      %p38 = scmp.eq.s32.totalorder %s37, 0
      %s40 = sadd.s32 %s39, 1
      %s41 = scalar_select %p38, %s39, %s40
      %p44 = pneg %p38
      %p45 = scmp.eq.s32.totalorder %s29, 1
      %p46 = por %p44, %p45
      %p47 = scmp.ne.s32.totalorder %s39, %s42
      %p48 = scmp.eq.s32.totalorder %s29, 0
      %p49 = por %p47, %p48
      %p50 = scmp.ne.s32.totalorder %s39, %s42
      %p51 = scmp.eq.s32.totalorder %s34, 1
      %p52 = por %p50, %p51
      %p53 = scmp.ne.s32.totalorder %s42, %s43
      %p54 = scmp.eq.s32.totalorder %s34, 0
      %p55 = por %p53, %p54
      %p56 = scmp.ne.s32.totalorder %s42, %s43
      %p57 = scmp.eq.s32.totalorder %s35, 1
      %p58 = por %p56, %p57
      %p60 = scmp.ne.s32.totalorder %s43, %s59
      %p61 = scmp.eq.s32.totalorder %s35, 0
      %p62 = por %p60, %p61
      %s64 = sadd.s32 %s63, 1
      %p67 = scmp.eq.s32.totalorder %s29, 1
      %p68 = scmp.ne.s32.totalorder %s63, %s65
      %p69 = scmp.eq.s32.totalorder %s29, 0
      %p70 = por %p68, %p69
      %p71 = scmp.ne.s32.totalorder %s63, %s65
      %p72 = scmp.eq.s32.totalorder %s34, 1
      %p73 = por %p71, %p72
      %p74 = scmp.ne.s32.totalorder %s65, %s66
      %p75 = scmp.eq.s32.totalorder %s34, 0
      %p76 = por %p74, %p75
      %p77 = scmp.ne.s32.totalorder %s65, %s66
      %p78 = scmp.eq.s32.totalorder %s35, 1
      %p79 = por %p77, %p78
      %p81 = scmp.ne.s32.totalorder %s66, %s80
      %p82 = scmp.eq.s32.totalorder %s35, 0
      %p83 = por %p81, %p82
      %s85 = sadd.s32 %s84, 1
      %p88 = scmp.eq.s32.totalorder %s29, 1
      %p89 = scmp.ne.s32.totalorder %s84, %s86
      %p90 = scmp.eq.s32.totalorder %s29, 0
      %p91 = por %p89, %p90
      %p92 = scmp.ne.s32.totalorder %s84, %s86
      %p93 = scmp.eq.s32.totalorder %s34, 1
      %p94 = por %p92, %p93
      %p95 = scmp.ne.s32.totalorder %s86, %s87
      %p96 = scmp.eq.s32.totalorder %s34, 0
      %p97 = por %p95, %p96
      %p98 = scmp.ne.s32.totalorder %s86, %s87
      %p99 = scmp.eq.s32.totalorder %s35, 1
      %p100 = por %p98, %p99
      %p102 = scmp.ne.s32.totalorder %s87, %s101
      %p103 = scmp.eq.s32.totalorder %s35, 0
      %p104 = por %p102, %p103
      %s106 = sadd.s32 %s105, 1
      %p109 = scmp.eq.s32.totalorder %s29, 1
      %p110 = scmp.ne.s32.totalorder %s105, %s107
      %p111 = scmp.eq.s32.totalorder %s29, 0
      %p112 = por %p110, %p111
      %p113 = scmp.ne.s32.totalorder %s105, %s107
      %p114 = scmp.eq.s32.totalorder %s34, 1
      %p115 = por %p113, %p114
      %p116 = scmp.ne.s32.totalorder %s107, %s108
      %p117 = scmp.eq.s32.totalorder %s34, 0
      %p118 = por %p116, %p117
      %p119 = scmp.ne.s32.totalorder %s107, %s108
      %p120 = scmp.eq.s32.totalorder %s35, 1
      %p121 = por %p119, %p120
      %p123 = scmp.ne.s32.totalorder %s108, %s122
      %p124 = scmp.eq.s32.totalorder %s35, 0
      %p125 = por %p123, %p124
      %s127 = sadd.s32 %s126, 1
      %p130 = scmp.eq.s32.totalorder %s29, 1
      %p131 = scmp.ne.s32.totalorder %s126, %s128
      %p132 = scmp.eq.s32.totalorder %s29, 0
      %p133 = por %p131, %p132
      %p134 = scmp.ne.s32.totalorder %s126, %s128
      %p135 = scmp.eq.s32.totalorder %s34, 1
      %p136 = por %p134, %p135
      %p137 = scmp.ne.s32.totalorder %s128, %s129
      %p138 = scmp.eq.s32.totalorder %s34, 0
      %p139 = por %p137, %p138
      %p140 = scmp.ne.s32.totalorder %s128, %s129
      %p141 = scmp.eq.s32.totalorder %s35, 1
      %p142 = por %p140, %p141
      %p144 = scmp.ne.s32.totalorder %s129, %s143
      %p145 = scmp.eq.s32.totalorder %s35, 0
      %p146 = por %p144, %p145
      %s148 = sadd.s32 %s147, 1
      %p151 = scmp.eq.s32.totalorder %s29, 1
      %p152 = scmp.ne.s32.totalorder %s147, %s149
      %p153 = scmp.eq.s32.totalorder %s29, 0
      %p154 = por %p152, %p153
      %p155 = scmp.ne.s32.totalorder %s147, %s149
      %p156 = scmp.eq.s32.totalorder %s34, 1
      %p157 = por %p155, %p156
      %p158 = scmp.ne.s32.totalorder %s149, %s150
      %p159 = scmp.eq.s32.totalorder %s34, 0
      %p160 = por %p158, %p159
      %p161 = scmp.ne.s32.totalorder %s149, %s150
      %p162 = scmp.eq.s32.totalorder %s35, 1
      %p163 = por %p161, %p162
      %p165 = scmp.ne.s32.totalorder %s150, %s164
      %p166 = scmp.eq.s32.totalorder %s35, 0
      %p167 = por %p165, %p166
      %s169 = sadd.s32 %s168, 1
      %p172 = scmp.eq.s32.totalorder %s29, 1
      %p173 = scmp.ne.s32.totalorder %s168, %s170
      %p174 = scmp.eq.s32.totalorder %s29, 0
      %p175 = por %p173, %p174
      %p176 = scmp.ne.s32.totalorder %s168, %s170
      %p177 = scmp.eq.s32.totalorder %s34, 1
      %p178 = por %p176, %p177
      %p179 = scmp.ne.s32.totalorder %s170, %s171
      %p180 = scmp.eq.s32.totalorder %s34, 0
      %p181 = por %p179, %p180
      %p182 = scmp.ne.s32.totalorder %s170, %s171
      %p183 = scmp.eq.s32.totalorder %s35, 1
      %p184 = por %p182, %p183
      %p186 = scmp.ne.s32.totalorder %s171, %s185
      %p187 = scmp.eq.s32.totalorder %s35, 0
      %p188 = por %p186, %p187
      %s190 = sadd.s32 %s189, 1
      %p193 = scmp.eq.s32.totalorder %s29, 1
      %p194 = scmp.ne.s32.totalorder %s189, %s191
      %p195 = scmp.eq.s32.totalorder %s29, 0
      %p196 = por %p194, %p195
      %p197 = scmp.ne.s32.totalorder %s189, %s191
      %p198 = scmp.eq.s32.totalorder %s34, 1
      %p199 = por %p197, %p198
      %p200 = scmp.ne.s32.totalorder %s191, %s192
      %p201 = scmp.eq.s32.totalorder %s34, 0
      %p202 = por %p200, %p201
      %p203 = scmp.ne.s32.totalorder %s191, %s192
      %p204 = scmp.eq.s32.totalorder %s35, 1
      %p205 = por %p203, %p204
      %p207 = scmp.ne.s32.totalorder %s192, %s206
      %p208 = scmp.eq.s32.totalorder %s35, 0
      %p209 = por %p207, %p208
      %s211 = sadd.s32 %s210, 1
      %p214 = scmp.eq.s32.totalorder %s29, 1
      %p215 = scmp.ne.s32.totalorder %s210, %s212
      %p216 = scmp.eq.s32.totalorder %s29, 0
      %p217 = por %p215, %p216
      %p218 = scmp.ne.s32.totalorder %s210, %s212
      %p219 = scmp.eq.s32.totalorder %s34, 1
      %p220 = por %p218, %p219
      %p221 = scmp.ne.s32.totalorder %s212, %s213
      %p222 = scmp.eq.s32.totalorder %s34, 0
      %p223 = por %p221, %p222
      %p224 = scmp.ne.s32.totalorder %s212, %s213
      %p225 = scmp.eq.s32.totalorder %s35, 1
      %p226 = por %p224, %p225
      %p228 = scmp.ne.s32.totalorder %s213, %s227
      %p229 = scmp.eq.s32.totalorder %s35, 0
      %p230 = por %p228, %p229
      %s232 = sadd.s32 %s231, 1
      %p235 = scmp.eq.s32.totalorder %s29, 1
      %p236 = scmp.ne.s32.totalorder %s231, %s233
      %p237 = scmp.eq.s32.totalorder %s29, 0
      %p238 = por %p236, %p237
      %p239 = scmp.ne.s32.totalorder %s231, %s233
      %p240 = scmp.eq.s32.totalorder %s34, 1
      %p241 = por %p239, %p240
      %p242 = scmp.ne.s32.totalorder %s233, %s234
      %p243 = scmp.eq.s32.totalorder %s34, 0
      %p244 = por %p242, %p243
      %p245 = scmp.ne.s32.totalorder %s233, %s234
      %p246 = scmp.eq.s32.totalorder %s35, 1
      %p247 = por %p245, %p246
      %p249 = scmp.ne.s32.totalorder %s234, %s248
      %p250 = scmp.eq.s32.totalorder %s35, 0
      %p251 = por %p249, %p250
      %s253 = sadd.s32 %s252, 1
      %p256 = scmp.eq.s32.totalorder %s29, 1
      %p257 = scmp.ne.s32.totalorder %s252, %s254
      %p258 = scmp.eq.s32.totalorder %s29, 0
      %p259 = por %p257, %p258
      %p260 = scmp.ne.s32.totalorder %s252, %s254
      %p261 = scmp.eq.s32.totalorder %s34, 1
      %p262 = por %p260, %p261
      %p263 = scmp.ne.s32.totalorder %s254, %s255
      %p264 = scmp.eq.s32.totalorder %s34, 0
      %p265 = por %p263, %p264
      %p266 = scmp.ne.s32.totalorder %s254, %s255
      %p267 = scmp.eq.s32.totalorder %s35, 1
      %p268 = por %p266, %p267
      %p270 = scmp.ne.s32.totalorder %s255, %s269
      %p271 = scmp.eq.s32.totalorder %s35, 0
      %p272 = por %p270, %p271
      %s274 = sadd.s32 %s273, 1
      %p277 = scmp.eq.s32.totalorder %s29, 1
      %p278 = scmp.ne.s32.totalorder %s273, %s275
      %p279 = scmp.eq.s32.totalorder %s29, 0
      %p280 = por %p278, %p279
      %p281 = scmp.ne.s32.totalorder %s273, %s275
      %p282 = scmp.eq.s32.totalorder %s34, 1
      %p283 = por %p281, %p282
      %p284 = scmp.ne.s32.totalorder %s275, %s276
      %p285 = scmp.eq.s32.totalorder %s34, 0
      %p286 = por %p284, %p285
      %p287 = scmp.ne.s32.totalorder %s275, %s276
      %p288 = scmp.eq.s32.totalorder %s35, 1
      %p289 = por %p287, %p288
      %p291 = scmp.ne.s32.totalorder %s276, %s290
      %p292 = scmp.eq.s32.totalorder %s35, 0
      %p293 = por %p291, %p292
      %s294 = ssub.s32 %s29, %s36
      %p295 = scmp.eq.s32.totalorder %s294, 0
      %s297 = sadd.s32 %s296, 1
      %s298 = scalar_select %p295, %s296, %s297
      %p301 = pneg %p295
      %p302 = scmp.eq.s32.totalorder %s29, 1
      %p303 = por %p301, %p302
      %p304 = scmp.ne.s32.totalorder %s296, %s299
      %p305 = scmp.eq.s32.totalorder %s29, 0
      %p306 = por %p304, %p305
      %p307 = scmp.ne.s32.totalorder %s296, %s299
      %p308 = scmp.eq.s32.totalorder %s34, 1
      %p309 = por %p307, %p308
      %p310 = scmp.ne.s32.totalorder %s299, %s300
      %p311 = scmp.eq.s32.totalorder %s34, 0
      %p312 = por %p310, %p311
      %p313 = scmp.ne.s32.totalorder %s299, %s300
      %p314 = scmp.eq.s32.totalorder %s35, 1
      %p315 = por %p313, %p314
      %p317 = scmp.ne.s32.totalorder %s300, %s316
      %p318 = scmp.eq.s32.totalorder %s35, 0
      %p319 = por %p317, %p318
      %s320 = ssub.s32 %s29, %s36
      %p321 = scmp.eq.s32.totalorder %s320, 0
      %s323 = sadd.s32 %s322, 1
      %s324 = scalar_select %p321, %s322, %s323
      %p327 = pneg %p321
      %p328 = scmp.eq.s32.totalorder %s29, 1
      %p329 = por %p327, %p328
      %p330 = scmp.ne.s32.totalorder %s322, %s325
      %p331 = scmp.eq.s32.totalorder %s29, 0
      %p332 = por %p330, %p331
      %p333 = scmp.ne.s32.totalorder %s322, %s325
      %p334 = scmp.eq.s32.totalorder %s34, 1
      %p335 = por %p333, %p334
      %p336 = scmp.ne.s32.totalorder %s325, %s326
      %p337 = scmp.eq.s32.totalorder %s34, 0
      %p338 = por %p336, %p337
      %p339 = scmp.ne.s32.totalorder %s325, %s326
      %p340 = scmp.eq.s32.totalorder %s35, 1
      %p341 = por %p339, %p340
      %p343 = scmp.ne.s32.totalorder %s326, %s342
      %p344 = scmp.eq.s32.totalorder %s35, 0
      %p345 = por %p343, %p344
      %p346 = scmp.le.s32.totalorder 1, %s29
      %p347 = scmp.lt.s32.totalorder %s29, 3
      %p348 = pnand %p346, %p347
      %p349 = pneg %p348
      // Predicated region
      $region9: #{embedding_net_apply.1} parent=5 // pred_check
        _
      $region10: #{embedding_net_apply.1} parent=5 // pred_check_branch
        %351 = sbr.rel (%p348) target = $region12
      $region11: #{embedding_net_apply.1} parent=5 // pred_region
        %s352 = ssub.s32 %s29, 1
        // Predicated region
        $region13: #{embedding_net_apply.1} parent=11 // pred_check
          %p353 = pneg %p76
        $region14: #{embedding_net_apply.1} parent=11 // pred_check_branch
          %355 = sbr.rel (%p353) target = $region16
        $region15: #{embedding_net_apply.1} parent=11 // pred_region
          %357 = vsyncadd [#allocation3], 0
          %s359 = sshll.u32 %s1, 4
          %s360 = int_to_ptr.hbm [resolvable:$true] %s359
          %s361 = sshll.u32 [#allocation2], 4
          %s362 = int_to_ptr.vmem [resolvable:$true] %s361
          %364 = dma.hbm_to_vmem [thread:$0]  %s360, 128, %s362, [#allocation3]
        $region16: #{embedding_net_apply.1} parent=11 // pred_fallthru
          _
        // Predicated region
        $region17: #{embedding_net_apply.1} parent=11 // pred_check
          %p365 = pneg %p97
        $region18: #{embedding_net_apply.1} parent=11 // pred_check_branch
          %367 = sbr.rel (%p365) target = $region20
        $region19: #{embedding_net_apply.1} parent=11 // pred_region
          %369 = vsyncadd [#allocation6], 0
          %s371 = sshll.u32 %s2, 4
          %s372 = int_to_ptr.hbm [resolvable:$true] %s371
          %s373 = sshll.u32 [#allocation5], 4
          %s374 = int_to_ptr.vmem [resolvable:$true] %s373
          %376 = dma.hbm_to_vmem [thread:$0]  %s372, 16, %s374, [#allocation6]
        $region20: #{embedding_net_apply.1} parent=11 // pred_fallthru
          _
        // Predicated region
        $region21: #{embedding_net_apply.1} parent=11 // pred_check
          %p377 = pneg %p118
        $region22: #{embedding_net_apply.1} parent=11 // pred_check_branch
          %379 = sbr.rel (%p377) target = $region24
        $region23: #{embedding_net_apply.1} parent=11 // pred_region
          %381 = vsyncadd [#allocation6], 0
          %s382 = sshll.u32 %s3, 4
          %s383 = int_to_ptr.hbm [resolvable:$true] %s382
          %s384 = sshll.u32 [#allocation7], 4
          %s385 = int_to_ptr.vmem [resolvable:$true] %s384
          %390 = dma.hbm_to_vmem [thread:$0]  %s383, 2560, %s385, [#allocation6], 128, 128, 8
        $region24: #{embedding_net_apply.1} parent=11 // pred_fallthru
          _
        // Predicated region
        $region25: #{embedding_net_apply.1} parent=11 // pred_check
          %p391 = pneg %p139
        $region26: #{embedding_net_apply.1} parent=11 // pred_check_branch
          %393 = sbr.rel (%p391) target = $region28
        $region27: #{embedding_net_apply.1} parent=11 // pred_region
          %395 = vsyncadd [#allocation9], 0
          %s397 = sshll.u32 %s4, 4
          %s398 = int_to_ptr.hbm [resolvable:$true] %s397
          %s399 = sshll.u32 [#allocation8], 4
          %s400 = int_to_ptr.vmem [resolvable:$true] %s399
          %402 = dma.hbm_to_vmem [thread:$0]  %s398, 16, %s400, [#allocation9]
        $region28: #{embedding_net_apply.1} parent=11 // pred_fallthru
          _
        // Predicated region
        $region29: #{embedding_net_apply.1} parent=11 // pred_check
          %p403 = pneg %p160
        $region30: #{embedding_net_apply.1} parent=11 // pred_check_branch
          %405 = sbr.rel (%p403) target = $region32
        $region31: #{embedding_net_apply.1} parent=11 // pred_region
          %407 = vsyncadd [#allocation9], 0
          %s408 = sshll.u32 %s5, 4
          %s409 = int_to_ptr.hbm [resolvable:$true] %s408
          %s410 = sshll.u32 [#allocation10], 4
          %s411 = int_to_ptr.vmem [resolvable:$true] %s410
          %416 = dma.hbm_to_vmem [thread:$0]  %s409, 122880, %s411, [#allocation9], 512, 512, 32
        $region32: #{embedding_net_apply.1} parent=11 // pred_fallthru
          _
        // Predicated region
        $region33: #{embedding_net_apply.1} parent=11 // pred_check
          %p417 = pneg %p181
        $region34: #{embedding_net_apply.1} parent=11 // pred_check_branch
          %419 = sbr.rel (%p417) target = $region36
        $region35: #{embedding_net_apply.1} parent=11 // pred_region
          %421 = vsyncadd [#allocation12], 0
          %s423 = sshll.u32 %s6, 4
          %s424 = int_to_ptr.hbm [resolvable:$true] %s423
          %s425 = sshll.u32 [#allocation11], 4
          %s426 = int_to_ptr.vmem [resolvable:$true] %s425
          %428 = dma.hbm_to_vmem [thread:$0]  %s424, 64, %s426, [#allocation12]
        $region36: #{embedding_net_apply.1} parent=11 // pred_fallthru
          _
        // Predicated region
        $region37: #{embedding_net_apply.1} parent=11 // pred_check
          %p429 = pneg %p202
        $region38: #{embedding_net_apply.1} parent=11 // pred_check_branch
          %431 = sbr.rel (%p429) target = $region40
        $region39: #{embedding_net_apply.1} parent=11 // pred_region
          %433 = vsyncadd [#allocation12], 0
          %s434 = sshll.u32 %s7, 4
          %s435 = int_to_ptr.hbm [resolvable:$true] %s434
          %s436 = sshll.u32 [#allocation13], 4
          %s437 = int_to_ptr.vmem [resolvable:$true] %s436
          %442 = dma.hbm_to_vmem [thread:$0]  %s435, 16384, %s437, [#allocation12], 256, 256, 16
        $region40: #{embedding_net_apply.1} parent=11 // pred_fallthru
          _
        // Predicated region
        $region41: #{embedding_net_apply.1} parent=11 // pred_check
          %p443 = pneg %p223
        $region42: #{embedding_net_apply.1} parent=11 // pred_check_branch
          %445 = sbr.rel (%p443) target = $region44
        $region43: #{embedding_net_apply.1} parent=11 // pred_region
          %447 = vsyncadd [#allocation15], 0
          %s449 = sshll.u32 %s8, 4
          %s450 = int_to_ptr.hbm [resolvable:$true] %s449
          %s451 = sshll.u32 [#allocation14], 4
          %s452 = int_to_ptr.vmem [resolvable:$true] %s451
          %454 = dma.hbm_to_vmem [thread:$0]  %s450, 32, %s452, [#allocation15]
        $region44: #{embedding_net_apply.1} parent=11 // pred_fallthru
          _
        // Predicated region
        $region45: #{embedding_net_apply.1} parent=11 // pred_check
          %p455 = pneg %p244
        $region46: #{embedding_net_apply.1} parent=11 // pred_check_branch
          %457 = sbr.rel (%p455) target = $region48
        $region47: #{embedding_net_apply.1} parent=11 // pred_region
          _
        $region48: #{embedding_net_apply.1} parent=11 // pred_fallthru
          _
        // Predicated region
        $region49: #{embedding_net_apply.1} parent=11 // pred_check
          %p458 = pneg %p265
        $region50: #{embedding_net_apply.1} parent=11 // pred_check_branch
          %460 = sbr.rel (%p458) target = $region52
        $region51: #{embedding_net_apply.1} parent=11 // pred_region
          %462 = vsyncadd [#allocation15], 0
          %s464 = sshll.u32 %s10, 4
          %s465 = int_to_ptr.hbm [resolvable:$true] %s464
          %s466 = sshll.u32 [#allocation16], 4
          %s467 = int_to_ptr.vmem [resolvable:$true] %s466
          %469 = dma.hbm_to_vmem [thread:$0]  %s465, 16, %s467, [#allocation15]
        $region52: #{embedding_net_apply.1} parent=11 // pred_fallthru
          _
        // Predicated region
        $region53: #{embedding_net_apply.1} parent=11 // pred_check
          %p470 = pneg %p286
        $region54: #{embedding_net_apply.1} parent=11 // pred_check_branch
          %472 = sbr.rel (%p470) target = $region56
        $region55: #{embedding_net_apply.1} parent=11 // pred_region
          %474 = vsyncadd [#allocation18], 0
          %s476 = sshll.u32 %s11, 4
          %s477 = int_to_ptr.hbm [resolvable:$true] %s476
          %s478 = sshll.u32 [#allocation17], 4
          %s479 = int_to_ptr.vmem [resolvable:$true] %s478
          %481 = dma.hbm_to_vmem [thread:$0]  %s477, 16, %s479, [#allocation18]
        $region56: #{embedding_net_apply.1} parent=11 // pred_fallthru
          _
      $region12: #{embedding_net_apply.1} parent=5 // pred_fallthru
        _
      %p482 = scmp.lt.s32.totalorder %s29, 2
      // Predicated region
      $region57: #{embedding_net_apply.1} parent=5 // pred_check
        %p483 = pneg %p482
      $region58: #{embedding_net_apply.1} parent=5 // pred_check_branch
        %485 = sbr.rel (%p483) target = $region60
      $region59: #{embedding_net_apply.1} parent=5 // pred_region
        // Predicated region
        $region61: #{embedding_net_apply.1} parent=59 // pred_check
          %p486 = pneg %p49
        $region62: #{embedding_net_apply.1} parent=59 // pred_check_branch
          %488 = sbr.rel (%p486) target = $region64
        $region63: #{embedding_net_apply.1} parent=59 // pred_region
          %p489 = scmp.lt.s32.totalorder %s29, 1
          %s490 = scalar_select %p489, %s29, 1
          %s491 = smul.addr %s490, 17
          %s492 = smul.addr %s491, 8
          %s493 = scalar_lea.vmem %s0, %s492
        $region64: #{embedding_net_apply.1} parent=59 // pred_fallthru
          _
      $region60: #{embedding_net_apply.1} parent=5 // pred_fallthru
        _
      %p494 = scmp.le.s32.totalorder 1, %s29
      %p495 = scmp.lt.s32.totalorder %s29, 3
      %p496 = pnand %p494, %p495
      %p497 = pneg %p496
      // Predicated region
      $region65: #{embedding_net_apply.1} parent=5 // pred_check
        _
      $region66: #{embedding_net_apply.1} parent=5 // pred_check_branch
        %499 = sbr.rel (%p496) target = $region68
      $region67: #{embedding_net_apply.1} parent=5 // pred_region
        %s500 = ssub.s32 %s29, 1
        // Predicated region
        $region69: #{embedding_net_apply.1} parent=67 // pred_check
          %p501 = pneg %p76
        $region70: #{embedding_net_apply.1} parent=67 // pred_check_branch
          %503 = sbr.rel (%p501) target = $region72
        $region71: #{embedding_net_apply.1} parent=67 // pred_region
          %505 = dma.done [#allocation3], 128
        $region72: #{embedding_net_apply.1} parent=67 // pred_fallthru
          _
        // Predicated region
        $region73: #{embedding_net_apply.1} parent=67 // pred_check
          %p506 = pneg %p97
        $region74: #{embedding_net_apply.1} parent=67 // pred_check_branch
          %508 = sbr.rel (%p506) target = $region76
        $region75: #{embedding_net_apply.1} parent=67 // pred_region
          %510 = dma.done [#allocation6], 16
        $region76: #{embedding_net_apply.1} parent=67 // pred_fallthru
          _
        // Predicated region
        $region77: #{embedding_net_apply.1} parent=67 // pred_check
          %p511 = pneg %p118
        $region78: #{embedding_net_apply.1} parent=67 // pred_check_branch
          %513 = sbr.rel (%p511) target = $region80
        $region79: #{embedding_net_apply.1} parent=67 // pred_region
          %515 = dma.done [#allocation6], 2560
        $region80: #{embedding_net_apply.1} parent=67 // pred_fallthru
          _
        // Predicated region
        $region81: #{embedding_net_apply.1} parent=67 // pred_check
          %p516 = pneg %p139
        $region82: #{embedding_net_apply.1} parent=67 // pred_check_branch
          %518 = sbr.rel (%p516) target = $region84
        $region83: #{embedding_net_apply.1} parent=67 // pred_region
          %520 = dma.done [#allocation9], 16
        $region84: #{embedding_net_apply.1} parent=67 // pred_fallthru
          _
        // Predicated region
        $region85: #{embedding_net_apply.1} parent=67 // pred_check
          %p521 = pneg %p160
        $region86: #{embedding_net_apply.1} parent=67 // pred_check_branch
          %523 = sbr.rel (%p521) target = $region88
        $region87: #{embedding_net_apply.1} parent=67 // pred_region
          %525 = dma.done [#allocation9], 122880
        $region88: #{embedding_net_apply.1} parent=67 // pred_fallthru
          _
        // Predicated region
        $region89: #{embedding_net_apply.1} parent=67 // pred_check
          %p526 = pneg %p181
        $region90: #{embedding_net_apply.1} parent=67 // pred_check_branch
          %528 = sbr.rel (%p526) target = $region92
        $region91: #{embedding_net_apply.1} parent=67 // pred_region
          %530 = dma.done [#allocation12], 64
        $region92: #{embedding_net_apply.1} parent=67 // pred_fallthru
          _
        // Predicated region
        $region93: #{embedding_net_apply.1} parent=67 // pred_check
          %p531 = pneg %p202
        $region94: #{embedding_net_apply.1} parent=67 // pred_check_branch
          %533 = sbr.rel (%p531) target = $region96
        $region95: #{embedding_net_apply.1} parent=67 // pred_region
          %535 = dma.done [#allocation12], 16384
        $region96: #{embedding_net_apply.1} parent=67 // pred_fallthru
          _
        // Predicated region
        $region97: #{embedding_net_apply.1} parent=67 // pred_check
          %p536 = pneg %p223
        $region98: #{embedding_net_apply.1} parent=67 // pred_check_branch
          %538 = sbr.rel (%p536) target = $region100
        $region99: #{embedding_net_apply.1} parent=67 // pred_region
          %540 = dma.done [#allocation15], 32
        $region100: #{embedding_net_apply.1} parent=67 // pred_fallthru
          _
        // Predicated region
        $region101: #{embedding_net_apply.1} parent=67 // pred_check
          %p541 = pneg %p265
        $region102: #{embedding_net_apply.1} parent=67 // pred_check_branch
          %543 = sbr.rel (%p541) target = $region104
        $region103: #{embedding_net_apply.1} parent=67 // pred_region
          %545 = dma.done [#allocation15], 16
        $region104: #{embedding_net_apply.1} parent=67 // pred_fallthru
          _
        // Predicated region
        $region105: #{embedding_net_apply.1} parent=67 // pred_check
          %p546 = pneg %p286
        $region106: #{embedding_net_apply.1} parent=67 // pred_check_branch
          %548 = sbr.rel (%p546) target = $region108
        $region107: #{embedding_net_apply.1} parent=67 // pred_region
          %550 = dma.done [#allocation18], 16
        $region108: #{embedding_net_apply.1} parent=67 // pred_fallthru
          _
        %p551 = scmp.lt.s32.totalorder %s34, 1
        %s552 = scalar_select %p551, %s34, 1
        %s553 = smul.addr %s552, 17
        %s554 = smul.addr %s553, 8
        %s555 = scalar_lea.vmem %s0, %s554
        %p556 = pneg %p55
        %p557 = pneg %p52
        %p558 = pneg %p76
        %p559 = pneg %p73
        %p560 = pneg %p97
        %p561 = pneg %p94
        %p562 = pneg %p118
        %p563 = pneg %p115
        %p564 = pneg %p139
        %p565 = pneg %p136
        %p566 = pneg %p160
        %p567 = pneg %p157
        %p568 = pneg %p181
        %p569 = pneg %p178
        %p570 = pneg %p202
        %p571 = pneg %p199
        %p572 = pneg %p223
        %p573 = pneg %p220
        %p574 = pneg %p244
        %p575 = pneg %p241
        %p576 = pneg %p265
        %p577 = pneg %p262
        %p578 = pneg %p286
        %p579 = pneg %p283
        %p580 = pneg %p312
        %p581 = pneg %p309
        %p582 = scmp.lt.s32.totalorder %s34, 1
        %s583 = scalar_select %p582, %s34, 1
        %s584 = smul.addr %s583, 2
        %s585 = scalar_lea.vmem %s12, %s584
        %p586 = pneg %p338
        %p587 = pneg %p335
        %s588 = sand.u32 %s325, 1
        %s589 = scalar_lea.sflag [#allocation4], %s588
        %s590 = sand.u32 %s325, 1
        %s591 = scalar_lea.vmem [#allocation19], %s590
        %p592 = scmp.lt.s32.totalorder %s34, 1
        %s593 = scalar_select %p592, %s34, 1
        %s594 = smul.addr %s593, 17
        %s595 = smul.addr %s594, 8
        %s596 = scalar_lea.vmem %s0, %s595
        %p597 = scmp.lt.s32.totalorder %s34, 1
        %s598 = scalar_select %p597, %s34, 1
        %s599 = smul.addr %s598, 2
        %s600 = scalar_lea.vmem %s12, %s599
        %v601 = vld [vmem:[#allocation17] sm:$0x1]
        %v602 = vld [vmem:[%s596] sm:$0xff]
        %v603 = vld [vmem:[%s596 + $0x8] sm:$0xff]
        %v604 = vld [vmem:[%s596 + $0x10] sm:$0xff]
        %v605 = vld [vmem:[%s596 + $0x18] sm:$0xff]
        %v606 = vld [vmem:[%s596 + $0x20] sm:$0xff]
        %v607 = vld [vmem:[%s596 + $0x28] sm:$0xff]
        %v608 = vld [vmem:[%s596 + $0x30] sm:$0xff]
        %v609 = vld [vmem:[%s596 + $0x38] sm:$0xff]
        %v610 = vld [vmem:[%s596 + $0x40] sm:$0xff]
        %v611 = vld [vmem:[%s596 + $0x48] sm:$0xff]
        %v612 = vld [vmem:[%s596 + $0x50] sm:$0xff]
        %v613 = vld [vmem:[%s596 + $0x58] sm:$0xff]
        %v614 = vld [vmem:[%s596 + $0x60] sm:$0xff]
        %v615 = vld [vmem:[%s596 + $0x68] sm:$0xff]
        %v616 = vld [vmem:[%s596 + $0x70] sm:$0xff]
        %v617 = vld [vmem:[%s596 + $0x78] sm:$0xff]
        %v618 = vld [vmem:[%s596 + $0x80] sm:$0xf]
        %v619 = vld [vmem:[#allocation2] sm:$0x1f]
        %621 = vset.pattern.permute.xlu0 0
        %622 = vperm.xlu0 %621, %v602
        %v623 = vpop.permute.xlu0 %622
        %626 = vset.pattern.permute.xlu0 0
        %627 = vperm.xlu0 %626, %v603
        %v628 = vpop.permute.xlu0 %627
        %631 = vset.pattern.permute.xlu0 0
        %632 = vperm.xlu0 %631, %v604
        %v633 = vpop.permute.xlu0 %632
        %636 = vset.pattern.permute.xlu0 0
        %637 = vperm.xlu0 %636, %v605
        %v638 = vpop.permute.xlu0 %637
        %641 = vset.pattern.permute.xlu0 0
        %642 = vperm.xlu0 %641, %v606
        %v643 = vpop.permute.xlu0 %642
        %646 = vset.pattern.permute.xlu0 0
        %647 = vperm.xlu0 %646, %v607
        %v648 = vpop.permute.xlu0 %647
        %651 = vset.pattern.permute.xlu0 0
        %652 = vperm.xlu0 %651, %v608
        %v653 = vpop.permute.xlu0 %652
        %656 = vset.pattern.permute.xlu0 0
        %657 = vperm.xlu0 %656, %v609
        %v658 = vpop.permute.xlu0 %657
        %661 = vset.pattern.permute.xlu0 0
        %662 = vperm.xlu0 %661, %v610
        %v663 = vpop.permute.xlu0 %662
        %666 = vset.pattern.permute.xlu0 0
        %667 = vperm.xlu0 %666, %v611
        %v668 = vpop.permute.xlu0 %667
        %671 = vset.pattern.permute.xlu0 0
        %672 = vperm.xlu0 %671, %v612
        %v673 = vpop.permute.xlu0 %672
        %676 = vset.pattern.permute.xlu0 0
        %677 = vperm.xlu0 %676, %v613
        %v678 = vpop.permute.xlu0 %677
        %681 = vset.pattern.permute.xlu0 0
        %682 = vperm.xlu0 %681, %v614
        %v683 = vpop.permute.xlu0 %682
        %686 = vset.pattern.permute.xlu0 0
        %687 = vperm.xlu0 %686, %v615
        %v688 = vpop.permute.xlu0 %687
        %691 = vset.pattern.permute.xlu0 0
        %692 = vperm.xlu0 %691, %v616
        %v693 = vpop.permute.xlu0 %692
        %696 = vset.pattern.permute.xlu0 0
        %697 = vperm.xlu0 %696, %v617
        %v698 = vpop.permute.xlu0 %697
        %v700 = vperm.slane %v619, 0
        %v701 = vmul.f32 %v623, %v700
        %v702 = vmul.f32 %v628, %v700
        %v703 = vmul.f32 %v633, %v700
        %v704 = vmul.f32 %v638, %v700
        %v705 = vmul.f32 %v643, %v700
        %v706 = vmul.f32 %v648, %v700
        %v707 = vmul.f32 %v653, %v700
        %v708 = vmul.f32 %v658, %v700
        %v709 = vmul.f32 %v663, %v700
        %v710 = vmul.f32 %v668, %v700
        %v711 = vmul.f32 %v673, %v700
        %v712 = vmul.f32 %v678, %v700
        %v713 = vmul.f32 %v683, %v700
        %v714 = vmul.f32 %v688, %v700
        %v715 = vmul.f32 %v693, %v700
        %v716 = vmul.f32 %v698, %v700
        %v717 = vadd.f32 %v701, 0.0
        %v718 = vadd.f32 %v702, 0.0
        %v719 = vadd.f32 %v703, 0.0
        %v720 = vadd.f32 %v704, 0.0
        %v721 = vadd.f32 %v705, 0.0
        %v722 = vadd.f32 %v706, 0.0
        %v723 = vadd.f32 %v707, 0.0
        %v724 = vadd.f32 %v708, 0.0
        %v725 = vadd.f32 %v709, 0.0
        %v726 = vadd.f32 %v710, 0.0
        %v727 = vadd.f32 %v711, 0.0
        %v728 = vadd.f32 %v712, 0.0
        %v729 = vadd.f32 %v713, 0.0
        %v730 = vadd.f32 %v714, 0.0
        %v731 = vadd.f32 %v715, 0.0
        %v732 = vadd.f32 %v716, 0.0
        %734 = vset.pattern.permute.xlu0 0
        %735 = vperm.xlu0 %734, %v618
        %v736 = vpop.permute.xlu0 %735
        %v738 = vperm.slane %v619, 1
        %v739 = vmul.f32 %v623, %v738
        %v740 = vmul.f32 %v628, %v738
        %v741 = vmul.f32 %v633, %v738
        %v742 = vmul.f32 %v638, %v738
        %v743 = vmul.f32 %v643, %v738
        %v744 = vmul.f32 %v648, %v738
        %v745 = vmul.f32 %v653, %v738
        %v746 = vmul.f32 %v658, %v738
        %v747 = vmul.f32 %v663, %v738
        %v748 = vmul.f32 %v668, %v738
        %v749 = vmul.f32 %v673, %v738
        %v750 = vmul.f32 %v678, %v738
        %v751 = vmul.f32 %v683, %v738
        %v752 = vmul.f32 %v688, %v738
        %v753 = vmul.f32 %v693, %v738
        %v754 = vmul.f32 %v698, %v738
        %v755 = vmul.f32 %v736, %v738
        %vm773 = vcmask 1046528
        %v774 = vrot.slane %v739, 1
        %v775 = vrot.slane %v740, 1
        %v776 = vsel %vm773, %v774, %v775
        %v777 = vrot.slane %v741, 1
        %v778 = vsel %vm773, %v775, %v777
        %v779 = vrot.slane %v742, 1
        %v780 = vsel %vm773, %v777, %v779
        %v781 = vrot.slane %v743, 1
        %v782 = vsel %vm773, %v779, %v781
        %v783 = vrot.slane %v744, 1
        %v784 = vsel %vm773, %v781, %v783
        %v785 = vrot.slane %v745, 1
        %v786 = vsel %vm773, %v783, %v785
        %v787 = vrot.slane %v746, 1
        %v788 = vsel %vm773, %v785, %v787
        %v789 = vrot.slane %v747, 1
        %v790 = vsel %vm773, %v787, %v789
        %v791 = vrot.slane %v748, 1
        %v792 = vsel %vm773, %v789, %v791
        %v793 = vrot.slane %v749, 1
        %v794 = vsel %vm773, %v791, %v793
        %v795 = vrot.slane %v750, 1
        %v796 = vsel %vm773, %v793, %v795
        %v797 = vrot.slane %v751, 1
        %v798 = vsel %vm773, %v795, %v797
        %v799 = vrot.slane %v752, 1
        %v800 = vsel %vm773, %v797, %v799
        %v801 = vrot.slane %v753, 1
        %v802 = vsel %vm773, %v799, %v801
        %v803 = vrot.slane %v754, 1
        %v804 = vsel %vm773, %v801, %v803
        %v805 = vrot.slane %v755, 1
        %v806 = vsel %vm773, %v803, %v805
        %v823 = vadd.f32 %v717, %v776
        %v824 = vadd.f32 %v718, %v778
        %v825 = vadd.f32 %v719, %v780
        %v826 = vadd.f32 %v720, %v782
        %v827 = vadd.f32 %v721, %v784
        %v828 = vadd.f32 %v722, %v786
        %v829 = vadd.f32 %v723, %v788
        %v830 = vadd.f32 %v724, %v790
        %v831 = vadd.f32 %v725, %v792
        %v832 = vadd.f32 %v726, %v794
        %v833 = vadd.f32 %v727, %v796
        %v834 = vadd.f32 %v728, %v798
        %v835 = vadd.f32 %v729, %v800
        %v836 = vadd.f32 %v730, %v802
        %v837 = vadd.f32 %v731, %v804
        %v838 = vadd.f32 %v732, %v806
        %v839 = vperm.slane %v619, 2
        %v840 = vmul.f32 %v623, %v839
        %v841 = vmul.f32 %v628, %v839
        %v842 = vmul.f32 %v633, %v839
        %v843 = vmul.f32 %v638, %v839
        %v844 = vmul.f32 %v643, %v839
        %v845 = vmul.f32 %v648, %v839
        %v846 = vmul.f32 %v653, %v839
        %v847 = vmul.f32 %v658, %v839
        %v848 = vmul.f32 %v663, %v839
        %v849 = vmul.f32 %v668, %v839
        %v850 = vmul.f32 %v673, %v839
        %v851 = vmul.f32 %v678, %v839
        %v852 = vmul.f32 %v683, %v839
        %v853 = vmul.f32 %v688, %v839
        %v854 = vmul.f32 %v693, %v839
        %v855 = vmul.f32 %v698, %v839
        %v856 = vmul.f32 %v736, %v839
        %vm874 = vcmask 1045504
        %v875 = vrot.slane %v840, 2
        %v876 = vrot.slane %v841, 2
        %v877 = vsel %vm874, %v875, %v876
        %v878 = vrot.slane %v842, 2
        %v879 = vsel %vm874, %v876, %v878
        %v880 = vrot.slane %v843, 2
        %v881 = vsel %vm874, %v878, %v880
        %v882 = vrot.slane %v844, 2
        %v883 = vsel %vm874, %v880, %v882
        %v884 = vrot.slane %v845, 2
        %v885 = vsel %vm874, %v882, %v884
        %v886 = vrot.slane %v846, 2
        %v887 = vsel %vm874, %v884, %v886
        %v888 = vrot.slane %v847, 2
        %v889 = vsel %vm874, %v886, %v888
        %v890 = vrot.slane %v848, 2
        %v891 = vsel %vm874, %v888, %v890
        %v892 = vrot.slane %v849, 2
        %v893 = vsel %vm874, %v890, %v892
        %v894 = vrot.slane %v850, 2
        %v895 = vsel %vm874, %v892, %v894
        %v896 = vrot.slane %v851, 2
        %v897 = vsel %vm874, %v894, %v896
        %v898 = vrot.slane %v852, 2
        %v899 = vsel %vm874, %v896, %v898
        %v900 = vrot.slane %v853, 2
        %v901 = vsel %vm874, %v898, %v900
        %v902 = vrot.slane %v854, 2
        %v903 = vsel %vm874, %v900, %v902
        %v904 = vrot.slane %v855, 2
        %v905 = vsel %vm874, %v902, %v904
        %v906 = vrot.slane %v856, 2
        %v907 = vsel %vm874, %v904, %v906
        %v924 = vadd.f32 %v823, %v877
        %v925 = vadd.f32 %v824, %v879
        %v926 = vadd.f32 %v825, %v881
        %v927 = vadd.f32 %v826, %v883
        %v928 = vadd.f32 %v827, %v885
        %v929 = vadd.f32 %v828, %v887
        %v930 = vadd.f32 %v829, %v889
        %v931 = vadd.f32 %v830, %v891
        %v932 = vadd.f32 %v831, %v893
        %v933 = vadd.f32 %v832, %v895
        %v934 = vadd.f32 %v833, %v897
        %v935 = vadd.f32 %v834, %v899
        %v936 = vadd.f32 %v835, %v901
        %v937 = vadd.f32 %v836, %v903
        %v938 = vadd.f32 %v837, %v905
        %v939 = vadd.f32 %v838, %v907
        %v940 = vperm.slane %v619, 3
        %v941 = vmul.f32 %v623, %v940
        %v942 = vmul.f32 %v628, %v940
        %v943 = vmul.f32 %v633, %v940
        %v944 = vmul.f32 %v638, %v940
        %v945 = vmul.f32 %v643, %v940
        %v946 = vmul.f32 %v648, %v940
        %v947 = vmul.f32 %v653, %v940
        %v948 = vmul.f32 %v658, %v940
        %v949 = vmul.f32 %v663, %v940
        %v950 = vmul.f32 %v668, %v940
        %v951 = vmul.f32 %v673, %v940
        %v952 = vmul.f32 %v678, %v940
        %v953 = vmul.f32 %v683, %v940
        %v954 = vmul.f32 %v688, %v940
        %v955 = vmul.f32 %v693, %v940
        %v956 = vmul.f32 %v698, %v940
        %v957 = vmul.f32 %v736, %v940
        %vm975 = vcmask 1044480
        %v976 = vrot.slane %v941, 3
        %v977 = vrot.slane %v942, 3
        %v978 = vsel %vm975, %v976, %v977
        %v979 = vrot.slane %v943, 3
        %v980 = vsel %vm975, %v977, %v979
        %v981 = vrot.slane %v944, 3
        %v982 = vsel %vm975, %v979, %v981
        %v983 = vrot.slane %v945, 3
        %v984 = vsel %vm975, %v981, %v983
        %v985 = vrot.slane %v946, 3
        %v986 = vsel %vm975, %v983, %v985
        %v987 = vrot.slane %v947, 3
        %v988 = vsel %vm975, %v985, %v987
        %v989 = vrot.slane %v948, 3
        %v990 = vsel %vm975, %v987, %v989
        %v991 = vrot.slane %v949, 3
        %v992 = vsel %vm975, %v989, %v991
        %v993 = vrot.slane %v950, 3
        %v994 = vsel %vm975, %v991, %v993
        %v995 = vrot.slane %v951, 3
        %v996 = vsel %vm975, %v993, %v995
        %v997 = vrot.slane %v952, 3
        %v998 = vsel %vm975, %v995, %v997
        %v999 = vrot.slane %v953, 3
        %v1000 = vsel %vm975, %v997, %v999
        %v1001 = vrot.slane %v954, 3
        %v1002 = vsel %vm975, %v999, %v1001
        %v1003 = vrot.slane %v955, 3
        %v1004 = vsel %vm975, %v1001, %v1003
        %v1005 = vrot.slane %v956, 3
        %v1006 = vsel %vm975, %v1003, %v1005
        %v1007 = vrot.slane %v957, 3
        %v1008 = vsel %vm975, %v1005, %v1007
        %v1025 = vadd.f32 %v924, %v978
        %v1026 = vadd.f32 %v925, %v980
        %v1027 = vadd.f32 %v926, %v982
        %v1028 = vadd.f32 %v927, %v984
        %v1029 = vadd.f32 %v928, %v986
        %v1030 = vadd.f32 %v929, %v988
        %v1031 = vadd.f32 %v930, %v990
        %v1032 = vadd.f32 %v931, %v992
        %v1033 = vadd.f32 %v932, %v994
        %v1034 = vadd.f32 %v933, %v996
        %v1035 = vadd.f32 %v934, %v998
        %v1036 = vadd.f32 %v935, %v1000
        %v1037 = vadd.f32 %v936, %v1002
        %v1038 = vadd.f32 %v937, %v1004
        %v1039 = vadd.f32 %v938, %v1006
        %v1040 = vadd.f32 %v939, %v1008
        %v1041 = vperm.slane %v619, 4
        %v1042 = vmul.f32 %v623, %v1041
        %v1043 = vmul.f32 %v628, %v1041
        %v1044 = vmul.f32 %v633, %v1041
        %v1045 = vmul.f32 %v638, %v1041
        %v1046 = vmul.f32 %v643, %v1041
        %v1047 = vmul.f32 %v648, %v1041
        %v1048 = vmul.f32 %v653, %v1041
        %v1049 = vmul.f32 %v658, %v1041
        %v1050 = vmul.f32 %v663, %v1041
        %v1051 = vmul.f32 %v668, %v1041
        %v1052 = vmul.f32 %v673, %v1041
        %v1053 = vmul.f32 %v678, %v1041
        %v1054 = vmul.f32 %v683, %v1041
        %v1055 = vmul.f32 %v688, %v1041
        %v1056 = vmul.f32 %v693, %v1041
        %v1057 = vmul.f32 %v698, %v1041
        %v1058 = vmul.f32 %v736, %v1041
        %vm1076 = vcmask 1043456
        %v1077 = vrot.slane %v1042, 4
        %v1078 = vrot.slane %v1043, 4
        %v1079 = vsel %vm1076, %v1077, %v1078
        %v1080 = vrot.slane %v1044, 4
        %v1081 = vsel %vm1076, %v1078, %v1080
        %v1082 = vrot.slane %v1045, 4
        %v1083 = vsel %vm1076, %v1080, %v1082
        %v1084 = vrot.slane %v1046, 4
        %v1085 = vsel %vm1076, %v1082, %v1084
        %v1086 = vrot.slane %v1047, 4
        %v1087 = vsel %vm1076, %v1084, %v1086
        %v1088 = vrot.slane %v1048, 4
        %v1089 = vsel %vm1076, %v1086, %v1088
        %v1090 = vrot.slane %v1049, 4
        %v1091 = vsel %vm1076, %v1088, %v1090
        %v1092 = vrot.slane %v1050, 4
        %v1093 = vsel %vm1076, %v1090, %v1092
        %v1094 = vrot.slane %v1051, 4
        %v1095 = vsel %vm1076, %v1092, %v1094
        %v1096 = vrot.slane %v1052, 4
        %v1097 = vsel %vm1076, %v1094, %v1096
        %v1098 = vrot.slane %v1053, 4
        %v1099 = vsel %vm1076, %v1096, %v1098
        %v1100 = vrot.slane %v1054, 4
        %v1101 = vsel %vm1076, %v1098, %v1100
        %v1102 = vrot.slane %v1055, 4
        %v1103 = vsel %vm1076, %v1100, %v1102
        %v1104 = vrot.slane %v1056, 4
        %v1105 = vsel %vm1076, %v1102, %v1104
        %v1106 = vrot.slane %v1057, 4
        %v1107 = vsel %vm1076, %v1104, %v1106
        %v1108 = vrot.slane %v1058, 4
        %v1109 = vsel %vm1076, %v1106, %v1108
        %v1126 = vadd.f32 %v1025, %v1079
        %v1127 = vadd.f32 %v1026, %v1081
        %v1128 = vadd.f32 %v1027, %v1083
        %v1129 = vadd.f32 %v1028, %v1085
        %v1130 = vadd.f32 %v1029, %v1087
        %v1131 = vadd.f32 %v1030, %v1089
        %v1132 = vadd.f32 %v1031, %v1091
        %v1133 = vadd.f32 %v1032, %v1093
        %v1134 = vadd.f32 %v1033, %v1095
        %v1135 = vadd.f32 %v1034, %v1097
        %v1136 = vadd.f32 %v1035, %v1099
        %v1137 = vadd.f32 %v1036, %v1101
        %v1138 = vadd.f32 %v1037, %v1103
        %v1139 = vadd.f32 %v1038, %v1105
        %v1140 = vadd.f32 %v1039, %v1107
        %v1141 = vadd.f32 %v1040, %v1109
        %v1142 = vld [vmem:[#allocation5] sm:$0x1]
        %v1144 = vperm.slane %v1142, 0
        %v1146 = vadd.f32 %v1126, %v1144
        %v1147 = vadd.f32 %v1127, %v1144
        %v1148 = vadd.f32 %v1128, %v1144
        %v1149 = vadd.f32 %v1129, %v1144
        %v1150 = vadd.f32 %v1130, %v1144
        %v1151 = vadd.f32 %v1131, %v1144
        %v1152 = vadd.f32 %v1132, %v1144
        %v1153 = vadd.f32 %v1133, %v1144
        %v1154 = vadd.f32 %v1134, %v1144
        %v1155 = vadd.f32 %v1135, %v1144
        %v1156 = vadd.f32 %v1136, %v1144
        %v1157 = vadd.f32 %v1137, %v1144
        %v1158 = vadd.f32 %v1138, %v1144
        %v1159 = vadd.f32 %v1139, %v1144
        %v1160 = vadd.f32 %v1140, %v1144
        %v1161 = vadd.f32 %v1141, %v1144
        %vm1162 = vcmp.ge.f32.partialorder %v1146, 0.0
        %vm1163 = vcmp.ge.f32.partialorder %v1147, 0.0
        %vm1164 = vcmp.ge.f32.partialorder %v1148, 0.0
        %vm1165 = vcmp.ge.f32.partialorder %v1149, 0.0
        %vm1166 = vcmp.ge.f32.partialorder %v1150, 0.0
        %vm1167 = vcmp.ge.f32.partialorder %v1151, 0.0
        %vm1168 = vcmp.ge.f32.partialorder %v1152, 0.0
        %vm1169 = vcmp.ge.f32.partialorder %v1153, 0.0
        %vm1170 = vcmp.ge.f32.partialorder %v1154, 0.0
        %vm1171 = vcmp.ge.f32.partialorder %v1155, 0.0
        %vm1172 = vcmp.ge.f32.partialorder %v1156, 0.0
        %vm1173 = vcmp.ge.f32.partialorder %v1157, 0.0
        %vm1174 = vcmp.ge.f32.partialorder %v1158, 0.0
        %vm1175 = vcmp.ge.f32.partialorder %v1159, 0.0
        %vm1176 = vcmp.ge.f32.partialorder %v1160, 0.0
        %vm1177 = vcmp.ge.f32.partialorder %v1161, 0.0
        %v1179 = vperm.slane %v601, 0
        %1180 = vset.pattern.permute.xlu0 0
        %1181 = vperm.xlu0 %1180, %v1179
        %v1182 = vpop.permute.xlu0 %1181
        %v1184 = vmul.f32 %v1182, %v1146
        %v1185 = vmul.f32 %v1182, %v1147
        %v1186 = vmul.f32 %v1182, %v1148
        %v1187 = vmul.f32 %v1182, %v1149
        %v1188 = vmul.f32 %v1182, %v1150
        %v1189 = vmul.f32 %v1182, %v1151
        %v1190 = vmul.f32 %v1182, %v1152
        %v1191 = vmul.f32 %v1182, %v1153
        %v1192 = vmul.f32 %v1182, %v1154
        %v1193 = vmul.f32 %v1182, %v1155
        %v1194 = vmul.f32 %v1182, %v1156
        %v1195 = vmul.f32 %v1182, %v1157
        %v1196 = vmul.f32 %v1182, %v1158
        %v1197 = vmul.f32 %v1182, %v1159
        %v1198 = vmul.f32 %v1182, %v1160
        %v1199 = vmul.f32 %v1182, %v1161
        %v1200 = vsel %vm1162, %v1146, %v1184
        %v1201 = vsel %vm1163, %v1147, %v1185
        %v1202 = vsel %vm1164, %v1148, %v1186
        %v1203 = vsel %vm1165, %v1149, %v1187
        %v1204 = vsel %vm1166, %v1150, %v1188
        %v1205 = vsel %vm1167, %v1151, %v1189
        %v1206 = vsel %vm1168, %v1152, %v1190
        %v1207 = vsel %vm1169, %v1153, %v1191
        %v1208 = vsel %vm1170, %v1154, %v1192
        %v1209 = vsel %vm1171, %v1155, %v1193
        %v1210 = vsel %vm1172, %v1156, %v1194
        %v1211 = vsel %vm1173, %v1157, %v1195
        %v1212 = vsel %vm1174, %v1158, %v1196
        %v1213 = vsel %vm1175, %v1159, %v1197
        %v1214 = vsel %vm1176, %v1160, %v1198
        %v1215 = vsel %vm1177, %v1161, %v1199
        %v1232 = vrot.slane %v1200, 1
        %v1233 = vrot.slane %v1201, 1
        %v1234 = vsel %vm773, %v1232, %v1233
        %v1235 = vrot.slane %v1202, 1
        %v1236 = vsel %vm773, %v1233, %v1235
        %v1237 = vrot.slane %v1203, 1
        %v1238 = vsel %vm773, %v1235, %v1237
        %v1239 = vrot.slane %v1204, 1
        %v1240 = vsel %vm773, %v1237, %v1239
        %v1241 = vrot.slane %v1205, 1
        %v1242 = vsel %vm773, %v1239, %v1241
        %v1243 = vrot.slane %v1206, 1
        %v1244 = vsel %vm773, %v1241, %v1243
        %v1245 = vrot.slane %v1207, 1
        %v1246 = vsel %vm773, %v1243, %v1245
        %v1247 = vrot.slane %v1208, 1
        %v1248 = vsel %vm773, %v1245, %v1247
        %v1249 = vrot.slane %v1209, 1
        %v1250 = vsel %vm773, %v1247, %v1249
        %v1251 = vrot.slane %v1210, 1
        %v1252 = vsel %vm773, %v1249, %v1251
        %v1253 = vrot.slane %v1211, 1
        %v1254 = vsel %vm773, %v1251, %v1253
        %v1255 = vrot.slane %v1212, 1
        %v1256 = vsel %vm773, %v1253, %v1255
        %v1257 = vrot.slane %v1213, 1
        %v1258 = vsel %vm773, %v1255, %v1257
        %v1259 = vrot.slane %v1214, 1
        %v1260 = vsel %vm773, %v1257, %v1259
        %v1261 = vrot.slane %v1215, 1
        %v1262 = vsel %vm773, %v1259, %v1261
        %v1279 = vmax.f32 %v1200, %v1234
        %v1280 = vmax.f32 %v1201, %v1236
        %v1281 = vmax.f32 %v1202, %v1238
        %v1282 = vmax.f32 %v1203, %v1240
        %v1283 = vmax.f32 %v1204, %v1242
        %v1284 = vmax.f32 %v1205, %v1244
        %v1285 = vmax.f32 %v1206, %v1246
        %v1286 = vmax.f32 %v1207, %v1248
        %v1287 = vmax.f32 %v1208, %v1250
        %v1288 = vmax.f32 %v1209, %v1252
        %v1289 = vmax.f32 %v1210, %v1254
        %v1290 = vmax.f32 %v1211, %v1256
        %v1291 = vmax.f32 %v1212, %v1258
        %v1292 = vmax.f32 %v1213, %v1260
        %v1293 = vmax.f32 %v1214, %v1262
        %v1294 = vmax.f32 %v1215, %v1261
        %v1295 = vlaneseq
        %v1296 = vshrl.u32 %v1295, 7
        %v1297 = vadd.s32 %v1296, 8
        %v1298 = vadd.s32 %v1296, 16
        %v1299 = vadd.s32 %v1296, 24
        %v1300 = vadd.s32 %v1296, 32
        %v1301 = vadd.s32 %v1296, 40
        %v1302 = vadd.s32 %v1296, 48
        %v1303 = vadd.s32 %v1296, 56
        %v1304 = vlaneseq
        %v1305 = vand.u32 %v1304, 127
        %v1306 = vmul.u32 %v1296, 2
        %v1307 = vmul.u32 %v1297, 2
        %v1308 = vmul.u32 %v1298, 2
        %v1309 = vmul.u32 %v1299, 2
        %v1310 = vmul.u32 %v1300, 2
        %v1311 = vmul.u32 %v1301, 2
        %v1312 = vmul.u32 %v1302, 2
        %v1313 = vmul.u32 %v1303, 2
        %vm1314 = vcmp.eq.s32.totalorder %v1305, %v1306
        %vm1315 = vcmp.eq.s32.totalorder %v1305, %v1307
        %vm1316 = vcmp.eq.s32.totalorder %v1305, %v1308
        %vm1317 = vcmp.eq.s32.totalorder %v1305, %v1309
        %vm1318 = vcmp.eq.s32.totalorder %v1305, %v1310
        %vm1319 = vcmp.eq.s32.totalorder %v1305, %v1311
        %vm1320 = vcmp.eq.s32.totalorder %v1305, %v1312
        %vm1321 = vcmp.eq.s32.totalorder %v1305, %v1313
        %v1322 = vsel %vm1314, 1, 0
        %v1323 = vsel %vm1315, 1, 0
        %v1324 = vsel %vm1316, 1, 0
        %v1325 = vsel %vm1317, 1, 0
        %v1326 = vsel %vm1318, 1, 0
        %v1327 = vsel %vm1319, 1, 0
        %v1328 = vsel %vm1320, 1, 0
        %v1329 = vsel %vm1321, 1, 0
        %v1330 = vcvt.s32.f32 %v1322
        %v1331 = vcvt.s32.f32 %v1323
        %v1332 = vcvt.s32.f32 %v1324
        %v1333 = vcvt.s32.f32 %v1325
        %v1334 = vcvt.s32.f32 %v1326
        %v1335 = vcvt.s32.f32 %v1327
        %v1336 = vcvt.s32.f32 %v1328
        %v1337 = vcvt.s32.f32 %v1329
        %vm1338 = vcmask 1039360
        %v1340 = vsel %vm1338, %v1330, 0
        %v1343 = vsel %vm1338, %v1331, 0
        %v1346 = vsel %vm1338, %v1332, 0
        %v1349 = vsel %vm1338, %v1333, 0
        %v1352 = vsel %vm1338, %v1334, 0
        %v1355 = vsel %vm1338, %v1335, 0
        %v1358 = vsel %vm1338, %v1336, 0
        %v1361 = vsel %vm1338, %v1337, 0
        %v1364 = vsel %vm773, %v1294, 0
        %1366 = vmatpush.msra.mxu0 %v1364
        %1367 = vmatpush.msra.mxu0 %v1293
        %1368 = vmatpush.msra.mxu0 %v1292
        %1369 = vmatpush.msra.mxu0 %v1291
        %1370 = vmatpush.msra.mxu0 %v1290
        %1371 = vmatpush.msra.mxu0 %v1289
        %1372 = vmatpush.msra.mxu0 %v1288
        %1373 = vmatpush.msra.mxu0 %v1287
        %1374 = vmatpush.msra.mxu0 %v1286
        %1375 = vmatpush.msra.mxu0 %v1285
        %1376 = vmatpush.msra.mxu0 %v1284
        %1377 = vmatpush.msra.mxu0 %v1283
        %1378 = vmatpush.msra.mxu0 %v1282
        %1379 = vmatpush.msra.mxu0 %v1281
        %1380 = vmatpush.msra.mxu0 %v1280
        %1381 = vmatpush.msra.mxu0 %v1279
        %1382 = vmatmul.f32.gmra.mxu0 %v1340
        %v1383 = vpop.f32.mrf.mxu0
        %v1384 = vadd.f32 0.0, %v1383
        %1385 = vmatmul.f32.gmra.mxu0 %v1343
        %v1386 = vpop.f32.mrf.mxu0
        %v1387 = vadd.f32 0.0, %v1386
        %1388 = vmatmul.f32.gmra.mxu0 %v1346
        %v1389 = vpop.f32.mrf.mxu0
        %v1390 = vadd.f32 0.0, %v1389
        %1391 = vmatmul.f32.gmra.mxu0 %v1349
        %v1392 = vpop.f32.mrf.mxu0
        %v1393 = vadd.f32 0.0, %v1392
        %1394 = vmatmul.f32.gmra.mxu0 %v1352
        %v1395 = vpop.f32.mrf.mxu0
        %v1396 = vadd.f32 0.0, %v1395
        %1397 = vmatmul.f32.gmra.mxu0 %v1355
        %v1398 = vpop.f32.mrf.mxu0
        %v1399 = vadd.f32 0.0, %v1398
        %1400 = vmatmul.f32.gmra.mxu0 %v1358
        %v1401 = vpop.f32.mrf.mxu0
        %v1402 = vadd.f32 0.0, %v1401
        %1403 = vmatmul.f32.gmra.mxu0 %v1361
        %v1404 = vpop.f32.mrf.mxu0
        %v1405 = vadd.f32 0.0, %v1404
        %1406 = vdwg.mxu0
        %v1407 = vld [vmem:[#allocation7] sm:$0xff]
        %v1408 = vld [vmem:[#allocation7 + $0x8] sm:$0xff]
        %v1409 = vld [vmem:[#allocation7 + $0x10] sm:$0xff]
        %v1410 = vld [vmem:[#allocation7 + $0x18] sm:$0xff]
        %s1411 = scalar_lea.vmem [#allocation7], 32
        %v1412 = vld [vmem:[%s1411] sm:$0xff]
        %v1413 = vld [vmem:[%s1411 + $0x8] sm:$0xff]
        %v1414 = vld [vmem:[%s1411 + $0x10] sm:$0xff]
        %v1415 = vld [vmem:[%s1411 + $0x18] sm:$0xff]
        %v1424 = vrot.slane %v1384, 1
        %v1425 = vrot.slane %v1387, 1
        %v1426 = vsel %vm773, %v1424, %v1425
        %v1427 = vrot.slane %v1390, 1
        %v1428 = vsel %vm773, %v1425, %v1427
        %v1429 = vrot.slane %v1393, 1
        %v1430 = vsel %vm773, %v1427, %v1429
        %v1431 = vrot.slane %v1396, 1
        %v1432 = vsel %vm773, %v1429, %v1431
        %v1433 = vrot.slane %v1399, 1
        %v1434 = vsel %vm773, %v1431, %v1433
        %v1435 = vrot.slane %v1402, 1
        %v1436 = vsel %vm773, %v1433, %v1435
        %v1437 = vrot.slane %v1405, 1
        %v1438 = vsel %vm773, %v1435, %v1437
        %vm1439 = vcmask 261120
        %v1440 = vsel %vm1439, %v1426, 0
        %v1442 = vsel %vm1439, %v1428, 0
        %v1444 = vsel %vm1439, %v1430, 0
        %v1446 = vsel %vm1439, %v1432, 0
        %v1448 = vsel %vm1439, %v1434, 0
        %v1450 = vsel %vm1439, %v1436, 0
        %v1452 = vsel %vm1439, %v1438, 0
        %v1454 = vsel %vm1439, %v1437, 0
        %1456 = vmatpush.msra.mxu0 0.0
        %1457 = vmatpush.msra.mxu0 0.0
        %1458 = vmatpush.msra.mxu0 0.0
        %1459 = vmatpush.msra.mxu0 0.0
        %1460 = vmatpush.msra.mxu0 0.0
        %1461 = vmatpush.msra.mxu0 0.0
        %1462 = vmatpush.msra.mxu0 0.0
        %1463 = vmatpush.msra.mxu0 0.0
        %1464 = vmatpush.msra.mxu0 0.0
        %1465 = vmatpush.msra.mxu0 0.0
        %1466 = vmatpush.msra.mxu0 0.0
        %1467 = vmatpush.msra.mxu0 0.0
        %1468 = vmatpush.msra.mxu0 %v1415
        %1469 = vmatpush.msra.mxu0 %v1414
        %1470 = vmatpush.msra.mxu0 %v1413
        %1471 = vmatpush.msra.mxu0 %v1412
        %1472 = vmatmul.f32.gmra.mxu0 %v1440
        %v1473 = vpop.f32.mrf.mxu0
        %v1474 = vadd.f32 0.0, %v1473
        %1475 = vmatmul.f32.gmra.mxu0 %v1442
        %v1476 = vpop.f32.mrf.mxu0
        %v1477 = vadd.f32 0.0, %v1476
        %1478 = vmatmul.f32.gmra.mxu0 %v1444
        %v1479 = vpop.f32.mrf.mxu0
        %v1480 = vadd.f32 0.0, %v1479
        %1481 = vmatmul.f32.gmra.mxu0 %v1446
        %v1482 = vpop.f32.mrf.mxu0
        %v1483 = vadd.f32 0.0, %v1482
        %1484 = vmatmul.f32.gmra.mxu0 %v1448
        %v1485 = vpop.f32.mrf.mxu0
        %v1486 = vadd.f32 0.0, %v1485
        %1487 = vmatmul.f32.gmra.mxu0 %v1450
        %v1488 = vpop.f32.mrf.mxu0
        %v1489 = vadd.f32 0.0, %v1488
        %1490 = vmatmul.f32.gmra.mxu0 %v1452
        %v1491 = vpop.f32.mrf.mxu0
        %v1492 = vadd.f32 0.0, %v1491
        %1493 = vmatmul.f32.gmra.mxu0 %v1454
        %v1494 = vpop.f32.mrf.mxu0
        %v1495 = vadd.f32 0.0, %v1494
        %1496 = vdwg.mxu0
        %v1497 = vsel %vm1439, %v1384, 0
        %v1499 = vsel %vm1439, %v1387, 0
        %v1501 = vsel %vm1439, %v1390, 0
        %v1503 = vsel %vm1439, %v1393, 0
        %v1505 = vsel %vm1439, %v1396, 0
        %v1507 = vsel %vm1439, %v1399, 0
        %v1509 = vsel %vm1439, %v1402, 0
        %v1511 = vsel %vm1439, %v1405, 0
        %1513 = vmatpush.msra.mxu0 0.0
        %1514 = vmatpush.msra.mxu0 0.0
        %1515 = vmatpush.msra.mxu0 0.0
        %1516 = vmatpush.msra.mxu0 0.0
        %1517 = vmatpush.msra.mxu0 0.0
        %1518 = vmatpush.msra.mxu0 0.0
        %1519 = vmatpush.msra.mxu0 0.0
        %1520 = vmatpush.msra.mxu0 0.0
        %1521 = vmatpush.msra.mxu0 0.0
        %1522 = vmatpush.msra.mxu0 0.0
        %1523 = vmatpush.msra.mxu0 0.0
        %1524 = vmatpush.msra.mxu0 0.0
        %1525 = vmatpush.msra.mxu0 %v1410
        %1526 = vmatpush.msra.mxu0 %v1409
        %1527 = vmatpush.msra.mxu0 %v1408
        %1528 = vmatpush.msra.mxu0 %v1407
        %1529 = vmatmul.f32.gmra.mxu0 %v1497
        %v1530 = vpop.f32.mrf.mxu0
        %v1531 = vadd.f32 %v1474, %v1530
        %1532 = vmatmul.f32.gmra.mxu0 %v1499
        %v1533 = vpop.f32.mrf.mxu0
        %v1534 = vadd.f32 %v1477, %v1533
        %1535 = vmatmul.f32.gmra.mxu0 %v1501
        %v1536 = vpop.f32.mrf.mxu0
        %v1537 = vadd.f32 %v1480, %v1536
        %1538 = vmatmul.f32.gmra.mxu0 %v1503
        %v1539 = vpop.f32.mrf.mxu0
        %v1540 = vadd.f32 %v1483, %v1539
        %1541 = vmatmul.f32.gmra.mxu0 %v1505
        %v1542 = vpop.f32.mrf.mxu0
        %v1543 = vadd.f32 %v1486, %v1542
        %1544 = vmatmul.f32.gmra.mxu0 %v1507
        %v1545 = vpop.f32.mrf.mxu0
        %v1546 = vadd.f32 %v1489, %v1545
        %1547 = vmatmul.f32.gmra.mxu0 %v1509
        %v1548 = vpop.f32.mrf.mxu0
        %v1549 = vadd.f32 %v1492, %v1548
        %1550 = vmatmul.f32.gmra.mxu0 %v1511
        %v1551 = vpop.f32.mrf.mxu0
        %v1552 = vadd.f32 %v1495, %v1551
        %1553 = vdwg.mxu0
        %s1554 = scalar_lea.vmem [#allocation7], 64
        %v1555 = vld [vmem:[%s1554] sm:$0xff]
        %v1556 = vld [vmem:[%s1554 + $0x8] sm:$0xff]
        %v1557 = vld [vmem:[%s1554 + $0x10] sm:$0xff]
        %v1558 = vld [vmem:[%s1554 + $0x18] sm:$0xff]
        %v1559 = vrot.slane %v1384, 2
        %v1560 = vrot.slane %v1387, 2
        %v1561 = vsel %vm874, %v1559, %v1560
        %v1562 = vrot.slane %v1390, 2
        %v1563 = vsel %vm874, %v1560, %v1562
        %v1564 = vrot.slane %v1393, 2
        %v1565 = vsel %vm874, %v1562, %v1564
        %v1566 = vrot.slane %v1396, 2
        %v1567 = vsel %vm874, %v1564, %v1566
        %v1568 = vrot.slane %v1399, 2
        %v1569 = vsel %vm874, %v1566, %v1568
        %v1570 = vrot.slane %v1402, 2
        %v1571 = vsel %vm874, %v1568, %v1570
        %v1572 = vrot.slane %v1405, 2
        %v1573 = vsel %vm874, %v1570, %v1572
        %v1574 = vsel %vm1439, %v1561, 0
        %v1576 = vsel %vm1439, %v1563, 0
        %v1578 = vsel %vm1439, %v1565, 0
        %v1580 = vsel %vm1439, %v1567, 0
        %v1582 = vsel %vm1439, %v1569, 0
        %v1584 = vsel %vm1439, %v1571, 0
        %v1586 = vsel %vm1439, %v1573, 0
        %v1588 = vsel %vm1439, %v1572, 0
        %1590 = vmatpush.msra.mxu0 0.0
        %1591 = vmatpush.msra.mxu0 0.0
        %1592 = vmatpush.msra.mxu0 0.0
        %1593 = vmatpush.msra.mxu0 0.0
        %1594 = vmatpush.msra.mxu0 0.0
        %1595 = vmatpush.msra.mxu0 0.0
        %1596 = vmatpush.msra.mxu0 0.0
        %1597 = vmatpush.msra.mxu0 0.0
        %1598 = vmatpush.msra.mxu0 0.0
        %1599 = vmatpush.msra.mxu0 0.0
        %1600 = vmatpush.msra.mxu0 0.0
        %1601 = vmatpush.msra.mxu0 0.0
        %1602 = vmatpush.msra.mxu0 %v1558
        %1603 = vmatpush.msra.mxu0 %v1557
        %1604 = vmatpush.msra.mxu0 %v1556
        %1605 = vmatpush.msra.mxu0 %v1555
        %1606 = vmatmul.f32.gmra.mxu0 %v1574
        %v1607 = vpop.f32.mrf.mxu0
        %v1608 = vadd.f32 0.0, %v1607
        %1609 = vmatmul.f32.gmra.mxu0 %v1576
        %v1610 = vpop.f32.mrf.mxu0
        %v1611 = vadd.f32 0.0, %v1610
        %1612 = vmatmul.f32.gmra.mxu0 %v1578
        %v1613 = vpop.f32.mrf.mxu0
        %v1614 = vadd.f32 0.0, %v1613
        %1615 = vmatmul.f32.gmra.mxu0 %v1580
        %v1616 = vpop.f32.mrf.mxu0
        %v1617 = vadd.f32 0.0, %v1616
        %1618 = vmatmul.f32.gmra.mxu0 %v1582
        %v1619 = vpop.f32.mrf.mxu0
        %v1620 = vadd.f32 0.0, %v1619
        %1621 = vmatmul.f32.gmra.mxu0 %v1584
        %v1622 = vpop.f32.mrf.mxu0
        %v1623 = vadd.f32 0.0, %v1622
        %1624 = vmatmul.f32.gmra.mxu0 %v1586
        %v1625 = vpop.f32.mrf.mxu0
        %v1626 = vadd.f32 0.0, %v1625
        %1627 = vmatmul.f32.gmra.mxu0 %v1588
        %v1628 = vpop.f32.mrf.mxu0
        %v1629 = vadd.f32 0.0, %v1628
        %1630 = vdwg.mxu0
        %v1631 = vadd.f32 %v1531, %v1608
        %v1632 = vadd.f32 %v1534, %v1611
        %v1633 = vadd.f32 %v1537, %v1614
        %v1634 = vadd.f32 %v1540, %v1617
        %v1635 = vadd.f32 %v1543, %v1620
        %v1636 = vadd.f32 %v1546, %v1623
        %v1637 = vadd.f32 %v1549, %v1626
        %v1638 = vadd.f32 %v1552, %v1629
        %s1639 = scalar_lea.vmem [#allocation7], 96
        %v1640 = vld [vmem:[%s1639] sm:$0xff]
        %v1641 = vld [vmem:[%s1639 + $0x8] sm:$0xff]
        %v1642 = vld [vmem:[%s1639 + $0x10] sm:$0xff]
        %v1643 = vld [vmem:[%s1639 + $0x18] sm:$0xff]
        %v1644 = vrot.slane %v1384, 3
        %v1645 = vrot.slane %v1387, 3
        %v1646 = vsel %vm975, %v1644, %v1645
        %v1647 = vrot.slane %v1390, 3
        %v1648 = vsel %vm975, %v1645, %v1647
        %v1649 = vrot.slane %v1393, 3
        %v1650 = vsel %vm975, %v1647, %v1649
        %v1651 = vrot.slane %v1396, 3
        %v1652 = vsel %vm975, %v1649, %v1651
        %v1653 = vrot.slane %v1399, 3
        %v1654 = vsel %vm975, %v1651, %v1653
        %v1655 = vrot.slane %v1402, 3
        %v1656 = vsel %vm975, %v1653, %v1655
        %v1657 = vrot.slane %v1405, 3
        %v1658 = vsel %vm975, %v1655, %v1657
        %v1659 = vsel %vm1439, %v1646, 0
        %v1661 = vsel %vm1439, %v1648, 0
        %v1663 = vsel %vm1439, %v1650, 0
        %v1665 = vsel %vm1439, %v1652, 0
        %v1667 = vsel %vm1439, %v1654, 0
        %v1669 = vsel %vm1439, %v1656, 0
        %v1671 = vsel %vm1439, %v1658, 0
        %v1673 = vsel %vm1439, %v1657, 0
        %1675 = vmatpush.msra.mxu0 0.0
        %1676 = vmatpush.msra.mxu0 0.0
        %1677 = vmatpush.msra.mxu0 0.0
        %1678 = vmatpush.msra.mxu0 0.0
        %1679 = vmatpush.msra.mxu0 0.0
        %1680 = vmatpush.msra.mxu0 0.0
        %1681 = vmatpush.msra.mxu0 0.0
        %1682 = vmatpush.msra.mxu0 0.0
        %1683 = vmatpush.msra.mxu0 0.0
        %1684 = vmatpush.msra.mxu0 0.0
        %1685 = vmatpush.msra.mxu0 0.0
        %1686 = vmatpush.msra.mxu0 0.0
        %1687 = vmatpush.msra.mxu0 %v1643
        %1688 = vmatpush.msra.mxu0 %v1642
        %1689 = vmatpush.msra.mxu0 %v1641
        %1690 = vmatpush.msra.mxu0 %v1640
        %1691 = vmatmul.f32.gmra.mxu0 %v1659
        %v1692 = vpop.f32.mrf.mxu0
        %v1693 = vadd.f32 0.0, %v1692
        %1694 = vmatmul.f32.gmra.mxu0 %v1661
        %v1695 = vpop.f32.mrf.mxu0
        %v1696 = vadd.f32 0.0, %v1695
        %1697 = vmatmul.f32.gmra.mxu0 %v1663
        %v1698 = vpop.f32.mrf.mxu0
        %v1699 = vadd.f32 0.0, %v1698
        %1700 = vmatmul.f32.gmra.mxu0 %v1665
        %v1701 = vpop.f32.mrf.mxu0
        %v1702 = vadd.f32 0.0, %v1701
        %1703 = vmatmul.f32.gmra.mxu0 %v1667
        %v1704 = vpop.f32.mrf.mxu0
        %v1705 = vadd.f32 0.0, %v1704
        %1706 = vmatmul.f32.gmra.mxu0 %v1669
        %v1707 = vpop.f32.mrf.mxu0
        %v1708 = vadd.f32 0.0, %v1707
        %1709 = vmatmul.f32.gmra.mxu0 %v1671
        %v1710 = vpop.f32.mrf.mxu0
        %v1711 = vadd.f32 0.0, %v1710
        %1712 = vmatmul.f32.gmra.mxu0 %v1673
        %v1713 = vpop.f32.mrf.mxu0
        %v1714 = vadd.f32 0.0, %v1713
        %1715 = vdwg.mxu0
        %v1716 = vadd.f32 %v1631, %v1693
        %v1717 = vadd.f32 %v1632, %v1696
        %v1718 = vadd.f32 %v1633, %v1699
        %v1719 = vadd.f32 %v1634, %v1702
        %v1720 = vadd.f32 %v1635, %v1705
        %v1721 = vadd.f32 %v1636, %v1708
        %v1722 = vadd.f32 %v1637, %v1711
        %v1723 = vadd.f32 %v1638, %v1714
        %s1724 = scalar_lea.vmem [#allocation7], 128
        %v1725 = vld [vmem:[%s1724] sm:$0xff]
        %v1726 = vld [vmem:[%s1724 + $0x8] sm:$0xff]
        %v1727 = vld [vmem:[%s1724 + $0x10] sm:$0xff]
        %v1728 = vld [vmem:[%s1724 + $0x18] sm:$0xff]
        %v1729 = vrot.slane %v1384, 4
        %v1730 = vrot.slane %v1387, 4
        %v1731 = vsel %vm1076, %v1729, %v1730
        %v1732 = vrot.slane %v1390, 4
        %v1733 = vsel %vm1076, %v1730, %v1732
        %v1734 = vrot.slane %v1393, 4
        %v1735 = vsel %vm1076, %v1732, %v1734
        %v1736 = vrot.slane %v1396, 4
        %v1737 = vsel %vm1076, %v1734, %v1736
        %v1738 = vrot.slane %v1399, 4
        %v1739 = vsel %vm1076, %v1736, %v1738
        %v1740 = vrot.slane %v1402, 4
        %v1741 = vsel %vm1076, %v1738, %v1740
        %v1742 = vrot.slane %v1405, 4
        %v1743 = vsel %vm1076, %v1740, %v1742
        %v1744 = vsel %vm1439, %v1731, 0
        %v1746 = vsel %vm1439, %v1733, 0
        %v1748 = vsel %vm1439, %v1735, 0
        %v1750 = vsel %vm1439, %v1737, 0
        %v1752 = vsel %vm1439, %v1739, 0
        %v1754 = vsel %vm1439, %v1741, 0
        %v1756 = vsel %vm1439, %v1743, 0
        %v1758 = vsel %vm1439, %v1742, 0
        %1760 = vmatpush.msra.mxu0 0.0
        %1761 = vmatpush.msra.mxu0 0.0
        %1762 = vmatpush.msra.mxu0 0.0
        %1763 = vmatpush.msra.mxu0 0.0
        %1764 = vmatpush.msra.mxu0 0.0
        %1765 = vmatpush.msra.mxu0 0.0
        %1766 = vmatpush.msra.mxu0 0.0
        %1767 = vmatpush.msra.mxu0 0.0
        %1768 = vmatpush.msra.mxu0 0.0
        %1769 = vmatpush.msra.mxu0 0.0
        %1770 = vmatpush.msra.mxu0 0.0
        %1771 = vmatpush.msra.mxu0 0.0
        %1772 = vmatpush.msra.mxu0 %v1728
        %1773 = vmatpush.msra.mxu0 %v1727
        %1774 = vmatpush.msra.mxu0 %v1726
        %1775 = vmatpush.msra.mxu0 %v1725
        %1776 = vmatmul.f32.gmra.mxu0 %v1744
        %v1777 = vpop.f32.mrf.mxu0
        %v1778 = vadd.f32 0.0, %v1777
        %1779 = vmatmul.f32.gmra.mxu0 %v1746
        %v1780 = vpop.f32.mrf.mxu0
        %v1781 = vadd.f32 0.0, %v1780
        %1782 = vmatmul.f32.gmra.mxu0 %v1748
        %v1783 = vpop.f32.mrf.mxu0
        %v1784 = vadd.f32 0.0, %v1783
        %1785 = vmatmul.f32.gmra.mxu0 %v1750
        %v1786 = vpop.f32.mrf.mxu0
        %v1787 = vadd.f32 0.0, %v1786
        %1788 = vmatmul.f32.gmra.mxu0 %v1752
        %v1789 = vpop.f32.mrf.mxu0
        %v1790 = vadd.f32 0.0, %v1789
        %1791 = vmatmul.f32.gmra.mxu0 %v1754
        %v1792 = vpop.f32.mrf.mxu0
        %v1793 = vadd.f32 0.0, %v1792
        %1794 = vmatmul.f32.gmra.mxu0 %v1756
        %v1795 = vpop.f32.mrf.mxu0
        %v1796 = vadd.f32 0.0, %v1795
        %1797 = vmatmul.f32.gmra.mxu0 %v1758
        %v1798 = vpop.f32.mrf.mxu0
        %v1799 = vadd.f32 0.0, %v1798
        %1800 = vdwg.mxu0
        %v1801 = vadd.f32 %v1716, %v1778
        %v1802 = vadd.f32 %v1717, %v1781
        %v1803 = vadd.f32 %v1718, %v1784
        %v1804 = vadd.f32 %v1719, %v1787
        %v1805 = vadd.f32 %v1720, %v1790
        %v1806 = vadd.f32 %v1721, %v1793
        %v1807 = vadd.f32 %v1722, %v1796
        %v1808 = vadd.f32 %v1723, %v1799
        %v1809 = vld [vmem:[#allocation8] sm:$0x1]
        %v1811 = vperm.slane %v1809, 0
        %v1813 = vadd.f32 %v1801, %v1811
        %v1814 = vadd.f32 %v1802, %v1811
        %v1815 = vadd.f32 %v1803, %v1811
        %v1816 = vadd.f32 %v1804, %v1811
        %v1817 = vadd.f32 %v1805, %v1811
        %v1818 = vadd.f32 %v1806, %v1811
        %v1819 = vadd.f32 %v1807, %v1811
        %v1820 = vadd.f32 %v1808, %v1811
        %vm1821 = vcmp.ge.f32.partialorder %v1813, 0.0
        %vm1822 = vcmp.ge.f32.partialorder %v1814, 0.0
        %vm1823 = vcmp.ge.f32.partialorder %v1815, 0.0
        %vm1824 = vcmp.ge.f32.partialorder %v1816, 0.0
        %vm1825 = vcmp.ge.f32.partialorder %v1817, 0.0
        %vm1826 = vcmp.ge.f32.partialorder %v1818, 0.0
        %vm1827 = vcmp.ge.f32.partialorder %v1819, 0.0
        %vm1828 = vcmp.ge.f32.partialorder %v1820, 0.0
        %1829 = vset.pattern.permute.xlu0 1
        %1830 = vperm.xlu0 %1829, %v1179
        %v1831 = vpop.permute.xlu0 %1830
        %v1833 = vmul.f32 %v1831, %v1813
        %v1834 = vmul.f32 %v1831, %v1814
        %v1835 = vmul.f32 %v1831, %v1815
        %v1836 = vmul.f32 %v1831, %v1816
        %v1837 = vmul.f32 %v1831, %v1817
        %v1838 = vmul.f32 %v1831, %v1818
        %v1839 = vmul.f32 %v1831, %v1819
        %v1840 = vmul.f32 %v1831, %v1820
        %v1841 = vsel %vm1821, %v1813, %v1833
        %v1842 = vsel %vm1822, %v1814, %v1834
        %v1843 = vsel %vm1823, %v1815, %v1835
        %v1844 = vsel %vm1824, %v1816, %v1836
        %v1845 = vsel %vm1825, %v1817, %v1837
        %v1846 = vsel %vm1826, %v1818, %v1838
        %v1847 = vsel %vm1827, %v1819, %v1839
        %v1848 = vsel %vm1828, %v1820, %v1840
        %v1857 = vrot.slane %v1841, 1
        %v1858 = vrot.slane %v1842, 1
        %v1859 = vsel %vm773, %v1857, %v1858
        %v1860 = vrot.slane %v1843, 1
        %v1861 = vsel %vm773, %v1858, %v1860
        %v1862 = vrot.slane %v1844, 1
        %v1863 = vsel %vm773, %v1860, %v1862
        %v1864 = vrot.slane %v1845, 1
        %v1865 = vsel %vm773, %v1862, %v1864
        %v1866 = vrot.slane %v1846, 1
        %v1867 = vsel %vm773, %v1864, %v1866
        %v1868 = vrot.slane %v1847, 1
        %v1869 = vsel %vm773, %v1866, %v1868
        %v1870 = vrot.slane %v1848, 1
        %v1871 = vsel %vm773, %v1868, %v1870
        %v1880 = vmax.f32 %v1841, %v1859
        %v1881 = vmax.f32 %v1842, %v1861
        %v1882 = vmax.f32 %v1843, %v1863
        %v1883 = vmax.f32 %v1844, %v1865
        %v1884 = vmax.f32 %v1845, %v1867
        %v1885 = vmax.f32 %v1846, %v1869
        %v1886 = vmax.f32 %v1847, %v1871
        %v1887 = vmax.f32 %v1848, %v1870
        %vm1888 = vcmask 482304
        %v1889 = vsel %vm1888, %v1330, 0
        %v1891 = vsel %vm1888, %v1331, 0
        %v1893 = vsel %vm1888, %v1332, 0
        %v1895 = vsel %vm1888, %v1333, 0
        %vm1897 = vcmask 1042432
        %v1899 = vsel %vm1897, %v1887, 0
        %1901 = vmatpush.msra.mxu0 0.0
        %1902 = vmatpush.msra.mxu0 0.0
        %1903 = vmatpush.msra.mxu0 0.0
        %1904 = vmatpush.msra.mxu0 0.0
        %1905 = vmatpush.msra.mxu0 0.0
        %1906 = vmatpush.msra.mxu0 0.0
        %1907 = vmatpush.msra.mxu0 0.0
        %1908 = vmatpush.msra.mxu0 0.0
        %1909 = vmatpush.msra.mxu0 %v1899
        %1910 = vmatpush.msra.mxu0 %v1886
        %1911 = vmatpush.msra.mxu0 %v1885
        %1912 = vmatpush.msra.mxu0 %v1884
        %1913 = vmatpush.msra.mxu0 %v1883
        %1914 = vmatpush.msra.mxu0 %v1882
        %1915 = vmatpush.msra.mxu0 %v1881
        %1916 = vmatpush.msra.mxu0 %v1880
        %1917 = vmatmul.f32.gmra.mxu0 %v1889
        %v1918 = vpop.f32.mrf.mxu0
        %v1919 = vadd.f32 0.0, %v1918
        %1920 = vmatmul.f32.gmra.mxu0 %v1891
        %v1921 = vpop.f32.mrf.mxu0
        %v1922 = vadd.f32 0.0, %v1921
        %1923 = vmatmul.f32.gmra.mxu0 %v1893
        %v1924 = vpop.f32.mrf.mxu0
        %v1925 = vadd.f32 0.0, %v1924
        %1926 = vmatmul.f32.gmra.mxu0 %v1895
        %v1927 = vpop.f32.mrf.mxu0
        %v1928 = vadd.f32 0.0, %v1927
        %1929 = vdwg.mxu0
        %v1930 = vld [vmem:[#allocation10] sm:$0xff]
        %v1931 = vld [vmem:[#allocation10 + $0x8] sm:$0xff]
        %v1932 = vld [vmem:[#allocation10 + $0x10] sm:$0xff]
        %v1933 = vld [vmem:[#allocation10 + $0x18] sm:$0xff]
        %v1934 = vld [vmem:[#allocation10 + $0x20] sm:$0xff]
        %v1935 = vld [vmem:[#allocation10 + $0x28] sm:$0xff]
        %v1936 = vld [vmem:[#allocation10 + $0x30] sm:$0xff]
        %v1937 = vld [vmem:[#allocation10 + $0x38] sm:$0xff]
        %v1938 = vld [vmem:[#allocation10 + $0x40] sm:$0xff]
        %v1939 = vld [vmem:[#allocation10 + $0x48] sm:$0xff]
        %v1940 = vld [vmem:[#allocation10 + $0x50] sm:$0xff]
        %v1941 = vld [vmem:[#allocation10 + $0x58] sm:$0xff]
        %v1942 = vld [vmem:[#allocation10 + $0x60] sm:$0xff]
        %v1943 = vld [vmem:[#allocation10 + $0x68] sm:$0xff]
        %v1944 = vld [vmem:[#allocation10 + $0x70] sm:$0xff]
        %v1945 = vld [vmem:[#allocation10 + $0x78] sm:$0xff]
        %v1946 = vld [vmem:[#allocation10 + $0x80] sm:$0xff]
        %v1947 = vld [vmem:[#allocation10 + $0x88] sm:$0xff]
        %v1948 = vld [vmem:[#allocation10 + $0x90] sm:$0xff]
        %v1949 = vld [vmem:[#allocation10 + $0x98] sm:$0xff]
        %v1950 = vld [vmem:[#allocation10 + $0xa0] sm:$0xff]
        %v1951 = vld [vmem:[#allocation10 + $0xa8] sm:$0xff]
        %v1952 = vld [vmem:[#allocation10 + $0xb0] sm:$0xff]
        %v1953 = vld [vmem:[#allocation10 + $0xb8] sm:$0xff]
        %v1954 = vld [vmem:[#allocation10 + $0xc0] sm:$0xff]
        %v1955 = vld [vmem:[#allocation10 + $0xc8] sm:$0xff]
        %v1956 = vld [vmem:[#allocation10 + $0xd0] sm:$0xff]
        %v1957 = vld [vmem:[#allocation10 + $0xd8] sm:$0xff]
        %v1958 = vld [vmem:[#allocation10 + $0xe0] sm:$0xff]
        %v1959 = vld [vmem:[#allocation10 + $0xe8] sm:$0xff]
        %v1960 = vld [vmem:[#allocation10 + $0xf0] sm:$0xff]
        %v1961 = vld [vmem:[#allocation10 + $0xf8] sm:$0xff]
        %s1962 = scalar_lea.vmem [#allocation10], 256
        %v1963 = vld [vmem:[%s1962] sm:$0xff]
        %v1964 = vld [vmem:[%s1962 + $0x8] sm:$0xff]
        %v1965 = vld [vmem:[%s1962 + $0x10] sm:$0xff]
        %v1966 = vld [vmem:[%s1962 + $0x18] sm:$0xff]
        %v1967 = vld [vmem:[%s1962 + $0x20] sm:$0xff]
        %v1968 = vld [vmem:[%s1962 + $0x28] sm:$0xff]
        %v1969 = vld [vmem:[%s1962 + $0x30] sm:$0xff]
        %v1970 = vld [vmem:[%s1962 + $0x38] sm:$0xff]
        %v1971 = vld [vmem:[%s1962 + $0x40] sm:$0xff]
        %v1972 = vld [vmem:[%s1962 + $0x48] sm:$0xff]
        %v1973 = vld [vmem:[%s1962 + $0x50] sm:$0xff]
        %v1974 = vld [vmem:[%s1962 + $0x58] sm:$0xff]
        %v1975 = vld [vmem:[%s1962 + $0x60] sm:$0xff]
        %v1976 = vld [vmem:[%s1962 + $0x68] sm:$0xff]
        %v1977 = vld [vmem:[%s1962 + $0x70] sm:$0xff]
        %v1978 = vld [vmem:[%s1962 + $0x78] sm:$0xff]
        %v1979 = vld [vmem:[%s1962 + $0x80] sm:$0xff]
        %v1980 = vld [vmem:[%s1962 + $0x88] sm:$0xff]
        %v1981 = vld [vmem:[%s1962 + $0x90] sm:$0xff]
        %v1982 = vld [vmem:[%s1962 + $0x98] sm:$0xff]
        %v1983 = vld [vmem:[%s1962 + $0xa0] sm:$0xff]
        %v1984 = vld [vmem:[%s1962 + $0xa8] sm:$0xff]
        %v1985 = vld [vmem:[%s1962 + $0xb0] sm:$0xff]
        %v1986 = vld [vmem:[%s1962 + $0xb8] sm:$0xff]
        %v1987 = vld [vmem:[%s1962 + $0xc0] sm:$0xff]
        %v1988 = vld [vmem:[%s1962 + $0xc8] sm:$0xff]
        %v1989 = vld [vmem:[%s1962 + $0xd0] sm:$0xff]
        %v1990 = vld [vmem:[%s1962 + $0xd8] sm:$0xff]
        %v1991 = vld [vmem:[%s1962 + $0xe0] sm:$0xff]
        %v1992 = vld [vmem:[%s1962 + $0xe8] sm:$0xff]
        %v1993 = vld [vmem:[%s1962 + $0xf0] sm:$0xff]
        %v1994 = vld [vmem:[%s1962 + $0xf8] sm:$0xff]
        %v1996 = vrot.slane %v1919, 1
        %vm1997 = vcmask 523264
        %v1998 = vsel %vm1997, %v1996, 0
        %2000 = vmatpush.msra.mxu0 0.0
        %2001 = vmatpush.msra.mxu0 0.0
        %2002 = vmatpush.msra.mxu0 0.0
        %2003 = vmatpush.msra.mxu0 0.0
        %2004 = vmatpush.msra.mxu0 0.0
        %2005 = vmatpush.msra.mxu0 0.0
        %2006 = vmatpush.msra.mxu0 0.0
        %2007 = vmatpush.msra.mxu0 0.0
        %2008 = vmatpush.msra.mxu0 %v1991
        %2009 = vmatpush.msra.mxu0 %v1987
        %2010 = vmatpush.msra.mxu0 %v1983
        %2011 = vmatpush.msra.mxu0 %v1979
        %2012 = vmatpush.msra.mxu0 %v1975
        %2013 = vmatpush.msra.mxu0 %v1971
        %2014 = vmatpush.msra.mxu0 %v1967
        %2015 = vmatpush.msra.mxu0 %v1963
        %2016 = vmatmul.f32.gmra.mxu0 %v1998
        %v2017 = vpop.f32.mrf.mxu0
        %v2018 = vadd.f32 0.0, %v2017
        %2019 = vdwg.mxu0
        %2020 = vmatpush.msra.mxu0 0.0
        %2021 = vmatpush.msra.mxu0 0.0
        %2022 = vmatpush.msra.mxu0 0.0
        %2023 = vmatpush.msra.mxu0 0.0
        %2024 = vmatpush.msra.mxu0 0.0
        %2025 = vmatpush.msra.mxu0 0.0
        %2026 = vmatpush.msra.mxu0 0.0
        %2027 = vmatpush.msra.mxu0 0.0
        %2028 = vmatpush.msra.mxu0 %v1992
        %2029 = vmatpush.msra.mxu0 %v1988
        %2030 = vmatpush.msra.mxu0 %v1984
        %2031 = vmatpush.msra.mxu0 %v1980
        %2032 = vmatpush.msra.mxu0 %v1976
        %2033 = vmatpush.msra.mxu0 %v1972
        %2034 = vmatpush.msra.mxu0 %v1968
        %2035 = vmatpush.msra.mxu0 %v1964
        %2036 = vmatmul.f32.gmra.mxu0 %v1998
        %v2037 = vpop.f32.mrf.mxu0
        %v2038 = vadd.f32 0.0, %v2037
        %2039 = vdwg.mxu0
        %2040 = vmatpush.msra.mxu0 0.0
        %2041 = vmatpush.msra.mxu0 0.0
        %2042 = vmatpush.msra.mxu0 0.0
        %2043 = vmatpush.msra.mxu0 0.0
        %2044 = vmatpush.msra.mxu0 0.0
        %2045 = vmatpush.msra.mxu0 0.0
        %2046 = vmatpush.msra.mxu0 0.0
        %2047 = vmatpush.msra.mxu0 0.0
        %2048 = vmatpush.msra.mxu0 %v1993
        %2049 = vmatpush.msra.mxu0 %v1989
        %2050 = vmatpush.msra.mxu0 %v1985
        %2051 = vmatpush.msra.mxu0 %v1981
        %2052 = vmatpush.msra.mxu0 %v1977
        %2053 = vmatpush.msra.mxu0 %v1973
        %2054 = vmatpush.msra.mxu0 %v1969
        %2055 = vmatpush.msra.mxu0 %v1965
        %2056 = vmatmul.f32.gmra.mxu0 %v1998
        %v2057 = vpop.f32.mrf.mxu0
        %v2058 = vadd.f32 0.0, %v2057
        %2059 = vdwg.mxu0
        %2060 = vmatpush.msra.mxu0 0.0
        %2061 = vmatpush.msra.mxu0 0.0
        %2062 = vmatpush.msra.mxu0 0.0
        %2063 = vmatpush.msra.mxu0 0.0
        %2064 = vmatpush.msra.mxu0 0.0
        %2065 = vmatpush.msra.mxu0 0.0
        %2066 = vmatpush.msra.mxu0 0.0
        %2067 = vmatpush.msra.mxu0 0.0
        %2068 = vmatpush.msra.mxu0 %v1994
        %2069 = vmatpush.msra.mxu0 %v1990
        %2070 = vmatpush.msra.mxu0 %v1986
        %2071 = vmatpush.msra.mxu0 %v1982
        %2072 = vmatpush.msra.mxu0 %v1978
        %2073 = vmatpush.msra.mxu0 %v1974
        %2074 = vmatpush.msra.mxu0 %v1970
        %2075 = vmatpush.msra.mxu0 %v1966
        %2076 = vmatmul.f32.gmra.mxu0 %v1998
        %v2077 = vpop.f32.mrf.mxu0
        %v2078 = vadd.f32 0.0, %v2077
        %2079 = vdwg.mxu0
        %v2080 = vsel %vm1997, %v1919, 0
        %2082 = vmatpush.msra.mxu0 0.0
        %2083 = vmatpush.msra.mxu0 0.0
        %2084 = vmatpush.msra.mxu0 0.0
        %2085 = vmatpush.msra.mxu0 0.0
        %2086 = vmatpush.msra.mxu0 0.0
        %2087 = vmatpush.msra.mxu0 0.0
        %2088 = vmatpush.msra.mxu0 0.0
        %2089 = vmatpush.msra.mxu0 0.0
        %2090 = vmatpush.msra.mxu0 %v1958
        %2091 = vmatpush.msra.mxu0 %v1954
        %2092 = vmatpush.msra.mxu0 %v1950
        %2093 = vmatpush.msra.mxu0 %v1946
        %2094 = vmatpush.msra.mxu0 %v1942
        %2095 = vmatpush.msra.mxu0 %v1938
        %2096 = vmatpush.msra.mxu0 %v1934
        %2097 = vmatpush.msra.mxu0 %v1930
        %2098 = vmatmul.f32.gmra.mxu0 %v2080
        %v2099 = vpop.f32.mrf.mxu0
        %v2100 = vadd.f32 %v2018, %v2099
        %2101 = vdwg.mxu0
        %2102 = vmatpush.msra.mxu0 0.0
        %2103 = vmatpush.msra.mxu0 0.0
        %2104 = vmatpush.msra.mxu0 0.0
        %2105 = vmatpush.msra.mxu0 0.0
        %2106 = vmatpush.msra.mxu0 0.0
        %2107 = vmatpush.msra.mxu0 0.0
        %2108 = vmatpush.msra.mxu0 0.0
        %2109 = vmatpush.msra.mxu0 0.0
        %2110 = vmatpush.msra.mxu0 %v1959
        %2111 = vmatpush.msra.mxu0 %v1955
        %2112 = vmatpush.msra.mxu0 %v1951
        %2113 = vmatpush.msra.mxu0 %v1947
        %2114 = vmatpush.msra.mxu0 %v1943
        %2115 = vmatpush.msra.mxu0 %v1939
        %2116 = vmatpush.msra.mxu0 %v1935
        %2117 = vmatpush.msra.mxu0 %v1931
        %2118 = vmatmul.f32.gmra.mxu0 %v2080
        %v2119 = vpop.f32.mrf.mxu0
        %v2120 = vadd.f32 %v2038, %v2119
        %2121 = vdwg.mxu0
        %2122 = vmatpush.msra.mxu0 0.0
        %2123 = vmatpush.msra.mxu0 0.0
        %2124 = vmatpush.msra.mxu0 0.0
        %2125 = vmatpush.msra.mxu0 0.0
        %2126 = vmatpush.msra.mxu0 0.0
        %2127 = vmatpush.msra.mxu0 0.0
        %2128 = vmatpush.msra.mxu0 0.0
        %2129 = vmatpush.msra.mxu0 0.0
        %2130 = vmatpush.msra.mxu0 %v1960
        %2131 = vmatpush.msra.mxu0 %v1956
        %2132 = vmatpush.msra.mxu0 %v1952
        %2133 = vmatpush.msra.mxu0 %v1948
        %2134 = vmatpush.msra.mxu0 %v1944
        %2135 = vmatpush.msra.mxu0 %v1940
        %2136 = vmatpush.msra.mxu0 %v1936
        %2137 = vmatpush.msra.mxu0 %v1932
        %2138 = vmatmul.f32.gmra.mxu0 %v2080
        %v2139 = vpop.f32.mrf.mxu0
        %v2140 = vadd.f32 %v2058, %v2139
        %2141 = vdwg.mxu0
        %2142 = vmatpush.msra.mxu0 0.0
        %2143 = vmatpush.msra.mxu0 0.0
        %2144 = vmatpush.msra.mxu0 0.0
        %2145 = vmatpush.msra.mxu0 0.0
        %2146 = vmatpush.msra.mxu0 0.0
        %2147 = vmatpush.msra.mxu0 0.0
        %2148 = vmatpush.msra.mxu0 0.0
        %2149 = vmatpush.msra.mxu0 0.0
        %2150 = vmatpush.msra.mxu0 %v1961
        %2151 = vmatpush.msra.mxu0 %v1957
        %2152 = vmatpush.msra.mxu0 %v1953
        %2153 = vmatpush.msra.mxu0 %v1949
        %2154 = vmatpush.msra.mxu0 %v1945
        %2155 = vmatpush.msra.mxu0 %v1941
        %2156 = vmatpush.msra.mxu0 %v1937
        %2157 = vmatpush.msra.mxu0 %v1933
        %2158 = vmatmul.f32.gmra.mxu0 %v2080
        %v2159 = vpop.f32.mrf.mxu0
        %v2160 = vadd.f32 %v2078, %v2159
        %2161 = vdwg.mxu0
        %s2162 = scalar_lea.vmem [#allocation10], 512
        %v2163 = vld [vmem:[%s2162] sm:$0xff]
        %v2164 = vld [vmem:[%s2162 + $0x8] sm:$0xff]
        %v2165 = vld [vmem:[%s2162 + $0x10] sm:$0xff]
        %v2166 = vld [vmem:[%s2162 + $0x18] sm:$0xff]
        %v2167 = vld [vmem:[%s2162 + $0x20] sm:$0xff]
        %v2168 = vld [vmem:[%s2162 + $0x28] sm:$0xff]
        %v2169 = vld [vmem:[%s2162 + $0x30] sm:$0xff]
        %v2170 = vld [vmem:[%s2162 + $0x38] sm:$0xff]
        %v2171 = vld [vmem:[%s2162 + $0x40] sm:$0xff]
        %v2172 = vld [vmem:[%s2162 + $0x48] sm:$0xff]
        %v2173 = vld [vmem:[%s2162 + $0x50] sm:$0xff]
        %v2174 = vld [vmem:[%s2162 + $0x58] sm:$0xff]
        %v2175 = vld [vmem:[%s2162 + $0x60] sm:$0xff]
        %v2176 = vld [vmem:[%s2162 + $0x68] sm:$0xff]
        %v2177 = vld [vmem:[%s2162 + $0x70] sm:$0xff]
        %v2178 = vld [vmem:[%s2162 + $0x78] sm:$0xff]
        %v2179 = vld [vmem:[%s2162 + $0x80] sm:$0xff]
        %v2180 = vld [vmem:[%s2162 + $0x88] sm:$0xff]
        %v2181 = vld [vmem:[%s2162 + $0x90] sm:$0xff]
        %v2182 = vld [vmem:[%s2162 + $0x98] sm:$0xff]
        %v2183 = vld [vmem:[%s2162 + $0xa0] sm:$0xff]
        %v2184 = vld [vmem:[%s2162 + $0xa8] sm:$0xff]
        %v2185 = vld [vmem:[%s2162 + $0xb0] sm:$0xff]
        %v2186 = vld [vmem:[%s2162 + $0xb8] sm:$0xff]
        %v2187 = vld [vmem:[%s2162 + $0xc0] sm:$0xff]
        %v2188 = vld [vmem:[%s2162 + $0xc8] sm:$0xff]
        %v2189 = vld [vmem:[%s2162 + $0xd0] sm:$0xff]
        %v2190 = vld [vmem:[%s2162 + $0xd8] sm:$0xff]
        %v2191 = vld [vmem:[%s2162 + $0xe0] sm:$0xff]
        %v2192 = vld [vmem:[%s2162 + $0xe8] sm:$0xff]
        %v2193 = vld [vmem:[%s2162 + $0xf0] sm:$0xff]
        %v2194 = vld [vmem:[%s2162 + $0xf8] sm:$0xff]
        %v2195 = vrot.slane %v1919, 2
        %v2196 = vsel %vm1997, %v2195, 0
        %2198 = vmatpush.msra.mxu0 0.0
        %2199 = vmatpush.msra.mxu0 0.0
        %2200 = vmatpush.msra.mxu0 0.0
        %2201 = vmatpush.msra.mxu0 0.0
        %2202 = vmatpush.msra.mxu0 0.0
        %2203 = vmatpush.msra.mxu0 0.0
        %2204 = vmatpush.msra.mxu0 0.0
        %2205 = vmatpush.msra.mxu0 0.0
        %2206 = vmatpush.msra.mxu0 %v2191
        %2207 = vmatpush.msra.mxu0 %v2187
        %2208 = vmatpush.msra.mxu0 %v2183
        %2209 = vmatpush.msra.mxu0 %v2179
        %2210 = vmatpush.msra.mxu0 %v2175
        %2211 = vmatpush.msra.mxu0 %v2171
        %2212 = vmatpush.msra.mxu0 %v2167
        %2213 = vmatpush.msra.mxu0 %v2163
        %2214 = vmatmul.f32.gmra.mxu0 %v2196
        %v2215 = vpop.f32.mrf.mxu0
        %v2216 = vadd.f32 0.0, %v2215
        %2217 = vdwg.mxu0
        %2218 = vmatpush.msra.mxu0 0.0
        %2219 = vmatpush.msra.mxu0 0.0
        %2220 = vmatpush.msra.mxu0 0.0
        %2221 = vmatpush.msra.mxu0 0.0
        %2222 = vmatpush.msra.mxu0 0.0
        %2223 = vmatpush.msra.mxu0 0.0
        %2224 = vmatpush.msra.mxu0 0.0
        %2225 = vmatpush.msra.mxu0 0.0
        %2226 = vmatpush.msra.mxu0 %v2192
        %2227 = vmatpush.msra.mxu0 %v2188
        %2228 = vmatpush.msra.mxu0 %v2184
        %2229 = vmatpush.msra.mxu0 %v2180
        %2230 = vmatpush.msra.mxu0 %v2176
        %2231 = vmatpush.msra.mxu0 %v2172
        %2232 = vmatpush.msra.mxu0 %v2168
        %2233 = vmatpush.msra.mxu0 %v2164
        %2234 = vmatmul.f32.gmra.mxu0 %v2196
        %v2235 = vpop.f32.mrf.mxu0
        %v2236 = vadd.f32 0.0, %v2235
        %2237 = vdwg.mxu0
        %2238 = vmatpush.msra.mxu0 0.0
        %2239 = vmatpush.msra.mxu0 0.0
        %2240 = vmatpush.msra.mxu0 0.0
        %2241 = vmatpush.msra.mxu0 0.0
        %2242 = vmatpush.msra.mxu0 0.0
        %2243 = vmatpush.msra.mxu0 0.0
        %2244 = vmatpush.msra.mxu0 0.0
        %2245 = vmatpush.msra.mxu0 0.0
        %2246 = vmatpush.msra.mxu0 %v2193
        %2247 = vmatpush.msra.mxu0 %v2189
        %2248 = vmatpush.msra.mxu0 %v2185
        %2249 = vmatpush.msra.mxu0 %v2181
        %2250 = vmatpush.msra.mxu0 %v2177
        %2251 = vmatpush.msra.mxu0 %v2173
        %2252 = vmatpush.msra.mxu0 %v2169
        %2253 = vmatpush.msra.mxu0 %v2165
        %2254 = vmatmul.f32.gmra.mxu0 %v2196
        %v2255 = vpop.f32.mrf.mxu0
        %v2256 = vadd.f32 0.0, %v2255
        %2257 = vdwg.mxu0
        %2258 = vmatpush.msra.mxu0 0.0
        %2259 = vmatpush.msra.mxu0 0.0
        %2260 = vmatpush.msra.mxu0 0.0
        %2261 = vmatpush.msra.mxu0 0.0
        %2262 = vmatpush.msra.mxu0 0.0
        %2263 = vmatpush.msra.mxu0 0.0
        %2264 = vmatpush.msra.mxu0 0.0
        %2265 = vmatpush.msra.mxu0 0.0
        %2266 = vmatpush.msra.mxu0 %v2194
        %2267 = vmatpush.msra.mxu0 %v2190
        %2268 = vmatpush.msra.mxu0 %v2186
        %2269 = vmatpush.msra.mxu0 %v2182
        %2270 = vmatpush.msra.mxu0 %v2178
        %2271 = vmatpush.msra.mxu0 %v2174
        %2272 = vmatpush.msra.mxu0 %v2170
        %2273 = vmatpush.msra.mxu0 %v2166
        %2274 = vmatmul.f32.gmra.mxu0 %v2196
        %v2275 = vpop.f32.mrf.mxu0
        %v2276 = vadd.f32 0.0, %v2275
        %2277 = vdwg.mxu0
        %v2278 = vadd.f32 %v2100, %v2216
        %v2279 = vadd.f32 %v2120, %v2236
        %v2280 = vadd.f32 %v2140, %v2256
        %v2281 = vadd.f32 %v2160, %v2276
        %s2282 = scalar_lea.vmem [#allocation10], 768
        %v2283 = vld [vmem:[%s2282] sm:$0xff]
        %v2284 = vld [vmem:[%s2282 + $0x8] sm:$0xff]
        %v2285 = vld [vmem:[%s2282 + $0x10] sm:$0xff]
        %v2286 = vld [vmem:[%s2282 + $0x18] sm:$0xff]
        %v2287 = vld [vmem:[%s2282 + $0x20] sm:$0xff]
        %v2288 = vld [vmem:[%s2282 + $0x28] sm:$0xff]
        %v2289 = vld [vmem:[%s2282 + $0x30] sm:$0xff]
        %v2290 = vld [vmem:[%s2282 + $0x38] sm:$0xff]
        %v2291 = vld [vmem:[%s2282 + $0x40] sm:$0xff]
        %v2292 = vld [vmem:[%s2282 + $0x48] sm:$0xff]
        %v2293 = vld [vmem:[%s2282 + $0x50] sm:$0xff]
        %v2294 = vld [vmem:[%s2282 + $0x58] sm:$0xff]
        %v2295 = vld [vmem:[%s2282 + $0x60] sm:$0xff]
        %v2296 = vld [vmem:[%s2282 + $0x68] sm:$0xff]
        %v2297 = vld [vmem:[%s2282 + $0x70] sm:$0xff]
        %v2298 = vld [vmem:[%s2282 + $0x78] sm:$0xff]
        %v2299 = vld [vmem:[%s2282 + $0x80] sm:$0xff]
        %v2300 = vld [vmem:[%s2282 + $0x88] sm:$0xff]
        %v2301 = vld [vmem:[%s2282 + $0x90] sm:$0xff]
        %v2302 = vld [vmem:[%s2282 + $0x98] sm:$0xff]
        %v2303 = vld [vmem:[%s2282 + $0xa0] sm:$0xff]
        %v2304 = vld [vmem:[%s2282 + $0xa8] sm:$0xff]
        %v2305 = vld [vmem:[%s2282 + $0xb0] sm:$0xff]
        %v2306 = vld [vmem:[%s2282 + $0xb8] sm:$0xff]
        %v2307 = vld [vmem:[%s2282 + $0xc0] sm:$0xff]
        %v2308 = vld [vmem:[%s2282 + $0xc8] sm:$0xff]
        %v2309 = vld [vmem:[%s2282 + $0xd0] sm:$0xff]
        %v2310 = vld [vmem:[%s2282 + $0xd8] sm:$0xff]
        %v2311 = vld [vmem:[%s2282 + $0xe0] sm:$0xff]
        %v2312 = vld [vmem:[%s2282 + $0xe8] sm:$0xff]
        %v2313 = vld [vmem:[%s2282 + $0xf0] sm:$0xff]
        %v2314 = vld [vmem:[%s2282 + $0xf8] sm:$0xff]
        %v2315 = vrot.slane %v1919, 3
        %v2316 = vsel %vm1997, %v2315, 0
        %2318 = vmatpush.msra.mxu0 0.0
        %2319 = vmatpush.msra.mxu0 0.0
        %2320 = vmatpush.msra.mxu0 0.0
        %2321 = vmatpush.msra.mxu0 0.0
        %2322 = vmatpush.msra.mxu0 0.0
        %2323 = vmatpush.msra.mxu0 0.0
        %2324 = vmatpush.msra.mxu0 0.0
        %2325 = vmatpush.msra.mxu0 0.0
        %2326 = vmatpush.msra.mxu0 %v2311
        %2327 = vmatpush.msra.mxu0 %v2307
        %2328 = vmatpush.msra.mxu0 %v2303
        %2329 = vmatpush.msra.mxu0 %v2299
        %2330 = vmatpush.msra.mxu0 %v2295
        %2331 = vmatpush.msra.mxu0 %v2291
        %2332 = vmatpush.msra.mxu0 %v2287
        %2333 = vmatpush.msra.mxu0 %v2283
        %2334 = vmatmul.f32.gmra.mxu0 %v2316
        %v2335 = vpop.f32.mrf.mxu0
        %v2336 = vadd.f32 0.0, %v2335
        %2337 = vdwg.mxu0
        %2338 = vmatpush.msra.mxu0 0.0
        %2339 = vmatpush.msra.mxu0 0.0
        %2340 = vmatpush.msra.mxu0 0.0
        %2341 = vmatpush.msra.mxu0 0.0
        %2342 = vmatpush.msra.mxu0 0.0
        %2343 = vmatpush.msra.mxu0 0.0
        %2344 = vmatpush.msra.mxu0 0.0
        %2345 = vmatpush.msra.mxu0 0.0
        %2346 = vmatpush.msra.mxu0 %v2312
        %2347 = vmatpush.msra.mxu0 %v2308
        %2348 = vmatpush.msra.mxu0 %v2304
        %2349 = vmatpush.msra.mxu0 %v2300
        %2350 = vmatpush.msra.mxu0 %v2296
        %2351 = vmatpush.msra.mxu0 %v2292
        %2352 = vmatpush.msra.mxu0 %v2288
        %2353 = vmatpush.msra.mxu0 %v2284
        %2354 = vmatmul.f32.gmra.mxu0 %v2316
        %v2355 = vpop.f32.mrf.mxu0
        %v2356 = vadd.f32 0.0, %v2355
        %2357 = vdwg.mxu0
        %2358 = vmatpush.msra.mxu0 0.0
        %2359 = vmatpush.msra.mxu0 0.0
        %2360 = vmatpush.msra.mxu0 0.0
        %2361 = vmatpush.msra.mxu0 0.0
        %2362 = vmatpush.msra.mxu0 0.0
        %2363 = vmatpush.msra.mxu0 0.0
        %2364 = vmatpush.msra.mxu0 0.0
        %2365 = vmatpush.msra.mxu0 0.0
        %2366 = vmatpush.msra.mxu0 %v2313
        %2367 = vmatpush.msra.mxu0 %v2309
        %2368 = vmatpush.msra.mxu0 %v2305
        %2369 = vmatpush.msra.mxu0 %v2301
        %2370 = vmatpush.msra.mxu0 %v2297
        %2371 = vmatpush.msra.mxu0 %v2293
        %2372 = vmatpush.msra.mxu0 %v2289
        %2373 = vmatpush.msra.mxu0 %v2285
        %2374 = vmatmul.f32.gmra.mxu0 %v2316
        %v2375 = vpop.f32.mrf.mxu0
        %v2376 = vadd.f32 0.0, %v2375
        %2377 = vdwg.mxu0
        %2378 = vmatpush.msra.mxu0 0.0
        %2379 = vmatpush.msra.mxu0 0.0
        %2380 = vmatpush.msra.mxu0 0.0
        %2381 = vmatpush.msra.mxu0 0.0
        %2382 = vmatpush.msra.mxu0 0.0
        %2383 = vmatpush.msra.mxu0 0.0
        %2384 = vmatpush.msra.mxu0 0.0
        %2385 = vmatpush.msra.mxu0 0.0
        %2386 = vmatpush.msra.mxu0 %v2314
        %2387 = vmatpush.msra.mxu0 %v2310
        %2388 = vmatpush.msra.mxu0 %v2306
        %2389 = vmatpush.msra.mxu0 %v2302
        %2390 = vmatpush.msra.mxu0 %v2298
        %2391 = vmatpush.msra.mxu0 %v2294
        %2392 = vmatpush.msra.mxu0 %v2290
        %2393 = vmatpush.msra.mxu0 %v2286
        %2394 = vmatmul.f32.gmra.mxu0 %v2316
        %v2395 = vpop.f32.mrf.mxu0
        %v2396 = vadd.f32 0.0, %v2395
        %2397 = vdwg.mxu0
        %v2398 = vadd.f32 %v2278, %v2336
        %v2399 = vadd.f32 %v2279, %v2356
        %v2400 = vadd.f32 %v2280, %v2376
        %v2401 = vadd.f32 %v2281, %v2396
        %s2402 = scalar_lea.vmem [#allocation10], 1024
        %v2403 = vld [vmem:[%s2402] sm:$0xff]
        %v2404 = vld [vmem:[%s2402 + $0x8] sm:$0xff]
        %v2405 = vld [vmem:[%s2402 + $0x10] sm:$0xff]
        %v2406 = vld [vmem:[%s2402 + $0x18] sm:$0xff]
        %v2407 = vld [vmem:[%s2402 + $0x20] sm:$0xff]
        %v2408 = vld [vmem:[%s2402 + $0x28] sm:$0xff]
        %v2409 = vld [vmem:[%s2402 + $0x30] sm:$0xff]
        %v2410 = vld [vmem:[%s2402 + $0x38] sm:$0xff]
        %v2411 = vld [vmem:[%s2402 + $0x40] sm:$0xff]
        %v2412 = vld [vmem:[%s2402 + $0x48] sm:$0xff]
        %v2413 = vld [vmem:[%s2402 + $0x50] sm:$0xff]
        %v2414 = vld [vmem:[%s2402 + $0x58] sm:$0xff]
        %v2415 = vld [vmem:[%s2402 + $0x60] sm:$0xff]
        %v2416 = vld [vmem:[%s2402 + $0x68] sm:$0xff]
        %v2417 = vld [vmem:[%s2402 + $0x70] sm:$0xff]
        %v2418 = vld [vmem:[%s2402 + $0x78] sm:$0xff]
        %v2419 = vld [vmem:[%s2402 + $0x80] sm:$0xff]
        %v2420 = vld [vmem:[%s2402 + $0x88] sm:$0xff]
        %v2421 = vld [vmem:[%s2402 + $0x90] sm:$0xff]
        %v2422 = vld [vmem:[%s2402 + $0x98] sm:$0xff]
        %v2423 = vld [vmem:[%s2402 + $0xa0] sm:$0xff]
        %v2424 = vld [vmem:[%s2402 + $0xa8] sm:$0xff]
        %v2425 = vld [vmem:[%s2402 + $0xb0] sm:$0xff]
        %v2426 = vld [vmem:[%s2402 + $0xb8] sm:$0xff]
        %v2427 = vld [vmem:[%s2402 + $0xc0] sm:$0xff]
        %v2428 = vld [vmem:[%s2402 + $0xc8] sm:$0xff]
        %v2429 = vld [vmem:[%s2402 + $0xd0] sm:$0xff]
        %v2430 = vld [vmem:[%s2402 + $0xd8] sm:$0xff]
        %v2431 = vld [vmem:[%s2402 + $0xe0] sm:$0xff]
        %v2432 = vld [vmem:[%s2402 + $0xe8] sm:$0xff]
        %v2433 = vld [vmem:[%s2402 + $0xf0] sm:$0xff]
        %v2434 = vld [vmem:[%s2402 + $0xf8] sm:$0xff]
        %v2435 = vrot.slane %v1919, 4
        %v2436 = vsel %vm1997, %v2435, 0
        %2438 = vmatpush.msra.mxu0 0.0
        %2439 = vmatpush.msra.mxu0 0.0
        %2440 = vmatpush.msra.mxu0 0.0
        %2441 = vmatpush.msra.mxu0 0.0
        %2442 = vmatpush.msra.mxu0 0.0
        %2443 = vmatpush.msra.mxu0 0.0
        %2444 = vmatpush.msra.mxu0 0.0
        %2445 = vmatpush.msra.mxu0 0.0
        %2446 = vmatpush.msra.mxu0 %v2431
        %2447 = vmatpush.msra.mxu0 %v2427
        %2448 = vmatpush.msra.mxu0 %v2423
        %2449 = vmatpush.msra.mxu0 %v2419
        %2450 = vmatpush.msra.mxu0 %v2415
        %2451 = vmatpush.msra.mxu0 %v2411
        %2452 = vmatpush.msra.mxu0 %v2407
        %2453 = vmatpush.msra.mxu0 %v2403
        %2454 = vmatmul.f32.gmra.mxu0 %v2436
        %v2455 = vpop.f32.mrf.mxu0
        %v2456 = vadd.f32 0.0, %v2455
        %2457 = vdwg.mxu0
        %2458 = vmatpush.msra.mxu0 0.0
        %2459 = vmatpush.msra.mxu0 0.0
        %2460 = vmatpush.msra.mxu0 0.0
        %2461 = vmatpush.msra.mxu0 0.0
        %2462 = vmatpush.msra.mxu0 0.0
        %2463 = vmatpush.msra.mxu0 0.0
        %2464 = vmatpush.msra.mxu0 0.0
        %2465 = vmatpush.msra.mxu0 0.0
        %2466 = vmatpush.msra.mxu0 %v2432
        %2467 = vmatpush.msra.mxu0 %v2428
        %2468 = vmatpush.msra.mxu0 %v2424
        %2469 = vmatpush.msra.mxu0 %v2420
        %2470 = vmatpush.msra.mxu0 %v2416
        %2471 = vmatpush.msra.mxu0 %v2412
        %2472 = vmatpush.msra.mxu0 %v2408
        %2473 = vmatpush.msra.mxu0 %v2404
        %2474 = vmatmul.f32.gmra.mxu0 %v2436
        %v2475 = vpop.f32.mrf.mxu0
        %v2476 = vadd.f32 0.0, %v2475
        %2477 = vdwg.mxu0
        %2478 = vmatpush.msra.mxu0 0.0
        %2479 = vmatpush.msra.mxu0 0.0
        %2480 = vmatpush.msra.mxu0 0.0
        %2481 = vmatpush.msra.mxu0 0.0
        %2482 = vmatpush.msra.mxu0 0.0
        %2483 = vmatpush.msra.mxu0 0.0
        %2484 = vmatpush.msra.mxu0 0.0
        %2485 = vmatpush.msra.mxu0 0.0
        %2486 = vmatpush.msra.mxu0 %v2433
        %2487 = vmatpush.msra.mxu0 %v2429
        %2488 = vmatpush.msra.mxu0 %v2425
        %2489 = vmatpush.msra.mxu0 %v2421
        %2490 = vmatpush.msra.mxu0 %v2417
        %2491 = vmatpush.msra.mxu0 %v2413
        %2492 = vmatpush.msra.mxu0 %v2409
        %2493 = vmatpush.msra.mxu0 %v2405
        %2494 = vmatmul.f32.gmra.mxu0 %v2436
        %v2495 = vpop.f32.mrf.mxu0
        %v2496 = vadd.f32 0.0, %v2495
        %2497 = vdwg.mxu0
        %2498 = vmatpush.msra.mxu0 0.0
        %2499 = vmatpush.msra.mxu0 0.0
        %2500 = vmatpush.msra.mxu0 0.0
        %2501 = vmatpush.msra.mxu0 0.0
        %2502 = vmatpush.msra.mxu0 0.0
        %2503 = vmatpush.msra.mxu0 0.0
        %2504 = vmatpush.msra.mxu0 0.0
        %2505 = vmatpush.msra.mxu0 0.0
        %2506 = vmatpush.msra.mxu0 %v2434
        %2507 = vmatpush.msra.mxu0 %v2430
        %2508 = vmatpush.msra.mxu0 %v2426
        %2509 = vmatpush.msra.mxu0 %v2422
        %2510 = vmatpush.msra.mxu0 %v2418
        %2511 = vmatpush.msra.mxu0 %v2414
        %2512 = vmatpush.msra.mxu0 %v2410
        %2513 = vmatpush.msra.mxu0 %v2406
        %2514 = vmatmul.f32.gmra.mxu0 %v2436
        %v2515 = vpop.f32.mrf.mxu0
        %v2516 = vadd.f32 0.0, %v2515
        %2517 = vdwg.mxu0
        %v2518 = vadd.f32 %v2398, %v2456
        %v2519 = vadd.f32 %v2399, %v2476
        %v2520 = vadd.f32 %v2400, %v2496
        %v2521 = vadd.f32 %v2401, %v2516
        %s2522 = scalar_lea.vmem [#allocation10], 1280
        %v2523 = vld [vmem:[%s2522] sm:$0xff]
        %v2524 = vld [vmem:[%s2522 + $0x8] sm:$0xff]
        %v2525 = vld [vmem:[%s2522 + $0x10] sm:$0xff]
        %v2526 = vld [vmem:[%s2522 + $0x18] sm:$0xff]
        %v2527 = vld [vmem:[%s2522 + $0x20] sm:$0xff]
        %v2528 = vld [vmem:[%s2522 + $0x28] sm:$0xff]
        %v2529 = vld [vmem:[%s2522 + $0x30] sm:$0xff]
        %v2530 = vld [vmem:[%s2522 + $0x38] sm:$0xff]
        %v2531 = vld [vmem:[%s2522 + $0x40] sm:$0xff]
        %v2532 = vld [vmem:[%s2522 + $0x48] sm:$0xff]
        %v2533 = vld [vmem:[%s2522 + $0x50] sm:$0xff]
        %v2534 = vld [vmem:[%s2522 + $0x58] sm:$0xff]
        %v2535 = vld [vmem:[%s2522 + $0x60] sm:$0xff]
        %v2536 = vld [vmem:[%s2522 + $0x68] sm:$0xff]
        %v2537 = vld [vmem:[%s2522 + $0x70] sm:$0xff]
        %v2538 = vld [vmem:[%s2522 + $0x78] sm:$0xff]
        %v2539 = vld [vmem:[%s2522 + $0x80] sm:$0xff]
        %v2540 = vld [vmem:[%s2522 + $0x88] sm:$0xff]
        %v2541 = vld [vmem:[%s2522 + $0x90] sm:$0xff]
        %v2542 = vld [vmem:[%s2522 + $0x98] sm:$0xff]
        %v2543 = vld [vmem:[%s2522 + $0xa0] sm:$0xff]
        %v2544 = vld [vmem:[%s2522 + $0xa8] sm:$0xff]
        %v2545 = vld [vmem:[%s2522 + $0xb0] sm:$0xff]
        %v2546 = vld [vmem:[%s2522 + $0xb8] sm:$0xff]
        %v2547 = vld [vmem:[%s2522 + $0xc0] sm:$0xff]
        %v2548 = vld [vmem:[%s2522 + $0xc8] sm:$0xff]
        %v2549 = vld [vmem:[%s2522 + $0xd0] sm:$0xff]
        %v2550 = vld [vmem:[%s2522 + $0xd8] sm:$0xff]
        %v2551 = vld [vmem:[%s2522 + $0xe0] sm:$0xff]
        %v2552 = vld [vmem:[%s2522 + $0xe8] sm:$0xff]
        %v2553 = vld [vmem:[%s2522 + $0xf0] sm:$0xff]
        %v2554 = vld [vmem:[%s2522 + $0xf8] sm:$0xff]
        %v2555 = vrot.slane %v1919, 5
        %v2556 = vsel %vm1997, %v2555, 0
        %2558 = vmatpush.msra.mxu0 0.0
        %2559 = vmatpush.msra.mxu0 0.0
        %2560 = vmatpush.msra.mxu0 0.0
        %2561 = vmatpush.msra.mxu0 0.0
        %2562 = vmatpush.msra.mxu0 0.0
        %2563 = vmatpush.msra.mxu0 0.0
        %2564 = vmatpush.msra.mxu0 0.0
        %2565 = vmatpush.msra.mxu0 0.0
        %2566 = vmatpush.msra.mxu0 %v2551
        %2567 = vmatpush.msra.mxu0 %v2547
        %2568 = vmatpush.msra.mxu0 %v2543
        %2569 = vmatpush.msra.mxu0 %v2539
        %2570 = vmatpush.msra.mxu0 %v2535
        %2571 = vmatpush.msra.mxu0 %v2531
        %2572 = vmatpush.msra.mxu0 %v2527
        %2573 = vmatpush.msra.mxu0 %v2523
        %2574 = vmatmul.f32.gmra.mxu0 %v2556
        %v2575 = vpop.f32.mrf.mxu0
        %v2576 = vadd.f32 0.0, %v2575
        %2577 = vdwg.mxu0
        %2578 = vmatpush.msra.mxu0 0.0
        %2579 = vmatpush.msra.mxu0 0.0
        %2580 = vmatpush.msra.mxu0 0.0
        %2581 = vmatpush.msra.mxu0 0.0
        %2582 = vmatpush.msra.mxu0 0.0
        %2583 = vmatpush.msra.mxu0 0.0
        %2584 = vmatpush.msra.mxu0 0.0
        %2585 = vmatpush.msra.mxu0 0.0
        %2586 = vmatpush.msra.mxu0 %v2552
        %2587 = vmatpush.msra.mxu0 %v2548
        %2588 = vmatpush.msra.mxu0 %v2544
        %2589 = vmatpush.msra.mxu0 %v2540
        %2590 = vmatpush.msra.mxu0 %v2536
        %2591 = vmatpush.msra.mxu0 %v2532
        %2592 = vmatpush.msra.mxu0 %v2528
        %2593 = vmatpush.msra.mxu0 %v2524
        %2594 = vmatmul.f32.gmra.mxu0 %v2556
        %v2595 = vpop.f32.mrf.mxu0
        %v2596 = vadd.f32 0.0, %v2595
        %2597 = vdwg.mxu0
        %2598 = vmatpush.msra.mxu0 0.0
        %2599 = vmatpush.msra.mxu0 0.0
        %2600 = vmatpush.msra.mxu0 0.0
        %2601 = vmatpush.msra.mxu0 0.0
        %2602 = vmatpush.msra.mxu0 0.0
        %2603 = vmatpush.msra.mxu0 0.0
        %2604 = vmatpush.msra.mxu0 0.0
        %2605 = vmatpush.msra.mxu0 0.0
        %2606 = vmatpush.msra.mxu0 %v2553
        %2607 = vmatpush.msra.mxu0 %v2549
        %2608 = vmatpush.msra.mxu0 %v2545
        %2609 = vmatpush.msra.mxu0 %v2541
        %2610 = vmatpush.msra.mxu0 %v2537
        %2611 = vmatpush.msra.mxu0 %v2533
        %2612 = vmatpush.msra.mxu0 %v2529
        %2613 = vmatpush.msra.mxu0 %v2525
        %2614 = vmatmul.f32.gmra.mxu0 %v2556
        %v2615 = vpop.f32.mrf.mxu0
        %v2616 = vadd.f32 0.0, %v2615
        %2617 = vdwg.mxu0
        %2618 = vmatpush.msra.mxu0 0.0
        %2619 = vmatpush.msra.mxu0 0.0
        %2620 = vmatpush.msra.mxu0 0.0
        %2621 = vmatpush.msra.mxu0 0.0
        %2622 = vmatpush.msra.mxu0 0.0
        %2623 = vmatpush.msra.mxu0 0.0
        %2624 = vmatpush.msra.mxu0 0.0
        %2625 = vmatpush.msra.mxu0 0.0
        %2626 = vmatpush.msra.mxu0 %v2554
        %2627 = vmatpush.msra.mxu0 %v2550
        %2628 = vmatpush.msra.mxu0 %v2546
        %2629 = vmatpush.msra.mxu0 %v2542
        %2630 = vmatpush.msra.mxu0 %v2538
        %2631 = vmatpush.msra.mxu0 %v2534
        %2632 = vmatpush.msra.mxu0 %v2530
        %2633 = vmatpush.msra.mxu0 %v2526
        %2634 = vmatmul.f32.gmra.mxu0 %v2556
        %v2635 = vpop.f32.mrf.mxu0
        %v2636 = vadd.f32 0.0, %v2635
        %2637 = vdwg.mxu0
        %v2638 = vadd.f32 %v2518, %v2576
        %v2639 = vadd.f32 %v2519, %v2596
        %v2640 = vadd.f32 %v2520, %v2616
        %v2641 = vadd.f32 %v2521, %v2636
        %s2642 = scalar_lea.vmem [#allocation10], 1536
        %v2643 = vld [vmem:[%s2642] sm:$0xff]
        %v2644 = vld [vmem:[%s2642 + $0x8] sm:$0xff]
        %v2645 = vld [vmem:[%s2642 + $0x10] sm:$0xff]
        %v2646 = vld [vmem:[%s2642 + $0x18] sm:$0xff]
        %v2647 = vld [vmem:[%s2642 + $0x20] sm:$0xff]
        %v2648 = vld [vmem:[%s2642 + $0x28] sm:$0xff]
        %v2649 = vld [vmem:[%s2642 + $0x30] sm:$0xff]
        %v2650 = vld [vmem:[%s2642 + $0x38] sm:$0xff]
        %v2651 = vld [vmem:[%s2642 + $0x40] sm:$0xff]
        %v2652 = vld [vmem:[%s2642 + $0x48] sm:$0xff]
        %v2653 = vld [vmem:[%s2642 + $0x50] sm:$0xff]
        %v2654 = vld [vmem:[%s2642 + $0x58] sm:$0xff]
        %v2655 = vld [vmem:[%s2642 + $0x60] sm:$0xff]
        %v2656 = vld [vmem:[%s2642 + $0x68] sm:$0xff]
        %v2657 = vld [vmem:[%s2642 + $0x70] sm:$0xff]
        %v2658 = vld [vmem:[%s2642 + $0x78] sm:$0xff]
        %v2659 = vld [vmem:[%s2642 + $0x80] sm:$0xff]
        %v2660 = vld [vmem:[%s2642 + $0x88] sm:$0xff]
        %v2661 = vld [vmem:[%s2642 + $0x90] sm:$0xff]
        %v2662 = vld [vmem:[%s2642 + $0x98] sm:$0xff]
        %v2663 = vld [vmem:[%s2642 + $0xa0] sm:$0xff]
        %v2664 = vld [vmem:[%s2642 + $0xa8] sm:$0xff]
        %v2665 = vld [vmem:[%s2642 + $0xb0] sm:$0xff]
        %v2666 = vld [vmem:[%s2642 + $0xb8] sm:$0xff]
        %v2667 = vld [vmem:[%s2642 + $0xc0] sm:$0xff]
        %v2668 = vld [vmem:[%s2642 + $0xc8] sm:$0xff]
        %v2669 = vld [vmem:[%s2642 + $0xd0] sm:$0xff]
        %v2670 = vld [vmem:[%s2642 + $0xd8] sm:$0xff]
        %v2671 = vld [vmem:[%s2642 + $0xe0] sm:$0xff]
        %v2672 = vld [vmem:[%s2642 + $0xe8] sm:$0xff]
        %v2673 = vld [vmem:[%s2642 + $0xf0] sm:$0xff]
        %v2674 = vld [vmem:[%s2642 + $0xf8] sm:$0xff]
        %v2675 = vrot.slane %v1919, 6
        %v2676 = vsel %vm1997, %v2675, 0
        %2678 = vmatpush.msra.mxu0 0.0
        %2679 = vmatpush.msra.mxu0 0.0
        %2680 = vmatpush.msra.mxu0 0.0
        %2681 = vmatpush.msra.mxu0 0.0
        %2682 = vmatpush.msra.mxu0 0.0
        %2683 = vmatpush.msra.mxu0 0.0
        %2684 = vmatpush.msra.mxu0 0.0
        %2685 = vmatpush.msra.mxu0 0.0
        %2686 = vmatpush.msra.mxu0 %v2671
        %2687 = vmatpush.msra.mxu0 %v2667
        %2688 = vmatpush.msra.mxu0 %v2663
        %2689 = vmatpush.msra.mxu0 %v2659
        %2690 = vmatpush.msra.mxu0 %v2655
        %2691 = vmatpush.msra.mxu0 %v2651
        %2692 = vmatpush.msra.mxu0 %v2647
        %2693 = vmatpush.msra.mxu0 %v2643
        %2694 = vmatmul.f32.gmra.mxu0 %v2676
        %v2695 = vpop.f32.mrf.mxu0
        %v2696 = vadd.f32 0.0, %v2695
        %2697 = vdwg.mxu0
        %2698 = vmatpush.msra.mxu0 0.0
        %2699 = vmatpush.msra.mxu0 0.0
        %2700 = vmatpush.msra.mxu0 0.0
        %2701 = vmatpush.msra.mxu0 0.0
        %2702 = vmatpush.msra.mxu0 0.0
        %2703 = vmatpush.msra.mxu0 0.0
        %2704 = vmatpush.msra.mxu0 0.0
        %2705 = vmatpush.msra.mxu0 0.0
        %2706 = vmatpush.msra.mxu0 %v2672
        %2707 = vmatpush.msra.mxu0 %v2668
        %2708 = vmatpush.msra.mxu0 %v2664
        %2709 = vmatpush.msra.mxu0 %v2660
        %2710 = vmatpush.msra.mxu0 %v2656
        %2711 = vmatpush.msra.mxu0 %v2652
        %2712 = vmatpush.msra.mxu0 %v2648
        %2713 = vmatpush.msra.mxu0 %v2644
        %2714 = vmatmul.f32.gmra.mxu0 %v2676
        %v2715 = vpop.f32.mrf.mxu0
        %v2716 = vadd.f32 0.0, %v2715
        %2717 = vdwg.mxu0
        %2718 = vmatpush.msra.mxu0 0.0
        %2719 = vmatpush.msra.mxu0 0.0
        %2720 = vmatpush.msra.mxu0 0.0
        %2721 = vmatpush.msra.mxu0 0.0
        %2722 = vmatpush.msra.mxu0 0.0
        %2723 = vmatpush.msra.mxu0 0.0
        %2724 = vmatpush.msra.mxu0 0.0
        %2725 = vmatpush.msra.mxu0 0.0
        %2726 = vmatpush.msra.mxu0 %v2673
        %2727 = vmatpush.msra.mxu0 %v2669
        %2728 = vmatpush.msra.mxu0 %v2665
        %2729 = vmatpush.msra.mxu0 %v2661
        %2730 = vmatpush.msra.mxu0 %v2657
        %2731 = vmatpush.msra.mxu0 %v2653
        %2732 = vmatpush.msra.mxu0 %v2649
        %2733 = vmatpush.msra.mxu0 %v2645
        %2734 = vmatmul.f32.gmra.mxu0 %v2676
        %v2735 = vpop.f32.mrf.mxu0
        %v2736 = vadd.f32 0.0, %v2735
        %2737 = vdwg.mxu0
        %2738 = vmatpush.msra.mxu0 0.0
        %2739 = vmatpush.msra.mxu0 0.0
        %2740 = vmatpush.msra.mxu0 0.0
        %2741 = vmatpush.msra.mxu0 0.0
        %2742 = vmatpush.msra.mxu0 0.0
        %2743 = vmatpush.msra.mxu0 0.0
        %2744 = vmatpush.msra.mxu0 0.0
        %2745 = vmatpush.msra.mxu0 0.0
        %2746 = vmatpush.msra.mxu0 %v2674
        %2747 = vmatpush.msra.mxu0 %v2670
        %2748 = vmatpush.msra.mxu0 %v2666
        %2749 = vmatpush.msra.mxu0 %v2662
        %2750 = vmatpush.msra.mxu0 %v2658
        %2751 = vmatpush.msra.mxu0 %v2654
        %2752 = vmatpush.msra.mxu0 %v2650
        %2753 = vmatpush.msra.mxu0 %v2646
        %2754 = vmatmul.f32.gmra.mxu0 %v2676
        %v2755 = vpop.f32.mrf.mxu0
        %v2756 = vadd.f32 0.0, %v2755
        %2757 = vdwg.mxu0
        %v2758 = vadd.f32 %v2638, %v2696
        %v2759 = vadd.f32 %v2639, %v2716
        %v2760 = vadd.f32 %v2640, %v2736
        %v2761 = vadd.f32 %v2641, %v2756
        %s2762 = scalar_lea.vmem [#allocation10], 1792
        %v2763 = vld [vmem:[%s2762] sm:$0xff]
        %v2764 = vld [vmem:[%s2762 + $0x8] sm:$0xff]
        %v2765 = vld [vmem:[%s2762 + $0x10] sm:$0xff]
        %v2766 = vld [vmem:[%s2762 + $0x18] sm:$0xff]
        %v2767 = vld [vmem:[%s2762 + $0x20] sm:$0xff]
        %v2768 = vld [vmem:[%s2762 + $0x28] sm:$0xff]
        %v2769 = vld [vmem:[%s2762 + $0x30] sm:$0xff]
        %v2770 = vld [vmem:[%s2762 + $0x38] sm:$0xff]
        %v2771 = vld [vmem:[%s2762 + $0x40] sm:$0xff]
        %v2772 = vld [vmem:[%s2762 + $0x48] sm:$0xff]
        %v2773 = vld [vmem:[%s2762 + $0x50] sm:$0xff]
        %v2774 = vld [vmem:[%s2762 + $0x58] sm:$0xff]
        %v2775 = vld [vmem:[%s2762 + $0x60] sm:$0xff]
        %v2776 = vld [vmem:[%s2762 + $0x68] sm:$0xff]
        %v2777 = vld [vmem:[%s2762 + $0x70] sm:$0xff]
        %v2778 = vld [vmem:[%s2762 + $0x78] sm:$0xff]
        %v2779 = vld [vmem:[%s2762 + $0x80] sm:$0xff]
        %v2780 = vld [vmem:[%s2762 + $0x88] sm:$0xff]
        %v2781 = vld [vmem:[%s2762 + $0x90] sm:$0xff]
        %v2782 = vld [vmem:[%s2762 + $0x98] sm:$0xff]
        %v2783 = vld [vmem:[%s2762 + $0xa0] sm:$0xff]
        %v2784 = vld [vmem:[%s2762 + $0xa8] sm:$0xff]
        %v2785 = vld [vmem:[%s2762 + $0xb0] sm:$0xff]
        %v2786 = vld [vmem:[%s2762 + $0xb8] sm:$0xff]
        %v2787 = vld [vmem:[%s2762 + $0xc0] sm:$0xff]
        %v2788 = vld [vmem:[%s2762 + $0xc8] sm:$0xff]
        %v2789 = vld [vmem:[%s2762 + $0xd0] sm:$0xff]
        %v2790 = vld [vmem:[%s2762 + $0xd8] sm:$0xff]
        %v2791 = vld [vmem:[%s2762 + $0xe0] sm:$0xff]
        %v2792 = vld [vmem:[%s2762 + $0xe8] sm:$0xff]
        %v2793 = vld [vmem:[%s2762 + $0xf0] sm:$0xff]
        %v2794 = vld [vmem:[%s2762 + $0xf8] sm:$0xff]
        %v2795 = vrot.slane %v1919, 7
        %v2796 = vsel %vm1997, %v2795, 0
        %2798 = vmatpush.msra.mxu0 0.0
        %2799 = vmatpush.msra.mxu0 0.0
        %2800 = vmatpush.msra.mxu0 0.0
        %2801 = vmatpush.msra.mxu0 0.0
        %2802 = vmatpush.msra.mxu0 0.0
        %2803 = vmatpush.msra.mxu0 0.0
        %2804 = vmatpush.msra.mxu0 0.0
        %2805 = vmatpush.msra.mxu0 0.0
        %2806 = vmatpush.msra.mxu0 %v2791
        %2807 = vmatpush.msra.mxu0 %v2787
        %2808 = vmatpush.msra.mxu0 %v2783
        %2809 = vmatpush.msra.mxu0 %v2779
        %2810 = vmatpush.msra.mxu0 %v2775
        %2811 = vmatpush.msra.mxu0 %v2771
        %2812 = vmatpush.msra.mxu0 %v2767
        %2813 = vmatpush.msra.mxu0 %v2763
        %2814 = vmatmul.f32.gmra.mxu0 %v2796
        %v2815 = vpop.f32.mrf.mxu0
        %v2816 = vadd.f32 0.0, %v2815
        %2817 = vdwg.mxu0
        %2818 = vmatpush.msra.mxu0 0.0
        %2819 = vmatpush.msra.mxu0 0.0
        %2820 = vmatpush.msra.mxu0 0.0
        %2821 = vmatpush.msra.mxu0 0.0
        %2822 = vmatpush.msra.mxu0 0.0
        %2823 = vmatpush.msra.mxu0 0.0
        %2824 = vmatpush.msra.mxu0 0.0
        %2825 = vmatpush.msra.mxu0 0.0
        %2826 = vmatpush.msra.mxu0 %v2792
        %2827 = vmatpush.msra.mxu0 %v2788
        %2828 = vmatpush.msra.mxu0 %v2784
        %2829 = vmatpush.msra.mxu0 %v2780
        %2830 = vmatpush.msra.mxu0 %v2776
        %2831 = vmatpush.msra.mxu0 %v2772
        %2832 = vmatpush.msra.mxu0 %v2768
        %2833 = vmatpush.msra.mxu0 %v2764
        %2834 = vmatmul.f32.gmra.mxu0 %v2796
        %v2835 = vpop.f32.mrf.mxu0
        %v2836 = vadd.f32 0.0, %v2835
        %2837 = vdwg.mxu0
        %2838 = vmatpush.msra.mxu0 0.0
        %2839 = vmatpush.msra.mxu0 0.0
        %2840 = vmatpush.msra.mxu0 0.0
        %2841 = vmatpush.msra.mxu0 0.0
        %2842 = vmatpush.msra.mxu0 0.0
        %2843 = vmatpush.msra.mxu0 0.0
        %2844 = vmatpush.msra.mxu0 0.0
        %2845 = vmatpush.msra.mxu0 0.0
        %2846 = vmatpush.msra.mxu0 %v2793
        %2847 = vmatpush.msra.mxu0 %v2789
        %2848 = vmatpush.msra.mxu0 %v2785
        %2849 = vmatpush.msra.mxu0 %v2781
        %2850 = vmatpush.msra.mxu0 %v2777
        %2851 = vmatpush.msra.mxu0 %v2773
        %2852 = vmatpush.msra.mxu0 %v2769
        %2853 = vmatpush.msra.mxu0 %v2765
        %2854 = vmatmul.f32.gmra.mxu0 %v2796
        %v2855 = vpop.f32.mrf.mxu0
        %v2856 = vadd.f32 0.0, %v2855
        %2857 = vdwg.mxu0
        %2858 = vmatpush.msra.mxu0 0.0
        %2859 = vmatpush.msra.mxu0 0.0
        %2860 = vmatpush.msra.mxu0 0.0
        %2861 = vmatpush.msra.mxu0 0.0
        %2862 = vmatpush.msra.mxu0 0.0
        %2863 = vmatpush.msra.mxu0 0.0
        %2864 = vmatpush.msra.mxu0 0.0
        %2865 = vmatpush.msra.mxu0 0.0
        %2866 = vmatpush.msra.mxu0 %v2794
        %2867 = vmatpush.msra.mxu0 %v2790
        %2868 = vmatpush.msra.mxu0 %v2786
        %2869 = vmatpush.msra.mxu0 %v2782
        %2870 = vmatpush.msra.mxu0 %v2778
        %2871 = vmatpush.msra.mxu0 %v2774
        %2872 = vmatpush.msra.mxu0 %v2770
        %2873 = vmatpush.msra.mxu0 %v2766
        %2874 = vmatmul.f32.gmra.mxu0 %v2796
        %v2875 = vpop.f32.mrf.mxu0
        %v2876 = vadd.f32 0.0, %v2875
        %2877 = vdwg.mxu0
        %v2878 = vadd.f32 %v2758, %v2816
        %v2879 = vadd.f32 %v2759, %v2836
        %v2880 = vadd.f32 %v2760, %v2856
        %v2881 = vadd.f32 %v2761, %v2876
        %s2882 = scalar_lea.vmem [#allocation10], 2048
        %v2883 = vld [vmem:[%s2882] sm:$0xff]
        %v2884 = vld [vmem:[%s2882 + $0x8] sm:$0xff]
        %v2885 = vld [vmem:[%s2882 + $0x10] sm:$0xff]
        %v2886 = vld [vmem:[%s2882 + $0x18] sm:$0xff]
        %v2887 = vld [vmem:[%s2882 + $0x20] sm:$0xff]
        %v2888 = vld [vmem:[%s2882 + $0x28] sm:$0xff]
        %v2889 = vld [vmem:[%s2882 + $0x30] sm:$0xff]
        %v2890 = vld [vmem:[%s2882 + $0x38] sm:$0xff]
        %v2891 = vld [vmem:[%s2882 + $0x40] sm:$0xff]
        %v2892 = vld [vmem:[%s2882 + $0x48] sm:$0xff]
        %v2893 = vld [vmem:[%s2882 + $0x50] sm:$0xff]
        %v2894 = vld [vmem:[%s2882 + $0x58] sm:$0xff]
        %v2895 = vld [vmem:[%s2882 + $0x60] sm:$0xff]
        %v2896 = vld [vmem:[%s2882 + $0x68] sm:$0xff]
        %v2897 = vld [vmem:[%s2882 + $0x70] sm:$0xff]
        %v2898 = vld [vmem:[%s2882 + $0x78] sm:$0xff]
        %v2899 = vld [vmem:[%s2882 + $0x80] sm:$0xff]
        %v2900 = vld [vmem:[%s2882 + $0x88] sm:$0xff]
        %v2901 = vld [vmem:[%s2882 + $0x90] sm:$0xff]
        %v2902 = vld [vmem:[%s2882 + $0x98] sm:$0xff]
        %v2903 = vld [vmem:[%s2882 + $0xa0] sm:$0xff]
        %v2904 = vld [vmem:[%s2882 + $0xa8] sm:$0xff]
        %v2905 = vld [vmem:[%s2882 + $0xb0] sm:$0xff]
        %v2906 = vld [vmem:[%s2882 + $0xb8] sm:$0xff]
        %v2907 = vld [vmem:[%s2882 + $0xc0] sm:$0xff]
        %v2908 = vld [vmem:[%s2882 + $0xc8] sm:$0xff]
        %v2909 = vld [vmem:[%s2882 + $0xd0] sm:$0xff]
        %v2910 = vld [vmem:[%s2882 + $0xd8] sm:$0xff]
        %v2911 = vld [vmem:[%s2882 + $0xe0] sm:$0xff]
        %v2912 = vld [vmem:[%s2882 + $0xe8] sm:$0xff]
        %v2913 = vld [vmem:[%s2882 + $0xf0] sm:$0xff]
        %v2914 = vld [vmem:[%s2882 + $0xf8] sm:$0xff]
        %v2916 = vsel %vm1997, %v1922, 0
        %2918 = vmatpush.msra.mxu0 0.0
        %2919 = vmatpush.msra.mxu0 0.0
        %2920 = vmatpush.msra.mxu0 0.0
        %2921 = vmatpush.msra.mxu0 0.0
        %2922 = vmatpush.msra.mxu0 0.0
        %2923 = vmatpush.msra.mxu0 0.0
        %2924 = vmatpush.msra.mxu0 0.0
        %2925 = vmatpush.msra.mxu0 0.0
        %2926 = vmatpush.msra.mxu0 %v2911
        %2927 = vmatpush.msra.mxu0 %v2907
        %2928 = vmatpush.msra.mxu0 %v2903
        %2929 = vmatpush.msra.mxu0 %v2899
        %2930 = vmatpush.msra.mxu0 %v2895
        %2931 = vmatpush.msra.mxu0 %v2891
        %2932 = vmatpush.msra.mxu0 %v2887
        %2933 = vmatpush.msra.mxu0 %v2883
        %2934 = vmatmul.f32.gmra.mxu0 %v2916
        %v2935 = vpop.f32.mrf.mxu0
        %v2936 = vadd.f32 0.0, %v2935
        %2937 = vdwg.mxu0
        %2938 = vmatpush.msra.mxu0 0.0
        %2939 = vmatpush.msra.mxu0 0.0
        %2940 = vmatpush.msra.mxu0 0.0
        %2941 = vmatpush.msra.mxu0 0.0
        %2942 = vmatpush.msra.mxu0 0.0
        %2943 = vmatpush.msra.mxu0 0.0
        %2944 = vmatpush.msra.mxu0 0.0
        %2945 = vmatpush.msra.mxu0 0.0
        %2946 = vmatpush.msra.mxu0 %v2912
        %2947 = vmatpush.msra.mxu0 %v2908
        %2948 = vmatpush.msra.mxu0 %v2904
        %2949 = vmatpush.msra.mxu0 %v2900
        %2950 = vmatpush.msra.mxu0 %v2896
        %2951 = vmatpush.msra.mxu0 %v2892
        %2952 = vmatpush.msra.mxu0 %v2888
        %2953 = vmatpush.msra.mxu0 %v2884
        %2954 = vmatmul.f32.gmra.mxu0 %v2916
        %v2955 = vpop.f32.mrf.mxu0
        %v2956 = vadd.f32 0.0, %v2955
        %2957 = vdwg.mxu0
        %2958 = vmatpush.msra.mxu0 0.0
        %2959 = vmatpush.msra.mxu0 0.0
        %2960 = vmatpush.msra.mxu0 0.0
        %2961 = vmatpush.msra.mxu0 0.0
        %2962 = vmatpush.msra.mxu0 0.0
        %2963 = vmatpush.msra.mxu0 0.0
        %2964 = vmatpush.msra.mxu0 0.0
        %2965 = vmatpush.msra.mxu0 0.0
        %2966 = vmatpush.msra.mxu0 %v2913
        %2967 = vmatpush.msra.mxu0 %v2909
        %2968 = vmatpush.msra.mxu0 %v2905
        %2969 = vmatpush.msra.mxu0 %v2901
        %2970 = vmatpush.msra.mxu0 %v2897
        %2971 = vmatpush.msra.mxu0 %v2893
        %2972 = vmatpush.msra.mxu0 %v2889
        %2973 = vmatpush.msra.mxu0 %v2885
        %2974 = vmatmul.f32.gmra.mxu0 %v2916
        %v2975 = vpop.f32.mrf.mxu0
        %v2976 = vadd.f32 0.0, %v2975
        %2977 = vdwg.mxu0
        %2978 = vmatpush.msra.mxu0 0.0
        %2979 = vmatpush.msra.mxu0 0.0
        %2980 = vmatpush.msra.mxu0 0.0
        %2981 = vmatpush.msra.mxu0 0.0
        %2982 = vmatpush.msra.mxu0 0.0
        %2983 = vmatpush.msra.mxu0 0.0
        %2984 = vmatpush.msra.mxu0 0.0
        %2985 = vmatpush.msra.mxu0 0.0
        %2986 = vmatpush.msra.mxu0 %v2914
        %2987 = vmatpush.msra.mxu0 %v2910
        %2988 = vmatpush.msra.mxu0 %v2906
        %2989 = vmatpush.msra.mxu0 %v2902
        %2990 = vmatpush.msra.mxu0 %v2898
        %2991 = vmatpush.msra.mxu0 %v2894
        %2992 = vmatpush.msra.mxu0 %v2890
        %2993 = vmatpush.msra.mxu0 %v2886
        %2994 = vmatmul.f32.gmra.mxu0 %v2916
        %v2995 = vpop.f32.mrf.mxu0
        %v2996 = vadd.f32 0.0, %v2995
        %2997 = vdwg.mxu0
        %v2998 = vadd.f32 %v2878, %v2936
        %v2999 = vadd.f32 %v2879, %v2956
        %v3000 = vadd.f32 %v2880, %v2976
        %v3001 = vadd.f32 %v2881, %v2996
        %s3002 = scalar_lea.vmem [#allocation10], 2304
        %v3003 = vld [vmem:[%s3002] sm:$0xff]
        %v3004 = vld [vmem:[%s3002 + $0x8] sm:$0xff]
        %v3005 = vld [vmem:[%s3002 + $0x10] sm:$0xff]
        %v3006 = vld [vmem:[%s3002 + $0x18] sm:$0xff]
        %v3007 = vld [vmem:[%s3002 + $0x20] sm:$0xff]
        %v3008 = vld [vmem:[%s3002 + $0x28] sm:$0xff]
        %v3009 = vld [vmem:[%s3002 + $0x30] sm:$0xff]
        %v3010 = vld [vmem:[%s3002 + $0x38] sm:$0xff]
        %v3011 = vld [vmem:[%s3002 + $0x40] sm:$0xff]
        %v3012 = vld [vmem:[%s3002 + $0x48] sm:$0xff]
        %v3013 = vld [vmem:[%s3002 + $0x50] sm:$0xff]
        %v3014 = vld [vmem:[%s3002 + $0x58] sm:$0xff]
        %v3015 = vld [vmem:[%s3002 + $0x60] sm:$0xff]
        %v3016 = vld [vmem:[%s3002 + $0x68] sm:$0xff]
        %v3017 = vld [vmem:[%s3002 + $0x70] sm:$0xff]
        %v3018 = vld [vmem:[%s3002 + $0x78] sm:$0xff]
        %v3019 = vld [vmem:[%s3002 + $0x80] sm:$0xff]
        %v3020 = vld [vmem:[%s3002 + $0x88] sm:$0xff]
        %v3021 = vld [vmem:[%s3002 + $0x90] sm:$0xff]
        %v3022 = vld [vmem:[%s3002 + $0x98] sm:$0xff]
        %v3023 = vld [vmem:[%s3002 + $0xa0] sm:$0xff]
        %v3024 = vld [vmem:[%s3002 + $0xa8] sm:$0xff]
        %v3025 = vld [vmem:[%s3002 + $0xb0] sm:$0xff]
        %v3026 = vld [vmem:[%s3002 + $0xb8] sm:$0xff]
        %v3027 = vld [vmem:[%s3002 + $0xc0] sm:$0xff]
        %v3028 = vld [vmem:[%s3002 + $0xc8] sm:$0xff]
        %v3029 = vld [vmem:[%s3002 + $0xd0] sm:$0xff]
        %v3030 = vld [vmem:[%s3002 + $0xd8] sm:$0xff]
        %v3031 = vld [vmem:[%s3002 + $0xe0] sm:$0xff]
        %v3032 = vld [vmem:[%s3002 + $0xe8] sm:$0xff]
        %v3033 = vld [vmem:[%s3002 + $0xf0] sm:$0xff]
        %v3034 = vld [vmem:[%s3002 + $0xf8] sm:$0xff]
        %v3035 = vrot.slane %v1922, 1
        %v3036 = vsel %vm1997, %v3035, 0
        %3038 = vmatpush.msra.mxu0 0.0
        %3039 = vmatpush.msra.mxu0 0.0
        %3040 = vmatpush.msra.mxu0 0.0
        %3041 = vmatpush.msra.mxu0 0.0
        %3042 = vmatpush.msra.mxu0 0.0
        %3043 = vmatpush.msra.mxu0 0.0
        %3044 = vmatpush.msra.mxu0 0.0
        %3045 = vmatpush.msra.mxu0 0.0
        %3046 = vmatpush.msra.mxu0 %v3031
        %3047 = vmatpush.msra.mxu0 %v3027
        %3048 = vmatpush.msra.mxu0 %v3023
        %3049 = vmatpush.msra.mxu0 %v3019
        %3050 = vmatpush.msra.mxu0 %v3015
        %3051 = vmatpush.msra.mxu0 %v3011
        %3052 = vmatpush.msra.mxu0 %v3007
        %3053 = vmatpush.msra.mxu0 %v3003
        %3054 = vmatmul.f32.gmra.mxu0 %v3036
        %v3055 = vpop.f32.mrf.mxu0
        %v3056 = vadd.f32 0.0, %v3055
        %3057 = vdwg.mxu0
        %3058 = vmatpush.msra.mxu0 0.0
        %3059 = vmatpush.msra.mxu0 0.0
        %3060 = vmatpush.msra.mxu0 0.0
        %3061 = vmatpush.msra.mxu0 0.0
        %3062 = vmatpush.msra.mxu0 0.0
        %3063 = vmatpush.msra.mxu0 0.0
        %3064 = vmatpush.msra.mxu0 0.0
        %3065 = vmatpush.msra.mxu0 0.0
        %3066 = vmatpush.msra.mxu0 %v3032
        %3067 = vmatpush.msra.mxu0 %v3028
        %3068 = vmatpush.msra.mxu0 %v3024
        %3069 = vmatpush.msra.mxu0 %v3020
        %3070 = vmatpush.msra.mxu0 %v3016
        %3071 = vmatpush.msra.mxu0 %v3012
        %3072 = vmatpush.msra.mxu0 %v3008
        %3073 = vmatpush.msra.mxu0 %v3004
        %3074 = vmatmul.f32.gmra.mxu0 %v3036
        %v3075 = vpop.f32.mrf.mxu0
        %v3076 = vadd.f32 0.0, %v3075
        %3077 = vdwg.mxu0
        %3078 = vmatpush.msra.mxu0 0.0
        %3079 = vmatpush.msra.mxu0 0.0
        %3080 = vmatpush.msra.mxu0 0.0
        %3081 = vmatpush.msra.mxu0 0.0
        %3082 = vmatpush.msra.mxu0 0.0
        %3083 = vmatpush.msra.mxu0 0.0
        %3084 = vmatpush.msra.mxu0 0.0
        %3085 = vmatpush.msra.mxu0 0.0
        %3086 = vmatpush.msra.mxu0 %v3033
        %3087 = vmatpush.msra.mxu0 %v3029
        %3088 = vmatpush.msra.mxu0 %v3025
        %3089 = vmatpush.msra.mxu0 %v3021
        %3090 = vmatpush.msra.mxu0 %v3017
        %3091 = vmatpush.msra.mxu0 %v3013
        %3092 = vmatpush.msra.mxu0 %v3009
        %3093 = vmatpush.msra.mxu0 %v3005
        %3094 = vmatmul.f32.gmra.mxu0 %v3036
        %v3095 = vpop.f32.mrf.mxu0
        %v3096 = vadd.f32 0.0, %v3095
        %3097 = vdwg.mxu0
        %3098 = vmatpush.msra.mxu0 0.0
        %3099 = vmatpush.msra.mxu0 0.0
        %3100 = vmatpush.msra.mxu0 0.0
        %3101 = vmatpush.msra.mxu0 0.0
        %3102 = vmatpush.msra.mxu0 0.0
        %3103 = vmatpush.msra.mxu0 0.0
        %3104 = vmatpush.msra.mxu0 0.0
        %3105 = vmatpush.msra.mxu0 0.0
        %3106 = vmatpush.msra.mxu0 %v3034
        %3107 = vmatpush.msra.mxu0 %v3030
        %3108 = vmatpush.msra.mxu0 %v3026
        %3109 = vmatpush.msra.mxu0 %v3022
        %3110 = vmatpush.msra.mxu0 %v3018
        %3111 = vmatpush.msra.mxu0 %v3014
        %3112 = vmatpush.msra.mxu0 %v3010
        %3113 = vmatpush.msra.mxu0 %v3006
        %3114 = vmatmul.f32.gmra.mxu0 %v3036
        %v3115 = vpop.f32.mrf.mxu0
        %v3116 = vadd.f32 0.0, %v3115
        %3117 = vdwg.mxu0
        %v3118 = vadd.f32 %v2998, %v3056
        %v3119 = vadd.f32 %v2999, %v3076
        %v3120 = vadd.f32 %v3000, %v3096
        %v3121 = vadd.f32 %v3001, %v3116
        %s3122 = scalar_lea.vmem [#allocation10], 2560
        %v3123 = vld [vmem:[%s3122] sm:$0xff]
        %v3124 = vld [vmem:[%s3122 + $0x8] sm:$0xff]
        %v3125 = vld [vmem:[%s3122 + $0x10] sm:$0xff]
        %v3126 = vld [vmem:[%s3122 + $0x18] sm:$0xff]
        %v3127 = vld [vmem:[%s3122 + $0x20] sm:$0xff]
        %v3128 = vld [vmem:[%s3122 + $0x28] sm:$0xff]
        %v3129 = vld [vmem:[%s3122 + $0x30] sm:$0xff]
        %v3130 = vld [vmem:[%s3122 + $0x38] sm:$0xff]
        %v3131 = vld [vmem:[%s3122 + $0x40] sm:$0xff]
        %v3132 = vld [vmem:[%s3122 + $0x48] sm:$0xff]
        %v3133 = vld [vmem:[%s3122 + $0x50] sm:$0xff]
        %v3134 = vld [vmem:[%s3122 + $0x58] sm:$0xff]
        %v3135 = vld [vmem:[%s3122 + $0x60] sm:$0xff]
        %v3136 = vld [vmem:[%s3122 + $0x68] sm:$0xff]
        %v3137 = vld [vmem:[%s3122 + $0x70] sm:$0xff]
        %v3138 = vld [vmem:[%s3122 + $0x78] sm:$0xff]
        %v3139 = vld [vmem:[%s3122 + $0x80] sm:$0xff]
        %v3140 = vld [vmem:[%s3122 + $0x88] sm:$0xff]
        %v3141 = vld [vmem:[%s3122 + $0x90] sm:$0xff]
        %v3142 = vld [vmem:[%s3122 + $0x98] sm:$0xff]
        %v3143 = vld [vmem:[%s3122 + $0xa0] sm:$0xff]
        %v3144 = vld [vmem:[%s3122 + $0xa8] sm:$0xff]
        %v3145 = vld [vmem:[%s3122 + $0xb0] sm:$0xff]
        %v3146 = vld [vmem:[%s3122 + $0xb8] sm:$0xff]
        %v3147 = vld [vmem:[%s3122 + $0xc0] sm:$0xff]
        %v3148 = vld [vmem:[%s3122 + $0xc8] sm:$0xff]
        %v3149 = vld [vmem:[%s3122 + $0xd0] sm:$0xff]
        %v3150 = vld [vmem:[%s3122 + $0xd8] sm:$0xff]
        %v3151 = vld [vmem:[%s3122 + $0xe0] sm:$0xff]
        %v3152 = vld [vmem:[%s3122 + $0xe8] sm:$0xff]
        %v3153 = vld [vmem:[%s3122 + $0xf0] sm:$0xff]
        %v3154 = vld [vmem:[%s3122 + $0xf8] sm:$0xff]
        %v3155 = vrot.slane %v1922, 2
        %v3156 = vsel %vm1997, %v3155, 0
        %3158 = vmatpush.msra.mxu0 0.0
        %3159 = vmatpush.msra.mxu0 0.0
        %3160 = vmatpush.msra.mxu0 0.0
        %3161 = vmatpush.msra.mxu0 0.0
        %3162 = vmatpush.msra.mxu0 0.0
        %3163 = vmatpush.msra.mxu0 0.0
        %3164 = vmatpush.msra.mxu0 0.0
        %3165 = vmatpush.msra.mxu0 0.0
        %3166 = vmatpush.msra.mxu0 %v3151
        %3167 = vmatpush.msra.mxu0 %v3147
        %3168 = vmatpush.msra.mxu0 %v3143
        %3169 = vmatpush.msra.mxu0 %v3139
        %3170 = vmatpush.msra.mxu0 %v3135
        %3171 = vmatpush.msra.mxu0 %v3131
        %3172 = vmatpush.msra.mxu0 %v3127
        %3173 = vmatpush.msra.mxu0 %v3123
        %3174 = vmatmul.f32.gmra.mxu0 %v3156
        %v3175 = vpop.f32.mrf.mxu0
        %v3176 = vadd.f32 0.0, %v3175
        %3177 = vdwg.mxu0
        %3178 = vmatpush.msra.mxu0 0.0
        %3179 = vmatpush.msra.mxu0 0.0
        %3180 = vmatpush.msra.mxu0 0.0
        %3181 = vmatpush.msra.mxu0 0.0
        %3182 = vmatpush.msra.mxu0 0.0
        %3183 = vmatpush.msra.mxu0 0.0
        %3184 = vmatpush.msra.mxu0 0.0
        %3185 = vmatpush.msra.mxu0 0.0
        %3186 = vmatpush.msra.mxu0 %v3152
        %3187 = vmatpush.msra.mxu0 %v3148
        %3188 = vmatpush.msra.mxu0 %v3144
        %3189 = vmatpush.msra.mxu0 %v3140
        %3190 = vmatpush.msra.mxu0 %v3136
        %3191 = vmatpush.msra.mxu0 %v3132
        %3192 = vmatpush.msra.mxu0 %v3128
        %3193 = vmatpush.msra.mxu0 %v3124
        %3194 = vmatmul.f32.gmra.mxu0 %v3156
        %v3195 = vpop.f32.mrf.mxu0
        %v3196 = vadd.f32 0.0, %v3195
        %3197 = vdwg.mxu0
        %3198 = vmatpush.msra.mxu0 0.0
        %3199 = vmatpush.msra.mxu0 0.0
        %3200 = vmatpush.msra.mxu0 0.0
        %3201 = vmatpush.msra.mxu0 0.0
        %3202 = vmatpush.msra.mxu0 0.0
        %3203 = vmatpush.msra.mxu0 0.0
        %3204 = vmatpush.msra.mxu0 0.0
        %3205 = vmatpush.msra.mxu0 0.0
        %3206 = vmatpush.msra.mxu0 %v3153
        %3207 = vmatpush.msra.mxu0 %v3149
        %3208 = vmatpush.msra.mxu0 %v3145
        %3209 = vmatpush.msra.mxu0 %v3141
        %3210 = vmatpush.msra.mxu0 %v3137
        %3211 = vmatpush.msra.mxu0 %v3133
        %3212 = vmatpush.msra.mxu0 %v3129
        %3213 = vmatpush.msra.mxu0 %v3125
        %3214 = vmatmul.f32.gmra.mxu0 %v3156
        %v3215 = vpop.f32.mrf.mxu0
        %v3216 = vadd.f32 0.0, %v3215
        %3217 = vdwg.mxu0
        %3218 = vmatpush.msra.mxu0 0.0
        %3219 = vmatpush.msra.mxu0 0.0
        %3220 = vmatpush.msra.mxu0 0.0
        %3221 = vmatpush.msra.mxu0 0.0
        %3222 = vmatpush.msra.mxu0 0.0
        %3223 = vmatpush.msra.mxu0 0.0
        %3224 = vmatpush.msra.mxu0 0.0
        %3225 = vmatpush.msra.mxu0 0.0
        %3226 = vmatpush.msra.mxu0 %v3154
        %3227 = vmatpush.msra.mxu0 %v3150
        %3228 = vmatpush.msra.mxu0 %v3146
        %3229 = vmatpush.msra.mxu0 %v3142
        %3230 = vmatpush.msra.mxu0 %v3138
        %3231 = vmatpush.msra.mxu0 %v3134
        %3232 = vmatpush.msra.mxu0 %v3130
        %3233 = vmatpush.msra.mxu0 %v3126
        %3234 = vmatmul.f32.gmra.mxu0 %v3156
        %v3235 = vpop.f32.mrf.mxu0
        %v3236 = vadd.f32 0.0, %v3235
        %3237 = vdwg.mxu0
        %v3238 = vadd.f32 %v3118, %v3176
        %v3239 = vadd.f32 %v3119, %v3196
        %v3240 = vadd.f32 %v3120, %v3216
        %v3241 = vadd.f32 %v3121, %v3236
        %s3242 = scalar_lea.vmem [#allocation10], 2816
        %v3243 = vld [vmem:[%s3242] sm:$0xff]
        %v3244 = vld [vmem:[%s3242 + $0x8] sm:$0xff]
        %v3245 = vld [vmem:[%s3242 + $0x10] sm:$0xff]
        %v3246 = vld [vmem:[%s3242 + $0x18] sm:$0xff]
        %v3247 = vld [vmem:[%s3242 + $0x20] sm:$0xff]
        %v3248 = vld [vmem:[%s3242 + $0x28] sm:$0xff]
        %v3249 = vld [vmem:[%s3242 + $0x30] sm:$0xff]
        %v3250 = vld [vmem:[%s3242 + $0x38] sm:$0xff]
        %v3251 = vld [vmem:[%s3242 + $0x40] sm:$0xff]
        %v3252 = vld [vmem:[%s3242 + $0x48] sm:$0xff]
        %v3253 = vld [vmem:[%s3242 + $0x50] sm:$0xff]
        %v3254 = vld [vmem:[%s3242 + $0x58] sm:$0xff]
        %v3255 = vld [vmem:[%s3242 + $0x60] sm:$0xff]
        %v3256 = vld [vmem:[%s3242 + $0x68] sm:$0xff]
        %v3257 = vld [vmem:[%s3242 + $0x70] sm:$0xff]
        %v3258 = vld [vmem:[%s3242 + $0x78] sm:$0xff]
        %v3259 = vld [vmem:[%s3242 + $0x80] sm:$0xff]
        %v3260 = vld [vmem:[%s3242 + $0x88] sm:$0xff]
        %v3261 = vld [vmem:[%s3242 + $0x90] sm:$0xff]
        %v3262 = vld [vmem:[%s3242 + $0x98] sm:$0xff]
        %v3263 = vld [vmem:[%s3242 + $0xa0] sm:$0xff]
        %v3264 = vld [vmem:[%s3242 + $0xa8] sm:$0xff]
        %v3265 = vld [vmem:[%s3242 + $0xb0] sm:$0xff]
        %v3266 = vld [vmem:[%s3242 + $0xb8] sm:$0xff]
        %v3267 = vld [vmem:[%s3242 + $0xc0] sm:$0xff]
        %v3268 = vld [vmem:[%s3242 + $0xc8] sm:$0xff]
        %v3269 = vld [vmem:[%s3242 + $0xd0] sm:$0xff]
        %v3270 = vld [vmem:[%s3242 + $0xd8] sm:$0xff]
        %v3271 = vld [vmem:[%s3242 + $0xe0] sm:$0xff]
        %v3272 = vld [vmem:[%s3242 + $0xe8] sm:$0xff]
        %v3273 = vld [vmem:[%s3242 + $0xf0] sm:$0xff]
        %v3274 = vld [vmem:[%s3242 + $0xf8] sm:$0xff]
        %v3275 = vrot.slane %v1922, 3
        %v3276 = vsel %vm1997, %v3275, 0
        %3278 = vmatpush.msra.mxu0 0.0
        %3279 = vmatpush.msra.mxu0 0.0
        %3280 = vmatpush.msra.mxu0 0.0
        %3281 = vmatpush.msra.mxu0 0.0
        %3282 = vmatpush.msra.mxu0 0.0
        %3283 = vmatpush.msra.mxu0 0.0
        %3284 = vmatpush.msra.mxu0 0.0
        %3285 = vmatpush.msra.mxu0 0.0
        %3286 = vmatpush.msra.mxu0 %v3271
        %3287 = vmatpush.msra.mxu0 %v3267
        %3288 = vmatpush.msra.mxu0 %v3263
        %3289 = vmatpush.msra.mxu0 %v3259
        %3290 = vmatpush.msra.mxu0 %v3255
        %3291 = vmatpush.msra.mxu0 %v3251
        %3292 = vmatpush.msra.mxu0 %v3247
        %3293 = vmatpush.msra.mxu0 %v3243
        %3294 = vmatmul.f32.gmra.mxu0 %v3276
        %v3295 = vpop.f32.mrf.mxu0
        %v3296 = vadd.f32 0.0, %v3295
        %3297 = vdwg.mxu0
        %3298 = vmatpush.msra.mxu0 0.0
        %3299 = vmatpush.msra.mxu0 0.0
        %3300 = vmatpush.msra.mxu0 0.0
        %3301 = vmatpush.msra.mxu0 0.0
        %3302 = vmatpush.msra.mxu0 0.0
        %3303 = vmatpush.msra.mxu0 0.0
        %3304 = vmatpush.msra.mxu0 0.0
        %3305 = vmatpush.msra.mxu0 0.0
        %3306 = vmatpush.msra.mxu0 %v3272
        %3307 = vmatpush.msra.mxu0 %v3268
        %3308 = vmatpush.msra.mxu0 %v3264
        %3309 = vmatpush.msra.mxu0 %v3260
        %3310 = vmatpush.msra.mxu0 %v3256
        %3311 = vmatpush.msra.mxu0 %v3252
        %3312 = vmatpush.msra.mxu0 %v3248
        %3313 = vmatpush.msra.mxu0 %v3244
        %3314 = vmatmul.f32.gmra.mxu0 %v3276
        %v3315 = vpop.f32.mrf.mxu0
        %v3316 = vadd.f32 0.0, %v3315
        %3317 = vdwg.mxu0
        %3318 = vmatpush.msra.mxu0 0.0
        %3319 = vmatpush.msra.mxu0 0.0
        %3320 = vmatpush.msra.mxu0 0.0
        %3321 = vmatpush.msra.mxu0 0.0
        %3322 = vmatpush.msra.mxu0 0.0
        %3323 = vmatpush.msra.mxu0 0.0
        %3324 = vmatpush.msra.mxu0 0.0
        %3325 = vmatpush.msra.mxu0 0.0
        %3326 = vmatpush.msra.mxu0 %v3273
        %3327 = vmatpush.msra.mxu0 %v3269
        %3328 = vmatpush.msra.mxu0 %v3265
        %3329 = vmatpush.msra.mxu0 %v3261
        %3330 = vmatpush.msra.mxu0 %v3257
        %3331 = vmatpush.msra.mxu0 %v3253
        %3332 = vmatpush.msra.mxu0 %v3249
        %3333 = vmatpush.msra.mxu0 %v3245
        %3334 = vmatmul.f32.gmra.mxu0 %v3276
        %v3335 = vpop.f32.mrf.mxu0
        %v3336 = vadd.f32 0.0, %v3335
        %3337 = vdwg.mxu0
        %3338 = vmatpush.msra.mxu0 0.0
        %3339 = vmatpush.msra.mxu0 0.0
        %3340 = vmatpush.msra.mxu0 0.0
        %3341 = vmatpush.msra.mxu0 0.0
        %3342 = vmatpush.msra.mxu0 0.0
        %3343 = vmatpush.msra.mxu0 0.0
        %3344 = vmatpush.msra.mxu0 0.0
        %3345 = vmatpush.msra.mxu0 0.0
        %3346 = vmatpush.msra.mxu0 %v3274
        %3347 = vmatpush.msra.mxu0 %v3270
        %3348 = vmatpush.msra.mxu0 %v3266
        %3349 = vmatpush.msra.mxu0 %v3262
        %3350 = vmatpush.msra.mxu0 %v3258
        %3351 = vmatpush.msra.mxu0 %v3254
        %3352 = vmatpush.msra.mxu0 %v3250
        %3353 = vmatpush.msra.mxu0 %v3246
        %3354 = vmatmul.f32.gmra.mxu0 %v3276
        %v3355 = vpop.f32.mrf.mxu0
        %v3356 = vadd.f32 0.0, %v3355
        %3357 = vdwg.mxu0
        %v3358 = vadd.f32 %v3238, %v3296
        %v3359 = vadd.f32 %v3239, %v3316
        %v3360 = vadd.f32 %v3240, %v3336
        %v3361 = vadd.f32 %v3241, %v3356
        %s3362 = scalar_lea.vmem [#allocation10], 3072
        %v3363 = vld [vmem:[%s3362] sm:$0xff]
        %v3364 = vld [vmem:[%s3362 + $0x8] sm:$0xff]
        %v3365 = vld [vmem:[%s3362 + $0x10] sm:$0xff]
        %v3366 = vld [vmem:[%s3362 + $0x18] sm:$0xff]
        %v3367 = vld [vmem:[%s3362 + $0x20] sm:$0xff]
        %v3368 = vld [vmem:[%s3362 + $0x28] sm:$0xff]
        %v3369 = vld [vmem:[%s3362 + $0x30] sm:$0xff]
        %v3370 = vld [vmem:[%s3362 + $0x38] sm:$0xff]
        %v3371 = vld [vmem:[%s3362 + $0x40] sm:$0xff]
        %v3372 = vld [vmem:[%s3362 + $0x48] sm:$0xff]
        %v3373 = vld [vmem:[%s3362 + $0x50] sm:$0xff]
        %v3374 = vld [vmem:[%s3362 + $0x58] sm:$0xff]
        %v3375 = vld [vmem:[%s3362 + $0x60] sm:$0xff]
        %v3376 = vld [vmem:[%s3362 + $0x68] sm:$0xff]
        %v3377 = vld [vmem:[%s3362 + $0x70] sm:$0xff]
        %v3378 = vld [vmem:[%s3362 + $0x78] sm:$0xff]
        %v3379 = vld [vmem:[%s3362 + $0x80] sm:$0xff]
        %v3380 = vld [vmem:[%s3362 + $0x88] sm:$0xff]
        %v3381 = vld [vmem:[%s3362 + $0x90] sm:$0xff]
        %v3382 = vld [vmem:[%s3362 + $0x98] sm:$0xff]
        %v3383 = vld [vmem:[%s3362 + $0xa0] sm:$0xff]
        %v3384 = vld [vmem:[%s3362 + $0xa8] sm:$0xff]
        %v3385 = vld [vmem:[%s3362 + $0xb0] sm:$0xff]
        %v3386 = vld [vmem:[%s3362 + $0xb8] sm:$0xff]
        %v3387 = vld [vmem:[%s3362 + $0xc0] sm:$0xff]
        %v3388 = vld [vmem:[%s3362 + $0xc8] sm:$0xff]
        %v3389 = vld [vmem:[%s3362 + $0xd0] sm:$0xff]
        %v3390 = vld [vmem:[%s3362 + $0xd8] sm:$0xff]
        %v3391 = vld [vmem:[%s3362 + $0xe0] sm:$0xff]
        %v3392 = vld [vmem:[%s3362 + $0xe8] sm:$0xff]
        %v3393 = vld [vmem:[%s3362 + $0xf0] sm:$0xff]
        %v3394 = vld [vmem:[%s3362 + $0xf8] sm:$0xff]
        %v3395 = vrot.slane %v1922, 4
        %v3396 = vsel %vm1997, %v3395, 0
        %3398 = vmatpush.msra.mxu0 0.0
        %3399 = vmatpush.msra.mxu0 0.0
        %3400 = vmatpush.msra.mxu0 0.0
        %3401 = vmatpush.msra.mxu0 0.0
        %3402 = vmatpush.msra.mxu0 0.0
        %3403 = vmatpush.msra.mxu0 0.0
        %3404 = vmatpush.msra.mxu0 0.0
        %3405 = vmatpush.msra.mxu0 0.0
        %3406 = vmatpush.msra.mxu0 %v3391
        %3407 = vmatpush.msra.mxu0 %v3387
        %3408 = vmatpush.msra.mxu0 %v3383
        %3409 = vmatpush.msra.mxu0 %v3379
        %3410 = vmatpush.msra.mxu0 %v3375
        %3411 = vmatpush.msra.mxu0 %v3371
        %3412 = vmatpush.msra.mxu0 %v3367
        %3413 = vmatpush.msra.mxu0 %v3363
        %3414 = vmatmul.f32.gmra.mxu0 %v3396
        %v3415 = vpop.f32.mrf.mxu0
        %v3416 = vadd.f32 0.0, %v3415
        %3417 = vdwg.mxu0
        %3418 = vmatpush.msra.mxu0 0.0
        %3419 = vmatpush.msra.mxu0 0.0
        %3420 = vmatpush.msra.mxu0 0.0
        %3421 = vmatpush.msra.mxu0 0.0
        %3422 = vmatpush.msra.mxu0 0.0
        %3423 = vmatpush.msra.mxu0 0.0
        %3424 = vmatpush.msra.mxu0 0.0
        %3425 = vmatpush.msra.mxu0 0.0
        %3426 = vmatpush.msra.mxu0 %v3392
        %3427 = vmatpush.msra.mxu0 %v3388
        %3428 = vmatpush.msra.mxu0 %v3384
        %3429 = vmatpush.msra.mxu0 %v3380
        %3430 = vmatpush.msra.mxu0 %v3376
        %3431 = vmatpush.msra.mxu0 %v3372
        %3432 = vmatpush.msra.mxu0 %v3368
        %3433 = vmatpush.msra.mxu0 %v3364
        %3434 = vmatmul.f32.gmra.mxu0 %v3396
        %v3435 = vpop.f32.mrf.mxu0
        %v3436 = vadd.f32 0.0, %v3435
        %3437 = vdwg.mxu0
        %3438 = vmatpush.msra.mxu0 0.0
        %3439 = vmatpush.msra.mxu0 0.0
        %3440 = vmatpush.msra.mxu0 0.0
        %3441 = vmatpush.msra.mxu0 0.0
        %3442 = vmatpush.msra.mxu0 0.0
        %3443 = vmatpush.msra.mxu0 0.0
        %3444 = vmatpush.msra.mxu0 0.0
        %3445 = vmatpush.msra.mxu0 0.0
        %3446 = vmatpush.msra.mxu0 %v3393
        %3447 = vmatpush.msra.mxu0 %v3389
        %3448 = vmatpush.msra.mxu0 %v3385
        %3449 = vmatpush.msra.mxu0 %v3381
        %3450 = vmatpush.msra.mxu0 %v3377
        %3451 = vmatpush.msra.mxu0 %v3373
        %3452 = vmatpush.msra.mxu0 %v3369
        %3453 = vmatpush.msra.mxu0 %v3365
        %3454 = vmatmul.f32.gmra.mxu0 %v3396
        %v3455 = vpop.f32.mrf.mxu0
        %v3456 = vadd.f32 0.0, %v3455
        %3457 = vdwg.mxu0
        %3458 = vmatpush.msra.mxu0 0.0
        %3459 = vmatpush.msra.mxu0 0.0
        %3460 = vmatpush.msra.mxu0 0.0
        %3461 = vmatpush.msra.mxu0 0.0
        %3462 = vmatpush.msra.mxu0 0.0
        %3463 = vmatpush.msra.mxu0 0.0
        %3464 = vmatpush.msra.mxu0 0.0
        %3465 = vmatpush.msra.mxu0 0.0
        %3466 = vmatpush.msra.mxu0 %v3394
        %3467 = vmatpush.msra.mxu0 %v3390
        %3468 = vmatpush.msra.mxu0 %v3386
        %3469 = vmatpush.msra.mxu0 %v3382
        %3470 = vmatpush.msra.mxu0 %v3378
        %3471 = vmatpush.msra.mxu0 %v3374
        %3472 = vmatpush.msra.mxu0 %v3370
        %3473 = vmatpush.msra.mxu0 %v3366
        %3474 = vmatmul.f32.gmra.mxu0 %v3396
        %v3475 = vpop.f32.mrf.mxu0
        %v3476 = vadd.f32 0.0, %v3475
        %3477 = vdwg.mxu0
        %v3478 = vadd.f32 %v3358, %v3416
        %v3479 = vadd.f32 %v3359, %v3436
        %v3480 = vadd.f32 %v3360, %v3456
        %v3481 = vadd.f32 %v3361, %v3476
        %s3482 = scalar_lea.vmem [#allocation10], 3328
        %v3483 = vld [vmem:[%s3482] sm:$0xff]
        %v3484 = vld [vmem:[%s3482 + $0x8] sm:$0xff]
        %v3485 = vld [vmem:[%s3482 + $0x10] sm:$0xff]
        %v3486 = vld [vmem:[%s3482 + $0x18] sm:$0xff]
        %v3487 = vld [vmem:[%s3482 + $0x20] sm:$0xff]
        %v3488 = vld [vmem:[%s3482 + $0x28] sm:$0xff]
        %v3489 = vld [vmem:[%s3482 + $0x30] sm:$0xff]
        %v3490 = vld [vmem:[%s3482 + $0x38] sm:$0xff]
        %v3491 = vld [vmem:[%s3482 + $0x40] sm:$0xff]
        %v3492 = vld [vmem:[%s3482 + $0x48] sm:$0xff]
        %v3493 = vld [vmem:[%s3482 + $0x50] sm:$0xff]
        %v3494 = vld [vmem:[%s3482 + $0x58] sm:$0xff]
        %v3495 = vld [vmem:[%s3482 + $0x60] sm:$0xff]
        %v3496 = vld [vmem:[%s3482 + $0x68] sm:$0xff]
        %v3497 = vld [vmem:[%s3482 + $0x70] sm:$0xff]
        %v3498 = vld [vmem:[%s3482 + $0x78] sm:$0xff]
        %v3499 = vld [vmem:[%s3482 + $0x80] sm:$0xff]
        %v3500 = vld [vmem:[%s3482 + $0x88] sm:$0xff]
        %v3501 = vld [vmem:[%s3482 + $0x90] sm:$0xff]
        %v3502 = vld [vmem:[%s3482 + $0x98] sm:$0xff]
        %v3503 = vld [vmem:[%s3482 + $0xa0] sm:$0xff]
        %v3504 = vld [vmem:[%s3482 + $0xa8] sm:$0xff]
        %v3505 = vld [vmem:[%s3482 + $0xb0] sm:$0xff]
        %v3506 = vld [vmem:[%s3482 + $0xb8] sm:$0xff]
        %v3507 = vld [vmem:[%s3482 + $0xc0] sm:$0xff]
        %v3508 = vld [vmem:[%s3482 + $0xc8] sm:$0xff]
        %v3509 = vld [vmem:[%s3482 + $0xd0] sm:$0xff]
        %v3510 = vld [vmem:[%s3482 + $0xd8] sm:$0xff]
        %v3511 = vld [vmem:[%s3482 + $0xe0] sm:$0xff]
        %v3512 = vld [vmem:[%s3482 + $0xe8] sm:$0xff]
        %v3513 = vld [vmem:[%s3482 + $0xf0] sm:$0xff]
        %v3514 = vld [vmem:[%s3482 + $0xf8] sm:$0xff]
        %v3515 = vrot.slane %v1922, 5
        %v3516 = vsel %vm1997, %v3515, 0
        %3518 = vmatpush.msra.mxu0 0.0
        %3519 = vmatpush.msra.mxu0 0.0
        %3520 = vmatpush.msra.mxu0 0.0
        %3521 = vmatpush.msra.mxu0 0.0
        %3522 = vmatpush.msra.mxu0 0.0
        %3523 = vmatpush.msra.mxu0 0.0
        %3524 = vmatpush.msra.mxu0 0.0
        %3525 = vmatpush.msra.mxu0 0.0
        %3526 = vmatpush.msra.mxu0 %v3511
        %3527 = vmatpush.msra.mxu0 %v3507
        %3528 = vmatpush.msra.mxu0 %v3503
        %3529 = vmatpush.msra.mxu0 %v3499
        %3530 = vmatpush.msra.mxu0 %v3495
        %3531 = vmatpush.msra.mxu0 %v3491
        %3532 = vmatpush.msra.mxu0 %v3487
        %3533 = vmatpush.msra.mxu0 %v3483
        %3534 = vmatmul.f32.gmra.mxu0 %v3516
        %v3535 = vpop.f32.mrf.mxu0
        %v3536 = vadd.f32 0.0, %v3535
        %3537 = vdwg.mxu0
        %3538 = vmatpush.msra.mxu0 0.0
        %3539 = vmatpush.msra.mxu0 0.0
        %3540 = vmatpush.msra.mxu0 0.0
        %3541 = vmatpush.msra.mxu0 0.0
        %3542 = vmatpush.msra.mxu0 0.0
        %3543 = vmatpush.msra.mxu0 0.0
        %3544 = vmatpush.msra.mxu0 0.0
        %3545 = vmatpush.msra.mxu0 0.0
        %3546 = vmatpush.msra.mxu0 %v3512
        %3547 = vmatpush.msra.mxu0 %v3508
        %3548 = vmatpush.msra.mxu0 %v3504
        %3549 = vmatpush.msra.mxu0 %v3500
        %3550 = vmatpush.msra.mxu0 %v3496
        %3551 = vmatpush.msra.mxu0 %v3492
        %3552 = vmatpush.msra.mxu0 %v3488
        %3553 = vmatpush.msra.mxu0 %v3484
        %3554 = vmatmul.f32.gmra.mxu0 %v3516
        %v3555 = vpop.f32.mrf.mxu0
        %v3556 = vadd.f32 0.0, %v3555
        %3557 = vdwg.mxu0
        %3558 = vmatpush.msra.mxu0 0.0
        %3559 = vmatpush.msra.mxu0 0.0
        %3560 = vmatpush.msra.mxu0 0.0
        %3561 = vmatpush.msra.mxu0 0.0
        %3562 = vmatpush.msra.mxu0 0.0
        %3563 = vmatpush.msra.mxu0 0.0
        %3564 = vmatpush.msra.mxu0 0.0
        %3565 = vmatpush.msra.mxu0 0.0
        %3566 = vmatpush.msra.mxu0 %v3513
        %3567 = vmatpush.msra.mxu0 %v3509
        %3568 = vmatpush.msra.mxu0 %v3505
        %3569 = vmatpush.msra.mxu0 %v3501
        %3570 = vmatpush.msra.mxu0 %v3497
        %3571 = vmatpush.msra.mxu0 %v3493
        %3572 = vmatpush.msra.mxu0 %v3489
        %3573 = vmatpush.msra.mxu0 %v3485
        %3574 = vmatmul.f32.gmra.mxu0 %v3516
        %v3575 = vpop.f32.mrf.mxu0
        %v3576 = vadd.f32 0.0, %v3575
        %3577 = vdwg.mxu0
        %3578 = vmatpush.msra.mxu0 0.0
        %3579 = vmatpush.msra.mxu0 0.0
        %3580 = vmatpush.msra.mxu0 0.0
        %3581 = vmatpush.msra.mxu0 0.0
        %3582 = vmatpush.msra.mxu0 0.0
        %3583 = vmatpush.msra.mxu0 0.0
        %3584 = vmatpush.msra.mxu0 0.0
        %3585 = vmatpush.msra.mxu0 0.0
        %3586 = vmatpush.msra.mxu0 %v3514
        %3587 = vmatpush.msra.mxu0 %v3510
        %3588 = vmatpush.msra.mxu0 %v3506
        %3589 = vmatpush.msra.mxu0 %v3502
        %3590 = vmatpush.msra.mxu0 %v3498
        %3591 = vmatpush.msra.mxu0 %v3494
        %3592 = vmatpush.msra.mxu0 %v3490
        %3593 = vmatpush.msra.mxu0 %v3486
        %3594 = vmatmul.f32.gmra.mxu0 %v3516
        %v3595 = vpop.f32.mrf.mxu0
        %v3596 = vadd.f32 0.0, %v3595
        %3597 = vdwg.mxu0
        %v3598 = vadd.f32 %v3478, %v3536
        %v3599 = vadd.f32 %v3479, %v3556
        %v3600 = vadd.f32 %v3480, %v3576
        %v3601 = vadd.f32 %v3481, %v3596
        %s3602 = scalar_lea.vmem [#allocation10], 3584
        %v3603 = vld [vmem:[%s3602] sm:$0xff]
        %v3604 = vld [vmem:[%s3602 + $0x8] sm:$0xff]
        %v3605 = vld [vmem:[%s3602 + $0x10] sm:$0xff]
        %v3606 = vld [vmem:[%s3602 + $0x18] sm:$0xff]
        %v3607 = vld [vmem:[%s3602 + $0x20] sm:$0xff]
        %v3608 = vld [vmem:[%s3602 + $0x28] sm:$0xff]
        %v3609 = vld [vmem:[%s3602 + $0x30] sm:$0xff]
        %v3610 = vld [vmem:[%s3602 + $0x38] sm:$0xff]
        %v3611 = vld [vmem:[%s3602 + $0x40] sm:$0xff]
        %v3612 = vld [vmem:[%s3602 + $0x48] sm:$0xff]
        %v3613 = vld [vmem:[%s3602 + $0x50] sm:$0xff]
        %v3614 = vld [vmem:[%s3602 + $0x58] sm:$0xff]
        %v3615 = vld [vmem:[%s3602 + $0x60] sm:$0xff]
        %v3616 = vld [vmem:[%s3602 + $0x68] sm:$0xff]
        %v3617 = vld [vmem:[%s3602 + $0x70] sm:$0xff]
        %v3618 = vld [vmem:[%s3602 + $0x78] sm:$0xff]
        %v3619 = vld [vmem:[%s3602 + $0x80] sm:$0xff]
        %v3620 = vld [vmem:[%s3602 + $0x88] sm:$0xff]
        %v3621 = vld [vmem:[%s3602 + $0x90] sm:$0xff]
        %v3622 = vld [vmem:[%s3602 + $0x98] sm:$0xff]
        %v3623 = vld [vmem:[%s3602 + $0xa0] sm:$0xff]
        %v3624 = vld [vmem:[%s3602 + $0xa8] sm:$0xff]
        %v3625 = vld [vmem:[%s3602 + $0xb0] sm:$0xff]
        %v3626 = vld [vmem:[%s3602 + $0xb8] sm:$0xff]
        %v3627 = vld [vmem:[%s3602 + $0xc0] sm:$0xff]
        %v3628 = vld [vmem:[%s3602 + $0xc8] sm:$0xff]
        %v3629 = vld [vmem:[%s3602 + $0xd0] sm:$0xff]
        %v3630 = vld [vmem:[%s3602 + $0xd8] sm:$0xff]
        %v3631 = vld [vmem:[%s3602 + $0xe0] sm:$0xff]
        %v3632 = vld [vmem:[%s3602 + $0xe8] sm:$0xff]
        %v3633 = vld [vmem:[%s3602 + $0xf0] sm:$0xff]
        %v3634 = vld [vmem:[%s3602 + $0xf8] sm:$0xff]
        %v3635 = vrot.slane %v1922, 6
        %v3636 = vsel %vm1997, %v3635, 0
        %3638 = vmatpush.msra.mxu0 0.0
        %3639 = vmatpush.msra.mxu0 0.0
        %3640 = vmatpush.msra.mxu0 0.0
        %3641 = vmatpush.msra.mxu0 0.0
        %3642 = vmatpush.msra.mxu0 0.0
        %3643 = vmatpush.msra.mxu0 0.0
        %3644 = vmatpush.msra.mxu0 0.0
        %3645 = vmatpush.msra.mxu0 0.0
        %3646 = vmatpush.msra.mxu0 %v3631
        %3647 = vmatpush.msra.mxu0 %v3627
        %3648 = vmatpush.msra.mxu0 %v3623
        %3649 = vmatpush.msra.mxu0 %v3619
        %3650 = vmatpush.msra.mxu0 %v3615
        %3651 = vmatpush.msra.mxu0 %v3611
        %3652 = vmatpush.msra.mxu0 %v3607
        %3653 = vmatpush.msra.mxu0 %v3603
        %3654 = vmatmul.f32.gmra.mxu0 %v3636
        %v3655 = vpop.f32.mrf.mxu0
        %v3656 = vadd.f32 0.0, %v3655
        %3657 = vdwg.mxu0
        %3658 = vmatpush.msra.mxu0 0.0
        %3659 = vmatpush.msra.mxu0 0.0
        %3660 = vmatpush.msra.mxu0 0.0
        %3661 = vmatpush.msra.mxu0 0.0
        %3662 = vmatpush.msra.mxu0 0.0
        %3663 = vmatpush.msra.mxu0 0.0
        %3664 = vmatpush.msra.mxu0 0.0
        %3665 = vmatpush.msra.mxu0 0.0
        %3666 = vmatpush.msra.mxu0 %v3632
        %3667 = vmatpush.msra.mxu0 %v3628
        %3668 = vmatpush.msra.mxu0 %v3624
        %3669 = vmatpush.msra.mxu0 %v3620
        %3670 = vmatpush.msra.mxu0 %v3616
        %3671 = vmatpush.msra.mxu0 %v3612
        %3672 = vmatpush.msra.mxu0 %v3608
        %3673 = vmatpush.msra.mxu0 %v3604
        %3674 = vmatmul.f32.gmra.mxu0 %v3636
        %v3675 = vpop.f32.mrf.mxu0
        %v3676 = vadd.f32 0.0, %v3675
        %3677 = vdwg.mxu0
        %3678 = vmatpush.msra.mxu0 0.0
        %3679 = vmatpush.msra.mxu0 0.0
        %3680 = vmatpush.msra.mxu0 0.0
        %3681 = vmatpush.msra.mxu0 0.0
        %3682 = vmatpush.msra.mxu0 0.0
        %3683 = vmatpush.msra.mxu0 0.0
        %3684 = vmatpush.msra.mxu0 0.0
        %3685 = vmatpush.msra.mxu0 0.0
        %3686 = vmatpush.msra.mxu0 %v3633
        %3687 = vmatpush.msra.mxu0 %v3629
        %3688 = vmatpush.msra.mxu0 %v3625
        %3689 = vmatpush.msra.mxu0 %v3621
        %3690 = vmatpush.msra.mxu0 %v3617
        %3691 = vmatpush.msra.mxu0 %v3613
        %3692 = vmatpush.msra.mxu0 %v3609
        %3693 = vmatpush.msra.mxu0 %v3605
        %3694 = vmatmul.f32.gmra.mxu0 %v3636
        %v3695 = vpop.f32.mrf.mxu0
        %v3696 = vadd.f32 0.0, %v3695
        %3697 = vdwg.mxu0
        %3698 = vmatpush.msra.mxu0 0.0
        %3699 = vmatpush.msra.mxu0 0.0
        %3700 = vmatpush.msra.mxu0 0.0
        %3701 = vmatpush.msra.mxu0 0.0
        %3702 = vmatpush.msra.mxu0 0.0
        %3703 = vmatpush.msra.mxu0 0.0
        %3704 = vmatpush.msra.mxu0 0.0
        %3705 = vmatpush.msra.mxu0 0.0
        %3706 = vmatpush.msra.mxu0 %v3634
        %3707 = vmatpush.msra.mxu0 %v3630
        %3708 = vmatpush.msra.mxu0 %v3626
        %3709 = vmatpush.msra.mxu0 %v3622
        %3710 = vmatpush.msra.mxu0 %v3618
        %3711 = vmatpush.msra.mxu0 %v3614
        %3712 = vmatpush.msra.mxu0 %v3610
        %3713 = vmatpush.msra.mxu0 %v3606
        %3714 = vmatmul.f32.gmra.mxu0 %v3636
        %v3715 = vpop.f32.mrf.mxu0
        %v3716 = vadd.f32 0.0, %v3715
        %3717 = vdwg.mxu0
        %v3718 = vadd.f32 %v3598, %v3656
        %v3719 = vadd.f32 %v3599, %v3676
        %v3720 = vadd.f32 %v3600, %v3696
        %v3721 = vadd.f32 %v3601, %v3716
        %s3722 = scalar_lea.vmem [#allocation10], 3840
        %v3723 = vld [vmem:[%s3722] sm:$0xff]
        %v3724 = vld [vmem:[%s3722 + $0x8] sm:$0xff]
        %v3725 = vld [vmem:[%s3722 + $0x10] sm:$0xff]
        %v3726 = vld [vmem:[%s3722 + $0x18] sm:$0xff]
        %v3727 = vld [vmem:[%s3722 + $0x20] sm:$0xff]
        %v3728 = vld [vmem:[%s3722 + $0x28] sm:$0xff]
        %v3729 = vld [vmem:[%s3722 + $0x30] sm:$0xff]
        %v3730 = vld [vmem:[%s3722 + $0x38] sm:$0xff]
        %v3731 = vld [vmem:[%s3722 + $0x40] sm:$0xff]
        %v3732 = vld [vmem:[%s3722 + $0x48] sm:$0xff]
        %v3733 = vld [vmem:[%s3722 + $0x50] sm:$0xff]
        %v3734 = vld [vmem:[%s3722 + $0x58] sm:$0xff]
        %v3735 = vld [vmem:[%s3722 + $0x60] sm:$0xff]
        %v3736 = vld [vmem:[%s3722 + $0x68] sm:$0xff]
        %v3737 = vld [vmem:[%s3722 + $0x70] sm:$0xff]
        %v3738 = vld [vmem:[%s3722 + $0x78] sm:$0xff]
        %v3739 = vld [vmem:[%s3722 + $0x80] sm:$0xff]
        %v3740 = vld [vmem:[%s3722 + $0x88] sm:$0xff]
        %v3741 = vld [vmem:[%s3722 + $0x90] sm:$0xff]
        %v3742 = vld [vmem:[%s3722 + $0x98] sm:$0xff]
        %v3743 = vld [vmem:[%s3722 + $0xa0] sm:$0xff]
        %v3744 = vld [vmem:[%s3722 + $0xa8] sm:$0xff]
        %v3745 = vld [vmem:[%s3722 + $0xb0] sm:$0xff]
        %v3746 = vld [vmem:[%s3722 + $0xb8] sm:$0xff]
        %v3747 = vld [vmem:[%s3722 + $0xc0] sm:$0xff]
        %v3748 = vld [vmem:[%s3722 + $0xc8] sm:$0xff]
        %v3749 = vld [vmem:[%s3722 + $0xd0] sm:$0xff]
        %v3750 = vld [vmem:[%s3722 + $0xd8] sm:$0xff]
        %v3751 = vld [vmem:[%s3722 + $0xe0] sm:$0xff]
        %v3752 = vld [vmem:[%s3722 + $0xe8] sm:$0xff]
        %v3753 = vld [vmem:[%s3722 + $0xf0] sm:$0xff]
        %v3754 = vld [vmem:[%s3722 + $0xf8] sm:$0xff]
        %v3755 = vrot.slane %v1922, 7
        %v3756 = vsel %vm1997, %v3755, 0
        %3758 = vmatpush.msra.mxu0 0.0
        %3759 = vmatpush.msra.mxu0 0.0
        %3760 = vmatpush.msra.mxu0 0.0
        %3761 = vmatpush.msra.mxu0 0.0
        %3762 = vmatpush.msra.mxu0 0.0
        %3763 = vmatpush.msra.mxu0 0.0
        %3764 = vmatpush.msra.mxu0 0.0
        %3765 = vmatpush.msra.mxu0 0.0
        %3766 = vmatpush.msra.mxu0 %v3751
        %3767 = vmatpush.msra.mxu0 %v3747
        %3768 = vmatpush.msra.mxu0 %v3743
        %3769 = vmatpush.msra.mxu0 %v3739
        %3770 = vmatpush.msra.mxu0 %v3735
        %3771 = vmatpush.msra.mxu0 %v3731
        %3772 = vmatpush.msra.mxu0 %v3727
        %3773 = vmatpush.msra.mxu0 %v3723
        %3774 = vmatmul.f32.gmra.mxu0 %v3756
        %v3775 = vpop.f32.mrf.mxu0
        %v3776 = vadd.f32 0.0, %v3775
        %3777 = vdwg.mxu0
        %3778 = vmatpush.msra.mxu0 0.0
        %3779 = vmatpush.msra.mxu0 0.0
        %3780 = vmatpush.msra.mxu0 0.0
        %3781 = vmatpush.msra.mxu0 0.0
        %3782 = vmatpush.msra.mxu0 0.0
        %3783 = vmatpush.msra.mxu0 0.0
        %3784 = vmatpush.msra.mxu0 0.0
        %3785 = vmatpush.msra.mxu0 0.0
        %3786 = vmatpush.msra.mxu0 %v3752
        %3787 = vmatpush.msra.mxu0 %v3748
        %3788 = vmatpush.msra.mxu0 %v3744
        %3789 = vmatpush.msra.mxu0 %v3740
        %3790 = vmatpush.msra.mxu0 %v3736
        %3791 = vmatpush.msra.mxu0 %v3732
        %3792 = vmatpush.msra.mxu0 %v3728
        %3793 = vmatpush.msra.mxu0 %v3724
        %3794 = vmatmul.f32.gmra.mxu0 %v3756
        %v3795 = vpop.f32.mrf.mxu0
        %v3796 = vadd.f32 0.0, %v3795
        %3797 = vdwg.mxu0
        %3798 = vmatpush.msra.mxu0 0.0
        %3799 = vmatpush.msra.mxu0 0.0
        %3800 = vmatpush.msra.mxu0 0.0
        %3801 = vmatpush.msra.mxu0 0.0
        %3802 = vmatpush.msra.mxu0 0.0
        %3803 = vmatpush.msra.mxu0 0.0
        %3804 = vmatpush.msra.mxu0 0.0
        %3805 = vmatpush.msra.mxu0 0.0
        %3806 = vmatpush.msra.mxu0 %v3753
        %3807 = vmatpush.msra.mxu0 %v3749
        %3808 = vmatpush.msra.mxu0 %v3745
        %3809 = vmatpush.msra.mxu0 %v3741
        %3810 = vmatpush.msra.mxu0 %v3737
        %3811 = vmatpush.msra.mxu0 %v3733
        %3812 = vmatpush.msra.mxu0 %v3729
        %3813 = vmatpush.msra.mxu0 %v3725
        %3814 = vmatmul.f32.gmra.mxu0 %v3756
        %v3815 = vpop.f32.mrf.mxu0
        %v3816 = vadd.f32 0.0, %v3815
        %3817 = vdwg.mxu0
        %3818 = vmatpush.msra.mxu0 0.0
        %3819 = vmatpush.msra.mxu0 0.0
        %3820 = vmatpush.msra.mxu0 0.0
        %3821 = vmatpush.msra.mxu0 0.0
        %3822 = vmatpush.msra.mxu0 0.0
        %3823 = vmatpush.msra.mxu0 0.0
        %3824 = vmatpush.msra.mxu0 0.0
        %3825 = vmatpush.msra.mxu0 0.0
        %3826 = vmatpush.msra.mxu0 %v3754
        %3827 = vmatpush.msra.mxu0 %v3750
        %3828 = vmatpush.msra.mxu0 %v3746
        %3829 = vmatpush.msra.mxu0 %v3742
        %3830 = vmatpush.msra.mxu0 %v3738
        %3831 = vmatpush.msra.mxu0 %v3734
        %3832 = vmatpush.msra.mxu0 %v3730
        %3833 = vmatpush.msra.mxu0 %v3726
        %3834 = vmatmul.f32.gmra.mxu0 %v3756
        %v3835 = vpop.f32.mrf.mxu0
        %v3836 = vadd.f32 0.0, %v3835
        %3837 = vdwg.mxu0
        %v3838 = vadd.f32 %v3718, %v3776
        %v3839 = vadd.f32 %v3719, %v3796
        %v3840 = vadd.f32 %v3720, %v3816
        %v3841 = vadd.f32 %v3721, %v3836
        %s3842 = scalar_lea.vmem [#allocation10], 4096
        %v3843 = vld [vmem:[%s3842] sm:$0xff]
        %v3844 = vld [vmem:[%s3842 + $0x8] sm:$0xff]
        %v3845 = vld [vmem:[%s3842 + $0x10] sm:$0xff]
        %v3846 = vld [vmem:[%s3842 + $0x18] sm:$0xff]
        %v3847 = vld [vmem:[%s3842 + $0x20] sm:$0xff]
        %v3848 = vld [vmem:[%s3842 + $0x28] sm:$0xff]
        %v3849 = vld [vmem:[%s3842 + $0x30] sm:$0xff]
        %v3850 = vld [vmem:[%s3842 + $0x38] sm:$0xff]
        %v3851 = vld [vmem:[%s3842 + $0x40] sm:$0xff]
        %v3852 = vld [vmem:[%s3842 + $0x48] sm:$0xff]
        %v3853 = vld [vmem:[%s3842 + $0x50] sm:$0xff]
        %v3854 = vld [vmem:[%s3842 + $0x58] sm:$0xff]
        %v3855 = vld [vmem:[%s3842 + $0x60] sm:$0xff]
        %v3856 = vld [vmem:[%s3842 + $0x68] sm:$0xff]
        %v3857 = vld [vmem:[%s3842 + $0x70] sm:$0xff]
        %v3858 = vld [vmem:[%s3842 + $0x78] sm:$0xff]
        %v3859 = vld [vmem:[%s3842 + $0x80] sm:$0xff]
        %v3860 = vld [vmem:[%s3842 + $0x88] sm:$0xff]
        %v3861 = vld [vmem:[%s3842 + $0x90] sm:$0xff]
        %v3862 = vld [vmem:[%s3842 + $0x98] sm:$0xff]
        %v3863 = vld [vmem:[%s3842 + $0xa0] sm:$0xff]
        %v3864 = vld [vmem:[%s3842 + $0xa8] sm:$0xff]
        %v3865 = vld [vmem:[%s3842 + $0xb0] sm:$0xff]
        %v3866 = vld [vmem:[%s3842 + $0xb8] sm:$0xff]
        %v3867 = vld [vmem:[%s3842 + $0xc0] sm:$0xff]
        %v3868 = vld [vmem:[%s3842 + $0xc8] sm:$0xff]
        %v3869 = vld [vmem:[%s3842 + $0xd0] sm:$0xff]
        %v3870 = vld [vmem:[%s3842 + $0xd8] sm:$0xff]
        %v3871 = vld [vmem:[%s3842 + $0xe0] sm:$0xff]
        %v3872 = vld [vmem:[%s3842 + $0xe8] sm:$0xff]
        %v3873 = vld [vmem:[%s3842 + $0xf0] sm:$0xff]
        %v3874 = vld [vmem:[%s3842 + $0xf8] sm:$0xff]
        %v3876 = vsel %vm1997, %v1925, 0
        %3878 = vmatpush.msra.mxu0 0.0
        %3879 = vmatpush.msra.mxu0 0.0
        %3880 = vmatpush.msra.mxu0 0.0
        %3881 = vmatpush.msra.mxu0 0.0
        %3882 = vmatpush.msra.mxu0 0.0
        %3883 = vmatpush.msra.mxu0 0.0
        %3884 = vmatpush.msra.mxu0 0.0
        %3885 = vmatpush.msra.mxu0 0.0
        %3886 = vmatpush.msra.mxu0 %v3871
        %3887 = vmatpush.msra.mxu0 %v3867
        %3888 = vmatpush.msra.mxu0 %v3863
        %3889 = vmatpush.msra.mxu0 %v3859
        %3890 = vmatpush.msra.mxu0 %v3855
        %3891 = vmatpush.msra.mxu0 %v3851
        %3892 = vmatpush.msra.mxu0 %v3847
        %3893 = vmatpush.msra.mxu0 %v3843
        %3894 = vmatmul.f32.gmra.mxu0 %v3876
        %v3895 = vpop.f32.mrf.mxu0
        %v3896 = vadd.f32 0.0, %v3895
        %3897 = vdwg.mxu0
        %3898 = vmatpush.msra.mxu0 0.0
        %3899 = vmatpush.msra.mxu0 0.0
        %3900 = vmatpush.msra.mxu0 0.0
        %3901 = vmatpush.msra.mxu0 0.0
        %3902 = vmatpush.msra.mxu0 0.0
        %3903 = vmatpush.msra.mxu0 0.0
        %3904 = vmatpush.msra.mxu0 0.0
        %3905 = vmatpush.msra.mxu0 0.0
        %3906 = vmatpush.msra.mxu0 %v3872
        %3907 = vmatpush.msra.mxu0 %v3868
        %3908 = vmatpush.msra.mxu0 %v3864
        %3909 = vmatpush.msra.mxu0 %v3860
        %3910 = vmatpush.msra.mxu0 %v3856
        %3911 = vmatpush.msra.mxu0 %v3852
        %3912 = vmatpush.msra.mxu0 %v3848
        %3913 = vmatpush.msra.mxu0 %v3844
        %3914 = vmatmul.f32.gmra.mxu0 %v3876
        %v3915 = vpop.f32.mrf.mxu0
        %v3916 = vadd.f32 0.0, %v3915
        %3917 = vdwg.mxu0
        %3918 = vmatpush.msra.mxu0 0.0
        %3919 = vmatpush.msra.mxu0 0.0
        %3920 = vmatpush.msra.mxu0 0.0
        %3921 = vmatpush.msra.mxu0 0.0
        %3922 = vmatpush.msra.mxu0 0.0
        %3923 = vmatpush.msra.mxu0 0.0
        %3924 = vmatpush.msra.mxu0 0.0
        %3925 = vmatpush.msra.mxu0 0.0
        %3926 = vmatpush.msra.mxu0 %v3873
        %3927 = vmatpush.msra.mxu0 %v3869
        %3928 = vmatpush.msra.mxu0 %v3865
        %3929 = vmatpush.msra.mxu0 %v3861
        %3930 = vmatpush.msra.mxu0 %v3857
        %3931 = vmatpush.msra.mxu0 %v3853
        %3932 = vmatpush.msra.mxu0 %v3849
        %3933 = vmatpush.msra.mxu0 %v3845
        %3934 = vmatmul.f32.gmra.mxu0 %v3876
        %v3935 = vpop.f32.mrf.mxu0
        %v3936 = vadd.f32 0.0, %v3935
        %3937 = vdwg.mxu0
        %3938 = vmatpush.msra.mxu0 0.0
        %3939 = vmatpush.msra.mxu0 0.0
        %3940 = vmatpush.msra.mxu0 0.0
        %3941 = vmatpush.msra.mxu0 0.0
        %3942 = vmatpush.msra.mxu0 0.0
        %3943 = vmatpush.msra.mxu0 0.0
        %3944 = vmatpush.msra.mxu0 0.0
        %3945 = vmatpush.msra.mxu0 0.0
        %3946 = vmatpush.msra.mxu0 %v3874
        %3947 = vmatpush.msra.mxu0 %v3870
        %3948 = vmatpush.msra.mxu0 %v3866
        %3949 = vmatpush.msra.mxu0 %v3862
        %3950 = vmatpush.msra.mxu0 %v3858
        %3951 = vmatpush.msra.mxu0 %v3854
        %3952 = vmatpush.msra.mxu0 %v3850
        %3953 = vmatpush.msra.mxu0 %v3846
        %3954 = vmatmul.f32.gmra.mxu0 %v3876
        %v3955 = vpop.f32.mrf.mxu0
        %v3956 = vadd.f32 0.0, %v3955
        %3957 = vdwg.mxu0
        %v3958 = vadd.f32 %v3838, %v3896
        %v3959 = vadd.f32 %v3839, %v3916
        %v3960 = vadd.f32 %v3840, %v3936
        %v3961 = vadd.f32 %v3841, %v3956
        %s3962 = scalar_lea.vmem [#allocation10], 4352
        %v3963 = vld [vmem:[%s3962] sm:$0xff]
        %v3964 = vld [vmem:[%s3962 + $0x8] sm:$0xff]
        %v3965 = vld [vmem:[%s3962 + $0x10] sm:$0xff]
        %v3966 = vld [vmem:[%s3962 + $0x18] sm:$0xff]
        %v3967 = vld [vmem:[%s3962 + $0x20] sm:$0xff]
        %v3968 = vld [vmem:[%s3962 + $0x28] sm:$0xff]
        %v3969 = vld [vmem:[%s3962 + $0x30] sm:$0xff]
        %v3970 = vld [vmem:[%s3962 + $0x38] sm:$0xff]
        %v3971 = vld [vmem:[%s3962 + $0x40] sm:$0xff]
        %v3972 = vld [vmem:[%s3962 + $0x48] sm:$0xff]
        %v3973 = vld [vmem:[%s3962 + $0x50] sm:$0xff]
        %v3974 = vld [vmem:[%s3962 + $0x58] sm:$0xff]
        %v3975 = vld [vmem:[%s3962 + $0x60] sm:$0xff]
        %v3976 = vld [vmem:[%s3962 + $0x68] sm:$0xff]
        %v3977 = vld [vmem:[%s3962 + $0x70] sm:$0xff]
        %v3978 = vld [vmem:[%s3962 + $0x78] sm:$0xff]
        %v3979 = vld [vmem:[%s3962 + $0x80] sm:$0xff]
        %v3980 = vld [vmem:[%s3962 + $0x88] sm:$0xff]
        %v3981 = vld [vmem:[%s3962 + $0x90] sm:$0xff]
        %v3982 = vld [vmem:[%s3962 + $0x98] sm:$0xff]
        %v3983 = vld [vmem:[%s3962 + $0xa0] sm:$0xff]
        %v3984 = vld [vmem:[%s3962 + $0xa8] sm:$0xff]
        %v3985 = vld [vmem:[%s3962 + $0xb0] sm:$0xff]
        %v3986 = vld [vmem:[%s3962 + $0xb8] sm:$0xff]
        %v3987 = vld [vmem:[%s3962 + $0xc0] sm:$0xff]
        %v3988 = vld [vmem:[%s3962 + $0xc8] sm:$0xff]
        %v3989 = vld [vmem:[%s3962 + $0xd0] sm:$0xff]
        %v3990 = vld [vmem:[%s3962 + $0xd8] sm:$0xff]
        %v3991 = vld [vmem:[%s3962 + $0xe0] sm:$0xff]
        %v3992 = vld [vmem:[%s3962 + $0xe8] sm:$0xff]
        %v3993 = vld [vmem:[%s3962 + $0xf0] sm:$0xff]
        %v3994 = vld [vmem:[%s3962 + $0xf8] sm:$0xff]
        %v3995 = vrot.slane %v1925, 1
        %v3996 = vsel %vm1997, %v3995, 0
        %3998 = vmatpush.msra.mxu0 0.0
        %3999 = vmatpush.msra.mxu0 0.0
        %4000 = vmatpush.msra.mxu0 0.0
        %4001 = vmatpush.msra.mxu0 0.0
        %4002 = vmatpush.msra.mxu0 0.0
        %4003 = vmatpush.msra.mxu0 0.0
        %4004 = vmatpush.msra.mxu0 0.0
        %4005 = vmatpush.msra.mxu0 0.0
        %4006 = vmatpush.msra.mxu0 %v3991
        %4007 = vmatpush.msra.mxu0 %v3987
        %4008 = vmatpush.msra.mxu0 %v3983
        %4009 = vmatpush.msra.mxu0 %v3979
        %4010 = vmatpush.msra.mxu0 %v3975
        %4011 = vmatpush.msra.mxu0 %v3971
        %4012 = vmatpush.msra.mxu0 %v3967
        %4013 = vmatpush.msra.mxu0 %v3963
        %4014 = vmatmul.f32.gmra.mxu0 %v3996
        %v4015 = vpop.f32.mrf.mxu0
        %v4016 = vadd.f32 0.0, %v4015
        %4017 = vdwg.mxu0
        %4018 = vmatpush.msra.mxu0 0.0
        %4019 = vmatpush.msra.mxu0 0.0
        %4020 = vmatpush.msra.mxu0 0.0
        %4021 = vmatpush.msra.mxu0 0.0
        %4022 = vmatpush.msra.mxu0 0.0
        %4023 = vmatpush.msra.mxu0 0.0
        %4024 = vmatpush.msra.mxu0 0.0
        %4025 = vmatpush.msra.mxu0 0.0
        %4026 = vmatpush.msra.mxu0 %v3992
        %4027 = vmatpush.msra.mxu0 %v3988
        %4028 = vmatpush.msra.mxu0 %v3984
        %4029 = vmatpush.msra.mxu0 %v3980
        %4030 = vmatpush.msra.mxu0 %v3976
        %4031 = vmatpush.msra.mxu0 %v3972
        %4032 = vmatpush.msra.mxu0 %v3968
        %4033 = vmatpush.msra.mxu0 %v3964
        %4034 = vmatmul.f32.gmra.mxu0 %v3996
        %v4035 = vpop.f32.mrf.mxu0
        %v4036 = vadd.f32 0.0, %v4035
        %4037 = vdwg.mxu0
        %4038 = vmatpush.msra.mxu0 0.0
        %4039 = vmatpush.msra.mxu0 0.0
        %4040 = vmatpush.msra.mxu0 0.0
        %4041 = vmatpush.msra.mxu0 0.0
        %4042 = vmatpush.msra.mxu0 0.0
        %4043 = vmatpush.msra.mxu0 0.0
        %4044 = vmatpush.msra.mxu0 0.0
        %4045 = vmatpush.msra.mxu0 0.0
        %4046 = vmatpush.msra.mxu0 %v3993
        %4047 = vmatpush.msra.mxu0 %v3989
        %4048 = vmatpush.msra.mxu0 %v3985
        %4049 = vmatpush.msra.mxu0 %v3981
        %4050 = vmatpush.msra.mxu0 %v3977
        %4051 = vmatpush.msra.mxu0 %v3973
        %4052 = vmatpush.msra.mxu0 %v3969
        %4053 = vmatpush.msra.mxu0 %v3965
        %4054 = vmatmul.f32.gmra.mxu0 %v3996
        %v4055 = vpop.f32.mrf.mxu0
        %v4056 = vadd.f32 0.0, %v4055
        %4057 = vdwg.mxu0
        %4058 = vmatpush.msra.mxu0 0.0
        %4059 = vmatpush.msra.mxu0 0.0
        %4060 = vmatpush.msra.mxu0 0.0
        %4061 = vmatpush.msra.mxu0 0.0
        %4062 = vmatpush.msra.mxu0 0.0
        %4063 = vmatpush.msra.mxu0 0.0
        %4064 = vmatpush.msra.mxu0 0.0
        %4065 = vmatpush.msra.mxu0 0.0
        %4066 = vmatpush.msra.mxu0 %v3994
        %4067 = vmatpush.msra.mxu0 %v3990
        %4068 = vmatpush.msra.mxu0 %v3986
        %4069 = vmatpush.msra.mxu0 %v3982
        %4070 = vmatpush.msra.mxu0 %v3978
        %4071 = vmatpush.msra.mxu0 %v3974
        %4072 = vmatpush.msra.mxu0 %v3970
        %4073 = vmatpush.msra.mxu0 %v3966
        %4074 = vmatmul.f32.gmra.mxu0 %v3996
        %v4075 = vpop.f32.mrf.mxu0
        %v4076 = vadd.f32 0.0, %v4075
        %4077 = vdwg.mxu0
        %v4078 = vadd.f32 %v3958, %v4016
        %v4079 = vadd.f32 %v3959, %v4036
        %v4080 = vadd.f32 %v3960, %v4056
        %v4081 = vadd.f32 %v3961, %v4076
        %s4082 = scalar_lea.vmem [#allocation10], 4608
        %v4083 = vld [vmem:[%s4082] sm:$0xff]
        %v4084 = vld [vmem:[%s4082 + $0x8] sm:$0xff]
        %v4085 = vld [vmem:[%s4082 + $0x10] sm:$0xff]
        %v4086 = vld [vmem:[%s4082 + $0x18] sm:$0xff]
        %v4087 = vld [vmem:[%s4082 + $0x20] sm:$0xff]
        %v4088 = vld [vmem:[%s4082 + $0x28] sm:$0xff]
        %v4089 = vld [vmem:[%s4082 + $0x30] sm:$0xff]
        %v4090 = vld [vmem:[%s4082 + $0x38] sm:$0xff]
        %v4091 = vld [vmem:[%s4082 + $0x40] sm:$0xff]
        %v4092 = vld [vmem:[%s4082 + $0x48] sm:$0xff]
        %v4093 = vld [vmem:[%s4082 + $0x50] sm:$0xff]
        %v4094 = vld [vmem:[%s4082 + $0x58] sm:$0xff]
        %v4095 = vld [vmem:[%s4082 + $0x60] sm:$0xff]
        %v4096 = vld [vmem:[%s4082 + $0x68] sm:$0xff]
        %v4097 = vld [vmem:[%s4082 + $0x70] sm:$0xff]
        %v4098 = vld [vmem:[%s4082 + $0x78] sm:$0xff]
        %v4099 = vld [vmem:[%s4082 + $0x80] sm:$0xff]
        %v4100 = vld [vmem:[%s4082 + $0x88] sm:$0xff]
        %v4101 = vld [vmem:[%s4082 + $0x90] sm:$0xff]
        %v4102 = vld [vmem:[%s4082 + $0x98] sm:$0xff]
        %v4103 = vld [vmem:[%s4082 + $0xa0] sm:$0xff]
        %v4104 = vld [vmem:[%s4082 + $0xa8] sm:$0xff]
        %v4105 = vld [vmem:[%s4082 + $0xb0] sm:$0xff]
        %v4106 = vld [vmem:[%s4082 + $0xb8] sm:$0xff]
        %v4107 = vld [vmem:[%s4082 + $0xc0] sm:$0xff]
        %v4108 = vld [vmem:[%s4082 + $0xc8] sm:$0xff]
        %v4109 = vld [vmem:[%s4082 + $0xd0] sm:$0xff]
        %v4110 = vld [vmem:[%s4082 + $0xd8] sm:$0xff]
        %v4111 = vld [vmem:[%s4082 + $0xe0] sm:$0xff]
        %v4112 = vld [vmem:[%s4082 + $0xe8] sm:$0xff]
        %v4113 = vld [vmem:[%s4082 + $0xf0] sm:$0xff]
        %v4114 = vld [vmem:[%s4082 + $0xf8] sm:$0xff]
        %v4115 = vrot.slane %v1925, 2
        %v4116 = vsel %vm1997, %v4115, 0
        %4118 = vmatpush.msra.mxu0 0.0
        %4119 = vmatpush.msra.mxu0 0.0
        %4120 = vmatpush.msra.mxu0 0.0
        %4121 = vmatpush.msra.mxu0 0.0
        %4122 = vmatpush.msra.mxu0 0.0
        %4123 = vmatpush.msra.mxu0 0.0
        %4124 = vmatpush.msra.mxu0 0.0
        %4125 = vmatpush.msra.mxu0 0.0
        %4126 = vmatpush.msra.mxu0 %v4111
        %4127 = vmatpush.msra.mxu0 %v4107
        %4128 = vmatpush.msra.mxu0 %v4103
        %4129 = vmatpush.msra.mxu0 %v4099
        %4130 = vmatpush.msra.mxu0 %v4095
        %4131 = vmatpush.msra.mxu0 %v4091
        %4132 = vmatpush.msra.mxu0 %v4087
        %4133 = vmatpush.msra.mxu0 %v4083
        %4134 = vmatmul.f32.gmra.mxu0 %v4116
        %v4135 = vpop.f32.mrf.mxu0
        %v4136 = vadd.f32 0.0, %v4135
        %4137 = vdwg.mxu0
        %4138 = vmatpush.msra.mxu0 0.0
        %4139 = vmatpush.msra.mxu0 0.0
        %4140 = vmatpush.msra.mxu0 0.0
        %4141 = vmatpush.msra.mxu0 0.0
        %4142 = vmatpush.msra.mxu0 0.0
        %4143 = vmatpush.msra.mxu0 0.0
        %4144 = vmatpush.msra.mxu0 0.0
        %4145 = vmatpush.msra.mxu0 0.0
        %4146 = vmatpush.msra.mxu0 %v4112
        %4147 = vmatpush.msra.mxu0 %v4108
        %4148 = vmatpush.msra.mxu0 %v4104
        %4149 = vmatpush.msra.mxu0 %v4100
        %4150 = vmatpush.msra.mxu0 %v4096
        %4151 = vmatpush.msra.mxu0 %v4092
        %4152 = vmatpush.msra.mxu0 %v4088
        %4153 = vmatpush.msra.mxu0 %v4084
        %4154 = vmatmul.f32.gmra.mxu0 %v4116
        %v4155 = vpop.f32.mrf.mxu0
        %v4156 = vadd.f32 0.0, %v4155
        %4157 = vdwg.mxu0
        %4158 = vmatpush.msra.mxu0 0.0
        %4159 = vmatpush.msra.mxu0 0.0
        %4160 = vmatpush.msra.mxu0 0.0
        %4161 = vmatpush.msra.mxu0 0.0
        %4162 = vmatpush.msra.mxu0 0.0
        %4163 = vmatpush.msra.mxu0 0.0
        %4164 = vmatpush.msra.mxu0 0.0
        %4165 = vmatpush.msra.mxu0 0.0
        %4166 = vmatpush.msra.mxu0 %v4113
        %4167 = vmatpush.msra.mxu0 %v4109
        %4168 = vmatpush.msra.mxu0 %v4105
        %4169 = vmatpush.msra.mxu0 %v4101
        %4170 = vmatpush.msra.mxu0 %v4097
        %4171 = vmatpush.msra.mxu0 %v4093
        %4172 = vmatpush.msra.mxu0 %v4089
        %4173 = vmatpush.msra.mxu0 %v4085
        %4174 = vmatmul.f32.gmra.mxu0 %v4116
        %v4175 = vpop.f32.mrf.mxu0
        %v4176 = vadd.f32 0.0, %v4175
        %4177 = vdwg.mxu0
        %4178 = vmatpush.msra.mxu0 0.0
        %4179 = vmatpush.msra.mxu0 0.0
        %4180 = vmatpush.msra.mxu0 0.0
        %4181 = vmatpush.msra.mxu0 0.0
        %4182 = vmatpush.msra.mxu0 0.0
        %4183 = vmatpush.msra.mxu0 0.0
        %4184 = vmatpush.msra.mxu0 0.0
        %4185 = vmatpush.msra.mxu0 0.0
        %4186 = vmatpush.msra.mxu0 %v4114
        %4187 = vmatpush.msra.mxu0 %v4110
        %4188 = vmatpush.msra.mxu0 %v4106
        %4189 = vmatpush.msra.mxu0 %v4102
        %4190 = vmatpush.msra.mxu0 %v4098
        %4191 = vmatpush.msra.mxu0 %v4094
        %4192 = vmatpush.msra.mxu0 %v4090
        %4193 = vmatpush.msra.mxu0 %v4086
        %4194 = vmatmul.f32.gmra.mxu0 %v4116
        %v4195 = vpop.f32.mrf.mxu0
        %v4196 = vadd.f32 0.0, %v4195
        %4197 = vdwg.mxu0
        %v4198 = vadd.f32 %v4078, %v4136
        %v4199 = vadd.f32 %v4079, %v4156
        %v4200 = vadd.f32 %v4080, %v4176
        %v4201 = vadd.f32 %v4081, %v4196
        %s4202 = scalar_lea.vmem [#allocation10], 4864
        %v4203 = vld [vmem:[%s4202] sm:$0xff]
        %v4204 = vld [vmem:[%s4202 + $0x8] sm:$0xff]
        %v4205 = vld [vmem:[%s4202 + $0x10] sm:$0xff]
        %v4206 = vld [vmem:[%s4202 + $0x18] sm:$0xff]
        %v4207 = vld [vmem:[%s4202 + $0x20] sm:$0xff]
        %v4208 = vld [vmem:[%s4202 + $0x28] sm:$0xff]
        %v4209 = vld [vmem:[%s4202 + $0x30] sm:$0xff]
        %v4210 = vld [vmem:[%s4202 + $0x38] sm:$0xff]
        %v4211 = vld [vmem:[%s4202 + $0x40] sm:$0xff]
        %v4212 = vld [vmem:[%s4202 + $0x48] sm:$0xff]
        %v4213 = vld [vmem:[%s4202 + $0x50] sm:$0xff]
        %v4214 = vld [vmem:[%s4202 + $0x58] sm:$0xff]
        %v4215 = vld [vmem:[%s4202 + $0x60] sm:$0xff]
        %v4216 = vld [vmem:[%s4202 + $0x68] sm:$0xff]
        %v4217 = vld [vmem:[%s4202 + $0x70] sm:$0xff]
        %v4218 = vld [vmem:[%s4202 + $0x78] sm:$0xff]
        %v4219 = vld [vmem:[%s4202 + $0x80] sm:$0xff]
        %v4220 = vld [vmem:[%s4202 + $0x88] sm:$0xff]
        %v4221 = vld [vmem:[%s4202 + $0x90] sm:$0xff]
        %v4222 = vld [vmem:[%s4202 + $0x98] sm:$0xff]
        %v4223 = vld [vmem:[%s4202 + $0xa0] sm:$0xff]
        %v4224 = vld [vmem:[%s4202 + $0xa8] sm:$0xff]
        %v4225 = vld [vmem:[%s4202 + $0xb0] sm:$0xff]
        %v4226 = vld [vmem:[%s4202 + $0xb8] sm:$0xff]
        %v4227 = vld [vmem:[%s4202 + $0xc0] sm:$0xff]
        %v4228 = vld [vmem:[%s4202 + $0xc8] sm:$0xff]
        %v4229 = vld [vmem:[%s4202 + $0xd0] sm:$0xff]
        %v4230 = vld [vmem:[%s4202 + $0xd8] sm:$0xff]
        %v4231 = vld [vmem:[%s4202 + $0xe0] sm:$0xff]
        %v4232 = vld [vmem:[%s4202 + $0xe8] sm:$0xff]
        %v4233 = vld [vmem:[%s4202 + $0xf0] sm:$0xff]
        %v4234 = vld [vmem:[%s4202 + $0xf8] sm:$0xff]
        %v4235 = vrot.slane %v1925, 3
        %v4236 = vsel %vm1997, %v4235, 0
        %4238 = vmatpush.msra.mxu0 0.0
        %4239 = vmatpush.msra.mxu0 0.0
        %4240 = vmatpush.msra.mxu0 0.0
        %4241 = vmatpush.msra.mxu0 0.0
        %4242 = vmatpush.msra.mxu0 0.0
        %4243 = vmatpush.msra.mxu0 0.0
        %4244 = vmatpush.msra.mxu0 0.0
        %4245 = vmatpush.msra.mxu0 0.0
        %4246 = vmatpush.msra.mxu0 %v4231
        %4247 = vmatpush.msra.mxu0 %v4227
        %4248 = vmatpush.msra.mxu0 %v4223
        %4249 = vmatpush.msra.mxu0 %v4219
        %4250 = vmatpush.msra.mxu0 %v4215
        %4251 = vmatpush.msra.mxu0 %v4211
        %4252 = vmatpush.msra.mxu0 %v4207
        %4253 = vmatpush.msra.mxu0 %v4203
        %4254 = vmatmul.f32.gmra.mxu0 %v4236
        %v4255 = vpop.f32.mrf.mxu0
        %v4256 = vadd.f32 0.0, %v4255
        %4257 = vdwg.mxu0
        %4258 = vmatpush.msra.mxu0 0.0
        %4259 = vmatpush.msra.mxu0 0.0
        %4260 = vmatpush.msra.mxu0 0.0
        %4261 = vmatpush.msra.mxu0 0.0
        %4262 = vmatpush.msra.mxu0 0.0
        %4263 = vmatpush.msra.mxu0 0.0
        %4264 = vmatpush.msra.mxu0 0.0
        %4265 = vmatpush.msra.mxu0 0.0
        %4266 = vmatpush.msra.mxu0 %v4232
        %4267 = vmatpush.msra.mxu0 %v4228
        %4268 = vmatpush.msra.mxu0 %v4224
        %4269 = vmatpush.msra.mxu0 %v4220
        %4270 = vmatpush.msra.mxu0 %v4216
        %4271 = vmatpush.msra.mxu0 %v4212
        %4272 = vmatpush.msra.mxu0 %v4208
        %4273 = vmatpush.msra.mxu0 %v4204
        %4274 = vmatmul.f32.gmra.mxu0 %v4236
        %v4275 = vpop.f32.mrf.mxu0
        %v4276 = vadd.f32 0.0, %v4275
        %4277 = vdwg.mxu0
        %4278 = vmatpush.msra.mxu0 0.0
        %4279 = vmatpush.msra.mxu0 0.0
        %4280 = vmatpush.msra.mxu0 0.0
        %4281 = vmatpush.msra.mxu0 0.0
        %4282 = vmatpush.msra.mxu0 0.0
        %4283 = vmatpush.msra.mxu0 0.0
        %4284 = vmatpush.msra.mxu0 0.0
        %4285 = vmatpush.msra.mxu0 0.0
        %4286 = vmatpush.msra.mxu0 %v4233
        %4287 = vmatpush.msra.mxu0 %v4229
        %4288 = vmatpush.msra.mxu0 %v4225
        %4289 = vmatpush.msra.mxu0 %v4221
        %4290 = vmatpush.msra.mxu0 %v4217
        %4291 = vmatpush.msra.mxu0 %v4213
        %4292 = vmatpush.msra.mxu0 %v4209
        %4293 = vmatpush.msra.mxu0 %v4205
        %4294 = vmatmul.f32.gmra.mxu0 %v4236
        %v4295 = vpop.f32.mrf.mxu0
        %v4296 = vadd.f32 0.0, %v4295
        %4297 = vdwg.mxu0
        %4298 = vmatpush.msra.mxu0 0.0
        %4299 = vmatpush.msra.mxu0 0.0
        %4300 = vmatpush.msra.mxu0 0.0
        %4301 = vmatpush.msra.mxu0 0.0
        %4302 = vmatpush.msra.mxu0 0.0
        %4303 = vmatpush.msra.mxu0 0.0
        %4304 = vmatpush.msra.mxu0 0.0
        %4305 = vmatpush.msra.mxu0 0.0
        %4306 = vmatpush.msra.mxu0 %v4234
        %4307 = vmatpush.msra.mxu0 %v4230
        %4308 = vmatpush.msra.mxu0 %v4226
        %4309 = vmatpush.msra.mxu0 %v4222
        %4310 = vmatpush.msra.mxu0 %v4218
        %4311 = vmatpush.msra.mxu0 %v4214
        %4312 = vmatpush.msra.mxu0 %v4210
        %4313 = vmatpush.msra.mxu0 %v4206
        %4314 = vmatmul.f32.gmra.mxu0 %v4236
        %v4315 = vpop.f32.mrf.mxu0
        %v4316 = vadd.f32 0.0, %v4315
        %4317 = vdwg.mxu0
        %v4318 = vadd.f32 %v4198, %v4256
        %v4319 = vadd.f32 %v4199, %v4276
        %v4320 = vadd.f32 %v4200, %v4296
        %v4321 = vadd.f32 %v4201, %v4316
        %s4322 = scalar_lea.vmem [#allocation10], 5120
        %v4323 = vld [vmem:[%s4322] sm:$0xff]
        %v4324 = vld [vmem:[%s4322 + $0x8] sm:$0xff]
        %v4325 = vld [vmem:[%s4322 + $0x10] sm:$0xff]
        %v4326 = vld [vmem:[%s4322 + $0x18] sm:$0xff]
        %v4327 = vld [vmem:[%s4322 + $0x20] sm:$0xff]
        %v4328 = vld [vmem:[%s4322 + $0x28] sm:$0xff]
        %v4329 = vld [vmem:[%s4322 + $0x30] sm:$0xff]
        %v4330 = vld [vmem:[%s4322 + $0x38] sm:$0xff]
        %v4331 = vld [vmem:[%s4322 + $0x40] sm:$0xff]
        %v4332 = vld [vmem:[%s4322 + $0x48] sm:$0xff]
        %v4333 = vld [vmem:[%s4322 + $0x50] sm:$0xff]
        %v4334 = vld [vmem:[%s4322 + $0x58] sm:$0xff]
        %v4335 = vld [vmem:[%s4322 + $0x60] sm:$0xff]
        %v4336 = vld [vmem:[%s4322 + $0x68] sm:$0xff]
        %v4337 = vld [vmem:[%s4322 + $0x70] sm:$0xff]
        %v4338 = vld [vmem:[%s4322 + $0x78] sm:$0xff]
        %v4339 = vld [vmem:[%s4322 + $0x80] sm:$0xff]
        %v4340 = vld [vmem:[%s4322 + $0x88] sm:$0xff]
        %v4341 = vld [vmem:[%s4322 + $0x90] sm:$0xff]
        %v4342 = vld [vmem:[%s4322 + $0x98] sm:$0xff]
        %v4343 = vld [vmem:[%s4322 + $0xa0] sm:$0xff]
        %v4344 = vld [vmem:[%s4322 + $0xa8] sm:$0xff]
        %v4345 = vld [vmem:[%s4322 + $0xb0] sm:$0xff]
        %v4346 = vld [vmem:[%s4322 + $0xb8] sm:$0xff]
        %v4347 = vld [vmem:[%s4322 + $0xc0] sm:$0xff]
        %v4348 = vld [vmem:[%s4322 + $0xc8] sm:$0xff]
        %v4349 = vld [vmem:[%s4322 + $0xd0] sm:$0xff]
        %v4350 = vld [vmem:[%s4322 + $0xd8] sm:$0xff]
        %v4351 = vld [vmem:[%s4322 + $0xe0] sm:$0xff]
        %v4352 = vld [vmem:[%s4322 + $0xe8] sm:$0xff]
        %v4353 = vld [vmem:[%s4322 + $0xf0] sm:$0xff]
        %v4354 = vld [vmem:[%s4322 + $0xf8] sm:$0xff]
        %v4355 = vrot.slane %v1925, 4
        %v4356 = vsel %vm1997, %v4355, 0
        %4358 = vmatpush.msra.mxu0 0.0
        %4359 = vmatpush.msra.mxu0 0.0
        %4360 = vmatpush.msra.mxu0 0.0
        %4361 = vmatpush.msra.mxu0 0.0
        %4362 = vmatpush.msra.mxu0 0.0
        %4363 = vmatpush.msra.mxu0 0.0
        %4364 = vmatpush.msra.mxu0 0.0
        %4365 = vmatpush.msra.mxu0 0.0
        %4366 = vmatpush.msra.mxu0 %v4351
        %4367 = vmatpush.msra.mxu0 %v4347
        %4368 = vmatpush.msra.mxu0 %v4343
        %4369 = vmatpush.msra.mxu0 %v4339
        %4370 = vmatpush.msra.mxu0 %v4335
        %4371 = vmatpush.msra.mxu0 %v4331
        %4372 = vmatpush.msra.mxu0 %v4327
        %4373 = vmatpush.msra.mxu0 %v4323
        %4374 = vmatmul.f32.gmra.mxu0 %v4356
        %v4375 = vpop.f32.mrf.mxu0
        %v4376 = vadd.f32 0.0, %v4375
        %4377 = vdwg.mxu0
        %4378 = vmatpush.msra.mxu0 0.0
        %4379 = vmatpush.msra.mxu0 0.0
        %4380 = vmatpush.msra.mxu0 0.0
        %4381 = vmatpush.msra.mxu0 0.0
        %4382 = vmatpush.msra.mxu0 0.0
        %4383 = vmatpush.msra.mxu0 0.0
        %4384 = vmatpush.msra.mxu0 0.0
        %4385 = vmatpush.msra.mxu0 0.0
        %4386 = vmatpush.msra.mxu0 %v4352
        %4387 = vmatpush.msra.mxu0 %v4348
        %4388 = vmatpush.msra.mxu0 %v4344
        %4389 = vmatpush.msra.mxu0 %v4340
        %4390 = vmatpush.msra.mxu0 %v4336
        %4391 = vmatpush.msra.mxu0 %v4332
        %4392 = vmatpush.msra.mxu0 %v4328
        %4393 = vmatpush.msra.mxu0 %v4324
        %4394 = vmatmul.f32.gmra.mxu0 %v4356
        %v4395 = vpop.f32.mrf.mxu0
        %v4396 = vadd.f32 0.0, %v4395
        %4397 = vdwg.mxu0
        %4398 = vmatpush.msra.mxu0 0.0
        %4399 = vmatpush.msra.mxu0 0.0
        %4400 = vmatpush.msra.mxu0 0.0
        %4401 = vmatpush.msra.mxu0 0.0
        %4402 = vmatpush.msra.mxu0 0.0
        %4403 = vmatpush.msra.mxu0 0.0
        %4404 = vmatpush.msra.mxu0 0.0
        %4405 = vmatpush.msra.mxu0 0.0
        %4406 = vmatpush.msra.mxu0 %v4353
        %4407 = vmatpush.msra.mxu0 %v4349
        %4408 = vmatpush.msra.mxu0 %v4345
        %4409 = vmatpush.msra.mxu0 %v4341
        %4410 = vmatpush.msra.mxu0 %v4337
        %4411 = vmatpush.msra.mxu0 %v4333
        %4412 = vmatpush.msra.mxu0 %v4329
        %4413 = vmatpush.msra.mxu0 %v4325
        %4414 = vmatmul.f32.gmra.mxu0 %v4356
        %v4415 = vpop.f32.mrf.mxu0
        %v4416 = vadd.f32 0.0, %v4415
        %4417 = vdwg.mxu0
        %4418 = vmatpush.msra.mxu0 0.0
        %4419 = vmatpush.msra.mxu0 0.0
        %4420 = vmatpush.msra.mxu0 0.0
        %4421 = vmatpush.msra.mxu0 0.0
        %4422 = vmatpush.msra.mxu0 0.0
        %4423 = vmatpush.msra.mxu0 0.0
        %4424 = vmatpush.msra.mxu0 0.0
        %4425 = vmatpush.msra.mxu0 0.0
        %4426 = vmatpush.msra.mxu0 %v4354
        %4427 = vmatpush.msra.mxu0 %v4350
        %4428 = vmatpush.msra.mxu0 %v4346
        %4429 = vmatpush.msra.mxu0 %v4342
        %4430 = vmatpush.msra.mxu0 %v4338
        %4431 = vmatpush.msra.mxu0 %v4334
        %4432 = vmatpush.msra.mxu0 %v4330
        %4433 = vmatpush.msra.mxu0 %v4326
        %4434 = vmatmul.f32.gmra.mxu0 %v4356
        %v4435 = vpop.f32.mrf.mxu0
        %v4436 = vadd.f32 0.0, %v4435
        %4437 = vdwg.mxu0
        %v4438 = vadd.f32 %v4318, %v4376
        %v4439 = vadd.f32 %v4319, %v4396
        %v4440 = vadd.f32 %v4320, %v4416
        %v4441 = vadd.f32 %v4321, %v4436
        %s4442 = scalar_lea.vmem [#allocation10], 5376
        %v4443 = vld [vmem:[%s4442] sm:$0xff]
        %v4444 = vld [vmem:[%s4442 + $0x8] sm:$0xff]
        %v4445 = vld [vmem:[%s4442 + $0x10] sm:$0xff]
        %v4446 = vld [vmem:[%s4442 + $0x18] sm:$0xff]
        %v4447 = vld [vmem:[%s4442 + $0x20] sm:$0xff]
        %v4448 = vld [vmem:[%s4442 + $0x28] sm:$0xff]
        %v4449 = vld [vmem:[%s4442 + $0x30] sm:$0xff]
        %v4450 = vld [vmem:[%s4442 + $0x38] sm:$0xff]
        %v4451 = vld [vmem:[%s4442 + $0x40] sm:$0xff]
        %v4452 = vld [vmem:[%s4442 + $0x48] sm:$0xff]
        %v4453 = vld [vmem:[%s4442 + $0x50] sm:$0xff]
        %v4454 = vld [vmem:[%s4442 + $0x58] sm:$0xff]
        %v4455 = vld [vmem:[%s4442 + $0x60] sm:$0xff]
        %v4456 = vld [vmem:[%s4442 + $0x68] sm:$0xff]
        %v4457 = vld [vmem:[%s4442 + $0x70] sm:$0xff]
        %v4458 = vld [vmem:[%s4442 + $0x78] sm:$0xff]
        %v4459 = vld [vmem:[%s4442 + $0x80] sm:$0xff]
        %v4460 = vld [vmem:[%s4442 + $0x88] sm:$0xff]
        %v4461 = vld [vmem:[%s4442 + $0x90] sm:$0xff]
        %v4462 = vld [vmem:[%s4442 + $0x98] sm:$0xff]
        %v4463 = vld [vmem:[%s4442 + $0xa0] sm:$0xff]
        %v4464 = vld [vmem:[%s4442 + $0xa8] sm:$0xff]
        %v4465 = vld [vmem:[%s4442 + $0xb0] sm:$0xff]
        %v4466 = vld [vmem:[%s4442 + $0xb8] sm:$0xff]
        %v4467 = vld [vmem:[%s4442 + $0xc0] sm:$0xff]
        %v4468 = vld [vmem:[%s4442 + $0xc8] sm:$0xff]
        %v4469 = vld [vmem:[%s4442 + $0xd0] sm:$0xff]
        %v4470 = vld [vmem:[%s4442 + $0xd8] sm:$0xff]
        %v4471 = vld [vmem:[%s4442 + $0xe0] sm:$0xff]
        %v4472 = vld [vmem:[%s4442 + $0xe8] sm:$0xff]
        %v4473 = vld [vmem:[%s4442 + $0xf0] sm:$0xff]
        %v4474 = vld [vmem:[%s4442 + $0xf8] sm:$0xff]
        %v4475 = vrot.slane %v1925, 5
        %v4476 = vsel %vm1997, %v4475, 0
        %4478 = vmatpush.msra.mxu0 0.0
        %4479 = vmatpush.msra.mxu0 0.0
        %4480 = vmatpush.msra.mxu0 0.0
        %4481 = vmatpush.msra.mxu0 0.0
        %4482 = vmatpush.msra.mxu0 0.0
        %4483 = vmatpush.msra.mxu0 0.0
        %4484 = vmatpush.msra.mxu0 0.0
        %4485 = vmatpush.msra.mxu0 0.0
        %4486 = vmatpush.msra.mxu0 %v4471
        %4487 = vmatpush.msra.mxu0 %v4467
        %4488 = vmatpush.msra.mxu0 %v4463
        %4489 = vmatpush.msra.mxu0 %v4459
        %4490 = vmatpush.msra.mxu0 %v4455
        %4491 = vmatpush.msra.mxu0 %v4451
        %4492 = vmatpush.msra.mxu0 %v4447
        %4493 = vmatpush.msra.mxu0 %v4443
        %4494 = vmatmul.f32.gmra.mxu0 %v4476
        %v4495 = vpop.f32.mrf.mxu0
        %v4496 = vadd.f32 0.0, %v4495
        %4497 = vdwg.mxu0
        %4498 = vmatpush.msra.mxu0 0.0
        %4499 = vmatpush.msra.mxu0 0.0
        %4500 = vmatpush.msra.mxu0 0.0
        %4501 = vmatpush.msra.mxu0 0.0
        %4502 = vmatpush.msra.mxu0 0.0
        %4503 = vmatpush.msra.mxu0 0.0
        %4504 = vmatpush.msra.mxu0 0.0
        %4505 = vmatpush.msra.mxu0 0.0
        %4506 = vmatpush.msra.mxu0 %v4472
        %4507 = vmatpush.msra.mxu0 %v4468
        %4508 = vmatpush.msra.mxu0 %v4464
        %4509 = vmatpush.msra.mxu0 %v4460
        %4510 = vmatpush.msra.mxu0 %v4456
        %4511 = vmatpush.msra.mxu0 %v4452
        %4512 = vmatpush.msra.mxu0 %v4448
        %4513 = vmatpush.msra.mxu0 %v4444
        %4514 = vmatmul.f32.gmra.mxu0 %v4476
        %v4515 = vpop.f32.mrf.mxu0
        %v4516 = vadd.f32 0.0, %v4515
        %4517 = vdwg.mxu0
        %4518 = vmatpush.msra.mxu0 0.0
        %4519 = vmatpush.msra.mxu0 0.0
        %4520 = vmatpush.msra.mxu0 0.0
        %4521 = vmatpush.msra.mxu0 0.0
        %4522 = vmatpush.msra.mxu0 0.0
        %4523 = vmatpush.msra.mxu0 0.0
        %4524 = vmatpush.msra.mxu0 0.0
        %4525 = vmatpush.msra.mxu0 0.0
        %4526 = vmatpush.msra.mxu0 %v4473
        %4527 = vmatpush.msra.mxu0 %v4469
        %4528 = vmatpush.msra.mxu0 %v4465
        %4529 = vmatpush.msra.mxu0 %v4461
        %4530 = vmatpush.msra.mxu0 %v4457
        %4531 = vmatpush.msra.mxu0 %v4453
        %4532 = vmatpush.msra.mxu0 %v4449
        %4533 = vmatpush.msra.mxu0 %v4445
        %4534 = vmatmul.f32.gmra.mxu0 %v4476
        %v4535 = vpop.f32.mrf.mxu0
        %v4536 = vadd.f32 0.0, %v4535
        %4537 = vdwg.mxu0
        %4538 = vmatpush.msra.mxu0 0.0
        %4539 = vmatpush.msra.mxu0 0.0
        %4540 = vmatpush.msra.mxu0 0.0
        %4541 = vmatpush.msra.mxu0 0.0
        %4542 = vmatpush.msra.mxu0 0.0
        %4543 = vmatpush.msra.mxu0 0.0
        %4544 = vmatpush.msra.mxu0 0.0
        %4545 = vmatpush.msra.mxu0 0.0
        %4546 = vmatpush.msra.mxu0 %v4474
        %4547 = vmatpush.msra.mxu0 %v4470
        %4548 = vmatpush.msra.mxu0 %v4466
        %4549 = vmatpush.msra.mxu0 %v4462
        %4550 = vmatpush.msra.mxu0 %v4458
        %4551 = vmatpush.msra.mxu0 %v4454
        %4552 = vmatpush.msra.mxu0 %v4450
        %4553 = vmatpush.msra.mxu0 %v4446
        %4554 = vmatmul.f32.gmra.mxu0 %v4476
        %v4555 = vpop.f32.mrf.mxu0
        %v4556 = vadd.f32 0.0, %v4555
        %4557 = vdwg.mxu0
        %v4558 = vadd.f32 %v4438, %v4496
        %v4559 = vadd.f32 %v4439, %v4516
        %v4560 = vadd.f32 %v4440, %v4536
        %v4561 = vadd.f32 %v4441, %v4556
        %s4562 = scalar_lea.vmem [#allocation10], 5632
        %v4563 = vld [vmem:[%s4562] sm:$0xff]
        %v4564 = vld [vmem:[%s4562 + $0x8] sm:$0xff]
        %v4565 = vld [vmem:[%s4562 + $0x10] sm:$0xff]
        %v4566 = vld [vmem:[%s4562 + $0x18] sm:$0xff]
        %v4567 = vld [vmem:[%s4562 + $0x20] sm:$0xff]
        %v4568 = vld [vmem:[%s4562 + $0x28] sm:$0xff]
        %v4569 = vld [vmem:[%s4562 + $0x30] sm:$0xff]
        %v4570 = vld [vmem:[%s4562 + $0x38] sm:$0xff]
        %v4571 = vld [vmem:[%s4562 + $0x40] sm:$0xff]
        %v4572 = vld [vmem:[%s4562 + $0x48] sm:$0xff]
        %v4573 = vld [vmem:[%s4562 + $0x50] sm:$0xff]
        %v4574 = vld [vmem:[%s4562 + $0x58] sm:$0xff]
        %v4575 = vld [vmem:[%s4562 + $0x60] sm:$0xff]
        %v4576 = vld [vmem:[%s4562 + $0x68] sm:$0xff]
        %v4577 = vld [vmem:[%s4562 + $0x70] sm:$0xff]
        %v4578 = vld [vmem:[%s4562 + $0x78] sm:$0xff]
        %v4579 = vld [vmem:[%s4562 + $0x80] sm:$0xff]
        %v4580 = vld [vmem:[%s4562 + $0x88] sm:$0xff]
        %v4581 = vld [vmem:[%s4562 + $0x90] sm:$0xff]
        %v4582 = vld [vmem:[%s4562 + $0x98] sm:$0xff]
        %v4583 = vld [vmem:[%s4562 + $0xa0] sm:$0xff]
        %v4584 = vld [vmem:[%s4562 + $0xa8] sm:$0xff]
        %v4585 = vld [vmem:[%s4562 + $0xb0] sm:$0xff]
        %v4586 = vld [vmem:[%s4562 + $0xb8] sm:$0xff]
        %v4587 = vld [vmem:[%s4562 + $0xc0] sm:$0xff]
        %v4588 = vld [vmem:[%s4562 + $0xc8] sm:$0xff]
        %v4589 = vld [vmem:[%s4562 + $0xd0] sm:$0xff]
        %v4590 = vld [vmem:[%s4562 + $0xd8] sm:$0xff]
        %v4591 = vld [vmem:[%s4562 + $0xe0] sm:$0xff]
        %v4592 = vld [vmem:[%s4562 + $0xe8] sm:$0xff]
        %v4593 = vld [vmem:[%s4562 + $0xf0] sm:$0xff]
        %v4594 = vld [vmem:[%s4562 + $0xf8] sm:$0xff]
        %v4595 = vrot.slane %v1925, 6
        %v4596 = vsel %vm1997, %v4595, 0
        %4598 = vmatpush.msra.mxu0 0.0
        %4599 = vmatpush.msra.mxu0 0.0
        %4600 = vmatpush.msra.mxu0 0.0
        %4601 = vmatpush.msra.mxu0 0.0
        %4602 = vmatpush.msra.mxu0 0.0
        %4603 = vmatpush.msra.mxu0 0.0
        %4604 = vmatpush.msra.mxu0 0.0
        %4605 = vmatpush.msra.mxu0 0.0
        %4606 = vmatpush.msra.mxu0 %v4591
        %4607 = vmatpush.msra.mxu0 %v4587
        %4608 = vmatpush.msra.mxu0 %v4583
        %4609 = vmatpush.msra.mxu0 %v4579
        %4610 = vmatpush.msra.mxu0 %v4575
        %4611 = vmatpush.msra.mxu0 %v4571
        %4612 = vmatpush.msra.mxu0 %v4567
        %4613 = vmatpush.msra.mxu0 %v4563
        %4614 = vmatmul.f32.gmra.mxu0 %v4596
        %v4615 = vpop.f32.mrf.mxu0
        %v4616 = vadd.f32 0.0, %v4615
        %4617 = vdwg.mxu0
        %4618 = vmatpush.msra.mxu0 0.0
        %4619 = vmatpush.msra.mxu0 0.0
        %4620 = vmatpush.msra.mxu0 0.0
        %4621 = vmatpush.msra.mxu0 0.0
        %4622 = vmatpush.msra.mxu0 0.0
        %4623 = vmatpush.msra.mxu0 0.0
        %4624 = vmatpush.msra.mxu0 0.0
        %4625 = vmatpush.msra.mxu0 0.0
        %4626 = vmatpush.msra.mxu0 %v4592
        %4627 = vmatpush.msra.mxu0 %v4588
        %4628 = vmatpush.msra.mxu0 %v4584
        %4629 = vmatpush.msra.mxu0 %v4580
        %4630 = vmatpush.msra.mxu0 %v4576
        %4631 = vmatpush.msra.mxu0 %v4572
        %4632 = vmatpush.msra.mxu0 %v4568
        %4633 = vmatpush.msra.mxu0 %v4564
        %4634 = vmatmul.f32.gmra.mxu0 %v4596
        %v4635 = vpop.f32.mrf.mxu0
        %v4636 = vadd.f32 0.0, %v4635
        %4637 = vdwg.mxu0
        %4638 = vmatpush.msra.mxu0 0.0
        %4639 = vmatpush.msra.mxu0 0.0
        %4640 = vmatpush.msra.mxu0 0.0
        %4641 = vmatpush.msra.mxu0 0.0
        %4642 = vmatpush.msra.mxu0 0.0
        %4643 = vmatpush.msra.mxu0 0.0
        %4644 = vmatpush.msra.mxu0 0.0
        %4645 = vmatpush.msra.mxu0 0.0
        %4646 = vmatpush.msra.mxu0 %v4593
        %4647 = vmatpush.msra.mxu0 %v4589
        %4648 = vmatpush.msra.mxu0 %v4585
        %4649 = vmatpush.msra.mxu0 %v4581
        %4650 = vmatpush.msra.mxu0 %v4577
        %4651 = vmatpush.msra.mxu0 %v4573
        %4652 = vmatpush.msra.mxu0 %v4569
        %4653 = vmatpush.msra.mxu0 %v4565
        %4654 = vmatmul.f32.gmra.mxu0 %v4596
        %v4655 = vpop.f32.mrf.mxu0
        %v4656 = vadd.f32 0.0, %v4655
        %4657 = vdwg.mxu0
        %4658 = vmatpush.msra.mxu0 0.0
        %4659 = vmatpush.msra.mxu0 0.0
        %4660 = vmatpush.msra.mxu0 0.0
        %4661 = vmatpush.msra.mxu0 0.0
        %4662 = vmatpush.msra.mxu0 0.0
        %4663 = vmatpush.msra.mxu0 0.0
        %4664 = vmatpush.msra.mxu0 0.0
        %4665 = vmatpush.msra.mxu0 0.0
        %4666 = vmatpush.msra.mxu0 %v4594
        %4667 = vmatpush.msra.mxu0 %v4590
        %4668 = vmatpush.msra.mxu0 %v4586
        %4669 = vmatpush.msra.mxu0 %v4582
        %4670 = vmatpush.msra.mxu0 %v4578
        %4671 = vmatpush.msra.mxu0 %v4574
        %4672 = vmatpush.msra.mxu0 %v4570
        %4673 = vmatpush.msra.mxu0 %v4566
        %4674 = vmatmul.f32.gmra.mxu0 %v4596
        %v4675 = vpop.f32.mrf.mxu0
        %v4676 = vadd.f32 0.0, %v4675
        %4677 = vdwg.mxu0
        %v4678 = vadd.f32 %v4558, %v4616
        %v4679 = vadd.f32 %v4559, %v4636
        %v4680 = vadd.f32 %v4560, %v4656
        %v4681 = vadd.f32 %v4561, %v4676
        %s4682 = scalar_lea.vmem [#allocation10], 5888
        %v4683 = vld [vmem:[%s4682] sm:$0xff]
        %v4684 = vld [vmem:[%s4682 + $0x8] sm:$0xff]
        %v4685 = vld [vmem:[%s4682 + $0x10] sm:$0xff]
        %v4686 = vld [vmem:[%s4682 + $0x18] sm:$0xff]
        %v4687 = vld [vmem:[%s4682 + $0x20] sm:$0xff]
        %v4688 = vld [vmem:[%s4682 + $0x28] sm:$0xff]
        %v4689 = vld [vmem:[%s4682 + $0x30] sm:$0xff]
        %v4690 = vld [vmem:[%s4682 + $0x38] sm:$0xff]
        %v4691 = vld [vmem:[%s4682 + $0x40] sm:$0xff]
        %v4692 = vld [vmem:[%s4682 + $0x48] sm:$0xff]
        %v4693 = vld [vmem:[%s4682 + $0x50] sm:$0xff]
        %v4694 = vld [vmem:[%s4682 + $0x58] sm:$0xff]
        %v4695 = vld [vmem:[%s4682 + $0x60] sm:$0xff]
        %v4696 = vld [vmem:[%s4682 + $0x68] sm:$0xff]
        %v4697 = vld [vmem:[%s4682 + $0x70] sm:$0xff]
        %v4698 = vld [vmem:[%s4682 + $0x78] sm:$0xff]
        %v4699 = vld [vmem:[%s4682 + $0x80] sm:$0xff]
        %v4700 = vld [vmem:[%s4682 + $0x88] sm:$0xff]
        %v4701 = vld [vmem:[%s4682 + $0x90] sm:$0xff]
        %v4702 = vld [vmem:[%s4682 + $0x98] sm:$0xff]
        %v4703 = vld [vmem:[%s4682 + $0xa0] sm:$0xff]
        %v4704 = vld [vmem:[%s4682 + $0xa8] sm:$0xff]
        %v4705 = vld [vmem:[%s4682 + $0xb0] sm:$0xff]
        %v4706 = vld [vmem:[%s4682 + $0xb8] sm:$0xff]
        %v4707 = vld [vmem:[%s4682 + $0xc0] sm:$0xff]
        %v4708 = vld [vmem:[%s4682 + $0xc8] sm:$0xff]
        %v4709 = vld [vmem:[%s4682 + $0xd0] sm:$0xff]
        %v4710 = vld [vmem:[%s4682 + $0xd8] sm:$0xff]
        %v4711 = vld [vmem:[%s4682 + $0xe0] sm:$0xff]
        %v4712 = vld [vmem:[%s4682 + $0xe8] sm:$0xff]
        %v4713 = vld [vmem:[%s4682 + $0xf0] sm:$0xff]
        %v4714 = vld [vmem:[%s4682 + $0xf8] sm:$0xff]
        %v4715 = vrot.slane %v1925, 7
        %v4716 = vsel %vm1997, %v4715, 0
        %4718 = vmatpush.msra.mxu0 0.0
        %4719 = vmatpush.msra.mxu0 0.0
        %4720 = vmatpush.msra.mxu0 0.0
        %4721 = vmatpush.msra.mxu0 0.0
        %4722 = vmatpush.msra.mxu0 0.0
        %4723 = vmatpush.msra.mxu0 0.0
        %4724 = vmatpush.msra.mxu0 0.0
        %4725 = vmatpush.msra.mxu0 0.0
        %4726 = vmatpush.msra.mxu0 %v4711
        %4727 = vmatpush.msra.mxu0 %v4707
        %4728 = vmatpush.msra.mxu0 %v4703
        %4729 = vmatpush.msra.mxu0 %v4699
        %4730 = vmatpush.msra.mxu0 %v4695
        %4731 = vmatpush.msra.mxu0 %v4691
        %4732 = vmatpush.msra.mxu0 %v4687
        %4733 = vmatpush.msra.mxu0 %v4683
        %4734 = vmatmul.f32.gmra.mxu0 %v4716
        %v4735 = vpop.f32.mrf.mxu0
        %v4736 = vadd.f32 0.0, %v4735
        %4737 = vdwg.mxu0
        %4738 = vmatpush.msra.mxu0 0.0
        %4739 = vmatpush.msra.mxu0 0.0
        %4740 = vmatpush.msra.mxu0 0.0
        %4741 = vmatpush.msra.mxu0 0.0
        %4742 = vmatpush.msra.mxu0 0.0
        %4743 = vmatpush.msra.mxu0 0.0
        %4744 = vmatpush.msra.mxu0 0.0
        %4745 = vmatpush.msra.mxu0 0.0
        %4746 = vmatpush.msra.mxu0 %v4712
        %4747 = vmatpush.msra.mxu0 %v4708
        %4748 = vmatpush.msra.mxu0 %v4704
        %4749 = vmatpush.msra.mxu0 %v4700
        %4750 = vmatpush.msra.mxu0 %v4696
        %4751 = vmatpush.msra.mxu0 %v4692
        %4752 = vmatpush.msra.mxu0 %v4688
        %4753 = vmatpush.msra.mxu0 %v4684
        %4754 = vmatmul.f32.gmra.mxu0 %v4716
        %v4755 = vpop.f32.mrf.mxu0
        %v4756 = vadd.f32 0.0, %v4755
        %4757 = vdwg.mxu0
        %4758 = vmatpush.msra.mxu0 0.0
        %4759 = vmatpush.msra.mxu0 0.0
        %4760 = vmatpush.msra.mxu0 0.0
        %4761 = vmatpush.msra.mxu0 0.0
        %4762 = vmatpush.msra.mxu0 0.0
        %4763 = vmatpush.msra.mxu0 0.0
        %4764 = vmatpush.msra.mxu0 0.0
        %4765 = vmatpush.msra.mxu0 0.0
        %4766 = vmatpush.msra.mxu0 %v4713
        %4767 = vmatpush.msra.mxu0 %v4709
        %4768 = vmatpush.msra.mxu0 %v4705
        %4769 = vmatpush.msra.mxu0 %v4701
        %4770 = vmatpush.msra.mxu0 %v4697
        %4771 = vmatpush.msra.mxu0 %v4693
        %4772 = vmatpush.msra.mxu0 %v4689
        %4773 = vmatpush.msra.mxu0 %v4685
        %4774 = vmatmul.f32.gmra.mxu0 %v4716
        %v4775 = vpop.f32.mrf.mxu0
        %v4776 = vadd.f32 0.0, %v4775
        %4777 = vdwg.mxu0
        %4778 = vmatpush.msra.mxu0 0.0
        %4779 = vmatpush.msra.mxu0 0.0
        %4780 = vmatpush.msra.mxu0 0.0
        %4781 = vmatpush.msra.mxu0 0.0
        %4782 = vmatpush.msra.mxu0 0.0
        %4783 = vmatpush.msra.mxu0 0.0
        %4784 = vmatpush.msra.mxu0 0.0
        %4785 = vmatpush.msra.mxu0 0.0
        %4786 = vmatpush.msra.mxu0 %v4714
        %4787 = vmatpush.msra.mxu0 %v4710
        %4788 = vmatpush.msra.mxu0 %v4706
        %4789 = vmatpush.msra.mxu0 %v4702
        %4790 = vmatpush.msra.mxu0 %v4698
        %4791 = vmatpush.msra.mxu0 %v4694
        %4792 = vmatpush.msra.mxu0 %v4690
        %4793 = vmatpush.msra.mxu0 %v4686
        %4794 = vmatmul.f32.gmra.mxu0 %v4716
        %v4795 = vpop.f32.mrf.mxu0
        %v4796 = vadd.f32 0.0, %v4795
        %4797 = vdwg.mxu0
        %v4798 = vadd.f32 %v4678, %v4736
        %v4799 = vadd.f32 %v4679, %v4756
        %v4800 = vadd.f32 %v4680, %v4776
        %v4801 = vadd.f32 %v4681, %v4796
        %s4802 = scalar_lea.vmem [#allocation10], 6144
        %v4803 = vld [vmem:[%s4802] sm:$0xff]
        %v4804 = vld [vmem:[%s4802 + $0x8] sm:$0xff]
        %v4805 = vld [vmem:[%s4802 + $0x10] sm:$0xff]
        %v4806 = vld [vmem:[%s4802 + $0x18] sm:$0xff]
        %v4807 = vld [vmem:[%s4802 + $0x20] sm:$0xff]
        %v4808 = vld [vmem:[%s4802 + $0x28] sm:$0xff]
        %v4809 = vld [vmem:[%s4802 + $0x30] sm:$0xff]
        %v4810 = vld [vmem:[%s4802 + $0x38] sm:$0xff]
        %v4811 = vld [vmem:[%s4802 + $0x40] sm:$0xff]
        %v4812 = vld [vmem:[%s4802 + $0x48] sm:$0xff]
        %v4813 = vld [vmem:[%s4802 + $0x50] sm:$0xff]
        %v4814 = vld [vmem:[%s4802 + $0x58] sm:$0xff]
        %v4815 = vld [vmem:[%s4802 + $0x60] sm:$0xff]
        %v4816 = vld [vmem:[%s4802 + $0x68] sm:$0xff]
        %v4817 = vld [vmem:[%s4802 + $0x70] sm:$0xff]
        %v4818 = vld [vmem:[%s4802 + $0x78] sm:$0xff]
        %v4819 = vld [vmem:[%s4802 + $0x80] sm:$0xff]
        %v4820 = vld [vmem:[%s4802 + $0x88] sm:$0xff]
        %v4821 = vld [vmem:[%s4802 + $0x90] sm:$0xff]
        %v4822 = vld [vmem:[%s4802 + $0x98] sm:$0xff]
        %v4823 = vld [vmem:[%s4802 + $0xa0] sm:$0xff]
        %v4824 = vld [vmem:[%s4802 + $0xa8] sm:$0xff]
        %v4825 = vld [vmem:[%s4802 + $0xb0] sm:$0xff]
        %v4826 = vld [vmem:[%s4802 + $0xb8] sm:$0xff]
        %v4827 = vld [vmem:[%s4802 + $0xc0] sm:$0xff]
        %v4828 = vld [vmem:[%s4802 + $0xc8] sm:$0xff]
        %v4829 = vld [vmem:[%s4802 + $0xd0] sm:$0xff]
        %v4830 = vld [vmem:[%s4802 + $0xd8] sm:$0xff]
        %v4831 = vld [vmem:[%s4802 + $0xe0] sm:$0xff]
        %v4832 = vld [vmem:[%s4802 + $0xe8] sm:$0xff]
        %v4833 = vld [vmem:[%s4802 + $0xf0] sm:$0xff]
        %v4834 = vld [vmem:[%s4802 + $0xf8] sm:$0xff]
        %v4836 = vsel %vm1997, %v1928, 0
        %4838 = vmatpush.msra.mxu0 0.0
        %4839 = vmatpush.msra.mxu0 0.0
        %4840 = vmatpush.msra.mxu0 0.0
        %4841 = vmatpush.msra.mxu0 0.0
        %4842 = vmatpush.msra.mxu0 0.0
        %4843 = vmatpush.msra.mxu0 0.0
        %4844 = vmatpush.msra.mxu0 0.0
        %4845 = vmatpush.msra.mxu0 0.0
        %4846 = vmatpush.msra.mxu0 %v4831
        %4847 = vmatpush.msra.mxu0 %v4827
        %4848 = vmatpush.msra.mxu0 %v4823
        %4849 = vmatpush.msra.mxu0 %v4819
        %4850 = vmatpush.msra.mxu0 %v4815
        %4851 = vmatpush.msra.mxu0 %v4811
        %4852 = vmatpush.msra.mxu0 %v4807
        %4853 = vmatpush.msra.mxu0 %v4803
        %4854 = vmatmul.f32.gmra.mxu0 %v4836
        %v4855 = vpop.f32.mrf.mxu0
        %v4856 = vadd.f32 0.0, %v4855
        %4857 = vdwg.mxu0
        %4858 = vmatpush.msra.mxu0 0.0
        %4859 = vmatpush.msra.mxu0 0.0
        %4860 = vmatpush.msra.mxu0 0.0
        %4861 = vmatpush.msra.mxu0 0.0
        %4862 = vmatpush.msra.mxu0 0.0
        %4863 = vmatpush.msra.mxu0 0.0
        %4864 = vmatpush.msra.mxu0 0.0
        %4865 = vmatpush.msra.mxu0 0.0
        %4866 = vmatpush.msra.mxu0 %v4832
        %4867 = vmatpush.msra.mxu0 %v4828
        %4868 = vmatpush.msra.mxu0 %v4824
        %4869 = vmatpush.msra.mxu0 %v4820
        %4870 = vmatpush.msra.mxu0 %v4816
        %4871 = vmatpush.msra.mxu0 %v4812
        %4872 = vmatpush.msra.mxu0 %v4808
        %4873 = vmatpush.msra.mxu0 %v4804
        %4874 = vmatmul.f32.gmra.mxu0 %v4836
        %v4875 = vpop.f32.mrf.mxu0
        %v4876 = vadd.f32 0.0, %v4875
        %4877 = vdwg.mxu0
        %4878 = vmatpush.msra.mxu0 0.0
        %4879 = vmatpush.msra.mxu0 0.0
        %4880 = vmatpush.msra.mxu0 0.0
        %4881 = vmatpush.msra.mxu0 0.0
        %4882 = vmatpush.msra.mxu0 0.0
        %4883 = vmatpush.msra.mxu0 0.0
        %4884 = vmatpush.msra.mxu0 0.0
        %4885 = vmatpush.msra.mxu0 0.0
        %4886 = vmatpush.msra.mxu0 %v4833
        %4887 = vmatpush.msra.mxu0 %v4829
        %4888 = vmatpush.msra.mxu0 %v4825
        %4889 = vmatpush.msra.mxu0 %v4821
        %4890 = vmatpush.msra.mxu0 %v4817
        %4891 = vmatpush.msra.mxu0 %v4813
        %4892 = vmatpush.msra.mxu0 %v4809
        %4893 = vmatpush.msra.mxu0 %v4805
        %4894 = vmatmul.f32.gmra.mxu0 %v4836
        %v4895 = vpop.f32.mrf.mxu0
        %v4896 = vadd.f32 0.0, %v4895
        %4897 = vdwg.mxu0
        %4898 = vmatpush.msra.mxu0 0.0
        %4899 = vmatpush.msra.mxu0 0.0
        %4900 = vmatpush.msra.mxu0 0.0
        %4901 = vmatpush.msra.mxu0 0.0
        %4902 = vmatpush.msra.mxu0 0.0
        %4903 = vmatpush.msra.mxu0 0.0
        %4904 = vmatpush.msra.mxu0 0.0
        %4905 = vmatpush.msra.mxu0 0.0
        %4906 = vmatpush.msra.mxu0 %v4834
        %4907 = vmatpush.msra.mxu0 %v4830
        %4908 = vmatpush.msra.mxu0 %v4826
        %4909 = vmatpush.msra.mxu0 %v4822
        %4910 = vmatpush.msra.mxu0 %v4818
        %4911 = vmatpush.msra.mxu0 %v4814
        %4912 = vmatpush.msra.mxu0 %v4810
        %4913 = vmatpush.msra.mxu0 %v4806
        %4914 = vmatmul.f32.gmra.mxu0 %v4836
        %v4915 = vpop.f32.mrf.mxu0
        %v4916 = vadd.f32 0.0, %v4915
        %4917 = vdwg.mxu0
        %v4918 = vadd.f32 %v4798, %v4856
        %v4919 = vadd.f32 %v4799, %v4876
        %v4920 = vadd.f32 %v4800, %v4896
        %v4921 = vadd.f32 %v4801, %v4916
        %s4922 = scalar_lea.vmem [#allocation10], 6400
        %v4923 = vld [vmem:[%s4922] sm:$0xff]
        %v4924 = vld [vmem:[%s4922 + $0x8] sm:$0xff]
        %v4925 = vld [vmem:[%s4922 + $0x10] sm:$0xff]
        %v4926 = vld [vmem:[%s4922 + $0x18] sm:$0xff]
        %v4927 = vld [vmem:[%s4922 + $0x20] sm:$0xff]
        %v4928 = vld [vmem:[%s4922 + $0x28] sm:$0xff]
        %v4929 = vld [vmem:[%s4922 + $0x30] sm:$0xff]
        %v4930 = vld [vmem:[%s4922 + $0x38] sm:$0xff]
        %v4931 = vld [vmem:[%s4922 + $0x40] sm:$0xff]
        %v4932 = vld [vmem:[%s4922 + $0x48] sm:$0xff]
        %v4933 = vld [vmem:[%s4922 + $0x50] sm:$0xff]
        %v4934 = vld [vmem:[%s4922 + $0x58] sm:$0xff]
        %v4935 = vld [vmem:[%s4922 + $0x60] sm:$0xff]
        %v4936 = vld [vmem:[%s4922 + $0x68] sm:$0xff]
        %v4937 = vld [vmem:[%s4922 + $0x70] sm:$0xff]
        %v4938 = vld [vmem:[%s4922 + $0x78] sm:$0xff]
        %v4939 = vld [vmem:[%s4922 + $0x80] sm:$0xff]
        %v4940 = vld [vmem:[%s4922 + $0x88] sm:$0xff]
        %v4941 = vld [vmem:[%s4922 + $0x90] sm:$0xff]
        %v4942 = vld [vmem:[%s4922 + $0x98] sm:$0xff]
        %v4943 = vld [vmem:[%s4922 + $0xa0] sm:$0xff]
        %v4944 = vld [vmem:[%s4922 + $0xa8] sm:$0xff]
        %v4945 = vld [vmem:[%s4922 + $0xb0] sm:$0xff]
        %v4946 = vld [vmem:[%s4922 + $0xb8] sm:$0xff]
        %v4947 = vld [vmem:[%s4922 + $0xc0] sm:$0xff]
        %v4948 = vld [vmem:[%s4922 + $0xc8] sm:$0xff]
        %v4949 = vld [vmem:[%s4922 + $0xd0] sm:$0xff]
        %v4950 = vld [vmem:[%s4922 + $0xd8] sm:$0xff]
        %v4951 = vld [vmem:[%s4922 + $0xe0] sm:$0xff]
        %v4952 = vld [vmem:[%s4922 + $0xe8] sm:$0xff]
        %v4953 = vld [vmem:[%s4922 + $0xf0] sm:$0xff]
        %v4954 = vld [vmem:[%s4922 + $0xf8] sm:$0xff]
        %v4955 = vrot.slane %v1928, 1
        %v4956 = vsel %vm1997, %v4955, 0
        %4958 = vmatpush.msra.mxu0 0.0
        %4959 = vmatpush.msra.mxu0 0.0
        %4960 = vmatpush.msra.mxu0 0.0
        %4961 = vmatpush.msra.mxu0 0.0
        %4962 = vmatpush.msra.mxu0 0.0
        %4963 = vmatpush.msra.mxu0 0.0
        %4964 = vmatpush.msra.mxu0 0.0
        %4965 = vmatpush.msra.mxu0 0.0
        %4966 = vmatpush.msra.mxu0 %v4951
        %4967 = vmatpush.msra.mxu0 %v4947
        %4968 = vmatpush.msra.mxu0 %v4943
        %4969 = vmatpush.msra.mxu0 %v4939
        %4970 = vmatpush.msra.mxu0 %v4935
        %4971 = vmatpush.msra.mxu0 %v4931
        %4972 = vmatpush.msra.mxu0 %v4927
        %4973 = vmatpush.msra.mxu0 %v4923
        %4974 = vmatmul.f32.gmra.mxu0 %v4956
        %v4975 = vpop.f32.mrf.mxu0
        %v4976 = vadd.f32 0.0, %v4975
        %4977 = vdwg.mxu0
        %4978 = vmatpush.msra.mxu0 0.0
        %4979 = vmatpush.msra.mxu0 0.0
        %4980 = vmatpush.msra.mxu0 0.0
        %4981 = vmatpush.msra.mxu0 0.0
        %4982 = vmatpush.msra.mxu0 0.0
        %4983 = vmatpush.msra.mxu0 0.0
        %4984 = vmatpush.msra.mxu0 0.0
        %4985 = vmatpush.msra.mxu0 0.0
        %4986 = vmatpush.msra.mxu0 %v4952
        %4987 = vmatpush.msra.mxu0 %v4948
        %4988 = vmatpush.msra.mxu0 %v4944
        %4989 = vmatpush.msra.mxu0 %v4940
        %4990 = vmatpush.msra.mxu0 %v4936
        %4991 = vmatpush.msra.mxu0 %v4932
        %4992 = vmatpush.msra.mxu0 %v4928
        %4993 = vmatpush.msra.mxu0 %v4924
        %4994 = vmatmul.f32.gmra.mxu0 %v4956
        %v4995 = vpop.f32.mrf.mxu0
        %v4996 = vadd.f32 0.0, %v4995
        %4997 = vdwg.mxu0
        %4998 = vmatpush.msra.mxu0 0.0
        %4999 = vmatpush.msra.mxu0 0.0
        %5000 = vmatpush.msra.mxu0 0.0
        %5001 = vmatpush.msra.mxu0 0.0
        %5002 = vmatpush.msra.mxu0 0.0
        %5003 = vmatpush.msra.mxu0 0.0
        %5004 = vmatpush.msra.mxu0 0.0
        %5005 = vmatpush.msra.mxu0 0.0
        %5006 = vmatpush.msra.mxu0 %v4953
        %5007 = vmatpush.msra.mxu0 %v4949
        %5008 = vmatpush.msra.mxu0 %v4945
        %5009 = vmatpush.msra.mxu0 %v4941
        %5010 = vmatpush.msra.mxu0 %v4937
        %5011 = vmatpush.msra.mxu0 %v4933
        %5012 = vmatpush.msra.mxu0 %v4929
        %5013 = vmatpush.msra.mxu0 %v4925
        %5014 = vmatmul.f32.gmra.mxu0 %v4956
        %v5015 = vpop.f32.mrf.mxu0
        %v5016 = vadd.f32 0.0, %v5015
        %5017 = vdwg.mxu0
        %5018 = vmatpush.msra.mxu0 0.0
        %5019 = vmatpush.msra.mxu0 0.0
        %5020 = vmatpush.msra.mxu0 0.0
        %5021 = vmatpush.msra.mxu0 0.0
        %5022 = vmatpush.msra.mxu0 0.0
        %5023 = vmatpush.msra.mxu0 0.0
        %5024 = vmatpush.msra.mxu0 0.0
        %5025 = vmatpush.msra.mxu0 0.0
        %5026 = vmatpush.msra.mxu0 %v4954
        %5027 = vmatpush.msra.mxu0 %v4950
        %5028 = vmatpush.msra.mxu0 %v4946
        %5029 = vmatpush.msra.mxu0 %v4942
        %5030 = vmatpush.msra.mxu0 %v4938
        %5031 = vmatpush.msra.mxu0 %v4934
        %5032 = vmatpush.msra.mxu0 %v4930
        %5033 = vmatpush.msra.mxu0 %v4926
        %5034 = vmatmul.f32.gmra.mxu0 %v4956
        %v5035 = vpop.f32.mrf.mxu0
        %v5036 = vadd.f32 0.0, %v5035
        %5037 = vdwg.mxu0
        %v5038 = vadd.f32 %v4918, %v4976
        %v5039 = vadd.f32 %v4919, %v4996
        %v5040 = vadd.f32 %v4920, %v5016
        %v5041 = vadd.f32 %v4921, %v5036
        %s5042 = scalar_lea.vmem [#allocation10], 6656
        %v5043 = vld [vmem:[%s5042] sm:$0xff]
        %v5044 = vld [vmem:[%s5042 + $0x8] sm:$0xff]
        %v5045 = vld [vmem:[%s5042 + $0x10] sm:$0xff]
        %v5046 = vld [vmem:[%s5042 + $0x18] sm:$0xff]
        %v5047 = vld [vmem:[%s5042 + $0x20] sm:$0xff]
        %v5048 = vld [vmem:[%s5042 + $0x28] sm:$0xff]
        %v5049 = vld [vmem:[%s5042 + $0x30] sm:$0xff]
        %v5050 = vld [vmem:[%s5042 + $0x38] sm:$0xff]
        %v5051 = vld [vmem:[%s5042 + $0x40] sm:$0xff]
        %v5052 = vld [vmem:[%s5042 + $0x48] sm:$0xff]
        %v5053 = vld [vmem:[%s5042 + $0x50] sm:$0xff]
        %v5054 = vld [vmem:[%s5042 + $0x58] sm:$0xff]
        %v5055 = vld [vmem:[%s5042 + $0x60] sm:$0xff]
        %v5056 = vld [vmem:[%s5042 + $0x68] sm:$0xff]
        %v5057 = vld [vmem:[%s5042 + $0x70] sm:$0xff]
        %v5058 = vld [vmem:[%s5042 + $0x78] sm:$0xff]
        %v5059 = vld [vmem:[%s5042 + $0x80] sm:$0xff]
        %v5060 = vld [vmem:[%s5042 + $0x88] sm:$0xff]
        %v5061 = vld [vmem:[%s5042 + $0x90] sm:$0xff]
        %v5062 = vld [vmem:[%s5042 + $0x98] sm:$0xff]
        %v5063 = vld [vmem:[%s5042 + $0xa0] sm:$0xff]
        %v5064 = vld [vmem:[%s5042 + $0xa8] sm:$0xff]
        %v5065 = vld [vmem:[%s5042 + $0xb0] sm:$0xff]
        %v5066 = vld [vmem:[%s5042 + $0xb8] sm:$0xff]
        %v5067 = vld [vmem:[%s5042 + $0xc0] sm:$0xff]
        %v5068 = vld [vmem:[%s5042 + $0xc8] sm:$0xff]
        %v5069 = vld [vmem:[%s5042 + $0xd0] sm:$0xff]
        %v5070 = vld [vmem:[%s5042 + $0xd8] sm:$0xff]
        %v5071 = vld [vmem:[%s5042 + $0xe0] sm:$0xff]
        %v5072 = vld [vmem:[%s5042 + $0xe8] sm:$0xff]
        %v5073 = vld [vmem:[%s5042 + $0xf0] sm:$0xff]
        %v5074 = vld [vmem:[%s5042 + $0xf8] sm:$0xff]
        %v5075 = vrot.slane %v1928, 2
        %v5076 = vsel %vm1997, %v5075, 0
        %5078 = vmatpush.msra.mxu0 0.0
        %5079 = vmatpush.msra.mxu0 0.0
        %5080 = vmatpush.msra.mxu0 0.0
        %5081 = vmatpush.msra.mxu0 0.0
        %5082 = vmatpush.msra.mxu0 0.0
        %5083 = vmatpush.msra.mxu0 0.0
        %5084 = vmatpush.msra.mxu0 0.0
        %5085 = vmatpush.msra.mxu0 0.0
        %5086 = vmatpush.msra.mxu0 %v5071
        %5087 = vmatpush.msra.mxu0 %v5067
        %5088 = vmatpush.msra.mxu0 %v5063
        %5089 = vmatpush.msra.mxu0 %v5059
        %5090 = vmatpush.msra.mxu0 %v5055
        %5091 = vmatpush.msra.mxu0 %v5051
        %5092 = vmatpush.msra.mxu0 %v5047
        %5093 = vmatpush.msra.mxu0 %v5043
        %5094 = vmatmul.f32.gmra.mxu0 %v5076
        %v5095 = vpop.f32.mrf.mxu0
        %v5096 = vadd.f32 0.0, %v5095
        %5097 = vdwg.mxu0
        %5098 = vmatpush.msra.mxu0 0.0
        %5099 = vmatpush.msra.mxu0 0.0
        %5100 = vmatpush.msra.mxu0 0.0
        %5101 = vmatpush.msra.mxu0 0.0
        %5102 = vmatpush.msra.mxu0 0.0
        %5103 = vmatpush.msra.mxu0 0.0
        %5104 = vmatpush.msra.mxu0 0.0
        %5105 = vmatpush.msra.mxu0 0.0
        %5106 = vmatpush.msra.mxu0 %v5072
        %5107 = vmatpush.msra.mxu0 %v5068
        %5108 = vmatpush.msra.mxu0 %v5064
        %5109 = vmatpush.msra.mxu0 %v5060
        %5110 = vmatpush.msra.mxu0 %v5056
        %5111 = vmatpush.msra.mxu0 %v5052
        %5112 = vmatpush.msra.mxu0 %v5048
        %5113 = vmatpush.msra.mxu0 %v5044
        %5114 = vmatmul.f32.gmra.mxu0 %v5076
        %v5115 = vpop.f32.mrf.mxu0
        %v5116 = vadd.f32 0.0, %v5115
        %5117 = vdwg.mxu0
        %5118 = vmatpush.msra.mxu0 0.0
        %5119 = vmatpush.msra.mxu0 0.0
        %5120 = vmatpush.msra.mxu0 0.0
        %5121 = vmatpush.msra.mxu0 0.0
        %5122 = vmatpush.msra.mxu0 0.0
        %5123 = vmatpush.msra.mxu0 0.0
        %5124 = vmatpush.msra.mxu0 0.0
        %5125 = vmatpush.msra.mxu0 0.0
        %5126 = vmatpush.msra.mxu0 %v5073
        %5127 = vmatpush.msra.mxu0 %v5069
        %5128 = vmatpush.msra.mxu0 %v5065
        %5129 = vmatpush.msra.mxu0 %v5061
        %5130 = vmatpush.msra.mxu0 %v5057
        %5131 = vmatpush.msra.mxu0 %v5053
        %5132 = vmatpush.msra.mxu0 %v5049
        %5133 = vmatpush.msra.mxu0 %v5045
        %5134 = vmatmul.f32.gmra.mxu0 %v5076
        %v5135 = vpop.f32.mrf.mxu0
        %v5136 = vadd.f32 0.0, %v5135
        %5137 = vdwg.mxu0
        %5138 = vmatpush.msra.mxu0 0.0
        %5139 = vmatpush.msra.mxu0 0.0
        %5140 = vmatpush.msra.mxu0 0.0
        %5141 = vmatpush.msra.mxu0 0.0
        %5142 = vmatpush.msra.mxu0 0.0
        %5143 = vmatpush.msra.mxu0 0.0
        %5144 = vmatpush.msra.mxu0 0.0
        %5145 = vmatpush.msra.mxu0 0.0
        %5146 = vmatpush.msra.mxu0 %v5074
        %5147 = vmatpush.msra.mxu0 %v5070
        %5148 = vmatpush.msra.mxu0 %v5066
        %5149 = vmatpush.msra.mxu0 %v5062
        %5150 = vmatpush.msra.mxu0 %v5058
        %5151 = vmatpush.msra.mxu0 %v5054
        %5152 = vmatpush.msra.mxu0 %v5050
        %5153 = vmatpush.msra.mxu0 %v5046
        %5154 = vmatmul.f32.gmra.mxu0 %v5076
        %v5155 = vpop.f32.mrf.mxu0
        %v5156 = vadd.f32 0.0, %v5155
        %5157 = vdwg.mxu0
        %v5158 = vadd.f32 %v5038, %v5096
        %v5159 = vadd.f32 %v5039, %v5116
        %v5160 = vadd.f32 %v5040, %v5136
        %v5161 = vadd.f32 %v5041, %v5156
        %s5162 = scalar_lea.vmem [#allocation10], 6912
        %v5163 = vld [vmem:[%s5162] sm:$0xff]
        %v5164 = vld [vmem:[%s5162 + $0x8] sm:$0xff]
        %v5165 = vld [vmem:[%s5162 + $0x10] sm:$0xff]
        %v5166 = vld [vmem:[%s5162 + $0x18] sm:$0xff]
        %v5167 = vld [vmem:[%s5162 + $0x20] sm:$0xff]
        %v5168 = vld [vmem:[%s5162 + $0x28] sm:$0xff]
        %v5169 = vld [vmem:[%s5162 + $0x30] sm:$0xff]
        %v5170 = vld [vmem:[%s5162 + $0x38] sm:$0xff]
        %v5171 = vld [vmem:[%s5162 + $0x40] sm:$0xff]
        %v5172 = vld [vmem:[%s5162 + $0x48] sm:$0xff]
        %v5173 = vld [vmem:[%s5162 + $0x50] sm:$0xff]
        %v5174 = vld [vmem:[%s5162 + $0x58] sm:$0xff]
        %v5175 = vld [vmem:[%s5162 + $0x60] sm:$0xff]
        %v5176 = vld [vmem:[%s5162 + $0x68] sm:$0xff]
        %v5177 = vld [vmem:[%s5162 + $0x70] sm:$0xff]
        %v5178 = vld [vmem:[%s5162 + $0x78] sm:$0xff]
        %v5179 = vld [vmem:[%s5162 + $0x80] sm:$0xff]
        %v5180 = vld [vmem:[%s5162 + $0x88] sm:$0xff]
        %v5181 = vld [vmem:[%s5162 + $0x90] sm:$0xff]
        %v5182 = vld [vmem:[%s5162 + $0x98] sm:$0xff]
        %v5183 = vld [vmem:[%s5162 + $0xa0] sm:$0xff]
        %v5184 = vld [vmem:[%s5162 + $0xa8] sm:$0xff]
        %v5185 = vld [vmem:[%s5162 + $0xb0] sm:$0xff]
        %v5186 = vld [vmem:[%s5162 + $0xb8] sm:$0xff]
        %v5187 = vld [vmem:[%s5162 + $0xc0] sm:$0xff]
        %v5188 = vld [vmem:[%s5162 + $0xc8] sm:$0xff]
        %v5189 = vld [vmem:[%s5162 + $0xd0] sm:$0xff]
        %v5190 = vld [vmem:[%s5162 + $0xd8] sm:$0xff]
        %v5191 = vld [vmem:[%s5162 + $0xe0] sm:$0xff]
        %v5192 = vld [vmem:[%s5162 + $0xe8] sm:$0xff]
        %v5193 = vld [vmem:[%s5162 + $0xf0] sm:$0xff]
        %v5194 = vld [vmem:[%s5162 + $0xf8] sm:$0xff]
        %v5195 = vrot.slane %v1928, 3
        %v5196 = vsel %vm1997, %v5195, 0
        %5198 = vmatpush.msra.mxu0 0.0
        %5199 = vmatpush.msra.mxu0 0.0
        %5200 = vmatpush.msra.mxu0 0.0
        %5201 = vmatpush.msra.mxu0 0.0
        %5202 = vmatpush.msra.mxu0 0.0
        %5203 = vmatpush.msra.mxu0 0.0
        %5204 = vmatpush.msra.mxu0 0.0
        %5205 = vmatpush.msra.mxu0 0.0
        %5206 = vmatpush.msra.mxu0 %v5191
        %5207 = vmatpush.msra.mxu0 %v5187
        %5208 = vmatpush.msra.mxu0 %v5183
        %5209 = vmatpush.msra.mxu0 %v5179
        %5210 = vmatpush.msra.mxu0 %v5175
        %5211 = vmatpush.msra.mxu0 %v5171
        %5212 = vmatpush.msra.mxu0 %v5167
        %5213 = vmatpush.msra.mxu0 %v5163
        %5214 = vmatmul.f32.gmra.mxu0 %v5196
        %v5215 = vpop.f32.mrf.mxu0
        %v5216 = vadd.f32 0.0, %v5215
        %5217 = vdwg.mxu0
        %5218 = vmatpush.msra.mxu0 0.0
        %5219 = vmatpush.msra.mxu0 0.0
        %5220 = vmatpush.msra.mxu0 0.0
        %5221 = vmatpush.msra.mxu0 0.0
        %5222 = vmatpush.msra.mxu0 0.0
        %5223 = vmatpush.msra.mxu0 0.0
        %5224 = vmatpush.msra.mxu0 0.0
        %5225 = vmatpush.msra.mxu0 0.0
        %5226 = vmatpush.msra.mxu0 %v5192
        %5227 = vmatpush.msra.mxu0 %v5188
        %5228 = vmatpush.msra.mxu0 %v5184
        %5229 = vmatpush.msra.mxu0 %v5180
        %5230 = vmatpush.msra.mxu0 %v5176
        %5231 = vmatpush.msra.mxu0 %v5172
        %5232 = vmatpush.msra.mxu0 %v5168
        %5233 = vmatpush.msra.mxu0 %v5164
        %5234 = vmatmul.f32.gmra.mxu0 %v5196
        %v5235 = vpop.f32.mrf.mxu0
        %v5236 = vadd.f32 0.0, %v5235
        %5237 = vdwg.mxu0
        %5238 = vmatpush.msra.mxu0 0.0
        %5239 = vmatpush.msra.mxu0 0.0
        %5240 = vmatpush.msra.mxu0 0.0
        %5241 = vmatpush.msra.mxu0 0.0
        %5242 = vmatpush.msra.mxu0 0.0
        %5243 = vmatpush.msra.mxu0 0.0
        %5244 = vmatpush.msra.mxu0 0.0
        %5245 = vmatpush.msra.mxu0 0.0
        %5246 = vmatpush.msra.mxu0 %v5193
        %5247 = vmatpush.msra.mxu0 %v5189
        %5248 = vmatpush.msra.mxu0 %v5185
        %5249 = vmatpush.msra.mxu0 %v5181
        %5250 = vmatpush.msra.mxu0 %v5177
        %5251 = vmatpush.msra.mxu0 %v5173
        %5252 = vmatpush.msra.mxu0 %v5169
        %5253 = vmatpush.msra.mxu0 %v5165
        %5254 = vmatmul.f32.gmra.mxu0 %v5196
        %v5255 = vpop.f32.mrf.mxu0
        %v5256 = vadd.f32 0.0, %v5255
        %5257 = vdwg.mxu0
        %5258 = vmatpush.msra.mxu0 0.0
        %5259 = vmatpush.msra.mxu0 0.0
        %5260 = vmatpush.msra.mxu0 0.0
        %5261 = vmatpush.msra.mxu0 0.0
        %5262 = vmatpush.msra.mxu0 0.0
        %5263 = vmatpush.msra.mxu0 0.0
        %5264 = vmatpush.msra.mxu0 0.0
        %5265 = vmatpush.msra.mxu0 0.0
        %5266 = vmatpush.msra.mxu0 %v5194
        %5267 = vmatpush.msra.mxu0 %v5190
        %5268 = vmatpush.msra.mxu0 %v5186
        %5269 = vmatpush.msra.mxu0 %v5182
        %5270 = vmatpush.msra.mxu0 %v5178
        %5271 = vmatpush.msra.mxu0 %v5174
        %5272 = vmatpush.msra.mxu0 %v5170
        %5273 = vmatpush.msra.mxu0 %v5166
        %5274 = vmatmul.f32.gmra.mxu0 %v5196
        %v5275 = vpop.f32.mrf.mxu0
        %v5276 = vadd.f32 0.0, %v5275
        %5277 = vdwg.mxu0
        %v5278 = vadd.f32 %v5158, %v5216
        %v5279 = vadd.f32 %v5159, %v5236
        %v5280 = vadd.f32 %v5160, %v5256
        %v5281 = vadd.f32 %v5161, %v5276
        %s5282 = scalar_lea.vmem [#allocation10], 7168
        %v5283 = vld [vmem:[%s5282] sm:$0xff]
        %v5284 = vld [vmem:[%s5282 + $0x8] sm:$0xff]
        %v5285 = vld [vmem:[%s5282 + $0x10] sm:$0xff]
        %v5286 = vld [vmem:[%s5282 + $0x18] sm:$0xff]
        %v5287 = vld [vmem:[%s5282 + $0x20] sm:$0xff]
        %v5288 = vld [vmem:[%s5282 + $0x28] sm:$0xff]
        %v5289 = vld [vmem:[%s5282 + $0x30] sm:$0xff]
        %v5290 = vld [vmem:[%s5282 + $0x38] sm:$0xff]
        %v5291 = vld [vmem:[%s5282 + $0x40] sm:$0xff]
        %v5292 = vld [vmem:[%s5282 + $0x48] sm:$0xff]
        %v5293 = vld [vmem:[%s5282 + $0x50] sm:$0xff]
        %v5294 = vld [vmem:[%s5282 + $0x58] sm:$0xff]
        %v5295 = vld [vmem:[%s5282 + $0x60] sm:$0xff]
        %v5296 = vld [vmem:[%s5282 + $0x68] sm:$0xff]
        %v5297 = vld [vmem:[%s5282 + $0x70] sm:$0xff]
        %v5298 = vld [vmem:[%s5282 + $0x78] sm:$0xff]
        %v5299 = vld [vmem:[%s5282 + $0x80] sm:$0xff]
        %v5300 = vld [vmem:[%s5282 + $0x88] sm:$0xff]
        %v5301 = vld [vmem:[%s5282 + $0x90] sm:$0xff]
        %v5302 = vld [vmem:[%s5282 + $0x98] sm:$0xff]
        %v5303 = vld [vmem:[%s5282 + $0xa0] sm:$0xff]
        %v5304 = vld [vmem:[%s5282 + $0xa8] sm:$0xff]
        %v5305 = vld [vmem:[%s5282 + $0xb0] sm:$0xff]
        %v5306 = vld [vmem:[%s5282 + $0xb8] sm:$0xff]
        %v5307 = vld [vmem:[%s5282 + $0xc0] sm:$0xff]
        %v5308 = vld [vmem:[%s5282 + $0xc8] sm:$0xff]
        %v5309 = vld [vmem:[%s5282 + $0xd0] sm:$0xff]
        %v5310 = vld [vmem:[%s5282 + $0xd8] sm:$0xff]
        %v5311 = vld [vmem:[%s5282 + $0xe0] sm:$0xff]
        %v5312 = vld [vmem:[%s5282 + $0xe8] sm:$0xff]
        %v5313 = vld [vmem:[%s5282 + $0xf0] sm:$0xff]
        %v5314 = vld [vmem:[%s5282 + $0xf8] sm:$0xff]
        %v5315 = vrot.slane %v1928, 4
        %v5316 = vsel %vm1997, %v5315, 0
        %5318 = vmatpush.msra.mxu0 0.0
        %5319 = vmatpush.msra.mxu0 0.0
        %5320 = vmatpush.msra.mxu0 0.0
        %5321 = vmatpush.msra.mxu0 0.0
        %5322 = vmatpush.msra.mxu0 0.0
        %5323 = vmatpush.msra.mxu0 0.0
        %5324 = vmatpush.msra.mxu0 0.0
        %5325 = vmatpush.msra.mxu0 0.0
        %5326 = vmatpush.msra.mxu0 %v5311
        %5327 = vmatpush.msra.mxu0 %v5307
        %5328 = vmatpush.msra.mxu0 %v5303
        %5329 = vmatpush.msra.mxu0 %v5299
        %5330 = vmatpush.msra.mxu0 %v5295
        %5331 = vmatpush.msra.mxu0 %v5291
        %5332 = vmatpush.msra.mxu0 %v5287
        %5333 = vmatpush.msra.mxu0 %v5283
        %5334 = vmatmul.f32.gmra.mxu0 %v5316
        %v5335 = vpop.f32.mrf.mxu0
        %v5336 = vadd.f32 0.0, %v5335
        %5337 = vdwg.mxu0
        %5338 = vmatpush.msra.mxu0 0.0
        %5339 = vmatpush.msra.mxu0 0.0
        %5340 = vmatpush.msra.mxu0 0.0
        %5341 = vmatpush.msra.mxu0 0.0
        %5342 = vmatpush.msra.mxu0 0.0
        %5343 = vmatpush.msra.mxu0 0.0
        %5344 = vmatpush.msra.mxu0 0.0
        %5345 = vmatpush.msra.mxu0 0.0
        %5346 = vmatpush.msra.mxu0 %v5312
        %5347 = vmatpush.msra.mxu0 %v5308
        %5348 = vmatpush.msra.mxu0 %v5304
        %5349 = vmatpush.msra.mxu0 %v5300
        %5350 = vmatpush.msra.mxu0 %v5296
        %5351 = vmatpush.msra.mxu0 %v5292
        %5352 = vmatpush.msra.mxu0 %v5288
        %5353 = vmatpush.msra.mxu0 %v5284
        %5354 = vmatmul.f32.gmra.mxu0 %v5316
        %v5355 = vpop.f32.mrf.mxu0
        %v5356 = vadd.f32 0.0, %v5355
        %5357 = vdwg.mxu0
        %5358 = vmatpush.msra.mxu0 0.0
        %5359 = vmatpush.msra.mxu0 0.0
        %5360 = vmatpush.msra.mxu0 0.0
        %5361 = vmatpush.msra.mxu0 0.0
        %5362 = vmatpush.msra.mxu0 0.0
        %5363 = vmatpush.msra.mxu0 0.0
        %5364 = vmatpush.msra.mxu0 0.0
        %5365 = vmatpush.msra.mxu0 0.0
        %5366 = vmatpush.msra.mxu0 %v5313
        %5367 = vmatpush.msra.mxu0 %v5309
        %5368 = vmatpush.msra.mxu0 %v5305
        %5369 = vmatpush.msra.mxu0 %v5301
        %5370 = vmatpush.msra.mxu0 %v5297
        %5371 = vmatpush.msra.mxu0 %v5293
        %5372 = vmatpush.msra.mxu0 %v5289
        %5373 = vmatpush.msra.mxu0 %v5285
        %5374 = vmatmul.f32.gmra.mxu0 %v5316
        %v5375 = vpop.f32.mrf.mxu0
        %v5376 = vadd.f32 0.0, %v5375
        %5377 = vdwg.mxu0
        %5378 = vmatpush.msra.mxu0 0.0
        %5379 = vmatpush.msra.mxu0 0.0
        %5380 = vmatpush.msra.mxu0 0.0
        %5381 = vmatpush.msra.mxu0 0.0
        %5382 = vmatpush.msra.mxu0 0.0
        %5383 = vmatpush.msra.mxu0 0.0
        %5384 = vmatpush.msra.mxu0 0.0
        %5385 = vmatpush.msra.mxu0 0.0
        %5386 = vmatpush.msra.mxu0 %v5314
        %5387 = vmatpush.msra.mxu0 %v5310
        %5388 = vmatpush.msra.mxu0 %v5306
        %5389 = vmatpush.msra.mxu0 %v5302
        %5390 = vmatpush.msra.mxu0 %v5298
        %5391 = vmatpush.msra.mxu0 %v5294
        %5392 = vmatpush.msra.mxu0 %v5290
        %5393 = vmatpush.msra.mxu0 %v5286
        %5394 = vmatmul.f32.gmra.mxu0 %v5316
        %v5395 = vpop.f32.mrf.mxu0
        %v5396 = vadd.f32 0.0, %v5395
        %5397 = vdwg.mxu0
        %v5398 = vadd.f32 %v5278, %v5336
        %v5399 = vadd.f32 %v5279, %v5356
        %v5400 = vadd.f32 %v5280, %v5376
        %v5401 = vadd.f32 %v5281, %v5396
        %s5402 = scalar_lea.vmem [#allocation10], 7424
        %v5403 = vld [vmem:[%s5402] sm:$0xff]
        %v5404 = vld [vmem:[%s5402 + $0x8] sm:$0xff]
        %v5405 = vld [vmem:[%s5402 + $0x10] sm:$0xff]
        %v5406 = vld [vmem:[%s5402 + $0x18] sm:$0xff]
        %v5407 = vld [vmem:[%s5402 + $0x20] sm:$0xff]
        %v5408 = vld [vmem:[%s5402 + $0x28] sm:$0xff]
        %v5409 = vld [vmem:[%s5402 + $0x30] sm:$0xff]
        %v5410 = vld [vmem:[%s5402 + $0x38] sm:$0xff]
        %v5411 = vld [vmem:[%s5402 + $0x40] sm:$0xff]
        %v5412 = vld [vmem:[%s5402 + $0x48] sm:$0xff]
        %v5413 = vld [vmem:[%s5402 + $0x50] sm:$0xff]
        %v5414 = vld [vmem:[%s5402 + $0x58] sm:$0xff]
        %v5415 = vld [vmem:[%s5402 + $0x60] sm:$0xff]
        %v5416 = vld [vmem:[%s5402 + $0x68] sm:$0xff]
        %v5417 = vld [vmem:[%s5402 + $0x70] sm:$0xff]
        %v5418 = vld [vmem:[%s5402 + $0x78] sm:$0xff]
        %v5419 = vld [vmem:[%s5402 + $0x80] sm:$0xff]
        %v5420 = vld [vmem:[%s5402 + $0x88] sm:$0xff]
        %v5421 = vld [vmem:[%s5402 + $0x90] sm:$0xff]
        %v5422 = vld [vmem:[%s5402 + $0x98] sm:$0xff]
        %v5423 = vld [vmem:[%s5402 + $0xa0] sm:$0xff]
        %v5424 = vld [vmem:[%s5402 + $0xa8] sm:$0xff]
        %v5425 = vld [vmem:[%s5402 + $0xb0] sm:$0xff]
        %v5426 = vld [vmem:[%s5402 + $0xb8] sm:$0xff]
        %v5427 = vld [vmem:[%s5402 + $0xc0] sm:$0xff]
        %v5428 = vld [vmem:[%s5402 + $0xc8] sm:$0xff]
        %v5429 = vld [vmem:[%s5402 + $0xd0] sm:$0xff]
        %v5430 = vld [vmem:[%s5402 + $0xd8] sm:$0xff]
        %v5431 = vld [vmem:[%s5402 + $0xe0] sm:$0xff]
        %v5432 = vld [vmem:[%s5402 + $0xe8] sm:$0xff]
        %v5433 = vld [vmem:[%s5402 + $0xf0] sm:$0xff]
        %v5434 = vld [vmem:[%s5402 + $0xf8] sm:$0xff]
        %v5435 = vrot.slane %v1928, 5
        %v5436 = vsel %vm1997, %v5435, 0
        %5438 = vmatpush.msra.mxu0 0.0
        %5439 = vmatpush.msra.mxu0 0.0
        %5440 = vmatpush.msra.mxu0 0.0
        %5441 = vmatpush.msra.mxu0 0.0
        %5442 = vmatpush.msra.mxu0 0.0
        %5443 = vmatpush.msra.mxu0 0.0
        %5444 = vmatpush.msra.mxu0 0.0
        %5445 = vmatpush.msra.mxu0 0.0
        %5446 = vmatpush.msra.mxu0 %v5431
        %5447 = vmatpush.msra.mxu0 %v5427
        %5448 = vmatpush.msra.mxu0 %v5423
        %5449 = vmatpush.msra.mxu0 %v5419
        %5450 = vmatpush.msra.mxu0 %v5415
        %5451 = vmatpush.msra.mxu0 %v5411
        %5452 = vmatpush.msra.mxu0 %v5407
        %5453 = vmatpush.msra.mxu0 %v5403
        %5454 = vmatmul.f32.gmra.mxu0 %v5436
        %v5455 = vpop.f32.mrf.mxu0
        %v5456 = vadd.f32 0.0, %v5455
        %5457 = vdwg.mxu0
        %5458 = vmatpush.msra.mxu0 0.0
        %5459 = vmatpush.msra.mxu0 0.0
        %5460 = vmatpush.msra.mxu0 0.0
        %5461 = vmatpush.msra.mxu0 0.0
        %5462 = vmatpush.msra.mxu0 0.0
        %5463 = vmatpush.msra.mxu0 0.0
        %5464 = vmatpush.msra.mxu0 0.0
        %5465 = vmatpush.msra.mxu0 0.0
        %5466 = vmatpush.msra.mxu0 %v5432
        %5467 = vmatpush.msra.mxu0 %v5428
        %5468 = vmatpush.msra.mxu0 %v5424
        %5469 = vmatpush.msra.mxu0 %v5420
        %5470 = vmatpush.msra.mxu0 %v5416
        %5471 = vmatpush.msra.mxu0 %v5412
        %5472 = vmatpush.msra.mxu0 %v5408
        %5473 = vmatpush.msra.mxu0 %v5404
        %5474 = vmatmul.f32.gmra.mxu0 %v5436
        %v5475 = vpop.f32.mrf.mxu0
        %v5476 = vadd.f32 0.0, %v5475
        %5477 = vdwg.mxu0
        %5478 = vmatpush.msra.mxu0 0.0
        %5479 = vmatpush.msra.mxu0 0.0
        %5480 = vmatpush.msra.mxu0 0.0
        %5481 = vmatpush.msra.mxu0 0.0
        %5482 = vmatpush.msra.mxu0 0.0
        %5483 = vmatpush.msra.mxu0 0.0
        %5484 = vmatpush.msra.mxu0 0.0
        %5485 = vmatpush.msra.mxu0 0.0
        %5486 = vmatpush.msra.mxu0 %v5433
        %5487 = vmatpush.msra.mxu0 %v5429
        %5488 = vmatpush.msra.mxu0 %v5425
        %5489 = vmatpush.msra.mxu0 %v5421
        %5490 = vmatpush.msra.mxu0 %v5417
        %5491 = vmatpush.msra.mxu0 %v5413
        %5492 = vmatpush.msra.mxu0 %v5409
        %5493 = vmatpush.msra.mxu0 %v5405
        %5494 = vmatmul.f32.gmra.mxu0 %v5436
        %v5495 = vpop.f32.mrf.mxu0
        %v5496 = vadd.f32 0.0, %v5495
        %5497 = vdwg.mxu0
        %5498 = vmatpush.msra.mxu0 0.0
        %5499 = vmatpush.msra.mxu0 0.0
        %5500 = vmatpush.msra.mxu0 0.0
        %5501 = vmatpush.msra.mxu0 0.0
        %5502 = vmatpush.msra.mxu0 0.0
        %5503 = vmatpush.msra.mxu0 0.0
        %5504 = vmatpush.msra.mxu0 0.0
        %5505 = vmatpush.msra.mxu0 0.0
        %5506 = vmatpush.msra.mxu0 %v5434
        %5507 = vmatpush.msra.mxu0 %v5430
        %5508 = vmatpush.msra.mxu0 %v5426
        %5509 = vmatpush.msra.mxu0 %v5422
        %5510 = vmatpush.msra.mxu0 %v5418
        %5511 = vmatpush.msra.mxu0 %v5414
        %5512 = vmatpush.msra.mxu0 %v5410
        %5513 = vmatpush.msra.mxu0 %v5406
        %5514 = vmatmul.f32.gmra.mxu0 %v5436
        %v5515 = vpop.f32.mrf.mxu0
        %v5516 = vadd.f32 0.0, %v5515
        %5517 = vdwg.mxu0
        %v5518 = vadd.f32 %v5398, %v5456
        %v5519 = vadd.f32 %v5399, %v5476
        %v5520 = vadd.f32 %v5400, %v5496
        %v5521 = vadd.f32 %v5401, %v5516
        %v5522 = vld [vmem:[#allocation11] sm:$0xf]
        %v5524 = vperm.slane %v5522, 0
        %v5525 = vperm.slane %v5522, 1
        %v5526 = vperm.slane %v5522, 2
        %v5527 = vperm.slane %v5522, 3
        %v5532 = vadd.f32 %v5518, %v5524
        %v5533 = vadd.f32 %v5519, %v5525
        %v5534 = vadd.f32 %v5520, %v5526
        %v5535 = vadd.f32 %v5521, %v5527
        %vm5536 = vcmp.ge.f32.partialorder %v5532, 0.0
        %vm5537 = vcmp.ge.f32.partialorder %v5533, 0.0
        %vm5538 = vcmp.ge.f32.partialorder %v5534, 0.0
        %vm5539 = vcmp.ge.f32.partialorder %v5535, 0.0
        %5540 = vset.pattern.permute.xlu0 2
        %5541 = vperm.xlu0 %5540, %v601
        %v5542 = vpop.permute.xlu0 %5541
        %v5544 = vperm.slane %v5542, 0
        %v5545 = vmul.f32 %v5544, %v5532
        %v5546 = vmul.f32 %v5544, %v5533
        %v5547 = vmul.f32 %v5544, %v5534
        %v5548 = vmul.f32 %v5544, %v5535
        %v5549 = vsel %vm5536, %v5532, %v5545
        %v5550 = vsel %vm5537, %v5533, %v5546
        %v5551 = vsel %vm5538, %v5534, %v5547
        %v5552 = vsel %vm5539, %v5535, %v5548
        %v5553 = vld [vmem:[#allocation13] sm:$0xff]
        %v5554 = vld [vmem:[#allocation13 + $0x8] sm:$0xff]
        %v5555 = vld [vmem:[#allocation13 + $0x10] sm:$0xff]
        %v5556 = vld [vmem:[#allocation13 + $0x18] sm:$0xff]
        %v5557 = vld [vmem:[#allocation13 + $0x20] sm:$0xff]
        %v5558 = vld [vmem:[#allocation13 + $0x28] sm:$0xff]
        %v5559 = vld [vmem:[#allocation13 + $0x30] sm:$0xff]
        %v5560 = vld [vmem:[#allocation13 + $0x38] sm:$0xff]
        %v5561 = vld [vmem:[#allocation13 + $0x40] sm:$0xff]
        %v5562 = vld [vmem:[#allocation13 + $0x48] sm:$0xff]
        %v5563 = vld [vmem:[#allocation13 + $0x50] sm:$0xff]
        %v5564 = vld [vmem:[#allocation13 + $0x58] sm:$0xff]
        %v5565 = vld [vmem:[#allocation13 + $0x60] sm:$0xff]
        %v5566 = vld [vmem:[#allocation13 + $0x68] sm:$0xff]
        %v5567 = vld [vmem:[#allocation13 + $0x70] sm:$0xff]
        %v5568 = vld [vmem:[#allocation13 + $0x78] sm:$0xff]
        %v5569 = vld [vmem:[#allocation13 + $0x80] sm:$0xff]
        %v5570 = vld [vmem:[#allocation13 + $0x88] sm:$0xff]
        %v5571 = vld [vmem:[#allocation13 + $0x90] sm:$0xff]
        %v5572 = vld [vmem:[#allocation13 + $0x98] sm:$0xff]
        %v5573 = vld [vmem:[#allocation13 + $0xa0] sm:$0xff]
        %v5574 = vld [vmem:[#allocation13 + $0xa8] sm:$0xff]
        %v5575 = vld [vmem:[#allocation13 + $0xb0] sm:$0xff]
        %v5576 = vld [vmem:[#allocation13 + $0xb8] sm:$0xff]
        %v5577 = vld [vmem:[#allocation13 + $0xc0] sm:$0xff]
        %v5578 = vld [vmem:[#allocation13 + $0xc8] sm:$0xff]
        %v5579 = vld [vmem:[#allocation13 + $0xd0] sm:$0xff]
        %v5580 = vld [vmem:[#allocation13 + $0xd8] sm:$0xff]
        %v5581 = vld [vmem:[#allocation13 + $0xe0] sm:$0xff]
        %v5582 = vld [vmem:[#allocation13 + $0xe8] sm:$0xff]
        %v5583 = vld [vmem:[#allocation13 + $0xf0] sm:$0xff]
        %v5584 = vld [vmem:[#allocation13 + $0xf8] sm:$0xff]
        %v5585 = vld [vmem:[#allocation13 + $0x100] sm:$0xff]
        %v5586 = vld [vmem:[#allocation13 + $0x108] sm:$0xff]
        %v5587 = vld [vmem:[#allocation13 + $0x110] sm:$0xff]
        %v5588 = vld [vmem:[#allocation13 + $0x118] sm:$0xff]
        %v5589 = vld [vmem:[#allocation13 + $0x120] sm:$0xff]
        %v5590 = vld [vmem:[#allocation13 + $0x128] sm:$0xff]
        %v5591 = vld [vmem:[#allocation13 + $0x130] sm:$0xff]
        %v5592 = vld [vmem:[#allocation13 + $0x138] sm:$0xff]
        %v5593 = vld [vmem:[#allocation13 + $0x140] sm:$0xff]
        %v5594 = vld [vmem:[#allocation13 + $0x148] sm:$0xff]
        %v5595 = vld [vmem:[#allocation13 + $0x150] sm:$0xff]
        %v5596 = vld [vmem:[#allocation13 + $0x158] sm:$0xff]
        %v5597 = vld [vmem:[#allocation13 + $0x160] sm:$0xff]
        %v5598 = vld [vmem:[#allocation13 + $0x168] sm:$0xff]
        %v5599 = vld [vmem:[#allocation13 + $0x170] sm:$0xff]
        %v5600 = vld [vmem:[#allocation13 + $0x178] sm:$0xff]
        %v5601 = vld [vmem:[#allocation13 + $0x180] sm:$0xff]
        %v5602 = vld [vmem:[#allocation13 + $0x188] sm:$0xff]
        %v5603 = vld [vmem:[#allocation13 + $0x190] sm:$0xff]
        %v5604 = vld [vmem:[#allocation13 + $0x198] sm:$0xff]
        %v5605 = vld [vmem:[#allocation13 + $0x1a0] sm:$0xff]
        %v5606 = vld [vmem:[#allocation13 + $0x1a8] sm:$0xff]
        %v5607 = vld [vmem:[#allocation13 + $0x1b0] sm:$0xff]
        %v5608 = vld [vmem:[#allocation13 + $0x1b8] sm:$0xff]
        %v5609 = vld [vmem:[#allocation13 + $0x1c0] sm:$0xff]
        %v5610 = vld [vmem:[#allocation13 + $0x1c8] sm:$0xff]
        %v5611 = vld [vmem:[#allocation13 + $0x1d0] sm:$0xff]
        %v5612 = vld [vmem:[#allocation13 + $0x1d8] sm:$0xff]
        %v5613 = vld [vmem:[#allocation13 + $0x1e0] sm:$0xff]
        %v5614 = vld [vmem:[#allocation13 + $0x1e8] sm:$0xff]
        %v5615 = vld [vmem:[#allocation13 + $0x1f0] sm:$0xff]
        %v5616 = vld [vmem:[#allocation13 + $0x1f8] sm:$0xff]
        %v5617 = vld [vmem:[#allocation13 + $0x200] sm:$0xff]
        %v5618 = vld [vmem:[#allocation13 + $0x208] sm:$0xff]
        %v5619 = vld [vmem:[#allocation13 + $0x210] sm:$0xff]
        %v5620 = vld [vmem:[#allocation13 + $0x218] sm:$0xff]
        %v5621 = vld [vmem:[#allocation13 + $0x220] sm:$0xff]
        %v5622 = vld [vmem:[#allocation13 + $0x228] sm:$0xff]
        %v5623 = vld [vmem:[#allocation13 + $0x230] sm:$0xff]
        %v5624 = vld [vmem:[#allocation13 + $0x238] sm:$0xff]
        %v5625 = vld [vmem:[#allocation13 + $0x240] sm:$0xff]
        %v5626 = vld [vmem:[#allocation13 + $0x248] sm:$0xff]
        %v5627 = vld [vmem:[#allocation13 + $0x250] sm:$0xff]
        %v5628 = vld [vmem:[#allocation13 + $0x258] sm:$0xff]
        %v5629 = vld [vmem:[#allocation13 + $0x260] sm:$0xff]
        %v5630 = vld [vmem:[#allocation13 + $0x268] sm:$0xff]
        %v5631 = vld [vmem:[#allocation13 + $0x270] sm:$0xff]
        %v5632 = vld [vmem:[#allocation13 + $0x278] sm:$0xff]
        %v5633 = vld [vmem:[#allocation13 + $0x280] sm:$0xff]
        %v5634 = vld [vmem:[#allocation13 + $0x288] sm:$0xff]
        %v5635 = vld [vmem:[#allocation13 + $0x290] sm:$0xff]
        %v5636 = vld [vmem:[#allocation13 + $0x298] sm:$0xff]
        %v5637 = vld [vmem:[#allocation13 + $0x2a0] sm:$0xff]
        %v5638 = vld [vmem:[#allocation13 + $0x2a8] sm:$0xff]
        %v5639 = vld [vmem:[#allocation13 + $0x2b0] sm:$0xff]
        %v5640 = vld [vmem:[#allocation13 + $0x2b8] sm:$0xff]
        %v5641 = vld [vmem:[#allocation13 + $0x2c0] sm:$0xff]
        %v5642 = vld [vmem:[#allocation13 + $0x2c8] sm:$0xff]
        %v5643 = vld [vmem:[#allocation13 + $0x2d0] sm:$0xff]
        %v5644 = vld [vmem:[#allocation13 + $0x2d8] sm:$0xff]
        %v5645 = vld [vmem:[#allocation13 + $0x2e0] sm:$0xff]
        %v5646 = vld [vmem:[#allocation13 + $0x2e8] sm:$0xff]
        %v5647 = vld [vmem:[#allocation13 + $0x2f0] sm:$0xff]
        %v5648 = vld [vmem:[#allocation13 + $0x2f8] sm:$0xff]
        %v5649 = vld [vmem:[#allocation13 + $0x300] sm:$0xff]
        %v5650 = vld [vmem:[#allocation13 + $0x308] sm:$0xff]
        %v5651 = vld [vmem:[#allocation13 + $0x310] sm:$0xff]
        %v5652 = vld [vmem:[#allocation13 + $0x318] sm:$0xff]
        %v5653 = vld [vmem:[#allocation13 + $0x320] sm:$0xff]
        %v5654 = vld [vmem:[#allocation13 + $0x328] sm:$0xff]
        %v5655 = vld [vmem:[#allocation13 + $0x330] sm:$0xff]
        %v5656 = vld [vmem:[#allocation13 + $0x338] sm:$0xff]
        %v5657 = vld [vmem:[#allocation13 + $0x340] sm:$0xff]
        %v5658 = vld [vmem:[#allocation13 + $0x348] sm:$0xff]
        %v5659 = vld [vmem:[#allocation13 + $0x350] sm:$0xff]
        %v5660 = vld [vmem:[#allocation13 + $0x358] sm:$0xff]
        %v5661 = vld [vmem:[#allocation13 + $0x360] sm:$0xff]
        %v5662 = vld [vmem:[#allocation13 + $0x368] sm:$0xff]
        %v5663 = vld [vmem:[#allocation13 + $0x370] sm:$0xff]
        %v5664 = vld [vmem:[#allocation13 + $0x378] sm:$0xff]
        %v5665 = vld [vmem:[#allocation13 + $0x380] sm:$0xff]
        %v5666 = vld [vmem:[#allocation13 + $0x388] sm:$0xff]
        %v5667 = vld [vmem:[#allocation13 + $0x390] sm:$0xff]
        %v5668 = vld [vmem:[#allocation13 + $0x398] sm:$0xff]
        %v5669 = vld [vmem:[#allocation13 + $0x3a0] sm:$0xff]
        %v5670 = vld [vmem:[#allocation13 + $0x3a8] sm:$0xff]
        %v5671 = vld [vmem:[#allocation13 + $0x3b0] sm:$0xff]
        %v5672 = vld [vmem:[#allocation13 + $0x3b8] sm:$0xff]
        %v5673 = vld [vmem:[#allocation13 + $0x3c0] sm:$0xff]
        %v5674 = vld [vmem:[#allocation13 + $0x3c8] sm:$0xff]
        %v5675 = vld [vmem:[#allocation13 + $0x3d0] sm:$0xff]
        %v5676 = vld [vmem:[#allocation13 + $0x3d8] sm:$0xff]
        %v5677 = vld [vmem:[#allocation13 + $0x3e0] sm:$0xff]
        %v5678 = vld [vmem:[#allocation13 + $0x3e8] sm:$0xff]
        %v5679 = vld [vmem:[#allocation13 + $0x3f0] sm:$0xff]
        %v5680 = vld [vmem:[#allocation13 + $0x3f8] sm:$0xff]
        %v5681 = vld [vmem:[#allocation14] sm:$0x3]
        %v5683 = vperm.slane %v5681, 0
        %v5684 = vperm.slane %v5681, 1
        %5687 = vmatpush.msra.mxu0 %v5583
        %5688 = vmatpush.msra.mxu0 %v5581
        %5689 = vmatpush.msra.mxu0 %v5579
        %5690 = vmatpush.msra.mxu0 %v5577
        %5691 = vmatpush.msra.mxu0 %v5575
        %5692 = vmatpush.msra.mxu0 %v5573
        %5693 = vmatpush.msra.mxu0 %v5571
        %5694 = vmatpush.msra.mxu0 %v5569
        %5695 = vmatpush.msra.mxu0 %v5567
        %5696 = vmatpush.msra.mxu0 %v5565
        %5697 = vmatpush.msra.mxu0 %v5563
        %5698 = vmatpush.msra.mxu0 %v5561
        %5699 = vmatpush.msra.mxu0 %v5559
        %5700 = vmatpush.msra.mxu0 %v5557
        %5701 = vmatpush.msra.mxu0 %v5555
        %5702 = vmatpush.msra.mxu0 %v5553
        %5703 = vmatmul.f32.gmra.mxu0 %v5549
        %v5704 = vpop.f32.mrf.mxu0
        %v5705 = vadd.f32 %v5683, %v5704
        %5706 = vdwg.mxu0
        %5707 = vmatpush.msra.mxu0 %v5615
        %5708 = vmatpush.msra.mxu0 %v5613
        %5709 = vmatpush.msra.mxu0 %v5611
        %5710 = vmatpush.msra.mxu0 %v5609
        %5711 = vmatpush.msra.mxu0 %v5607
        %5712 = vmatpush.msra.mxu0 %v5605
        %5713 = vmatpush.msra.mxu0 %v5603
        %5714 = vmatpush.msra.mxu0 %v5601
        %5715 = vmatpush.msra.mxu0 %v5599
        %5716 = vmatpush.msra.mxu0 %v5597
        %5717 = vmatpush.msra.mxu0 %v5595
        %5718 = vmatpush.msra.mxu0 %v5593
        %5719 = vmatpush.msra.mxu0 %v5591
        %5720 = vmatpush.msra.mxu0 %v5589
        %5721 = vmatpush.msra.mxu0 %v5587
        %5722 = vmatpush.msra.mxu0 %v5585
        %5723 = vmatmul.f32.gmra.mxu0 %v5550
        %v5724 = vpop.f32.mrf.mxu0
        %v5725 = vadd.f32 %v5705, %v5724
        %5726 = vdwg.mxu0
        %5727 = vmatpush.msra.mxu0 %v5647
        %5728 = vmatpush.msra.mxu0 %v5645
        %5729 = vmatpush.msra.mxu0 %v5643
        %5730 = vmatpush.msra.mxu0 %v5641
        %5731 = vmatpush.msra.mxu0 %v5639
        %5732 = vmatpush.msra.mxu0 %v5637
        %5733 = vmatpush.msra.mxu0 %v5635
        %5734 = vmatpush.msra.mxu0 %v5633
        %5735 = vmatpush.msra.mxu0 %v5631
        %5736 = vmatpush.msra.mxu0 %v5629
        %5737 = vmatpush.msra.mxu0 %v5627
        %5738 = vmatpush.msra.mxu0 %v5625
        %5739 = vmatpush.msra.mxu0 %v5623
        %5740 = vmatpush.msra.mxu0 %v5621
        %5741 = vmatpush.msra.mxu0 %v5619
        %5742 = vmatpush.msra.mxu0 %v5617
        %5743 = vmatmul.f32.gmra.mxu0 %v5551
        %v5744 = vpop.f32.mrf.mxu0
        %v5745 = vadd.f32 %v5725, %v5744
        %5746 = vdwg.mxu0
        %5747 = vmatpush.msra.mxu0 %v5679
        %5748 = vmatpush.msra.mxu0 %v5677
        %5749 = vmatpush.msra.mxu0 %v5675
        %5750 = vmatpush.msra.mxu0 %v5673
        %5751 = vmatpush.msra.mxu0 %v5671
        %5752 = vmatpush.msra.mxu0 %v5669
        %5753 = vmatpush.msra.mxu0 %v5667
        %5754 = vmatpush.msra.mxu0 %v5665
        %5755 = vmatpush.msra.mxu0 %v5663
        %5756 = vmatpush.msra.mxu0 %v5661
        %5757 = vmatpush.msra.mxu0 %v5659
        %5758 = vmatpush.msra.mxu0 %v5657
        %5759 = vmatpush.msra.mxu0 %v5655
        %5760 = vmatpush.msra.mxu0 %v5653
        %5761 = vmatpush.msra.mxu0 %v5651
        %5762 = vmatpush.msra.mxu0 %v5649
        %5763 = vmatmul.f32.gmra.mxu0 %v5552
        %v5764 = vpop.f32.mrf.mxu0
        %v5765 = vadd.f32 %v5745, %v5764
        %5766 = vdwg.mxu0
        %5767 = vmatpush.msra.mxu0 %v5584
        %5768 = vmatpush.msra.mxu0 %v5582
        %5769 = vmatpush.msra.mxu0 %v5580
        %5770 = vmatpush.msra.mxu0 %v5578
        %5771 = vmatpush.msra.mxu0 %v5576
        %5772 = vmatpush.msra.mxu0 %v5574
        %5773 = vmatpush.msra.mxu0 %v5572
        %5774 = vmatpush.msra.mxu0 %v5570
        %5775 = vmatpush.msra.mxu0 %v5568
        %5776 = vmatpush.msra.mxu0 %v5566
        %5777 = vmatpush.msra.mxu0 %v5564
        %5778 = vmatpush.msra.mxu0 %v5562
        %5779 = vmatpush.msra.mxu0 %v5560
        %5780 = vmatpush.msra.mxu0 %v5558
        %5781 = vmatpush.msra.mxu0 %v5556
        %5782 = vmatpush.msra.mxu0 %v5554
        %5783 = vmatmul.f32.gmra.mxu0 %v5549
        %v5784 = vpop.f32.mrf.mxu0
        %v5785 = vadd.f32 %v5684, %v5784
        %5786 = vdwg.mxu0
        %5787 = vmatpush.msra.mxu0 %v5616
        %5788 = vmatpush.msra.mxu0 %v5614
        %5789 = vmatpush.msra.mxu0 %v5612
        %5790 = vmatpush.msra.mxu0 %v5610
        %5791 = vmatpush.msra.mxu0 %v5608
        %5792 = vmatpush.msra.mxu0 %v5606
        %5793 = vmatpush.msra.mxu0 %v5604
        %5794 = vmatpush.msra.mxu0 %v5602
        %5795 = vmatpush.msra.mxu0 %v5600
        %5796 = vmatpush.msra.mxu0 %v5598
        %5797 = vmatpush.msra.mxu0 %v5596
        %5798 = vmatpush.msra.mxu0 %v5594
        %5799 = vmatpush.msra.mxu0 %v5592
        %5800 = vmatpush.msra.mxu0 %v5590
        %5801 = vmatpush.msra.mxu0 %v5588
        %5802 = vmatpush.msra.mxu0 %v5586
        %5803 = vmatmul.f32.gmra.mxu0 %v5550
        %v5804 = vpop.f32.mrf.mxu0
        %v5805 = vadd.f32 %v5785, %v5804
        %5806 = vdwg.mxu0
        %5807 = vmatpush.msra.mxu0 %v5648
        %5808 = vmatpush.msra.mxu0 %v5646
        %5809 = vmatpush.msra.mxu0 %v5644
        %5810 = vmatpush.msra.mxu0 %v5642
        %5811 = vmatpush.msra.mxu0 %v5640
        %5812 = vmatpush.msra.mxu0 %v5638
        %5813 = vmatpush.msra.mxu0 %v5636
        %5814 = vmatpush.msra.mxu0 %v5634
        %5815 = vmatpush.msra.mxu0 %v5632
        %5816 = vmatpush.msra.mxu0 %v5630
        %5817 = vmatpush.msra.mxu0 %v5628
        %5818 = vmatpush.msra.mxu0 %v5626
        %5819 = vmatpush.msra.mxu0 %v5624
        %5820 = vmatpush.msra.mxu0 %v5622
        %5821 = vmatpush.msra.mxu0 %v5620
        %5822 = vmatpush.msra.mxu0 %v5618
        %5823 = vmatmul.f32.gmra.mxu0 %v5551
        %v5824 = vpop.f32.mrf.mxu0
        %v5825 = vadd.f32 %v5805, %v5824
        %5826 = vdwg.mxu0
        %5827 = vmatpush.msra.mxu0 %v5680
        %5828 = vmatpush.msra.mxu0 %v5678
        %5829 = vmatpush.msra.mxu0 %v5676
        %5830 = vmatpush.msra.mxu0 %v5674
        %5831 = vmatpush.msra.mxu0 %v5672
        %5832 = vmatpush.msra.mxu0 %v5670
        %5833 = vmatpush.msra.mxu0 %v5668
        %5834 = vmatpush.msra.mxu0 %v5666
        %5835 = vmatpush.msra.mxu0 %v5664
        %5836 = vmatpush.msra.mxu0 %v5662
        %5837 = vmatpush.msra.mxu0 %v5660
        %5838 = vmatpush.msra.mxu0 %v5658
        %5839 = vmatpush.msra.mxu0 %v5656
        %5840 = vmatpush.msra.mxu0 %v5654
        %5841 = vmatpush.msra.mxu0 %v5652
        %5842 = vmatpush.msra.mxu0 %v5650
        %5843 = vmatmul.f32.gmra.mxu0 %v5552
        %v5844 = vpop.f32.mrf.mxu0
        %v5845 = vadd.f32 %v5825, %v5844
        %5846 = vdwg.mxu0
        %v5849 = vrot.slane %v5845, 7
        %vm5850 = vcmask 1040384
        %v5851 = vsel %vm5850, %v5765, %v5849
        %v5853 = vlaneseq
        %vm5854 = vcmp.ge.s32.totalorder %v5853, 0
        %vm5855 = vcmp.lt.s32.totalorder %v5853, 256
        %vm5856 = vmand %vm5854, %vm5855
        %5857 = vst.msk [vmem:[%s600] sm:$0x3] %vm5856, %v5851
        %vm5858 = vcmp.ge.f32.partialorder %v5765, 0.0
        %vm5859 = vcmp.ge.f32.partialorder %v5845, 0.0
        %5860 = vset.pattern.permute.xlu0 3
        %5861 = vperm.xlu0 %5860, %v601
        %v5862 = vpop.permute.xlu0 %5861
        %v5864 = vperm.slane %v5862, 0
        %v5865 = vmul.f32 %v5864, %v5765
        %v5866 = vmul.f32 %v5864, %v5845
        %v5867 = vsel %vm5858, %v5765, %v5865
        %v5868 = vsel %vm5859, %v5845, %v5866
        %v5869 = vld [vmem:[%s9] sm:$0xff]
        %v5870 = vld [vmem:[%s9 + $0x8] sm:$0xff]
        %v5871 = vld [vmem:[%s9 + $0x10] sm:$0xff]
        %v5872 = vld [vmem:[%s9 + $0x18] sm:$0xff]
        %v5873 = vld [vmem:[%s9 + $0x20] sm:$0xff]
        %v5874 = vld [vmem:[%s9 + $0x28] sm:$0xff]
        %v5875 = vld [vmem:[%s9 + $0x30] sm:$0xff]
        %v5876 = vld [vmem:[%s9 + $0x38] sm:$0xff]
        %v5877 = vld [vmem:[%s9 + $0x40] sm:$0xff]
        %v5878 = vld [vmem:[%s9 + $0x48] sm:$0xff]
        %v5879 = vld [vmem:[%s9 + $0x50] sm:$0xff]
        %v5880 = vld [vmem:[%s9 + $0x58] sm:$0xff]
        %v5881 = vld [vmem:[%s9 + $0x60] sm:$0xff]
        %v5882 = vld [vmem:[%s9 + $0x68] sm:$0xff]
        %v5883 = vld [vmem:[%s9 + $0x70] sm:$0xff]
        %v5884 = vld [vmem:[%s9 + $0x78] sm:$0xff]
        %v5885 = vld [vmem:[%s9 + $0x80] sm:$0xff]
        %v5886 = vld [vmem:[%s9 + $0x88] sm:$0xff]
        %v5887 = vld [vmem:[%s9 + $0x90] sm:$0xff]
        %v5888 = vld [vmem:[%s9 + $0x98] sm:$0xff]
        %v5889 = vld [vmem:[%s9 + $0xa0] sm:$0xff]
        %v5890 = vld [vmem:[%s9 + $0xa8] sm:$0xff]
        %v5891 = vld [vmem:[%s9 + $0xb0] sm:$0xff]
        %v5892 = vld [vmem:[%s9 + $0xb8] sm:$0xff]
        %v5893 = vld [vmem:[%s9 + $0xc0] sm:$0xff]
        %v5894 = vld [vmem:[%s9 + $0xc8] sm:$0xff]
        %v5895 = vld [vmem:[%s9 + $0xd0] sm:$0xff]
        %v5896 = vld [vmem:[%s9 + $0xd8] sm:$0xff]
        %v5897 = vld [vmem:[%s9 + $0xe0] sm:$0xff]
        %v5898 = vld [vmem:[%s9 + $0xe8] sm:$0xff]
        %v5899 = vld [vmem:[%s9 + $0xf0] sm:$0xff]
        %v5900 = vld [vmem:[%s9 + $0xf8] sm:$0xff]
        %v5901 = vld [vmem:[#allocation16] sm:$0x1]
        %5902 = vmatpush.msra.mxu0 %v5884
        %5903 = vmatpush.msra.mxu0 %v5883
        %5904 = vmatpush.msra.mxu0 %v5882
        %5905 = vmatpush.msra.mxu0 %v5881
        %5906 = vmatpush.msra.mxu0 %v5880
        %5907 = vmatpush.msra.mxu0 %v5879
        %5908 = vmatpush.msra.mxu0 %v5878
        %5909 = vmatpush.msra.mxu0 %v5877
        %5910 = vmatpush.msra.mxu0 %v5876
        %5911 = vmatpush.msra.mxu0 %v5875
        %5912 = vmatpush.msra.mxu0 %v5874
        %5913 = vmatpush.msra.mxu0 %v5873
        %5914 = vmatpush.msra.mxu0 %v5872
        %5915 = vmatpush.msra.mxu0 %v5871
        %5916 = vmatpush.msra.mxu0 %v5870
        %5917 = vmatpush.msra.mxu0 %v5869
        %5918 = vmatmul.f32.gmra.mxu0 %v5867
        %v5919 = vpop.f32.mrf.mxu0
        %v5920 = vadd.f32 %v5901, %v5919
        %5921 = vdwg.mxu0
        %5922 = vmatpush.msra.mxu0 %v5900
        %5923 = vmatpush.msra.mxu0 %v5899
        %5924 = vmatpush.msra.mxu0 %v5898
        %5925 = vmatpush.msra.mxu0 %v5897
        %5926 = vmatpush.msra.mxu0 %v5896
        %5927 = vmatpush.msra.mxu0 %v5895
        %5928 = vmatpush.msra.mxu0 %v5894
        %5929 = vmatpush.msra.mxu0 %v5893
        %5930 = vmatpush.msra.mxu0 %v5892
        %5931 = vmatpush.msra.mxu0 %v5891
        %5932 = vmatpush.msra.mxu0 %v5890
        %5933 = vmatpush.msra.mxu0 %v5889
        %5934 = vmatpush.msra.mxu0 %v5888
        %5935 = vmatpush.msra.mxu0 %v5887
        %5936 = vmatpush.msra.mxu0 %v5886
        %5937 = vmatpush.msra.mxu0 %v5885
        %5938 = vmatmul.f32.gmra.mxu0 %v5868
        %v5939 = vpop.f32.mrf.mxu0
        %v5940 = vadd.f32 %v5920, %v5939
        %5941 = vdwg.mxu0
        %vm5942 = vcmask 8192
        %5943 = vst.msk [vmem:[%s591] sm:$0x1] %vm5942, %v5940
        %p5944 = scmp.lt.s32.totalorder %s34, 1
        %s5945 = scalar_select %p5944, %s34, 1
        %s5946 = smul.addr %s5945, 2
        %s5947 = scalar_lea.vmem %s12, %s5946
        %s5948 = sand.u32 %s325, 1
        %s5949 = scalar_lea.sflag [#allocation4], %s5948
        %s5950 = sand.u32 %s325, 1
        %s5951 = scalar_lea.vmem [#allocation19], %s5950
        // Predicated region
        $region109: #{embedding_net_apply.1} parent=67 // pred_check
          %p5952 = pneg %p309
        $region110: #{embedding_net_apply.1} parent=67 // pred_check_branch
          %5954 = sbr.rel (%p5952) target = $region112
        $region111: #{embedding_net_apply.1} parent=67 // pred_region
          _
        $region112: #{embedding_net_apply.1} parent=67 // pred_fallthru
          _
        // Predicated region
        $region113: #{embedding_net_apply.1} parent=67 // pred_check
          %p5955 = pneg %p335
        $region114: #{embedding_net_apply.1} parent=67 // pred_check_branch
          %5957 = sbr.rel (%p5955) target = $region116
        $region115: #{embedding_net_apply.1} parent=67 // pred_region
          %5959 = vsyncadd %s5949, 0
          %s5960 = scalar_lea.hbm %s13, %s34
          %s5962 = sshll.u32 %s5951, 4
          %s5963 = int_to_ptr.vmem [resolvable:$true] %s5962
          %s5964 = sshll.u32 %s5960, 4
          %s5965 = int_to_ptr.hbm [resolvable:$true] %s5964
          %5967 = dma.vmem_to_hbm [thread:$0]  %s5963, 16, %s5965, %s5949
        $region116: #{embedding_net_apply.1} parent=67 // pred_fallthru
          _
      $region68: #{embedding_net_apply.1} parent=5 // pred_fallthru
        _
      %p5968 = scmp.le.s32.totalorder 2, %s29
      // Predicated region
      $region117: #{embedding_net_apply.1} parent=5 // pred_check
        %p5969 = pneg %p5968
      $region118: #{embedding_net_apply.1} parent=5 // pred_check_branch
        %5971 = sbr.rel (%p5969) target = $region120
      $region119: #{embedding_net_apply.1} parent=5 // pred_region
        %s5972 = ssub.s32 %s29, 2
        // Predicated region
        $region121: #{embedding_net_apply.1} parent=119 // pred_check
          %p5973 = pneg %p315
        $region122: #{embedding_net_apply.1} parent=119 // pred_check_branch
          %5975 = sbr.rel (%p5973) target = $region124
        $region123: #{embedding_net_apply.1} parent=119 // pred_region
          %p5976 = scmp.lt.s32.totalorder %s35, 1
          %s5977 = scalar_select %p5976, %s35, 1
          %s5978 = smul.addr %s5977, 2
          %s5979 = scalar_lea.vmem %s12, %s5978
        $region124: #{embedding_net_apply.1} parent=119 // pred_fallthru
          _
        // Predicated region
        $region125: #{embedding_net_apply.1} parent=119 // pred_check
          %p5980 = pneg %p341
        $region126: #{embedding_net_apply.1} parent=119 // pred_check_branch
          %5982 = sbr.rel (%p5980) target = $region128
        $region127: #{embedding_net_apply.1} parent=119 // pred_region
          %s5983 = sand.u32 %s326, 1
          %s5984 = scalar_lea.sflag [#allocation4], %s5983
          %s5985 = sand.u32 %s326, 1
          %s5986 = scalar_lea.vmem [#allocation19], %s5985
          %5988 = dma.done %s5984, 16
        $region128: #{embedding_net_apply.1} parent=119 // pred_fallthru
          _
      $region120: #{embedding_net_apply.1} parent=5 // pred_fallthru
        _
    $region6: #{embedding_net_apply.1} parent=1 // loop_footer
      %s33 = sadd.s32 1, %s29
    $region7: #{embedding_net_apply.1} parent=1 // loop_footer_branch
      %28 = sbr.rel target = $region3
    $region8: #{embedding_net_apply.1} parent=1 // loop_exit
      _
    %5989 = vsyncpa [#allocation3], 1
    %s5990 = scalar_lea.sflag [#allocation3], 1
    %5991 = vsyncpa %s5990, 1
    %5992 = vsyncpa [#allocation6], 1
    %5993 = vsyncpa [#allocation9], 1
    %5994 = vsyncpa [#allocation12], 1
    %5995 = vsyncpa [#allocation15], 1
    %5996 = vsyncpa [#allocation18], 1
    %5997 = vsyncpa [#allocation4], 1
    %s5998 = scalar_lea.sflag [#allocation4], 1
    %5999 = vsyncpa %s5998, 1

</llo_original>
